<compile_context>
chip_gen: v7x
topology: tpu7x:2x2x1
jax: 0.10.0
libtpu: 0.0.40
codegen_flags: <defaults>
</compile_context>

<pallas_src>
import jax
import jax.numpy as jnp
from jax.experimental import pallas as pl
from jax.experimental.pallas import tpu as pltpu

DIM = 64
DIMENSION = 8
OUTPUT_DIM = 784


# ----------------------------------------------------------------------------
# Pallas kernels (single grid step each, whole operands VMEM-resident)
# ----------------------------------------------------------------------------
def _matmul_bias_relu_kernel(p_ref, w_ref, b_ref, o_ref):
    # out = relu(patches @ weights + bias)  -- one fused MXU pass.
    acc = jnp.dot(p_ref[...], w_ref[...], preferred_element_type=jnp.float32)
    o_ref[...] = jnp.maximum(acc + b_ref[...], 0.0)


def _block2_deconv_kernel(p_ref, w2_ref, b2_ref, w3_ref, o_ref):
    # h2      = relu(patches2 @ w2 + b2)   (ConvTranspose2d #2 + ReLU)
    # contrib = h2 @ w3                    (deconv_out: 64 taps folded into N)
    h = jnp.dot(p_ref[...], w2_ref[...], preferred_element_type=jnp.float32)
    h = jnp.maximum(h + b2_ref[...], 0.0)
    o_ref[...] = jnp.dot(h.astype(w3_ref.dtype), w3_ref[...],
                         preferred_element_type=jnp.float32)


def _fused_matmul_bias_relu(p, w, b):
    M, K = p.shape
    N = w.shape[1]
    return pl.pallas_call(
        _matmul_bias_relu_kernel,
        out_shape=jax.ShapeDtypeStruct((M, N), jnp.float32),
        grid=(1,),
        in_specs=[
            pl.BlockSpec((M, K), lambda i: (0, 0)),
            pl.BlockSpec((K, N), lambda i: (0, 0)),
            pl.BlockSpec((1, N), lambda i: (0, 0)),
        ],
        out_specs=pl.BlockSpec((M, N), lambda i: (0, 0)),
        compiler_params=pltpu.CompilerParams(
            dimension_semantics=("arbitrary",)),
    )(p, w, b)


def _fused_block2_deconv(p, w2, b2, w3):
    M, K = p.shape
    N2 = w2.shape[1]
    N3 = w3.shape[1]
    return pl.pallas_call(
        _block2_deconv_kernel,
        out_shape=jax.ShapeDtypeStruct((M, N3), jnp.float32),
        grid=(1,),
        in_specs=[
            pl.BlockSpec((M, K), lambda i: (0, 0)),
            pl.BlockSpec((K, N2), lambda i: (0, 0)),
            pl.BlockSpec((1, N2), lambda i: (0, 0)),
            pl.BlockSpec((N2, N3), lambda i: (0, 0)),
        ],
        out_specs=pl.BlockSpec((M, N3), lambda i: (0, 0)),
        compiler_params=pltpu.CompilerParams(
            dimension_semantics=("arbitrary",)),
    )(p, w2, b2, w3)


# ----------------------------------------------------------------------------
# XLA glue: patch / weight flattening for the stride-1 transposed convolutions
# ----------------------------------------------------------------------------
def _flat_deconv_weight(w_pt):
    # [Cin, Cout, k, k] (PyTorch ConvTranspose2d) -> [k*k*Cin, Cout]
    # (spatially flipped; tap-major, channel-minor -- must match _flat_patches)
    k = w_pt.shape[-1]
    wf = jnp.flip(w_pt, axis=(2, 3))
    wf = jnp.transpose(wf, (2, 3, 0, 1))            # [k, k, Cin, Cout]
    return wf.reshape(k * k * w_pt.shape[0], w_pt.shape[1])


def _flat_patches(xp, k, Ho, Wo):
    # xp: [B, Hp, Wp, C] zero-padded NHWC -> [B*Ho*Wo, k*k*C]
    B, _, _, C = xp.shape
    taps = [xp[:, ky:ky + Ho, kx:kx + Wo, :]
            for ky in range(k) for kx in range(k)]
    pat = jnp.concatenate(taps, axis=-1)            # [B, Ho, Wo, k*k*C]
    return pat.reshape(B * Ho * Wo, k * k * C)


# ----------------------------------------------------------------------------
# Generator forward pass
# ----------------------------------------------------------------------------
def generator_forward(x, params):
    B = x.shape[0]
    bf16 = jnp.bfloat16

    # preprocess: Linear(DIMENSION, 4*4*4*DIM) + ReLU  (tiny; plain XLA)
    h = jnp.maximum(x @ params["lin_w"].T + params["lin_b"], 0.0)   # [B, 4096]
    # view(-1, 4*DIM, 4, 4) (NCHW) -> NHWC
    h = h.reshape(B, 4 * DIM, 4, 4).transpose(0, 2, 3, 1)           # [B,4,4,256]

    # block1: ConvTranspose2d(4*DIM, 2*DIM, 5) + ReLU -> [B, 8, 8, 128]
    k1 = 5
    xp1 = jnp.pad(h, ((0, 0), (k1 - 1, k1 - 1), (k1 - 1, k1 - 1), (0, 0)))
    p1 = _flat_patches(xp1.astype(bf16), k1, 8, 8)                  # [B*64, 6400]
    w1 = _flat_deconv_weight(params["w1"]).astype(bf16)             # [6400, 128]
    h1 = _fused_matmul_bias_relu(p1, w1, params["b1"].reshape(1, -1))
    h1 = h1.reshape(B, 8, 8, 2 * DIM)[:, :7, :7, :]                 # crop 7x7

    # block2 + deconv_out channel contraction (single fused kernel)
    k2 = 5
    xp2 = jnp.pad(h1, ((0, 0), (k2 - 1, k2 - 1), (k2 - 1, k2 - 1), (0, 0)))
    p2 = _flat_patches(xp2.astype(bf16), k2, 11, 11)                # [B*121, 3200]
    M2 = p2.shape[0]
    M2p = ((M2 + 7) // 8) * 8                                       # sublane-align M
    if M2p != M2:
        p2 = jnp.pad(p2, ((0, M2p - M2), (0, 0)))
    w2 = _flat_deconv_weight(params["w2"]).astype(bf16)             # [3200, 64]
    w3 = params["w3"][:, 0].reshape(DIM, 64).astype(bf16)           # [Cin, p*8+q]
    contrib = _fused_block2_deconv(p2, w2, params["b2"].reshape(1, -1), w3)
    contrib = contrib[:M2].reshape(B, 11, 11, 8, 8)                 # [B,i,j,p,q]

    # deconv_out stride-2 scatter-add + bias + sigmoid on the tiny [B,28,28]
    # output, vectorized as one einsum against a constant 0/1 selection tensor:
    #   out[b, 2i+p, 2j+q] += contrib[b, i, j, p, q]
    # TODO(synk): the strided scatter-add + sigmoid stay in XLA (no clean Pallas
    # formulation without strided lane stores; output is only ~6 KB).
    sel = (jnp.arange(28)[None, None, :] ==
           (2 * jnp.arange(11)[:, None, None] +
            jnp.arange(8)[None, :, None])).astype(jnp.float32)      # [11, 8, 28]
    out28 = jnp.einsum('bijpq,jqx,ipy->byx', contrib, sel, sel)     # [B, 28, 28]
    out = jax.nn.sigmoid(out28 + params["b3"][0])
    return out.reshape(B, OUTPUT_DIM)


def init_params(key):
    ks = jax.random.split(key, 8)
    s = 0.05
    return {
        "lin_w": s * jax.random.normal(ks[0], (4 * 4 * 4 * DIM, DIMENSION), jnp.float32),
        "lin_b": s * jax.random.normal(ks[1], (4 * 4 * 4 * DIM,), jnp.float32),
        "w1": s * jax.random.normal(ks[2], (4 * DIM, 2 * DIM, 5, 5), jnp.float32),
        "b1": s * jax.random.normal(ks[3], (2 * DIM,), jnp.float32),
        "w2": s * jax.random.normal(ks[4], (2 * DIM, DIM, 5, 5), jnp.float32),
        "b2": s * jax.random.normal(ks[5], (DIM,), jnp.float32),
        "w3": s * jax.random.normal(ks[6], (DIM, 1, 8, 8), jnp.float32),
        "b3": s * jax.random.normal(ks[7], (1,), jnp.float32),
    }


if __name__ == "__main__":
    key = jax.random.PRNGKey(0)
    pkey, xkey = jax.random.split(key)
    params = init_params(pkey)
    x = jax.random.normal(xkey, (2, DIMENSION), jnp.float32)

    out = jax.jit(generator_forward)(x, params)
    jax.block_until_ready(out)
    assert out.shape == (2, OUTPUT_DIM)
    assert bool(jnp.all(jnp.isfinite(out)))
    print("KERNEL_OK")
</pallas_src>

<mosaic_0001>
module attributes {stable_mosaic.version = 11 : i64} {
  func.func @_matmul_bias_relu_kernel(%arg0: i32, %arg1: memref<128x6400xbf16, #tpu.memory_space<vmem>>, %arg2: memref<6400x128xbf16, #tpu.memory_space<vmem>>, %arg3: memref<1x128xf32, #tpu.memory_space<vmem>>, %arg4: memref<128x128xf32, #tpu.memory_space<vmem>>) attributes {dimension_semantics = [#tpu.dimension_semantics<arbitrary>], iteration_bounds = array<i64: 1>, scalar_prefetch = 0 : i64, scratch_operands = 0 : i64, tpu.core_type = #tpu.core_type<tc>, window_params = [{pipeline_mode = #tpu.pipeline_mode<synchronous>, transform_indices = @transform_0, window_bounds = array<i64: 128, 6400>}, {pipeline_mode = #tpu.pipeline_mode<synchronous>, transform_indices = @transform_1, window_bounds = array<i64: 6400, 128>}, {pipeline_mode = #tpu.pipeline_mode<synchronous>, transform_indices = @transform_2, window_bounds = array<i64: 1, 128>}, {pipeline_mode = #tpu.pipeline_mode<synchronous>, transform_indices = @transform_3, window_bounds = array<i64: 128, 128>}]} {
    %c0 = arith.constant 0 : index
    %c0_0 = arith.constant 0 : index
    %0 = vector.load %arg1[%c0, %c0_0] : memref<128x6400xbf16, #tpu.memory_space<vmem>>, vector<128x6400xbf16>
    %c0_1 = arith.constant 0 : index
    %c0_2 = arith.constant 0 : index
    %1 = vector.load %arg2[%c0_1, %c0_2] : memref<6400x128xbf16, #tpu.memory_space<vmem>>, vector<6400x128xbf16>
    %cst = arith.constant dense<0.000000e+00> : vector<128x128xf32>
    %2 = tpu.matmul %0, %1, %cst {dimension_numbers = #tpu.dot_dimension_numbers<[1], [0], [0], [1], [0, 0, 1, 1], [], []>} : vector<128x6400xbf16>, vector<6400x128xbf16>, vector<128x128xf32> -> vector<128x128xf32>
    %c0_3 = arith.constant 0 : index
    %c0_4 = arith.constant 0 : index
    %3 = vector.load %arg3[%c0_3, %c0_4] : memref<1x128xf32, #tpu.memory_space<vmem>>, vector<1x128xf32>
    %4 = vector.broadcast %3 : vector<1x128xf32> to vector<128x128xf32>
    %5 = arith.addf %2, %4 : vector<128x128xf32>
    %cst_5 = arith.constant 0.000000e+00 : f32
    %6 = vector.broadcast %cst_5 : f32 to vector<128x128xf32>
    %7 = arith.maximumf %5, %6 : vector<128x128xf32>
    %c0_6 = arith.constant 0 : index
    %c0_7 = arith.constant 0 : index
    %8 = vector.load %arg4[%c0_6, %c0_7] : memref<128x128xf32, #tpu.memory_space<vmem>>, vector<128x128xf32>
    tpu.vector_store %arg4[%c0_6, %c0_7], %7 {strides = array<i32>} : memref<128x128xf32, #tpu.memory_space<vmem>>, vector<128x128xf32>,
    return
  }
  func.func @transform_0(%arg0: i32) -> (i32, i32) {
    %c0_i32 = arith.constant 0 : i32
    %c0_i32_0 = arith.constant 0 : i32
    %c0_i32_1 = arith.constant 0 : i32
    return %c0_i32, %c0_i32_0 : i32, i32
  }
  func.func @transform_1(%arg0: i32) -> (i32, i32) {
    %c0_i32 = arith.constant 0 : i32
    %c0_i32_0 = arith.constant 0 : i32
    %c0_i32_1 = arith.constant 0 : i32
    return %c0_i32, %c0_i32_0 : i32, i32
  }
  func.func @transform_2(%arg0: i32) -> (i32, i32) {
    %c0_i32 = arith.constant 0 : i32
    %c0_i32_0 = arith.constant 0 : i32
    %c0_i32_1 = arith.constant 0 : i32
    return %c0_i32, %c0_i32_0 : i32, i32
  }
  func.func @transform_3(%arg0: i32) -> (i32, i32) {
    %c0_i32 = arith.constant 0 : i32
    %c0_i32_0 = arith.constant 0 : i32
    %c0_i32_1 = arith.constant 0 : i32
    return %c0_i32, %c0_i32_0 : i32, i32
  }
}

module attributes {stable_mosaic.version = 11 : i64} {
  func.func @_block2_deconv_kernel(%arg0: i32, %arg1: memref<248x3200xbf16, #tpu.memory_space<vmem>>, %arg2: memref<3200x64xbf16, #tpu.memory_space<vmem>>, %arg3: memref<1x64xf32, #tpu.memory_space<vmem>>, %arg4: memref<64x64xbf16, #tpu.memory_space<vmem>>, %arg5: memref<248x64xf32, #tpu.memory_space<vmem>>) attributes {dimension_semantics = [#tpu.dimension_semantics<arbitrary>], iteration_bounds = array<i64: 1>, scalar_prefetch = 0 : i64, scratch_operands = 0 : i64, tpu.core_type = #tpu.core_type<tc>, window_params = [{pipeline_mode = #tpu.pipeline_mode<synchronous>, transform_indices = @transform_0, window_bounds = array<i64: 248, 3200>}, {pipeline_mode = #tpu.pipeline_mode<synchronous>, transform_indices = @transform_1, window_bounds = array<i64: 3200, 64>}, {pipeline_mode = #tpu.pipeline_mode<synchronous>, transform_indices = @transform_2, window_bounds = array<i64: 1, 64>}, {pipeline_mode = #tpu.pipeline_mode<synchronous>, transform_indices = @transform_3, window_bounds = array<i64: 64, 64>}, {pipeline_mode = #tpu.pipeline_mode<synchronous>, transform_indices = @transform_4, window_bounds = array<i64: 248, 64>}]} {
    %c0 = arith.constant 0 : index
    %c0_0 = arith.constant 0 : index
    %0 = vector.load %arg1[%c0, %c0_0] : memref<248x3200xbf16, #tpu.memory_space<vmem>>, vector<248x3200xbf16>
    %c0_1 = arith.constant 0 : index
    %c0_2 = arith.constant 0 : index
    %1 = vector.load %arg2[%c0_1, %c0_2] : memref<3200x64xbf16, #tpu.memory_space<vmem>>, vector<3200x64xbf16>
    %cst = arith.constant dense<0.000000e+00> : vector<248x64xf32>
    %2 = tpu.matmul %0, %1, %cst {dimension_numbers = #tpu.dot_dimension_numbers<[1], [0], [0], [1], [0, 0, 1, 1], [], []>} : vector<248x3200xbf16>, vector<3200x64xbf16>, vector<248x64xf32> -> vector<248x64xf32>
    %c0_3 = arith.constant 0 : index
    %c0_4 = arith.constant 0 : index
    %3 = vector.load %arg3[%c0_3, %c0_4] : memref<1x64xf32, #tpu.memory_space<vmem>>, vector<1x64xf32>
    %4 = vector.broadcast %3 : vector<1x64xf32> to vector<248x64xf32>
    %5 = arith.addf %2, %4 : vector<248x64xf32>
    %cst_5 = arith.constant 0.000000e+00 : f32
    %6 = vector.broadcast %cst_5 : f32 to vector<248x64xf32>
    %7 = arith.maximumf %5, %6 : vector<248x64xf32>
    %8 = arith.truncf %7 : vector<248x64xf32> to vector<248x64xbf16>
    %c0_6 = arith.constant 0 : index
    %c0_7 = arith.constant 0 : index
    %9 = vector.load %arg4[%c0_6, %c0_7] : memref<64x64xbf16, #tpu.memory_space<vmem>>, vector<64x64xbf16>
    %cst_8 = arith.constant dense<0.000000e+00> : vector<248x64xf32>
    %10 = tpu.matmul %8, %9, %cst_8 {dimension_numbers = #tpu.dot_dimension_numbers<[1], [0], [0], [1], [0, 0, 1, 1], [], []>} : vector<248x64xbf16>, vector<64x64xbf16>, vector<248x64xf32> -> vector<248x64xf32>
    %c0_9 = arith.constant 0 : index
    %c0_10 = arith.constant 0 : index
    %11 = vector.load %arg5[%c0_9, %c0_10] : memref<248x64xf32, #tpu.memory_space<vmem>>, vector<248x64xf32>
    tpu.vector_store %arg5[%c0_9, %c0_10], %10 {strides = array<i32>} : memref<248x64xf32, #tpu.memory_space<vmem>>, vector<248x64xf32>,
    return
  }
  func.func @transform_0(%arg0: i32) -> (i32, i32) {
    %c0_i32 = arith.constant 0 : i32
    %c0_i32_0 = arith.constant 0 : i32
    %c0_i32_1 = arith.constant 0 : i32
    return %c0_i32, %c0_i32_0 : i32, i32
  }
  func.func @transform_1(%arg0: i32) -> (i32, i32) {
    %c0_i32 = arith.constant 0 : i32
    %c0_i32_0 = arith.constant 0 : i32
    %c0_i32_1 = arith.constant 0 : i32
    return %c0_i32, %c0_i32_0 : i32, i32
  }
  func.func @transform_2(%arg0: i32) -> (i32, i32) {
    %c0_i32 = arith.constant 0 : i32
    %c0_i32_0 = arith.constant 0 : i32
    %c0_i32_1 = arith.constant 0 : i32
    return %c0_i32, %c0_i32_0 : i32, i32
  }
  func.func @transform_3(%arg0: i32) -> (i32, i32) {
    %c0_i32 = arith.constant 0 : i32
    %c0_i32_0 = arith.constant 0 : i32
    %c0_i32_1 = arith.constant 0 : i32
    return %c0_i32, %c0_i32_0 : i32, i32
  }
  func.func @transform_4(%arg0: i32) -> (i32, i32) {
    %c0_i32 = arith.constant 0 : i32
    %c0_i32_0 = arith.constant 0 : i32
    %c0_i32_1 = arith.constant 0 : i32
    return %c0_i32, %c0_i32_0 : i32, i32
  }
}

</mosaic_0001>

<llo_original>
// kernel: generator_forward.2
$region0: #{generator_forward.2}
  #allocation0 [shape = 'u32[]', space=smem, size = 0x4, offset = 0x4, fixed_abs, tag = 'smem constant byte address 0x4 - core index']
  #allocation1 [shape = 'u32[144,128]{1,0:T(1,128)}', space=vmem, size = 0x12000, scoped, tag = 'internal scratch']
  %s0 = inlined_call_operand.vmem [shape: bf16[128,6400], index: 0, kind: input, shape index: {}]
  %s1 = inlined_call_operand.vmem [shape: bf16[6400,128], index: 1, kind: input, shape index: {}]
  %s2 = inlined_call_operand.vmem [shape: f32[1,128], index: 2, kind: input, shape index: {}]
  %s3 = inlined_call_operand.vmem [shape: f32[128,128], index: 3, kind: output, shape index: {}]
  %s4 = sld [smem:[#allocation0]]
  $region22: #{generator_forward.2} parent=0
    _
  %s6 = ssub.s32 1, %s4
  %s7 = scalar_select 0, %s6, %s4
  // Predicated region
  $region2: #{generator_forward.2} parent=0 // pred_check
    _
  $region3: #{generator_forward.2} parent=0 // pred_check_branch
    %9 = sbr.rel (0) target = $region5
  $region4: #{generator_forward.2} parent=0 // pred_region
    _
  $region5: #{generator_forward.2} parent=0 // pred_fallthru
    _
  // Predicated region
  $region6: #{generator_forward.2} parent=0 // pred_check
    _
  $region7: #{generator_forward.2} parent=0 // pred_check_branch
    %11 = sbr.rel (0) target = $region9
  $region8: #{generator_forward.2} parent=0 // pred_region
    _
  $region9: #{generator_forward.2} parent=0 // pred_fallthru
    _
  // Predicated region
  $region10: #{generator_forward.2} parent=0 // pred_check
    _
  $region11: #{generator_forward.2} parent=0 // pred_check_branch
    %13 = sbr.rel (0) target = $region13
  $region12: #{generator_forward.2} parent=0 // pred_region
    _
  $region13: #{generator_forward.2} parent=0 // pred_fallthru
    _
  %v15 = vld [vmem:[%s0] sm:$0xff]
  %v16 = vld [vmem:[%s0 + $0x8] sm:$0xff]
  %v17 = vld [vmem:[%s0 + $0x10] sm:$0xff]
  %v18 = vld [vmem:[%s0 + $0x18] sm:$0xff]
  %v19 = vld [vmem:[%s0 + $0x20] sm:$0xff]
  %v20 = vld [vmem:[%s0 + $0x28] sm:$0xff]
  %v21 = vld [vmem:[%s0 + $0x30] sm:$0xff]
  %v22 = vld [vmem:[%s0 + $0x38] sm:$0xff]
  %v23 = vld [vmem:[%s0 + $0x40] sm:$0xff]
  %v24 = vld [vmem:[%s0 + $0x48] sm:$0xff]
  %v25 = vld [vmem:[%s0 + $0x50] sm:$0xff]
  %v26 = vld [vmem:[%s0 + $0x58] sm:$0xff]
  %v27 = vld [vmem:[%s0 + $0x60] sm:$0xff]
  %v28 = vld [vmem:[%s0 + $0x68] sm:$0xff]
  %v29 = vld [vmem:[%s0 + $0x70] sm:$0xff]
  %v30 = vld [vmem:[%s0 + $0x78] sm:$0xff]
  %v31 = vld [vmem:[%s0 + $0x80] sm:$0xff]
  %v32 = vld [vmem:[%s0 + $0x88] sm:$0xff]
  %v33 = vld [vmem:[%s0 + $0x90] sm:$0xff]
  %v34 = vld [vmem:[%s0 + $0x98] sm:$0xff]
  %v35 = vld [vmem:[%s0 + $0xa0] sm:$0xff]
  %v36 = vld [vmem:[%s0 + $0xa8] sm:$0xff]
  %v37 = vld [vmem:[%s0 + $0xb0] sm:$0xff]
  %v38 = vld [vmem:[%s0 + $0xb8] sm:$0xff]
  %v39 = vld [vmem:[%s0 + $0xc0] sm:$0xff]
  %v40 = vld [vmem:[%s0 + $0xc8] sm:$0xff]
  %v41 = vld [vmem:[%s0 + $0xd0] sm:$0xff]
  %v42 = vld [vmem:[%s0 + $0xd8] sm:$0xff]
  %v43 = vld [vmem:[%s0 + $0xe0] sm:$0xff]
  %v44 = vld [vmem:[%s0 + $0xe8] sm:$0xff]
  %v45 = vld [vmem:[%s0 + $0xf0] sm:$0xff]
  %v46 = vld [vmem:[%s0 + $0xf8] sm:$0xff]
  %v47 = vld [vmem:[%s0 + $0x100] sm:$0xff]
  %v48 = vld [vmem:[%s0 + $0x108] sm:$0xff]
  %v49 = vld [vmem:[%s0 + $0x110] sm:$0xff]
  %v50 = vld [vmem:[%s0 + $0x118] sm:$0xff]
  %v51 = vld [vmem:[%s0 + $0x120] sm:$0xff]
  %v52 = vld [vmem:[%s0 + $0x128] sm:$0xff]
  %v53 = vld [vmem:[%s0 + $0x130] sm:$0xff]
  %v54 = vld [vmem:[%s0 + $0x138] sm:$0xff]
  %v55 = vld [vmem:[%s0 + $0x140] sm:$0xff]
  %v56 = vld [vmem:[%s0 + $0x148] sm:$0xff]
  %v57 = vld [vmem:[%s0 + $0x150] sm:$0xff]
  %v58 = vld [vmem:[%s0 + $0x158] sm:$0xff]
  %v59 = vld [vmem:[%s0 + $0x160] sm:$0xff]
  %v60 = vld [vmem:[%s0 + $0x168] sm:$0xff]
  %v61 = vld [vmem:[%s0 + $0x170] sm:$0xff]
  %v62 = vld [vmem:[%s0 + $0x178] sm:$0xff]
  %v63 = vld [vmem:[%s0 + $0x180] sm:$0xff]
  %v64 = vld [vmem:[%s0 + $0x188] sm:$0xff]
  %v65 = vld [vmem:[%s0 + $0x190] sm:$0xff]
  %v66 = vld [vmem:[%s0 + $0x198] sm:$0xff]
  %v67 = vld [vmem:[%s0 + $0x1a0] sm:$0xff]
  %v68 = vld [vmem:[%s0 + $0x1a8] sm:$0xff]
  %v69 = vld [vmem:[%s0 + $0x1b0] sm:$0xff]
  %v70 = vld [vmem:[%s0 + $0x1b8] sm:$0xff]
  %v71 = vld [vmem:[%s0 + $0x1c0] sm:$0xff]
  %v72 = vld [vmem:[%s0 + $0x1c8] sm:$0xff]
  %v73 = vld [vmem:[%s0 + $0x1d0] sm:$0xff]
  %v74 = vld [vmem:[%s0 + $0x1d8] sm:$0xff]
  %v75 = vld [vmem:[%s0 + $0x1e0] sm:$0xff]
  %v76 = vld [vmem:[%s0 + $0x1e8] sm:$0xff]
  %v77 = vld [vmem:[%s0 + $0x1f0] sm:$0xff]
  %v78 = vld [vmem:[%s0 + $0x1f8] sm:$0xff]
  %v79 = vld [vmem:[%s0 + $0x200] sm:$0xff]
  %v80 = vld [vmem:[%s0 + $0x208] sm:$0xff]
  %v81 = vld [vmem:[%s0 + $0x210] sm:$0xff]
  %v82 = vld [vmem:[%s0 + $0x218] sm:$0xff]
  %v83 = vld [vmem:[%s0 + $0x220] sm:$0xff]
  %v84 = vld [vmem:[%s0 + $0x228] sm:$0xff]
  %v85 = vld [vmem:[%s0 + $0x230] sm:$0xff]
  %v86 = vld [vmem:[%s0 + $0x238] sm:$0xff]
  %v87 = vld [vmem:[%s0 + $0x240] sm:$0xff]
  %v88 = vld [vmem:[%s0 + $0x248] sm:$0xff]
  %v89 = vld [vmem:[%s0 + $0x250] sm:$0xff]
  %v90 = vld [vmem:[%s0 + $0x258] sm:$0xff]
  %v91 = vld [vmem:[%s0 + $0x260] sm:$0xff]
  %v92 = vld [vmem:[%s0 + $0x268] sm:$0xff]
  %v93 = vld [vmem:[%s0 + $0x270] sm:$0xff]
  %v94 = vld [vmem:[%s0 + $0x278] sm:$0xff]
  %v95 = vld [vmem:[%s0 + $0x280] sm:$0xff]
  %v96 = vld [vmem:[%s0 + $0x288] sm:$0xff]
  %v97 = vld [vmem:[%s0 + $0x290] sm:$0xff]
  %v98 = vld [vmem:[%s0 + $0x298] sm:$0xff]
  %v99 = vld [vmem:[%s0 + $0x2a0] sm:$0xff]
  %v100 = vld [vmem:[%s0 + $0x2a8] sm:$0xff]
  %v101 = vld [vmem:[%s0 + $0x2b0] sm:$0xff]
  %v102 = vld [vmem:[%s0 + $0x2b8] sm:$0xff]
  %v103 = vld [vmem:[%s0 + $0x2c0] sm:$0xff]
  %v104 = vld [vmem:[%s0 + $0x2c8] sm:$0xff]
  %v105 = vld [vmem:[%s0 + $0x2d0] sm:$0xff]
  %v106 = vld [vmem:[%s0 + $0x2d8] sm:$0xff]
  %v107 = vld [vmem:[%s0 + $0x2e0] sm:$0xff]
  %v108 = vld [vmem:[%s0 + $0x2e8] sm:$0xff]
  %v109 = vld [vmem:[%s0 + $0x2f0] sm:$0xff]
  %v110 = vld [vmem:[%s0 + $0x2f8] sm:$0xff]
  %v111 = vld [vmem:[%s0 + $0x300] sm:$0xff]
  %v112 = vld [vmem:[%s0 + $0x308] sm:$0xff]
  %v113 = vld [vmem:[%s0 + $0x310] sm:$0xff]
  %v114 = vld [vmem:[%s0 + $0x318] sm:$0xff]
  %v115 = vld [vmem:[%s0 + $0x320] sm:$0xff]
  %v116 = vld [vmem:[%s0 + $0x328] sm:$0xff]
  %v117 = vld [vmem:[%s0 + $0x330] sm:$0xff]
  %v118 = vld [vmem:[%s0 + $0x338] sm:$0xff]
  %v119 = vld [vmem:[%s0 + $0x340] sm:$0xff]
  %v120 = vld [vmem:[%s0 + $0x348] sm:$0xff]
  %v121 = vld [vmem:[%s0 + $0x350] sm:$0xff]
  %v122 = vld [vmem:[%s0 + $0x358] sm:$0xff]
  %v123 = vld [vmem:[%s0 + $0x360] sm:$0xff]
  %v124 = vld [vmem:[%s0 + $0x368] sm:$0xff]
  %v125 = vld [vmem:[%s0 + $0x370] sm:$0xff]
  %v126 = vld [vmem:[%s0 + $0x378] sm:$0xff]
  %v127 = vld [vmem:[%s0 + $0x380] sm:$0xff]
  %v128 = vld [vmem:[%s0 + $0x388] sm:$0xff]
  %v129 = vld [vmem:[%s0 + $0x390] sm:$0xff]
  %v130 = vld [vmem:[%s0 + $0x398] sm:$0xff]
  %v131 = vld [vmem:[%s0 + $0x3a0] sm:$0xff]
  %v132 = vld [vmem:[%s0 + $0x3a8] sm:$0xff]
  %v133 = vld [vmem:[%s0 + $0x3b0] sm:$0xff]
  %v134 = vld [vmem:[%s0 + $0x3b8] sm:$0xff]
  %v135 = vld [vmem:[%s0 + $0x3c0] sm:$0xff]
  %v136 = vld [vmem:[%s0 + $0x3c8] sm:$0xff]
  %v137 = vld [vmem:[%s0 + $0x3d0] sm:$0xff]
  %v138 = vld [vmem:[%s0 + $0x3d8] sm:$0xff]
  %v139 = vld [vmem:[%s0 + $0x3e0] sm:$0xff]
  %v140 = vld [vmem:[%s0 + $0x3e8] sm:$0xff]
  %v141 = vld [vmem:[%s0 + $0x3f0] sm:$0xff]
  %v142 = vld [vmem:[%s0 + $0x3f8] sm:$0xff]
  %v143 = vld [vmem:[%s0 + $0x400] sm:$0xff]
  %v144 = vld [vmem:[%s0 + $0x408] sm:$0xff]
  %v145 = vld [vmem:[%s0 + $0x410] sm:$0xff]
  %v146 = vld [vmem:[%s0 + $0x418] sm:$0xff]
  %v147 = vld [vmem:[%s0 + $0x420] sm:$0xff]
  %v148 = vld [vmem:[%s0 + $0x428] sm:$0xff]
  %v149 = vld [vmem:[%s0 + $0x430] sm:$0xff]
  %v150 = vld [vmem:[%s0 + $0x438] sm:$0xff]
  %v151 = vld [vmem:[%s0 + $0x440] sm:$0xff]
  %v152 = vld [vmem:[%s0 + $0x448] sm:$0xff]
  %v153 = vld [vmem:[%s0 + $0x450] sm:$0xff]
  %v154 = vld [vmem:[%s0 + $0x458] sm:$0xff]
  %v155 = vld [vmem:[%s0 + $0x460] sm:$0xff]
  %v156 = vld [vmem:[%s0 + $0x468] sm:$0xff]
  %v157 = vld [vmem:[%s0 + $0x470] sm:$0xff]
  %v158 = vld [vmem:[%s0 + $0x478] sm:$0xff]
  %v159 = vld [vmem:[%s0 + $0x480] sm:$0xff]
  %v160 = vld [vmem:[%s0 + $0x488] sm:$0xff]
  %v161 = vld [vmem:[%s0 + $0x490] sm:$0xff]
  %v162 = vld [vmem:[%s0 + $0x498] sm:$0xff]
  %v163 = vld [vmem:[%s0 + $0x4a0] sm:$0xff]
  %v164 = vld [vmem:[%s0 + $0x4a8] sm:$0xff]
  %v165 = vld [vmem:[%s0 + $0x4b0] sm:$0xff]
  %v166 = vld [vmem:[%s0 + $0x4b8] sm:$0xff]
  %v167 = vld [vmem:[%s0 + $0x4c0] sm:$0xff]
  %v168 = vld [vmem:[%s0 + $0x4c8] sm:$0xff]
  %v169 = vld [vmem:[%s0 + $0x4d0] sm:$0xff]
  %v170 = vld [vmem:[%s0 + $0x4d8] sm:$0xff]
  %v171 = vld [vmem:[%s0 + $0x4e0] sm:$0xff]
  %v172 = vld [vmem:[%s0 + $0x4e8] sm:$0xff]
  %v173 = vld [vmem:[%s0 + $0x4f0] sm:$0xff]
  %v174 = vld [vmem:[%s0 + $0x4f8] sm:$0xff]
  %v175 = vld [vmem:[%s0 + $0x500] sm:$0xff]
  %v176 = vld [vmem:[%s0 + $0x508] sm:$0xff]
  %v177 = vld [vmem:[%s0 + $0x510] sm:$0xff]
  %v178 = vld [vmem:[%s0 + $0x518] sm:$0xff]
  %v179 = vld [vmem:[%s0 + $0x520] sm:$0xff]
  %v180 = vld [vmem:[%s0 + $0x528] sm:$0xff]
  %v181 = vld [vmem:[%s0 + $0x530] sm:$0xff]
  %v182 = vld [vmem:[%s0 + $0x538] sm:$0xff]
  %v183 = vld [vmem:[%s0 + $0x540] sm:$0xff]
  %v184 = vld [vmem:[%s0 + $0x548] sm:$0xff]
  %v185 = vld [vmem:[%s0 + $0x550] sm:$0xff]
  %v186 = vld [vmem:[%s0 + $0x558] sm:$0xff]
  %v187 = vld [vmem:[%s0 + $0x560] sm:$0xff]
  %v188 = vld [vmem:[%s0 + $0x568] sm:$0xff]
  %v189 = vld [vmem:[%s0 + $0x570] sm:$0xff]
  %v190 = vld [vmem:[%s0 + $0x578] sm:$0xff]
  %v191 = vld [vmem:[%s0 + $0x580] sm:$0xff]
  %v192 = vld [vmem:[%s0 + $0x588] sm:$0xff]
  %v193 = vld [vmem:[%s0 + $0x590] sm:$0xff]
  %v194 = vld [vmem:[%s0 + $0x598] sm:$0xff]
  %v195 = vld [vmem:[%s0 + $0x5a0] sm:$0xff]
  %v196 = vld [vmem:[%s0 + $0x5a8] sm:$0xff]
  %v197 = vld [vmem:[%s0 + $0x5b0] sm:$0xff]
  %v198 = vld [vmem:[%s0 + $0x5b8] sm:$0xff]
  %v199 = vld [vmem:[%s0 + $0x5c0] sm:$0xff]
  %v200 = vld [vmem:[%s0 + $0x5c8] sm:$0xff]
  %v201 = vld [vmem:[%s0 + $0x5d0] sm:$0xff]
  %v202 = vld [vmem:[%s0 + $0x5d8] sm:$0xff]
  %v203 = vld [vmem:[%s0 + $0x5e0] sm:$0xff]
  %v204 = vld [vmem:[%s0 + $0x5e8] sm:$0xff]
  %v205 = vld [vmem:[%s0 + $0x5f0] sm:$0xff]
  %v206 = vld [vmem:[%s0 + $0x5f8] sm:$0xff]
  %v207 = vld [vmem:[%s0 + $0x600] sm:$0xff]
  %v208 = vld [vmem:[%s0 + $0x608] sm:$0xff]
  %v209 = vld [vmem:[%s0 + $0x610] sm:$0xff]
  %v210 = vld [vmem:[%s0 + $0x618] sm:$0xff]
  %v211 = vld [vmem:[%s0 + $0x620] sm:$0xff]
  %v212 = vld [vmem:[%s0 + $0x628] sm:$0xff]
  %v213 = vld [vmem:[%s0 + $0x630] sm:$0xff]
  %v214 = vld [vmem:[%s0 + $0x638] sm:$0xff]
  %v215 = vld [vmem:[%s0 + $0x640] sm:$0xff]
  %v216 = vld [vmem:[%s0 + $0x648] sm:$0xff]
  %v217 = vld [vmem:[%s0 + $0x650] sm:$0xff]
  %v218 = vld [vmem:[%s0 + $0x658] sm:$0xff]
  %v219 = vld [vmem:[%s0 + $0x660] sm:$0xff]
  %v220 = vld [vmem:[%s0 + $0x668] sm:$0xff]
  %v221 = vld [vmem:[%s0 + $0x670] sm:$0xff]
  %v222 = vld [vmem:[%s0 + $0x678] sm:$0xff]
  %v223 = vld [vmem:[%s0 + $0x680] sm:$0xff]
  %v224 = vld [vmem:[%s0 + $0x688] sm:$0xff]
  %v225 = vld [vmem:[%s0 + $0x690] sm:$0xff]
  %v226 = vld [vmem:[%s0 + $0x698] sm:$0xff]
  %v227 = vld [vmem:[%s0 + $0x6a0] sm:$0xff]
  %v228 = vld [vmem:[%s0 + $0x6a8] sm:$0xff]
  %v229 = vld [vmem:[%s0 + $0x6b0] sm:$0xff]
  %v230 = vld [vmem:[%s0 + $0x6b8] sm:$0xff]
  %v231 = vld [vmem:[%s0 + $0x6c0] sm:$0xff]
  %v232 = vld [vmem:[%s0 + $0x6c8] sm:$0xff]
  %v233 = vld [vmem:[%s0 + $0x6d0] sm:$0xff]
  %v234 = vld [vmem:[%s0 + $0x6d8] sm:$0xff]
  %v235 = vld [vmem:[%s0 + $0x6e0] sm:$0xff]
  %v236 = vld [vmem:[%s0 + $0x6e8] sm:$0xff]
  %v237 = vld [vmem:[%s0 + $0x6f0] sm:$0xff]
  %v238 = vld [vmem:[%s0 + $0x6f8] sm:$0xff]
  %v239 = vld [vmem:[%s0 + $0x700] sm:$0xff]
  %v240 = vld [vmem:[%s0 + $0x708] sm:$0xff]
  %v241 = vld [vmem:[%s0 + $0x710] sm:$0xff]
  %v242 = vld [vmem:[%s0 + $0x718] sm:$0xff]
  %v243 = vld [vmem:[%s0 + $0x720] sm:$0xff]
  %v244 = vld [vmem:[%s0 + $0x728] sm:$0xff]
  %v245 = vld [vmem:[%s0 + $0x730] sm:$0xff]
  %v246 = vld [vmem:[%s0 + $0x738] sm:$0xff]
  %v247 = vld [vmem:[%s0 + $0x740] sm:$0xff]
  %v248 = vld [vmem:[%s0 + $0x748] sm:$0xff]
  %v249 = vld [vmem:[%s0 + $0x750] sm:$0xff]
  %v250 = vld [vmem:[%s0 + $0x758] sm:$0xff]
  %v251 = vld [vmem:[%s0 + $0x760] sm:$0xff]
  %v252 = vld [vmem:[%s0 + $0x768] sm:$0xff]
  %v253 = vld [vmem:[%s0 + $0x770] sm:$0xff]
  %v254 = vld [vmem:[%s0 + $0x778] sm:$0xff]
  %v255 = vld [vmem:[%s0 + $0x780] sm:$0xff]
  %v256 = vld [vmem:[%s0 + $0x788] sm:$0xff]
  %v257 = vld [vmem:[%s0 + $0x790] sm:$0xff]
  %v258 = vld [vmem:[%s0 + $0x798] sm:$0xff]
  %v259 = vld [vmem:[%s0 + $0x7a0] sm:$0xff]
  %v260 = vld [vmem:[%s0 + $0x7a8] sm:$0xff]
  %v261 = vld [vmem:[%s0 + $0x7b0] sm:$0xff]
  %v262 = vld [vmem:[%s0 + $0x7b8] sm:$0xff]
  %v263 = vld [vmem:[%s0 + $0x7c0] sm:$0xff]
  %v264 = vld [vmem:[%s0 + $0x7c8] sm:$0xff]
  %v265 = vld [vmem:[%s0 + $0x7d0] sm:$0xff]
  %v266 = vld [vmem:[%s0 + $0x7d8] sm:$0xff]
  %v267 = vld [vmem:[%s0 + $0x7e0] sm:$0xff]
  %v268 = vld [vmem:[%s0 + $0x7e8] sm:$0xff]
  %v269 = vld [vmem:[%s0 + $0x7f0] sm:$0xff]
  %v270 = vld [vmem:[%s0 + $0x7f8] sm:$0xff]
  %v271 = vld [vmem:[%s0 + $0x800] sm:$0xff]
  %v272 = vld [vmem:[%s0 + $0x808] sm:$0xff]
  %v273 = vld [vmem:[%s0 + $0x810] sm:$0xff]
  %v274 = vld [vmem:[%s0 + $0x818] sm:$0xff]
  %v275 = vld [vmem:[%s0 + $0x820] sm:$0xff]
  %v276 = vld [vmem:[%s0 + $0x828] sm:$0xff]
  %v277 = vld [vmem:[%s0 + $0x830] sm:$0xff]
  %v278 = vld [vmem:[%s0 + $0x838] sm:$0xff]
  %v279 = vld [vmem:[%s0 + $0x840] sm:$0xff]
  %v280 = vld [vmem:[%s0 + $0x848] sm:$0xff]
  %v281 = vld [vmem:[%s0 + $0x850] sm:$0xff]
  %v282 = vld [vmem:[%s0 + $0x858] sm:$0xff]
  %v283 = vld [vmem:[%s0 + $0x860] sm:$0xff]
  %v284 = vld [vmem:[%s0 + $0x868] sm:$0xff]
  %v285 = vld [vmem:[%s0 + $0x870] sm:$0xff]
  %v286 = vld [vmem:[%s0 + $0x878] sm:$0xff]
  %v287 = vld [vmem:[%s0 + $0x880] sm:$0xff]
  %v288 = vld [vmem:[%s0 + $0x888] sm:$0xff]
  %v289 = vld [vmem:[%s0 + $0x890] sm:$0xff]
  %v290 = vld [vmem:[%s0 + $0x898] sm:$0xff]
  %v291 = vld [vmem:[%s0 + $0x8a0] sm:$0xff]
  %v292 = vld [vmem:[%s0 + $0x8a8] sm:$0xff]
  %v293 = vld [vmem:[%s0 + $0x8b0] sm:$0xff]
  %v294 = vld [vmem:[%s0 + $0x8b8] sm:$0xff]
  %v295 = vld [vmem:[%s0 + $0x8c0] sm:$0xff]
  %v296 = vld [vmem:[%s0 + $0x8c8] sm:$0xff]
  %v297 = vld [vmem:[%s0 + $0x8d0] sm:$0xff]
  %v298 = vld [vmem:[%s0 + $0x8d8] sm:$0xff]
  %v299 = vld [vmem:[%s0 + $0x8e0] sm:$0xff]
  %v300 = vld [vmem:[%s0 + $0x8e8] sm:$0xff]
  %v301 = vld [vmem:[%s0 + $0x8f0] sm:$0xff]
  %v302 = vld [vmem:[%s0 + $0x8f8] sm:$0xff]
  %v303 = vld [vmem:[%s0 + $0x900] sm:$0xff]
  %v304 = vld [vmem:[%s0 + $0x908] sm:$0xff]
  %v305 = vld [vmem:[%s0 + $0x910] sm:$0xff]
  %v306 = vld [vmem:[%s0 + $0x918] sm:$0xff]
  %v307 = vld [vmem:[%s0 + $0x920] sm:$0xff]
  %v308 = vld [vmem:[%s0 + $0x928] sm:$0xff]
  %v309 = vld [vmem:[%s0 + $0x930] sm:$0xff]
  %v310 = vld [vmem:[%s0 + $0x938] sm:$0xff]
  %v311 = vld [vmem:[%s0 + $0x940] sm:$0xff]
  %v312 = vld [vmem:[%s0 + $0x948] sm:$0xff]
  %v313 = vld [vmem:[%s0 + $0x950] sm:$0xff]
  %v314 = vld [vmem:[%s0 + $0x958] sm:$0xff]
  %v315 = vld [vmem:[%s0 + $0x960] sm:$0xff]
  %v316 = vld [vmem:[%s0 + $0x968] sm:$0xff]
  %v317 = vld [vmem:[%s0 + $0x970] sm:$0xff]
  %v318 = vld [vmem:[%s0 + $0x978] sm:$0xff]
  %v319 = vld [vmem:[%s0 + $0x980] sm:$0xff]
  %v320 = vld [vmem:[%s0 + $0x988] sm:$0xff]
  %v321 = vld [vmem:[%s0 + $0x990] sm:$0xff]
  %v322 = vld [vmem:[%s0 + $0x998] sm:$0xff]
  %v323 = vld [vmem:[%s0 + $0x9a0] sm:$0xff]
  %v324 = vld [vmem:[%s0 + $0x9a8] sm:$0xff]
  %v325 = vld [vmem:[%s0 + $0x9b0] sm:$0xff]
  %v326 = vld [vmem:[%s0 + $0x9b8] sm:$0xff]
  %v327 = vld [vmem:[%s0 + $0x9c0] sm:$0xff]
  %v328 = vld [vmem:[%s0 + $0x9c8] sm:$0xff]
  %v329 = vld [vmem:[%s0 + $0x9d0] sm:$0xff]
  %v330 = vld [vmem:[%s0 + $0x9d8] sm:$0xff]
  %v331 = vld [vmem:[%s0 + $0x9e0] sm:$0xff]
  %v332 = vld [vmem:[%s0 + $0x9e8] sm:$0xff]
  %v333 = vld [vmem:[%s0 + $0x9f0] sm:$0xff]
  %v334 = vld [vmem:[%s0 + $0x9f8] sm:$0xff]
  %v335 = vld [vmem:[%s0 + $0xa00] sm:$0xff]
  %v336 = vld [vmem:[%s0 + $0xa08] sm:$0xff]
  %v337 = vld [vmem:[%s0 + $0xa10] sm:$0xff]
  %v338 = vld [vmem:[%s0 + $0xa18] sm:$0xff]
  %v339 = vld [vmem:[%s0 + $0xa20] sm:$0xff]
  %v340 = vld [vmem:[%s0 + $0xa28] sm:$0xff]
  %v341 = vld [vmem:[%s0 + $0xa30] sm:$0xff]
  %v342 = vld [vmem:[%s0 + $0xa38] sm:$0xff]
  %v343 = vld [vmem:[%s0 + $0xa40] sm:$0xff]
  %v344 = vld [vmem:[%s0 + $0xa48] sm:$0xff]
  %v345 = vld [vmem:[%s0 + $0xa50] sm:$0xff]
  %v346 = vld [vmem:[%s0 + $0xa58] sm:$0xff]
  %v347 = vld [vmem:[%s0 + $0xa60] sm:$0xff]
  %v348 = vld [vmem:[%s0 + $0xa68] sm:$0xff]
  %v349 = vld [vmem:[%s0 + $0xa70] sm:$0xff]
  %v350 = vld [vmem:[%s0 + $0xa78] sm:$0xff]
  %v351 = vld [vmem:[%s0 + $0xa80] sm:$0xff]
  %v352 = vld [vmem:[%s0 + $0xa88] sm:$0xff]
  %v353 = vld [vmem:[%s0 + $0xa90] sm:$0xff]
  %v354 = vld [vmem:[%s0 + $0xa98] sm:$0xff]
  %v355 = vld [vmem:[%s0 + $0xaa0] sm:$0xff]
  %v356 = vld [vmem:[%s0 + $0xaa8] sm:$0xff]
  %v357 = vld [vmem:[%s0 + $0xab0] sm:$0xff]
  %v358 = vld [vmem:[%s0 + $0xab8] sm:$0xff]
  %v359 = vld [vmem:[%s0 + $0xac0] sm:$0xff]
  %v360 = vld [vmem:[%s0 + $0xac8] sm:$0xff]
  %v361 = vld [vmem:[%s0 + $0xad0] sm:$0xff]
  %v362 = vld [vmem:[%s0 + $0xad8] sm:$0xff]
  %v363 = vld [vmem:[%s0 + $0xae0] sm:$0xff]
  %v364 = vld [vmem:[%s0 + $0xae8] sm:$0xff]
  %v365 = vld [vmem:[%s0 + $0xaf0] sm:$0xff]
  %v366 = vld [vmem:[%s0 + $0xaf8] sm:$0xff]
  %v367 = vld [vmem:[%s0 + $0xb00] sm:$0xff]
  %v368 = vld [vmem:[%s0 + $0xb08] sm:$0xff]
  %v369 = vld [vmem:[%s0 + $0xb10] sm:$0xff]
  %v370 = vld [vmem:[%s0 + $0xb18] sm:$0xff]
  %v371 = vld [vmem:[%s0 + $0xb20] sm:$0xff]
  %v372 = vld [vmem:[%s0 + $0xb28] sm:$0xff]
  %v373 = vld [vmem:[%s0 + $0xb30] sm:$0xff]
  %v374 = vld [vmem:[%s0 + $0xb38] sm:$0xff]
  %v375 = vld [vmem:[%s0 + $0xb40] sm:$0xff]
  %v376 = vld [vmem:[%s0 + $0xb48] sm:$0xff]
  %v377 = vld [vmem:[%s0 + $0xb50] sm:$0xff]
  %v378 = vld [vmem:[%s0 + $0xb58] sm:$0xff]
  %v379 = vld [vmem:[%s0 + $0xb60] sm:$0xff]
  %v380 = vld [vmem:[%s0 + $0xb68] sm:$0xff]
  %v381 = vld [vmem:[%s0 + $0xb70] sm:$0xff]
  %v382 = vld [vmem:[%s0 + $0xb78] sm:$0xff]
  %v383 = vld [vmem:[%s0 + $0xb80] sm:$0xff]
  %v384 = vld [vmem:[%s0 + $0xb88] sm:$0xff]
  %v385 = vld [vmem:[%s0 + $0xb90] sm:$0xff]
  %v386 = vld [vmem:[%s0 + $0xb98] sm:$0xff]
  %v387 = vld [vmem:[%s0 + $0xba0] sm:$0xff]
  %v388 = vld [vmem:[%s0 + $0xba8] sm:$0xff]
  %v389 = vld [vmem:[%s0 + $0xbb0] sm:$0xff]
  %v390 = vld [vmem:[%s0 + $0xbb8] sm:$0xff]
  %v391 = vld [vmem:[%s0 + $0xbc0] sm:$0xff]
  %v392 = vld [vmem:[%s0 + $0xbc8] sm:$0xff]
  %v393 = vld [vmem:[%s0 + $0xbd0] sm:$0xff]
  %v394 = vld [vmem:[%s0 + $0xbd8] sm:$0xff]
  %v395 = vld [vmem:[%s0 + $0xbe0] sm:$0xff]
  %v396 = vld [vmem:[%s0 + $0xbe8] sm:$0xff]
  %v397 = vld [vmem:[%s0 + $0xbf0] sm:$0xff]
  %v398 = vld [vmem:[%s0 + $0xbf8] sm:$0xff]
  %v399 = vld [vmem:[%s0 + $0xc00] sm:$0xff]
  %v400 = vld [vmem:[%s0 + $0xc08] sm:$0xff]
  %v401 = vld [vmem:[%s0 + $0xc10] sm:$0xff]
  %v402 = vld [vmem:[%s0 + $0xc18] sm:$0xff]
  %v403 = vld [vmem:[%s0 + $0xc20] sm:$0xff]
  %v404 = vld [vmem:[%s0 + $0xc28] sm:$0xff]
  %v405 = vld [vmem:[%s0 + $0xc30] sm:$0xff]
  %v406 = vld [vmem:[%s0 + $0xc38] sm:$0xff]
  %v407 = vld [vmem:[%s0 + $0xc40] sm:$0xff]
  %v408 = vld [vmem:[%s0 + $0xc48] sm:$0xff]
  %v409 = vld [vmem:[%s0 + $0xc50] sm:$0xff]
  %v410 = vld [vmem:[%s0 + $0xc58] sm:$0xff]
  %v411 = vld [vmem:[%s0 + $0xc60] sm:$0xff]
  %v412 = vld [vmem:[%s0 + $0xc68] sm:$0xff]
  %v413 = vld [vmem:[%s0 + $0xc70] sm:$0xff]
  %v414 = vld [vmem:[%s0 + $0xc78] sm:$0xff]
  %v415 = vld [vmem:[%s1] sm:$0xf]
  %v416 = vld [vmem:[%s1 + $0x4] sm:$0xf]
  %v417 = vld [vmem:[%s1 + $0x8] sm:$0xf]
  %v418 = vld [vmem:[%s1 + $0xc] sm:$0xf]
  %v419 = vld [vmem:[%s1 + $0x10] sm:$0xf]
  %v420 = vld [vmem:[%s1 + $0x14] sm:$0xf]
  %v421 = vld [vmem:[%s1 + $0x18] sm:$0xf]
  %v422 = vld [vmem:[%s1 + $0x1c] sm:$0xf]
  %v423 = vld [vmem:[%s1 + $0x20] sm:$0xf]
  %v424 = vld [vmem:[%s1 + $0x24] sm:$0xf]
  %v425 = vld [vmem:[%s1 + $0x28] sm:$0xf]
  %v426 = vld [vmem:[%s1 + $0x2c] sm:$0xf]
  %v427 = vld [vmem:[%s1 + $0x30] sm:$0xf]
  %v428 = vld [vmem:[%s1 + $0x34] sm:$0xf]
  %v429 = vld [vmem:[%s1 + $0x38] sm:$0xf]
  %v430 = vld [vmem:[%s1 + $0x3c] sm:$0xf]
  %v431 = vld [vmem:[%s1 + $0x40] sm:$0xf]
  %v432 = vld [vmem:[%s1 + $0x44] sm:$0xf]
  %v433 = vld [vmem:[%s1 + $0x48] sm:$0xf]
  %v434 = vld [vmem:[%s1 + $0x4c] sm:$0xf]
  %v435 = vld [vmem:[%s1 + $0x50] sm:$0xf]
  %v436 = vld [vmem:[%s1 + $0x54] sm:$0xf]
  %v437 = vld [vmem:[%s1 + $0x58] sm:$0xf]
  %v438 = vld [vmem:[%s1 + $0x5c] sm:$0xf]
  %v439 = vld [vmem:[%s1 + $0x60] sm:$0xf]
  %v440 = vld [vmem:[%s1 + $0x64] sm:$0xf]
  %v441 = vld [vmem:[%s1 + $0x68] sm:$0xf]
  %v442 = vld [vmem:[%s1 + $0x6c] sm:$0xf]
  %v443 = vld [vmem:[%s1 + $0x70] sm:$0xf]
  %v444 = vld [vmem:[%s1 + $0x74] sm:$0xf]
  %v445 = vld [vmem:[%s1 + $0x78] sm:$0xf]
  %v446 = vld [vmem:[%s1 + $0x7c] sm:$0xf]
  %v447 = vld [vmem:[%s1 + $0x80] sm:$0xf]
  %v448 = vld [vmem:[%s1 + $0x84] sm:$0xf]
  %v449 = vld [vmem:[%s1 + $0x88] sm:$0xf]
  %v450 = vld [vmem:[%s1 + $0x8c] sm:$0xf]
  %v451 = vld [vmem:[%s1 + $0x90] sm:$0xf]
  %v452 = vld [vmem:[%s1 + $0x94] sm:$0xf]
  %v453 = vld [vmem:[%s1 + $0x98] sm:$0xf]
  %v454 = vld [vmem:[%s1 + $0x9c] sm:$0xf]
  %v455 = vld [vmem:[%s1 + $0xa0] sm:$0xf]
  %v456 = vld [vmem:[%s1 + $0xa4] sm:$0xf]
  %v457 = vld [vmem:[%s1 + $0xa8] sm:$0xf]
  %v458 = vld [vmem:[%s1 + $0xac] sm:$0xf]
  %v459 = vld [vmem:[%s1 + $0xb0] sm:$0xf]
  %v460 = vld [vmem:[%s1 + $0xb4] sm:$0xf]
  %v461 = vld [vmem:[%s1 + $0xb8] sm:$0xf]
  %v462 = vld [vmem:[%s1 + $0xbc] sm:$0xf]
  %v463 = vld [vmem:[%s1 + $0xc0] sm:$0xf]
  %v464 = vld [vmem:[%s1 + $0xc4] sm:$0xf]
  %v465 = vld [vmem:[%s1 + $0xc8] sm:$0xf]
  %v466 = vld [vmem:[%s1 + $0xcc] sm:$0xf]
  %v467 = vld [vmem:[%s1 + $0xd0] sm:$0xf]
  %v468 = vld [vmem:[%s1 + $0xd4] sm:$0xf]
  %v469 = vld [vmem:[%s1 + $0xd8] sm:$0xf]
  %v470 = vld [vmem:[%s1 + $0xdc] sm:$0xf]
  %v471 = vld [vmem:[%s1 + $0xe0] sm:$0xf]
  %v472 = vld [vmem:[%s1 + $0xe4] sm:$0xf]
  %v473 = vld [vmem:[%s1 + $0xe8] sm:$0xf]
  %v474 = vld [vmem:[%s1 + $0xec] sm:$0xf]
  %v475 = vld [vmem:[%s1 + $0xf0] sm:$0xf]
  %v476 = vld [vmem:[%s1 + $0xf4] sm:$0xf]
  %v477 = vld [vmem:[%s1 + $0xf8] sm:$0xf]
  %v478 = vld [vmem:[%s1 + $0xfc] sm:$0xf]
  %v479 = vld [vmem:[%s1 + $0x100] sm:$0xf]
  %v480 = vld [vmem:[%s1 + $0x104] sm:$0xf]
  %v481 = vld [vmem:[%s1 + $0x108] sm:$0xf]
  %v482 = vld [vmem:[%s1 + $0x10c] sm:$0xf]
  %v483 = vld [vmem:[%s1 + $0x110] sm:$0xf]
  %v484 = vld [vmem:[%s1 + $0x114] sm:$0xf]
  %v485 = vld [vmem:[%s1 + $0x118] sm:$0xf]
  %v486 = vld [vmem:[%s1 + $0x11c] sm:$0xf]
  %v487 = vld [vmem:[%s1 + $0x120] sm:$0xf]
  %v488 = vld [vmem:[%s1 + $0x124] sm:$0xf]
  %v489 = vld [vmem:[%s1 + $0x128] sm:$0xf]
  %v490 = vld [vmem:[%s1 + $0x12c] sm:$0xf]
  %v491 = vld [vmem:[%s1 + $0x130] sm:$0xf]
  %v492 = vld [vmem:[%s1 + $0x134] sm:$0xf]
  %v493 = vld [vmem:[%s1 + $0x138] sm:$0xf]
  %v494 = vld [vmem:[%s1 + $0x13c] sm:$0xf]
  %v495 = vld [vmem:[%s1 + $0x140] sm:$0xf]
  %v496 = vld [vmem:[%s1 + $0x144] sm:$0xf]
  %v497 = vld [vmem:[%s1 + $0x148] sm:$0xf]
  %v498 = vld [vmem:[%s1 + $0x14c] sm:$0xf]
  %v499 = vld [vmem:[%s1 + $0x150] sm:$0xf]
  %v500 = vld [vmem:[%s1 + $0x154] sm:$0xf]
  %v501 = vld [vmem:[%s1 + $0x158] sm:$0xf]
  %v502 = vld [vmem:[%s1 + $0x15c] sm:$0xf]
  %v503 = vld [vmem:[%s1 + $0x160] sm:$0xf]
  %v504 = vld [vmem:[%s1 + $0x164] sm:$0xf]
  %v505 = vld [vmem:[%s1 + $0x168] sm:$0xf]
  %v506 = vld [vmem:[%s1 + $0x16c] sm:$0xf]
  %v507 = vld [vmem:[%s1 + $0x170] sm:$0xf]
  %v508 = vld [vmem:[%s1 + $0x174] sm:$0xf]
  %v509 = vld [vmem:[%s1 + $0x178] sm:$0xf]
  %v510 = vld [vmem:[%s1 + $0x17c] sm:$0xf]
  %v511 = vld [vmem:[%s1 + $0x180] sm:$0xf]
  %v512 = vld [vmem:[%s1 + $0x184] sm:$0xf]
  %v513 = vld [vmem:[%s1 + $0x188] sm:$0xf]
  %v514 = vld [vmem:[%s1 + $0x18c] sm:$0xf]
  %v515 = vld [vmem:[%s1 + $0x190] sm:$0xf]
  %v516 = vld [vmem:[%s1 + $0x194] sm:$0xf]
  %v517 = vld [vmem:[%s1 + $0x198] sm:$0xf]
  %v518 = vld [vmem:[%s1 + $0x19c] sm:$0xf]
  %v519 = vld [vmem:[%s1 + $0x1a0] sm:$0xf]
  %v520 = vld [vmem:[%s1 + $0x1a4] sm:$0xf]
  %v521 = vld [vmem:[%s1 + $0x1a8] sm:$0xf]
  %v522 = vld [vmem:[%s1 + $0x1ac] sm:$0xf]
  %v523 = vld [vmem:[%s1 + $0x1b0] sm:$0xf]
  %v524 = vld [vmem:[%s1 + $0x1b4] sm:$0xf]
  %v525 = vld [vmem:[%s1 + $0x1b8] sm:$0xf]
  %v526 = vld [vmem:[%s1 + $0x1bc] sm:$0xf]
  %v527 = vld [vmem:[%s1 + $0x1c0] sm:$0xf]
  %v528 = vld [vmem:[%s1 + $0x1c4] sm:$0xf]
  %v529 = vld [vmem:[%s1 + $0x1c8] sm:$0xf]
  %v530 = vld [vmem:[%s1 + $0x1cc] sm:$0xf]
  %v531 = vld [vmem:[%s1 + $0x1d0] sm:$0xf]
  %v532 = vld [vmem:[%s1 + $0x1d4] sm:$0xf]
  %v533 = vld [vmem:[%s1 + $0x1d8] sm:$0xf]
  %v534 = vld [vmem:[%s1 + $0x1dc] sm:$0xf]
  %v535 = vld [vmem:[%s1 + $0x1e0] sm:$0xf]
  %v536 = vld [vmem:[%s1 + $0x1e4] sm:$0xf]
  %v537 = vld [vmem:[%s1 + $0x1e8] sm:$0xf]
  %v538 = vld [vmem:[%s1 + $0x1ec] sm:$0xf]
  %v539 = vld [vmem:[%s1 + $0x1f0] sm:$0xf]
  %v540 = vld [vmem:[%s1 + $0x1f4] sm:$0xf]
  %v541 = vld [vmem:[%s1 + $0x1f8] sm:$0xf]
  %v542 = vld [vmem:[%s1 + $0x1fc] sm:$0xf]
  %v543 = vld [vmem:[%s1 + $0x200] sm:$0xf]
  %v544 = vld [vmem:[%s1 + $0x204] sm:$0xf]
  %v545 = vld [vmem:[%s1 + $0x208] sm:$0xf]
  %v546 = vld [vmem:[%s1 + $0x20c] sm:$0xf]
  %v547 = vld [vmem:[%s1 + $0x210] sm:$0xf]
  %v548 = vld [vmem:[%s1 + $0x214] sm:$0xf]
  %v549 = vld [vmem:[%s1 + $0x218] sm:$0xf]
  %v550 = vld [vmem:[%s1 + $0x21c] sm:$0xf]
  %v551 = vld [vmem:[%s1 + $0x220] sm:$0xf]
  %v552 = vld [vmem:[%s1 + $0x224] sm:$0xf]
  %v553 = vld [vmem:[%s1 + $0x228] sm:$0xf]
  %v554 = vld [vmem:[%s1 + $0x22c] sm:$0xf]
  %v555 = vld [vmem:[%s1 + $0x230] sm:$0xf]
  %v556 = vld [vmem:[%s1 + $0x234] sm:$0xf]
  %v557 = vld [vmem:[%s1 + $0x238] sm:$0xf]
  %v558 = vld [vmem:[%s1 + $0x23c] sm:$0xf]
  %v559 = vld [vmem:[%s1 + $0x240] sm:$0xf]
  %v560 = vld [vmem:[%s1 + $0x244] sm:$0xf]
  %v561 = vld [vmem:[%s1 + $0x248] sm:$0xf]
  %v562 = vld [vmem:[%s1 + $0x24c] sm:$0xf]
  %v563 = vld [vmem:[%s1 + $0x250] sm:$0xf]
  %v564 = vld [vmem:[%s1 + $0x254] sm:$0xf]
  %v565 = vld [vmem:[%s1 + $0x258] sm:$0xf]
  %v566 = vld [vmem:[%s1 + $0x25c] sm:$0xf]
  %v567 = vld [vmem:[%s1 + $0x260] sm:$0xf]
  %v568 = vld [vmem:[%s1 + $0x264] sm:$0xf]
  %v569 = vld [vmem:[%s1 + $0x268] sm:$0xf]
  %v570 = vld [vmem:[%s1 + $0x26c] sm:$0xf]
  %v571 = vld [vmem:[%s1 + $0x270] sm:$0xf]
  %v572 = vld [vmem:[%s1 + $0x274] sm:$0xf]
  %v573 = vld [vmem:[%s1 + $0x278] sm:$0xf]
  %v574 = vld [vmem:[%s1 + $0x27c] sm:$0xf]
  %v575 = vld [vmem:[%s1 + $0x280] sm:$0xf]
  %v576 = vld [vmem:[%s1 + $0x284] sm:$0xf]
  %v577 = vld [vmem:[%s1 + $0x288] sm:$0xf]
  %v578 = vld [vmem:[%s1 + $0x28c] sm:$0xf]
  %v579 = vld [vmem:[%s1 + $0x290] sm:$0xf]
  %v580 = vld [vmem:[%s1 + $0x294] sm:$0xf]
  %v581 = vld [vmem:[%s1 + $0x298] sm:$0xf]
  %v582 = vld [vmem:[%s1 + $0x29c] sm:$0xf]
  %v583 = vld [vmem:[%s1 + $0x2a0] sm:$0xf]
  %v584 = vld [vmem:[%s1 + $0x2a4] sm:$0xf]
  %v585 = vld [vmem:[%s1 + $0x2a8] sm:$0xf]
  %v586 = vld [vmem:[%s1 + $0x2ac] sm:$0xf]
  %v587 = vld [vmem:[%s1 + $0x2b0] sm:$0xf]
  %v588 = vld [vmem:[%s1 + $0x2b4] sm:$0xf]
  %v589 = vld [vmem:[%s1 + $0x2b8] sm:$0xf]
  %v590 = vld [vmem:[%s1 + $0x2bc] sm:$0xf]
  %v591 = vld [vmem:[%s1 + $0x2c0] sm:$0xf]
  %v592 = vld [vmem:[%s1 + $0x2c4] sm:$0xf]
  %v593 = vld [vmem:[%s1 + $0x2c8] sm:$0xf]
  %v594 = vld [vmem:[%s1 + $0x2cc] sm:$0xf]
  %v595 = vld [vmem:[%s1 + $0x2d0] sm:$0xf]
  %v596 = vld [vmem:[%s1 + $0x2d4] sm:$0xf]
  %v597 = vld [vmem:[%s1 + $0x2d8] sm:$0xf]
  %v598 = vld [vmem:[%s1 + $0x2dc] sm:$0xf]
  %v599 = vld [vmem:[%s1 + $0x2e0] sm:$0xf]
  %v600 = vld [vmem:[%s1 + $0x2e4] sm:$0xf]
  %v601 = vld [vmem:[%s1 + $0x2e8] sm:$0xf]
  %v602 = vld [vmem:[%s1 + $0x2ec] sm:$0xf]
  %v603 = vld [vmem:[%s1 + $0x2f0] sm:$0xf]
  %v604 = vld [vmem:[%s1 + $0x2f4] sm:$0xf]
  %v605 = vld [vmem:[%s1 + $0x2f8] sm:$0xf]
  %v606 = vld [vmem:[%s1 + $0x2fc] sm:$0xf]
  %v607 = vld [vmem:[%s1 + $0x300] sm:$0xf]
  %v608 = vld [vmem:[%s1 + $0x304] sm:$0xf]
  %v609 = vld [vmem:[%s1 + $0x308] sm:$0xf]
  %v610 = vld [vmem:[%s1 + $0x30c] sm:$0xf]
  %v611 = vld [vmem:[%s1 + $0x310] sm:$0xf]
  %v612 = vld [vmem:[%s1 + $0x314] sm:$0xf]
  %v613 = vld [vmem:[%s1 + $0x318] sm:$0xf]
  %v614 = vld [vmem:[%s1 + $0x31c] sm:$0xf]
  %v615 = vld [vmem:[%s1 + $0x320] sm:$0xf]
  %v616 = vld [vmem:[%s1 + $0x324] sm:$0xf]
  %v617 = vld [vmem:[%s1 + $0x328] sm:$0xf]
  %v618 = vld [vmem:[%s1 + $0x32c] sm:$0xf]
  %v619 = vld [vmem:[%s1 + $0x330] sm:$0xf]
  %v620 = vld [vmem:[%s1 + $0x334] sm:$0xf]
  %v621 = vld [vmem:[%s1 + $0x338] sm:$0xf]
  %v622 = vld [vmem:[%s1 + $0x33c] sm:$0xf]
  %v623 = vld [vmem:[%s1 + $0x340] sm:$0xf]
  %v624 = vld [vmem:[%s1 + $0x344] sm:$0xf]
  %v625 = vld [vmem:[%s1 + $0x348] sm:$0xf]
  %v626 = vld [vmem:[%s1 + $0x34c] sm:$0xf]
  %v627 = vld [vmem:[%s1 + $0x350] sm:$0xf]
  %v628 = vld [vmem:[%s1 + $0x354] sm:$0xf]
  %v629 = vld [vmem:[%s1 + $0x358] sm:$0xf]
  %v630 = vld [vmem:[%s1 + $0x35c] sm:$0xf]
  %v631 = vld [vmem:[%s1 + $0x360] sm:$0xf]
  %v632 = vld [vmem:[%s1 + $0x364] sm:$0xf]
  %v633 = vld [vmem:[%s1 + $0x368] sm:$0xf]
  %v634 = vld [vmem:[%s1 + $0x36c] sm:$0xf]
  %v635 = vld [vmem:[%s1 + $0x370] sm:$0xf]
  %v636 = vld [vmem:[%s1 + $0x374] sm:$0xf]
  %v637 = vld [vmem:[%s1 + $0x378] sm:$0xf]
  %v638 = vld [vmem:[%s1 + $0x37c] sm:$0xf]
  %v639 = vld [vmem:[%s1 + $0x380] sm:$0xf]
  %v640 = vld [vmem:[%s1 + $0x384] sm:$0xf]
  %v641 = vld [vmem:[%s1 + $0x388] sm:$0xf]
  %v642 = vld [vmem:[%s1 + $0x38c] sm:$0xf]
  %v643 = vld [vmem:[%s1 + $0x390] sm:$0xf]
  %v644 = vld [vmem:[%s1 + $0x394] sm:$0xf]
  %v645 = vld [vmem:[%s1 + $0x398] sm:$0xf]
  %v646 = vld [vmem:[%s1 + $0x39c] sm:$0xf]
  %v647 = vld [vmem:[%s1 + $0x3a0] sm:$0xf]
  %v648 = vld [vmem:[%s1 + $0x3a4] sm:$0xf]
  %v649 = vld [vmem:[%s1 + $0x3a8] sm:$0xf]
  %v650 = vld [vmem:[%s1 + $0x3ac] sm:$0xf]
  %v651 = vld [vmem:[%s1 + $0x3b0] sm:$0xf]
  %v652 = vld [vmem:[%s1 + $0x3b4] sm:$0xf]
  %v653 = vld [vmem:[%s1 + $0x3b8] sm:$0xf]
  %v654 = vld [vmem:[%s1 + $0x3bc] sm:$0xf]
  %v655 = vld [vmem:[%s1 + $0x3c0] sm:$0xf]
  %v656 = vld [vmem:[%s1 + $0x3c4] sm:$0xf]
  %v657 = vld [vmem:[%s1 + $0x3c8] sm:$0xf]
  %v658 = vld [vmem:[%s1 + $0x3cc] sm:$0xf]
  %v659 = vld [vmem:[%s1 + $0x3d0] sm:$0xf]
  %v660 = vld [vmem:[%s1 + $0x3d4] sm:$0xf]
  %v661 = vld [vmem:[%s1 + $0x3d8] sm:$0xf]
  %v662 = vld [vmem:[%s1 + $0x3dc] sm:$0xf]
  %v663 = vld [vmem:[%s1 + $0x3e0] sm:$0xf]
  %v664 = vld [vmem:[%s1 + $0x3e4] sm:$0xf]
  %v665 = vld [vmem:[%s1 + $0x3e8] sm:$0xf]
  %v666 = vld [vmem:[%s1 + $0x3ec] sm:$0xf]
  %v667 = vld [vmem:[%s1 + $0x3f0] sm:$0xf]
  %v668 = vld [vmem:[%s1 + $0x3f4] sm:$0xf]
  %v669 = vld [vmem:[%s1 + $0x3f8] sm:$0xf]
  %v670 = vld [vmem:[%s1 + $0x3fc] sm:$0xf]
  %v671 = vld [vmem:[%s1 + $0x400] sm:$0xf]
  %v672 = vld [vmem:[%s1 + $0x404] sm:$0xf]
  %v673 = vld [vmem:[%s1 + $0x408] sm:$0xf]
  %v674 = vld [vmem:[%s1 + $0x40c] sm:$0xf]
  %v675 = vld [vmem:[%s1 + $0x410] sm:$0xf]
  %v676 = vld [vmem:[%s1 + $0x414] sm:$0xf]
  %v677 = vld [vmem:[%s1 + $0x418] sm:$0xf]
  %v678 = vld [vmem:[%s1 + $0x41c] sm:$0xf]
  %v679 = vld [vmem:[%s1 + $0x420] sm:$0xf]
  %v680 = vld [vmem:[%s1 + $0x424] sm:$0xf]
  %v681 = vld [vmem:[%s1 + $0x428] sm:$0xf]
  %v682 = vld [vmem:[%s1 + $0x42c] sm:$0xf]
  %v683 = vld [vmem:[%s1 + $0x430] sm:$0xf]
  %v684 = vld [vmem:[%s1 + $0x434] sm:$0xf]
  %v685 = vld [vmem:[%s1 + $0x438] sm:$0xf]
  %v686 = vld [vmem:[%s1 + $0x43c] sm:$0xf]
  %v687 = vld [vmem:[%s1 + $0x440] sm:$0xf]
  %v688 = vld [vmem:[%s1 + $0x444] sm:$0xf]
  %v689 = vld [vmem:[%s1 + $0x448] sm:$0xf]
  %v690 = vld [vmem:[%s1 + $0x44c] sm:$0xf]
  %v691 = vld [vmem:[%s1 + $0x450] sm:$0xf]
  %v692 = vld [vmem:[%s1 + $0x454] sm:$0xf]
  %v693 = vld [vmem:[%s1 + $0x458] sm:$0xf]
  %v694 = vld [vmem:[%s1 + $0x45c] sm:$0xf]
  %v695 = vld [vmem:[%s1 + $0x460] sm:$0xf]
  %v696 = vld [vmem:[%s1 + $0x464] sm:$0xf]
  %v697 = vld [vmem:[%s1 + $0x468] sm:$0xf]
  %v698 = vld [vmem:[%s1 + $0x46c] sm:$0xf]
  %v699 = vld [vmem:[%s1 + $0x470] sm:$0xf]
  %v700 = vld [vmem:[%s1 + $0x474] sm:$0xf]
  %v701 = vld [vmem:[%s1 + $0x478] sm:$0xf]
  %v702 = vld [vmem:[%s1 + $0x47c] sm:$0xf]
  %v703 = vld [vmem:[%s1 + $0x480] sm:$0xf]
  %v704 = vld [vmem:[%s1 + $0x484] sm:$0xf]
  %v705 = vld [vmem:[%s1 + $0x488] sm:$0xf]
  %v706 = vld [vmem:[%s1 + $0x48c] sm:$0xf]
  %v707 = vld [vmem:[%s1 + $0x490] sm:$0xf]
  %v708 = vld [vmem:[%s1 + $0x494] sm:$0xf]
  %v709 = vld [vmem:[%s1 + $0x498] sm:$0xf]
  %v710 = vld [vmem:[%s1 + $0x49c] sm:$0xf]
  %v711 = vld [vmem:[%s1 + $0x4a0] sm:$0xf]
  %v712 = vld [vmem:[%s1 + $0x4a4] sm:$0xf]
  %v713 = vld [vmem:[%s1 + $0x4a8] sm:$0xf]
  %v714 = vld [vmem:[%s1 + $0x4ac] sm:$0xf]
  %v715 = vld [vmem:[%s1 + $0x4b0] sm:$0xf]
  %v716 = vld [vmem:[%s1 + $0x4b4] sm:$0xf]
  %v717 = vld [vmem:[%s1 + $0x4b8] sm:$0xf]
  %v718 = vld [vmem:[%s1 + $0x4bc] sm:$0xf]
  %v719 = vld [vmem:[%s1 + $0x4c0] sm:$0xf]
  %v720 = vld [vmem:[%s1 + $0x4c4] sm:$0xf]
  %v721 = vld [vmem:[%s1 + $0x4c8] sm:$0xf]
  %v722 = vld [vmem:[%s1 + $0x4cc] sm:$0xf]
  %v723 = vld [vmem:[%s1 + $0x4d0] sm:$0xf]
  %v724 = vld [vmem:[%s1 + $0x4d4] sm:$0xf]
  %v725 = vld [vmem:[%s1 + $0x4d8] sm:$0xf]
  %v726 = vld [vmem:[%s1 + $0x4dc] sm:$0xf]
  %v727 = vld [vmem:[%s1 + $0x4e0] sm:$0xf]
  %v728 = vld [vmem:[%s1 + $0x4e4] sm:$0xf]
  %v729 = vld [vmem:[%s1 + $0x4e8] sm:$0xf]
  %v730 = vld [vmem:[%s1 + $0x4ec] sm:$0xf]
  %v731 = vld [vmem:[%s1 + $0x4f0] sm:$0xf]
  %v732 = vld [vmem:[%s1 + $0x4f4] sm:$0xf]
  %v733 = vld [vmem:[%s1 + $0x4f8] sm:$0xf]
  %v734 = vld [vmem:[%s1 + $0x4fc] sm:$0xf]
  %v735 = vld [vmem:[%s1 + $0x500] sm:$0xf]
  %v736 = vld [vmem:[%s1 + $0x504] sm:$0xf]
  %v737 = vld [vmem:[%s1 + $0x508] sm:$0xf]
  %v738 = vld [vmem:[%s1 + $0x50c] sm:$0xf]
  %v739 = vld [vmem:[%s1 + $0x510] sm:$0xf]
  %v740 = vld [vmem:[%s1 + $0x514] sm:$0xf]
  %v741 = vld [vmem:[%s1 + $0x518] sm:$0xf]
  %v742 = vld [vmem:[%s1 + $0x51c] sm:$0xf]
  %v743 = vld [vmem:[%s1 + $0x520] sm:$0xf]
  %v744 = vld [vmem:[%s1 + $0x524] sm:$0xf]
  %v745 = vld [vmem:[%s1 + $0x528] sm:$0xf]
  %v746 = vld [vmem:[%s1 + $0x52c] sm:$0xf]
  %v747 = vld [vmem:[%s1 + $0x530] sm:$0xf]
  %v748 = vld [vmem:[%s1 + $0x534] sm:$0xf]
  %v749 = vld [vmem:[%s1 + $0x538] sm:$0xf]
  %v750 = vld [vmem:[%s1 + $0x53c] sm:$0xf]
  %v751 = vld [vmem:[%s1 + $0x540] sm:$0xf]
  %v752 = vld [vmem:[%s1 + $0x544] sm:$0xf]
  %v753 = vld [vmem:[%s1 + $0x548] sm:$0xf]
  %v754 = vld [vmem:[%s1 + $0x54c] sm:$0xf]
  %v755 = vld [vmem:[%s1 + $0x550] sm:$0xf]
  %v756 = vld [vmem:[%s1 + $0x554] sm:$0xf]
  %v757 = vld [vmem:[%s1 + $0x558] sm:$0xf]
  %v758 = vld [vmem:[%s1 + $0x55c] sm:$0xf]
  %v759 = vld [vmem:[%s1 + $0x560] sm:$0xf]
  %v760 = vld [vmem:[%s1 + $0x564] sm:$0xf]
  %v761 = vld [vmem:[%s1 + $0x568] sm:$0xf]
  %v762 = vld [vmem:[%s1 + $0x56c] sm:$0xf]
  %v763 = vld [vmem:[%s1 + $0x570] sm:$0xf]
  %v764 = vld [vmem:[%s1 + $0x574] sm:$0xf]
  %v765 = vld [vmem:[%s1 + $0x578] sm:$0xf]
  %v766 = vld [vmem:[%s1 + $0x57c] sm:$0xf]
  %v767 = vld [vmem:[%s1 + $0x580] sm:$0xf]
  %v768 = vld [vmem:[%s1 + $0x584] sm:$0xf]
  %v769 = vld [vmem:[%s1 + $0x588] sm:$0xf]
  %v770 = vld [vmem:[%s1 + $0x58c] sm:$0xf]
  %v771 = vld [vmem:[%s1 + $0x590] sm:$0xf]
  %v772 = vld [vmem:[%s1 + $0x594] sm:$0xf]
  %v773 = vld [vmem:[%s1 + $0x598] sm:$0xf]
  %v774 = vld [vmem:[%s1 + $0x59c] sm:$0xf]
  %v775 = vld [vmem:[%s1 + $0x5a0] sm:$0xf]
  %v776 = vld [vmem:[%s1 + $0x5a4] sm:$0xf]
  %v777 = vld [vmem:[%s1 + $0x5a8] sm:$0xf]
  %v778 = vld [vmem:[%s1 + $0x5ac] sm:$0xf]
  %v779 = vld [vmem:[%s1 + $0x5b0] sm:$0xf]
  %v780 = vld [vmem:[%s1 + $0x5b4] sm:$0xf]
  %v781 = vld [vmem:[%s1 + $0x5b8] sm:$0xf]
  %v782 = vld [vmem:[%s1 + $0x5bc] sm:$0xf]
  %v783 = vld [vmem:[%s1 + $0x5c0] sm:$0xf]
  %v784 = vld [vmem:[%s1 + $0x5c4] sm:$0xf]
  %v785 = vld [vmem:[%s1 + $0x5c8] sm:$0xf]
  %v786 = vld [vmem:[%s1 + $0x5cc] sm:$0xf]
  %v787 = vld [vmem:[%s1 + $0x5d0] sm:$0xf]
  %v788 = vld [vmem:[%s1 + $0x5d4] sm:$0xf]
  %v789 = vld [vmem:[%s1 + $0x5d8] sm:$0xf]
  %v790 = vld [vmem:[%s1 + $0x5dc] sm:$0xf]
  %v791 = vld [vmem:[%s1 + $0x5e0] sm:$0xf]
  %v792 = vld [vmem:[%s1 + $0x5e4] sm:$0xf]
  %v793 = vld [vmem:[%s1 + $0x5e8] sm:$0xf]
  %v794 = vld [vmem:[%s1 + $0x5ec] sm:$0xf]
  %v795 = vld [vmem:[%s1 + $0x5f0] sm:$0xf]
  %v796 = vld [vmem:[%s1 + $0x5f4] sm:$0xf]
  %v797 = vld [vmem:[%s1 + $0x5f8] sm:$0xf]
  %v798 = vld [vmem:[%s1 + $0x5fc] sm:$0xf]
  %v799 = vld [vmem:[%s1 + $0x600] sm:$0xf]
  %v800 = vld [vmem:[%s1 + $0x604] sm:$0xf]
  %v801 = vld [vmem:[%s1 + $0x608] sm:$0xf]
  %v802 = vld [vmem:[%s1 + $0x60c] sm:$0xf]
  %v803 = vld [vmem:[%s1 + $0x610] sm:$0xf]
  %v804 = vld [vmem:[%s1 + $0x614] sm:$0xf]
  %v805 = vld [vmem:[%s1 + $0x618] sm:$0xf]
  %v806 = vld [vmem:[%s1 + $0x61c] sm:$0xf]
  %v807 = vld [vmem:[%s1 + $0x620] sm:$0xf]
  %v808 = vld [vmem:[%s1 + $0x624] sm:$0xf]
  %v809 = vld [vmem:[%s1 + $0x628] sm:$0xf]
  %v810 = vld [vmem:[%s1 + $0x62c] sm:$0xf]
  %v811 = vld [vmem:[%s1 + $0x630] sm:$0xf]
  %v812 = vld [vmem:[%s1 + $0x634] sm:$0xf]
  %v813 = vld [vmem:[%s1 + $0x638] sm:$0xf]
  %v814 = vld [vmem:[%s1 + $0x63c] sm:$0xf]
  %v815 = vld [vmem:[%s1 + $0x640] sm:$0xf]
  %v816 = vld [vmem:[%s1 + $0x644] sm:$0xf]
  %v817 = vld [vmem:[%s1 + $0x648] sm:$0xf]
  %v818 = vld [vmem:[%s1 + $0x64c] sm:$0xf]
  %v819 = vld [vmem:[%s1 + $0x650] sm:$0xf]
  %v820 = vld [vmem:[%s1 + $0x654] sm:$0xf]
  %v821 = vld [vmem:[%s1 + $0x658] sm:$0xf]
  %v822 = vld [vmem:[%s1 + $0x65c] sm:$0xf]
  %v823 = vld [vmem:[%s1 + $0x660] sm:$0xf]
  %v824 = vld [vmem:[%s1 + $0x664] sm:$0xf]
  %v825 = vld [vmem:[%s1 + $0x668] sm:$0xf]
  %v826 = vld [vmem:[%s1 + $0x66c] sm:$0xf]
  %v827 = vld [vmem:[%s1 + $0x670] sm:$0xf]
  %v828 = vld [vmem:[%s1 + $0x674] sm:$0xf]
  %v829 = vld [vmem:[%s1 + $0x678] sm:$0xf]
  %v830 = vld [vmem:[%s1 + $0x67c] sm:$0xf]
  %v831 = vld [vmem:[%s1 + $0x680] sm:$0xf]
  %v832 = vld [vmem:[%s1 + $0x684] sm:$0xf]
  %v833 = vld [vmem:[%s1 + $0x688] sm:$0xf]
  %v834 = vld [vmem:[%s1 + $0x68c] sm:$0xf]
  %v835 = vld [vmem:[%s1 + $0x690] sm:$0xf]
  %v836 = vld [vmem:[%s1 + $0x694] sm:$0xf]
  %v837 = vld [vmem:[%s1 + $0x698] sm:$0xf]
  %v838 = vld [vmem:[%s1 + $0x69c] sm:$0xf]
  %v839 = vld [vmem:[%s1 + $0x6a0] sm:$0xf]
  %v840 = vld [vmem:[%s1 + $0x6a4] sm:$0xf]
  %v841 = vld [vmem:[%s1 + $0x6a8] sm:$0xf]
  %v842 = vld [vmem:[%s1 + $0x6ac] sm:$0xf]
  %v843 = vld [vmem:[%s1 + $0x6b0] sm:$0xf]
  %v844 = vld [vmem:[%s1 + $0x6b4] sm:$0xf]
  %v845 = vld [vmem:[%s1 + $0x6b8] sm:$0xf]
  %v846 = vld [vmem:[%s1 + $0x6bc] sm:$0xf]
  %v847 = vld [vmem:[%s1 + $0x6c0] sm:$0xf]
  %v848 = vld [vmem:[%s1 + $0x6c4] sm:$0xf]
  %v849 = vld [vmem:[%s1 + $0x6c8] sm:$0xf]
  %v850 = vld [vmem:[%s1 + $0x6cc] sm:$0xf]
  %v851 = vld [vmem:[%s1 + $0x6d0] sm:$0xf]
  %v852 = vld [vmem:[%s1 + $0x6d4] sm:$0xf]
  %v853 = vld [vmem:[%s1 + $0x6d8] sm:$0xf]
  %v854 = vld [vmem:[%s1 + $0x6dc] sm:$0xf]
  %v855 = vld [vmem:[%s1 + $0x6e0] sm:$0xf]
  %v856 = vld [vmem:[%s1 + $0x6e4] sm:$0xf]
  %v857 = vld [vmem:[%s1 + $0x6e8] sm:$0xf]
  %v858 = vld [vmem:[%s1 + $0x6ec] sm:$0xf]
  %v859 = vld [vmem:[%s1 + $0x6f0] sm:$0xf]
  %v860 = vld [vmem:[%s1 + $0x6f4] sm:$0xf]
  %v861 = vld [vmem:[%s1 + $0x6f8] sm:$0xf]
  %v862 = vld [vmem:[%s1 + $0x6fc] sm:$0xf]
  %v863 = vld [vmem:[%s1 + $0x700] sm:$0xf]
  %v864 = vld [vmem:[%s1 + $0x704] sm:$0xf]
  %v865 = vld [vmem:[%s1 + $0x708] sm:$0xf]
  %v866 = vld [vmem:[%s1 + $0x70c] sm:$0xf]
  %v867 = vld [vmem:[%s1 + $0x710] sm:$0xf]
  %v868 = vld [vmem:[%s1 + $0x714] sm:$0xf]
  %v869 = vld [vmem:[%s1 + $0x718] sm:$0xf]
  %v870 = vld [vmem:[%s1 + $0x71c] sm:$0xf]
  %v871 = vld [vmem:[%s1 + $0x720] sm:$0xf]
  %v872 = vld [vmem:[%s1 + $0x724] sm:$0xf]
  %v873 = vld [vmem:[%s1 + $0x728] sm:$0xf]
  %v874 = vld [vmem:[%s1 + $0x72c] sm:$0xf]
  %v875 = vld [vmem:[%s1 + $0x730] sm:$0xf]
  %v876 = vld [vmem:[%s1 + $0x734] sm:$0xf]
  %v877 = vld [vmem:[%s1 + $0x738] sm:$0xf]
  %v878 = vld [vmem:[%s1 + $0x73c] sm:$0xf]
  %v879 = vld [vmem:[%s1 + $0x740] sm:$0xf]
  %v880 = vld [vmem:[%s1 + $0x744] sm:$0xf]
  %v881 = vld [vmem:[%s1 + $0x748] sm:$0xf]
  %v882 = vld [vmem:[%s1 + $0x74c] sm:$0xf]
  %v883 = vld [vmem:[%s1 + $0x750] sm:$0xf]
  %v884 = vld [vmem:[%s1 + $0x754] sm:$0xf]
  %v885 = vld [vmem:[%s1 + $0x758] sm:$0xf]
  %v886 = vld [vmem:[%s1 + $0x75c] sm:$0xf]
  %v887 = vld [vmem:[%s1 + $0x760] sm:$0xf]
  %v888 = vld [vmem:[%s1 + $0x764] sm:$0xf]
  %v889 = vld [vmem:[%s1 + $0x768] sm:$0xf]
  %v890 = vld [vmem:[%s1 + $0x76c] sm:$0xf]
  %v891 = vld [vmem:[%s1 + $0x770] sm:$0xf]
  %v892 = vld [vmem:[%s1 + $0x774] sm:$0xf]
  %v893 = vld [vmem:[%s1 + $0x778] sm:$0xf]
  %v894 = vld [vmem:[%s1 + $0x77c] sm:$0xf]
  %v895 = vld [vmem:[%s1 + $0x780] sm:$0xf]
  %v896 = vld [vmem:[%s1 + $0x784] sm:$0xf]
  %v897 = vld [vmem:[%s1 + $0x788] sm:$0xf]
  %v898 = vld [vmem:[%s1 + $0x78c] sm:$0xf]
  %v899 = vld [vmem:[%s1 + $0x790] sm:$0xf]
  %v900 = vld [vmem:[%s1 + $0x794] sm:$0xf]
  %v901 = vld [vmem:[%s1 + $0x798] sm:$0xf]
  %v902 = vld [vmem:[%s1 + $0x79c] sm:$0xf]
  %v903 = vld [vmem:[%s1 + $0x7a0] sm:$0xf]
  %v904 = vld [vmem:[%s1 + $0x7a4] sm:$0xf]
  %v905 = vld [vmem:[%s1 + $0x7a8] sm:$0xf]
  %v906 = vld [vmem:[%s1 + $0x7ac] sm:$0xf]
  %v907 = vld [vmem:[%s1 + $0x7b0] sm:$0xf]
  %v908 = vld [vmem:[%s1 + $0x7b4] sm:$0xf]
  %v909 = vld [vmem:[%s1 + $0x7b8] sm:$0xf]
  %v910 = vld [vmem:[%s1 + $0x7bc] sm:$0xf]
  %v911 = vld [vmem:[%s1 + $0x7c0] sm:$0xf]
  %v912 = vld [vmem:[%s1 + $0x7c4] sm:$0xf]
  %v913 = vld [vmem:[%s1 + $0x7c8] sm:$0xf]
  %v914 = vld [vmem:[%s1 + $0x7cc] sm:$0xf]
  %v915 = vld [vmem:[%s1 + $0x7d0] sm:$0xf]
  %v916 = vld [vmem:[%s1 + $0x7d4] sm:$0xf]
  %v917 = vld [vmem:[%s1 + $0x7d8] sm:$0xf]
  %v918 = vld [vmem:[%s1 + $0x7dc] sm:$0xf]
  %v919 = vld [vmem:[%s1 + $0x7e0] sm:$0xf]
  %v920 = vld [vmem:[%s1 + $0x7e4] sm:$0xf]
  %v921 = vld [vmem:[%s1 + $0x7e8] sm:$0xf]
  %v922 = vld [vmem:[%s1 + $0x7ec] sm:$0xf]
  %v923 = vld [vmem:[%s1 + $0x7f0] sm:$0xf]
  %v924 = vld [vmem:[%s1 + $0x7f4] sm:$0xf]
  %v925 = vld [vmem:[%s1 + $0x7f8] sm:$0xf]
  %v926 = vld [vmem:[%s1 + $0x7fc] sm:$0xf]
  %v927 = vld [vmem:[%s1 + $0x800] sm:$0xf]
  %v928 = vld [vmem:[%s1 + $0x804] sm:$0xf]
  %v929 = vld [vmem:[%s1 + $0x808] sm:$0xf]
  %v930 = vld [vmem:[%s1 + $0x80c] sm:$0xf]
  %v931 = vld [vmem:[%s1 + $0x810] sm:$0xf]
  %v932 = vld [vmem:[%s1 + $0x814] sm:$0xf]
  %v933 = vld [vmem:[%s1 + $0x818] sm:$0xf]
  %v934 = vld [vmem:[%s1 + $0x81c] sm:$0xf]
  %v935 = vld [vmem:[%s1 + $0x820] sm:$0xf]
  %v936 = vld [vmem:[%s1 + $0x824] sm:$0xf]
  %v937 = vld [vmem:[%s1 + $0x828] sm:$0xf]
  %v938 = vld [vmem:[%s1 + $0x82c] sm:$0xf]
  %v939 = vld [vmem:[%s1 + $0x830] sm:$0xf]
  %v940 = vld [vmem:[%s1 + $0x834] sm:$0xf]
  %v941 = vld [vmem:[%s1 + $0x838] sm:$0xf]
  %v942 = vld [vmem:[%s1 + $0x83c] sm:$0xf]
  %v943 = vld [vmem:[%s1 + $0x840] sm:$0xf]
  %v944 = vld [vmem:[%s1 + $0x844] sm:$0xf]
  %v945 = vld [vmem:[%s1 + $0x848] sm:$0xf]
  %v946 = vld [vmem:[%s1 + $0x84c] sm:$0xf]
  %v947 = vld [vmem:[%s1 + $0x850] sm:$0xf]
  %v948 = vld [vmem:[%s1 + $0x854] sm:$0xf]
  %v949 = vld [vmem:[%s1 + $0x858] sm:$0xf]
  %v950 = vld [vmem:[%s1 + $0x85c] sm:$0xf]
  %v951 = vld [vmem:[%s1 + $0x860] sm:$0xf]
  %v952 = vld [vmem:[%s1 + $0x864] sm:$0xf]
  %v953 = vld [vmem:[%s1 + $0x868] sm:$0xf]
  %v954 = vld [vmem:[%s1 + $0x86c] sm:$0xf]
  %v955 = vld [vmem:[%s1 + $0x870] sm:$0xf]
  %v956 = vld [vmem:[%s1 + $0x874] sm:$0xf]
  %v957 = vld [vmem:[%s1 + $0x878] sm:$0xf]
  %v958 = vld [vmem:[%s1 + $0x87c] sm:$0xf]
  %v959 = vld [vmem:[%s1 + $0x880] sm:$0xf]
  %v960 = vld [vmem:[%s1 + $0x884] sm:$0xf]
  %v961 = vld [vmem:[%s1 + $0x888] sm:$0xf]
  %v962 = vld [vmem:[%s1 + $0x88c] sm:$0xf]
  %v963 = vld [vmem:[%s1 + $0x890] sm:$0xf]
  %v964 = vld [vmem:[%s1 + $0x894] sm:$0xf]
  %v965 = vld [vmem:[%s1 + $0x898] sm:$0xf]
  %v966 = vld [vmem:[%s1 + $0x89c] sm:$0xf]
  %v967 = vld [vmem:[%s1 + $0x8a0] sm:$0xf]
  %v968 = vld [vmem:[%s1 + $0x8a4] sm:$0xf]
  %v969 = vld [vmem:[%s1 + $0x8a8] sm:$0xf]
  %v970 = vld [vmem:[%s1 + $0x8ac] sm:$0xf]
  %v971 = vld [vmem:[%s1 + $0x8b0] sm:$0xf]
  %v972 = vld [vmem:[%s1 + $0x8b4] sm:$0xf]
  %v973 = vld [vmem:[%s1 + $0x8b8] sm:$0xf]
  %v974 = vld [vmem:[%s1 + $0x8bc] sm:$0xf]
  %v975 = vld [vmem:[%s1 + $0x8c0] sm:$0xf]
  %v976 = vld [vmem:[%s1 + $0x8c4] sm:$0xf]
  %v977 = vld [vmem:[%s1 + $0x8c8] sm:$0xf]
  %v978 = vld [vmem:[%s1 + $0x8cc] sm:$0xf]
  %v979 = vld [vmem:[%s1 + $0x8d0] sm:$0xf]
  %v980 = vld [vmem:[%s1 + $0x8d4] sm:$0xf]
  %v981 = vld [vmem:[%s1 + $0x8d8] sm:$0xf]
  %v982 = vld [vmem:[%s1 + $0x8dc] sm:$0xf]
  %v983 = vld [vmem:[%s1 + $0x8e0] sm:$0xf]
  %v984 = vld [vmem:[%s1 + $0x8e4] sm:$0xf]
  %v985 = vld [vmem:[%s1 + $0x8e8] sm:$0xf]
  %v986 = vld [vmem:[%s1 + $0x8ec] sm:$0xf]
  %v987 = vld [vmem:[%s1 + $0x8f0] sm:$0xf]
  %v988 = vld [vmem:[%s1 + $0x8f4] sm:$0xf]
  %v989 = vld [vmem:[%s1 + $0x8f8] sm:$0xf]
  %v990 = vld [vmem:[%s1 + $0x8fc] sm:$0xf]
  %v991 = vld [vmem:[%s1 + $0x900] sm:$0xf]
  %v992 = vld [vmem:[%s1 + $0x904] sm:$0xf]
  %v993 = vld [vmem:[%s1 + $0x908] sm:$0xf]
  %v994 = vld [vmem:[%s1 + $0x90c] sm:$0xf]
  %v995 = vld [vmem:[%s1 + $0x910] sm:$0xf]
  %v996 = vld [vmem:[%s1 + $0x914] sm:$0xf]
  %v997 = vld [vmem:[%s1 + $0x918] sm:$0xf]
  %v998 = vld [vmem:[%s1 + $0x91c] sm:$0xf]
  %v999 = vld [vmem:[%s1 + $0x920] sm:$0xf]
  %v1000 = vld [vmem:[%s1 + $0x924] sm:$0xf]
  %v1001 = vld [vmem:[%s1 + $0x928] sm:$0xf]
  %v1002 = vld [vmem:[%s1 + $0x92c] sm:$0xf]
  %v1003 = vld [vmem:[%s1 + $0x930] sm:$0xf]
  %v1004 = vld [vmem:[%s1 + $0x934] sm:$0xf]
  %v1005 = vld [vmem:[%s1 + $0x938] sm:$0xf]
  %v1006 = vld [vmem:[%s1 + $0x93c] sm:$0xf]
  %v1007 = vld [vmem:[%s1 + $0x940] sm:$0xf]
  %v1008 = vld [vmem:[%s1 + $0x944] sm:$0xf]
  %v1009 = vld [vmem:[%s1 + $0x948] sm:$0xf]
  %v1010 = vld [vmem:[%s1 + $0x94c] sm:$0xf]
  %v1011 = vld [vmem:[%s1 + $0x950] sm:$0xf]
  %v1012 = vld [vmem:[%s1 + $0x954] sm:$0xf]
  %v1013 = vld [vmem:[%s1 + $0x958] sm:$0xf]
  %v1014 = vld [vmem:[%s1 + $0x95c] sm:$0xf]
  %v1015 = vld [vmem:[%s1 + $0x960] sm:$0xf]
  %v1016 = vld [vmem:[%s1 + $0x964] sm:$0xf]
  %v1017 = vld [vmem:[%s1 + $0x968] sm:$0xf]
  %v1018 = vld [vmem:[%s1 + $0x96c] sm:$0xf]
  %v1019 = vld [vmem:[%s1 + $0x970] sm:$0xf]
  %v1020 = vld [vmem:[%s1 + $0x974] sm:$0xf]
  %v1021 = vld [vmem:[%s1 + $0x978] sm:$0xf]
  %v1022 = vld [vmem:[%s1 + $0x97c] sm:$0xf]
  %v1023 = vld [vmem:[%s1 + $0x980] sm:$0xf]
  %v1024 = vld [vmem:[%s1 + $0x984] sm:$0xf]
  %v1025 = vld [vmem:[%s1 + $0x988] sm:$0xf]
  %v1026 = vld [vmem:[%s1 + $0x98c] sm:$0xf]
  %v1027 = vld [vmem:[%s1 + $0x990] sm:$0xf]
  %v1028 = vld [vmem:[%s1 + $0x994] sm:$0xf]
  %v1029 = vld [vmem:[%s1 + $0x998] sm:$0xf]
  %v1030 = vld [vmem:[%s1 + $0x99c] sm:$0xf]
  %v1031 = vld [vmem:[%s1 + $0x9a0] sm:$0xf]
  %v1032 = vld [vmem:[%s1 + $0x9a4] sm:$0xf]
  %v1033 = vld [vmem:[%s1 + $0x9a8] sm:$0xf]
  %v1034 = vld [vmem:[%s1 + $0x9ac] sm:$0xf]
  %v1035 = vld [vmem:[%s1 + $0x9b0] sm:$0xf]
  %v1036 = vld [vmem:[%s1 + $0x9b4] sm:$0xf]
  %v1037 = vld [vmem:[%s1 + $0x9b8] sm:$0xf]
  %v1038 = vld [vmem:[%s1 + $0x9bc] sm:$0xf]
  %v1039 = vld [vmem:[%s1 + $0x9c0] sm:$0xf]
  %v1040 = vld [vmem:[%s1 + $0x9c4] sm:$0xf]
  %v1041 = vld [vmem:[%s1 + $0x9c8] sm:$0xf]
  %v1042 = vld [vmem:[%s1 + $0x9cc] sm:$0xf]
  %v1043 = vld [vmem:[%s1 + $0x9d0] sm:$0xf]
  %v1044 = vld [vmem:[%s1 + $0x9d4] sm:$0xf]
  %v1045 = vld [vmem:[%s1 + $0x9d8] sm:$0xf]
  %v1046 = vld [vmem:[%s1 + $0x9dc] sm:$0xf]
  %v1047 = vld [vmem:[%s1 + $0x9e0] sm:$0xf]
  %v1048 = vld [vmem:[%s1 + $0x9e4] sm:$0xf]
  %v1049 = vld [vmem:[%s1 + $0x9e8] sm:$0xf]
  %v1050 = vld [vmem:[%s1 + $0x9ec] sm:$0xf]
  %v1051 = vld [vmem:[%s1 + $0x9f0] sm:$0xf]
  %v1052 = vld [vmem:[%s1 + $0x9f4] sm:$0xf]
  %v1053 = vld [vmem:[%s1 + $0x9f8] sm:$0xf]
  %v1054 = vld [vmem:[%s1 + $0x9fc] sm:$0xf]
  %v1055 = vld [vmem:[%s1 + $0xa00] sm:$0xf]
  %v1056 = vld [vmem:[%s1 + $0xa04] sm:$0xf]
  %v1057 = vld [vmem:[%s1 + $0xa08] sm:$0xf]
  %v1058 = vld [vmem:[%s1 + $0xa0c] sm:$0xf]
  %v1059 = vld [vmem:[%s1 + $0xa10] sm:$0xf]
  %v1060 = vld [vmem:[%s1 + $0xa14] sm:$0xf]
  %v1061 = vld [vmem:[%s1 + $0xa18] sm:$0xf]
  %v1062 = vld [vmem:[%s1 + $0xa1c] sm:$0xf]
  %v1063 = vld [vmem:[%s1 + $0xa20] sm:$0xf]
  %v1064 = vld [vmem:[%s1 + $0xa24] sm:$0xf]
  %v1065 = vld [vmem:[%s1 + $0xa28] sm:$0xf]
  %v1066 = vld [vmem:[%s1 + $0xa2c] sm:$0xf]
  %v1067 = vld [vmem:[%s1 + $0xa30] sm:$0xf]
  %v1068 = vld [vmem:[%s1 + $0xa34] sm:$0xf]
  %v1069 = vld [vmem:[%s1 + $0xa38] sm:$0xf]
  %v1070 = vld [vmem:[%s1 + $0xa3c] sm:$0xf]
  %v1071 = vld [vmem:[%s1 + $0xa40] sm:$0xf]
  %v1072 = vld [vmem:[%s1 + $0xa44] sm:$0xf]
  %v1073 = vld [vmem:[%s1 + $0xa48] sm:$0xf]
  %v1074 = vld [vmem:[%s1 + $0xa4c] sm:$0xf]
  %v1075 = vld [vmem:[%s1 + $0xa50] sm:$0xf]
  %v1076 = vld [vmem:[%s1 + $0xa54] sm:$0xf]
  %v1077 = vld [vmem:[%s1 + $0xa58] sm:$0xf]
  %v1078 = vld [vmem:[%s1 + $0xa5c] sm:$0xf]
  %v1079 = vld [vmem:[%s1 + $0xa60] sm:$0xf]
  %v1080 = vld [vmem:[%s1 + $0xa64] sm:$0xf]
  %v1081 = vld [vmem:[%s1 + $0xa68] sm:$0xf]
  %v1082 = vld [vmem:[%s1 + $0xa6c] sm:$0xf]
  %v1083 = vld [vmem:[%s1 + $0xa70] sm:$0xf]
  %v1084 = vld [vmem:[%s1 + $0xa74] sm:$0xf]
  %v1085 = vld [vmem:[%s1 + $0xa78] sm:$0xf]
  %v1086 = vld [vmem:[%s1 + $0xa7c] sm:$0xf]
  %v1087 = vld [vmem:[%s1 + $0xa80] sm:$0xf]
  %v1088 = vld [vmem:[%s1 + $0xa84] sm:$0xf]
  %v1089 = vld [vmem:[%s1 + $0xa88] sm:$0xf]
  %v1090 = vld [vmem:[%s1 + $0xa8c] sm:$0xf]
  %v1091 = vld [vmem:[%s1 + $0xa90] sm:$0xf]
  %v1092 = vld [vmem:[%s1 + $0xa94] sm:$0xf]
  %v1093 = vld [vmem:[%s1 + $0xa98] sm:$0xf]
  %v1094 = vld [vmem:[%s1 + $0xa9c] sm:$0xf]
  %v1095 = vld [vmem:[%s1 + $0xaa0] sm:$0xf]
  %v1096 = vld [vmem:[%s1 + $0xaa4] sm:$0xf]
  %v1097 = vld [vmem:[%s1 + $0xaa8] sm:$0xf]
  %v1098 = vld [vmem:[%s1 + $0xaac] sm:$0xf]
  %v1099 = vld [vmem:[%s1 + $0xab0] sm:$0xf]
  %v1100 = vld [vmem:[%s1 + $0xab4] sm:$0xf]
  %v1101 = vld [vmem:[%s1 + $0xab8] sm:$0xf]
  %v1102 = vld [vmem:[%s1 + $0xabc] sm:$0xf]
  %v1103 = vld [vmem:[%s1 + $0xac0] sm:$0xf]
  %v1104 = vld [vmem:[%s1 + $0xac4] sm:$0xf]
  %v1105 = vld [vmem:[%s1 + $0xac8] sm:$0xf]
  %v1106 = vld [vmem:[%s1 + $0xacc] sm:$0xf]
  %v1107 = vld [vmem:[%s1 + $0xad0] sm:$0xf]
  %v1108 = vld [vmem:[%s1 + $0xad4] sm:$0xf]
  %v1109 = vld [vmem:[%s1 + $0xad8] sm:$0xf]
  %v1110 = vld [vmem:[%s1 + $0xadc] sm:$0xf]
  %v1111 = vld [vmem:[%s1 + $0xae0] sm:$0xf]
  %v1112 = vld [vmem:[%s1 + $0xae4] sm:$0xf]
  %v1113 = vld [vmem:[%s1 + $0xae8] sm:$0xf]
  %v1114 = vld [vmem:[%s1 + $0xaec] sm:$0xf]
  %v1115 = vld [vmem:[%s1 + $0xaf0] sm:$0xf]
  %v1116 = vld [vmem:[%s1 + $0xaf4] sm:$0xf]
  %v1117 = vld [vmem:[%s1 + $0xaf8] sm:$0xf]
  %v1118 = vld [vmem:[%s1 + $0xafc] sm:$0xf]
  %v1119 = vld [vmem:[%s1 + $0xb00] sm:$0xf]
  %v1120 = vld [vmem:[%s1 + $0xb04] sm:$0xf]
  %v1121 = vld [vmem:[%s1 + $0xb08] sm:$0xf]
  %v1122 = vld [vmem:[%s1 + $0xb0c] sm:$0xf]
  %v1123 = vld [vmem:[%s1 + $0xb10] sm:$0xf]
  %v1124 = vld [vmem:[%s1 + $0xb14] sm:$0xf]
  %v1125 = vld [vmem:[%s1 + $0xb18] sm:$0xf]
  %v1126 = vld [vmem:[%s1 + $0xb1c] sm:$0xf]
  %v1127 = vld [vmem:[%s1 + $0xb20] sm:$0xf]
  %v1128 = vld [vmem:[%s1 + $0xb24] sm:$0xf]
  %v1129 = vld [vmem:[%s1 + $0xb28] sm:$0xf]
  %v1130 = vld [vmem:[%s1 + $0xb2c] sm:$0xf]
  %v1131 = vld [vmem:[%s1 + $0xb30] sm:$0xf]
  %v1132 = vld [vmem:[%s1 + $0xb34] sm:$0xf]
  %v1133 = vld [vmem:[%s1 + $0xb38] sm:$0xf]
  %v1134 = vld [vmem:[%s1 + $0xb3c] sm:$0xf]
  %v1135 = vld [vmem:[%s1 + $0xb40] sm:$0xf]
  %v1136 = vld [vmem:[%s1 + $0xb44] sm:$0xf]
  %v1137 = vld [vmem:[%s1 + $0xb48] sm:$0xf]
  %v1138 = vld [vmem:[%s1 + $0xb4c] sm:$0xf]
  %v1139 = vld [vmem:[%s1 + $0xb50] sm:$0xf]
  %v1140 = vld [vmem:[%s1 + $0xb54] sm:$0xf]
  %v1141 = vld [vmem:[%s1 + $0xb58] sm:$0xf]
  %v1142 = vld [vmem:[%s1 + $0xb5c] sm:$0xf]
  %v1143 = vld [vmem:[%s1 + $0xb60] sm:$0xf]
  %v1144 = vld [vmem:[%s1 + $0xb64] sm:$0xf]
  %v1145 = vld [vmem:[%s1 + $0xb68] sm:$0xf]
  %v1146 = vld [vmem:[%s1 + $0xb6c] sm:$0xf]
  %v1147 = vld [vmem:[%s1 + $0xb70] sm:$0xf]
  %v1148 = vld [vmem:[%s1 + $0xb74] sm:$0xf]
  %v1149 = vld [vmem:[%s1 + $0xb78] sm:$0xf]
  %v1150 = vld [vmem:[%s1 + $0xb7c] sm:$0xf]
  %v1151 = vld [vmem:[%s1 + $0xb80] sm:$0xf]
  %v1152 = vld [vmem:[%s1 + $0xb84] sm:$0xf]
  %v1153 = vld [vmem:[%s1 + $0xb88] sm:$0xf]
  %v1154 = vld [vmem:[%s1 + $0xb8c] sm:$0xf]
  %v1155 = vld [vmem:[%s1 + $0xb90] sm:$0xf]
  %v1156 = vld [vmem:[%s1 + $0xb94] sm:$0xf]
  %v1157 = vld [vmem:[%s1 + $0xb98] sm:$0xf]
  %v1158 = vld [vmem:[%s1 + $0xb9c] sm:$0xf]
  %v1159 = vld [vmem:[%s1 + $0xba0] sm:$0xf]
  %v1160 = vld [vmem:[%s1 + $0xba4] sm:$0xf]
  %v1161 = vld [vmem:[%s1 + $0xba8] sm:$0xf]
  %v1162 = vld [vmem:[%s1 + $0xbac] sm:$0xf]
  %v1163 = vld [vmem:[%s1 + $0xbb0] sm:$0xf]
  %v1164 = vld [vmem:[%s1 + $0xbb4] sm:$0xf]
  %v1165 = vld [vmem:[%s1 + $0xbb8] sm:$0xf]
  %v1166 = vld [vmem:[%s1 + $0xbbc] sm:$0xf]
  %v1167 = vld [vmem:[%s1 + $0xbc0] sm:$0xf]
  %v1168 = vld [vmem:[%s1 + $0xbc4] sm:$0xf]
  %v1169 = vld [vmem:[%s1 + $0xbc8] sm:$0xf]
  %v1170 = vld [vmem:[%s1 + $0xbcc] sm:$0xf]
  %v1171 = vld [vmem:[%s1 + $0xbd0] sm:$0xf]
  %v1172 = vld [vmem:[%s1 + $0xbd4] sm:$0xf]
  %v1173 = vld [vmem:[%s1 + $0xbd8] sm:$0xf]
  %v1174 = vld [vmem:[%s1 + $0xbdc] sm:$0xf]
  %v1175 = vld [vmem:[%s1 + $0xbe0] sm:$0xf]
  %v1176 = vld [vmem:[%s1 + $0xbe4] sm:$0xf]
  %v1177 = vld [vmem:[%s1 + $0xbe8] sm:$0xf]
  %v1178 = vld [vmem:[%s1 + $0xbec] sm:$0xf]
  %v1179 = vld [vmem:[%s1 + $0xbf0] sm:$0xf]
  %v1180 = vld [vmem:[%s1 + $0xbf4] sm:$0xf]
  %v1181 = vld [vmem:[%s1 + $0xbf8] sm:$0xf]
  %v1182 = vld [vmem:[%s1 + $0xbfc] sm:$0xf]
  %v1183 = vld [vmem:[%s1 + $0xc00] sm:$0xf]
  %v1184 = vld [vmem:[%s1 + $0xc04] sm:$0xf]
  %v1185 = vld [vmem:[%s1 + $0xc08] sm:$0xf]
  %v1186 = vld [vmem:[%s1 + $0xc0c] sm:$0xf]
  %v1187 = vld [vmem:[%s1 + $0xc10] sm:$0xf]
  %v1188 = vld [vmem:[%s1 + $0xc14] sm:$0xf]
  %v1189 = vld [vmem:[%s1 + $0xc18] sm:$0xf]
  %v1190 = vld [vmem:[%s1 + $0xc1c] sm:$0xf]
  %v1191 = vld [vmem:[%s1 + $0xc20] sm:$0xf]
  %v1192 = vld [vmem:[%s1 + $0xc24] sm:$0xf]
  %v1193 = vld [vmem:[%s1 + $0xc28] sm:$0xf]
  %v1194 = vld [vmem:[%s1 + $0xc2c] sm:$0xf]
  %v1195 = vld [vmem:[%s1 + $0xc30] sm:$0xf]
  %v1196 = vld [vmem:[%s1 + $0xc34] sm:$0xf]
  %v1197 = vld [vmem:[%s1 + $0xc38] sm:$0xf]
  %v1198 = vld [vmem:[%s1 + $0xc3c] sm:$0xf]
  %v1199 = vld [vmem:[%s1 + $0xc40] sm:$0xf]
  %v1200 = vld [vmem:[%s1 + $0xc44] sm:$0xf]
  %v1201 = vld [vmem:[%s1 + $0xc48] sm:$0xf]
  %v1202 = vld [vmem:[%s1 + $0xc4c] sm:$0xf]
  %v1203 = vld [vmem:[%s1 + $0xc50] sm:$0xf]
  %v1204 = vld [vmem:[%s1 + $0xc54] sm:$0xf]
  %v1205 = vld [vmem:[%s1 + $0xc58] sm:$0xf]
  %v1206 = vld [vmem:[%s1 + $0xc5c] sm:$0xf]
  %v1207 = vld [vmem:[%s1 + $0xc60] sm:$0xf]
  %v1208 = vld [vmem:[%s1 + $0xc64] sm:$0xf]
  %v1209 = vld [vmem:[%s1 + $0xc68] sm:$0xf]
  %v1210 = vld [vmem:[%s1 + $0xc6c] sm:$0xf]
  %v1211 = vld [vmem:[%s1 + $0xc70] sm:$0xf]
  %v1212 = vld [vmem:[%s1 + $0xc74] sm:$0xf]
  %v1213 = vld [vmem:[%s1 + $0xc78] sm:$0xf]
  %v1214 = vld [vmem:[%s1 + $0xc7c] sm:$0xf]
  %v1215 = vld [vmem:[%s2] sm:$0x1]
  %v1217 = vlaneseq
  %v1218 = vshrl.u32 %v1217, 7
  %v1219 = vsub.s32 0, %v1218
  %v1220 = vrot.slane %v1215, %v1219
  %v1622 = vunpack.c.l.b16 %v15
  %v1623 = vunpack.c.h.b16 %v15
  %v1624 = vunpack.c.l.b16 %v16
  %v1625 = vunpack.c.h.b16 %v16
  %v1626 = vunpack.c.l.b16 %v17
  %v1627 = vunpack.c.h.b16 %v17
  %v1628 = vunpack.c.l.b16 %v18
  %v1629 = vunpack.c.h.b16 %v18
  %v1630 = vunpack.c.l.b16 %v19
  %v1631 = vunpack.c.h.b16 %v19
  %v1632 = vunpack.c.l.b16 %v20
  %v1633 = vunpack.c.h.b16 %v20
  %v1634 = vunpack.c.l.b16 %v21
  %v1635 = vunpack.c.h.b16 %v21
  %v1636 = vunpack.c.l.b16 %v22
  %v1637 = vunpack.c.h.b16 %v22
  %v1638 = vunpack.c.l.b16 %v23
  %v1639 = vunpack.c.h.b16 %v23
  %v1640 = vunpack.c.l.b16 %v24
  %v1641 = vunpack.c.h.b16 %v24
  %v1642 = vunpack.c.l.b16 %v25
  %v1643 = vunpack.c.h.b16 %v25
  %v1644 = vunpack.c.l.b16 %v26
  %v1645 = vunpack.c.h.b16 %v26
  %v1646 = vunpack.c.l.b16 %v27
  %v1647 = vunpack.c.h.b16 %v27
  %v1648 = vunpack.c.l.b16 %v28
  %v1649 = vunpack.c.h.b16 %v28
  %v1650 = vunpack.c.l.b16 %v29
  %v1651 = vunpack.c.h.b16 %v29
  %v1652 = vunpack.c.l.b16 %v30
  %v1653 = vunpack.c.h.b16 %v30
  %v1654 = vunpack.c.l.b16 %v31
  %v1655 = vunpack.c.h.b16 %v31
  %v1656 = vunpack.c.l.b16 %v32
  %v1657 = vunpack.c.h.b16 %v32
  %v1658 = vunpack.c.l.b16 %v33
  %v1659 = vunpack.c.h.b16 %v33
  %v1660 = vunpack.c.l.b16 %v34
  %v1661 = vunpack.c.h.b16 %v34
  %v1662 = vunpack.c.l.b16 %v35
  %v1663 = vunpack.c.h.b16 %v35
  %v1664 = vunpack.c.l.b16 %v36
  %v1665 = vunpack.c.h.b16 %v36
  %v1666 = vunpack.c.l.b16 %v37
  %v1667 = vunpack.c.h.b16 %v37
  %v1668 = vunpack.c.l.b16 %v38
  %v1669 = vunpack.c.h.b16 %v38
  %v1670 = vunpack.c.l.b16 %v39
  %v1671 = vunpack.c.h.b16 %v39
  %v1672 = vunpack.c.l.b16 %v40
  %v1673 = vunpack.c.h.b16 %v40
  %v1674 = vunpack.c.l.b16 %v41
  %v1675 = vunpack.c.h.b16 %v41
  %v1676 = vunpack.c.l.b16 %v42
  %v1677 = vunpack.c.h.b16 %v42
  %v1678 = vunpack.c.l.b16 %v43
  %v1679 = vunpack.c.h.b16 %v43
  %v1680 = vunpack.c.l.b16 %v44
  %v1681 = vunpack.c.h.b16 %v44
  %v1682 = vunpack.c.l.b16 %v45
  %v1683 = vunpack.c.h.b16 %v45
  %v1684 = vunpack.c.l.b16 %v46
  %v1685 = vunpack.c.h.b16 %v46
  %v1686 = vunpack.c.l.b16 %v47
  %v1687 = vunpack.c.h.b16 %v47
  %v1688 = vunpack.c.l.b16 %v48
  %v1689 = vunpack.c.h.b16 %v48
  %v1690 = vunpack.c.l.b16 %v49
  %v1691 = vunpack.c.h.b16 %v49
  %v1692 = vunpack.c.l.b16 %v50
  %v1693 = vunpack.c.h.b16 %v50
  %v1694 = vunpack.c.l.b16 %v51
  %v1695 = vunpack.c.h.b16 %v51
  %v1696 = vunpack.c.l.b16 %v52
  %v1697 = vunpack.c.h.b16 %v52
  %v1698 = vunpack.c.l.b16 %v53
  %v1699 = vunpack.c.h.b16 %v53
  %v1700 = vunpack.c.l.b16 %v54
  %v1701 = vunpack.c.h.b16 %v54
  %v1702 = vunpack.c.l.b16 %v55
  %v1703 = vunpack.c.h.b16 %v55
  %v1704 = vunpack.c.l.b16 %v56
  %v1705 = vunpack.c.h.b16 %v56
  %v1706 = vunpack.c.l.b16 %v57
  %v1707 = vunpack.c.h.b16 %v57
  %v1708 = vunpack.c.l.b16 %v58
  %v1709 = vunpack.c.h.b16 %v58
  %v1710 = vunpack.c.l.b16 %v59
  %v1711 = vunpack.c.h.b16 %v59
  %v1712 = vunpack.c.l.b16 %v60
  %v1713 = vunpack.c.h.b16 %v60
  %v1714 = vunpack.c.l.b16 %v61
  %v1715 = vunpack.c.h.b16 %v61
  %v1716 = vunpack.c.l.b16 %v62
  %v1717 = vunpack.c.h.b16 %v62
  %v1718 = vunpack.c.l.b16 %v63
  %v1719 = vunpack.c.h.b16 %v63
  %v1720 = vunpack.c.l.b16 %v64
  %v1721 = vunpack.c.h.b16 %v64
  %v1722 = vunpack.c.l.b16 %v65
  %v1723 = vunpack.c.h.b16 %v65
  %v1724 = vunpack.c.l.b16 %v66
  %v1725 = vunpack.c.h.b16 %v66
  %v1726 = vunpack.c.l.b16 %v67
  %v1727 = vunpack.c.h.b16 %v67
  %v1728 = vunpack.c.l.b16 %v68
  %v1729 = vunpack.c.h.b16 %v68
  %v1730 = vunpack.c.l.b16 %v69
  %v1731 = vunpack.c.h.b16 %v69
  %v1732 = vunpack.c.l.b16 %v70
  %v1733 = vunpack.c.h.b16 %v70
  %v1734 = vunpack.c.l.b16 %v71
  %v1735 = vunpack.c.h.b16 %v71
  %v1736 = vunpack.c.l.b16 %v72
  %v1737 = vunpack.c.h.b16 %v72
  %v1738 = vunpack.c.l.b16 %v73
  %v1739 = vunpack.c.h.b16 %v73
  %v1740 = vunpack.c.l.b16 %v74
  %v1741 = vunpack.c.h.b16 %v74
  %v1742 = vunpack.c.l.b16 %v75
  %v1743 = vunpack.c.h.b16 %v75
  %v1744 = vunpack.c.l.b16 %v76
  %v1745 = vunpack.c.h.b16 %v76
  %v1746 = vunpack.c.l.b16 %v77
  %v1747 = vunpack.c.h.b16 %v77
  %v1748 = vunpack.c.l.b16 %v78
  %v1749 = vunpack.c.h.b16 %v78
  %v1750 = vunpack.c.l.b16 %v79
  %v1751 = vunpack.c.h.b16 %v79
  %v1752 = vunpack.c.l.b16 %v80
  %v1753 = vunpack.c.h.b16 %v80
  %v1754 = vunpack.c.l.b16 %v81
  %v1755 = vunpack.c.h.b16 %v81
  %v1756 = vunpack.c.l.b16 %v82
  %v1757 = vunpack.c.h.b16 %v82
  %v1758 = vunpack.c.l.b16 %v83
  %v1759 = vunpack.c.h.b16 %v83
  %v1760 = vunpack.c.l.b16 %v84
  %v1761 = vunpack.c.h.b16 %v84
  %v1762 = vunpack.c.l.b16 %v85
  %v1763 = vunpack.c.h.b16 %v85
  %v1764 = vunpack.c.l.b16 %v86
  %v1765 = vunpack.c.h.b16 %v86
  %v1766 = vunpack.c.l.b16 %v87
  %v1767 = vunpack.c.h.b16 %v87
  %v1768 = vunpack.c.l.b16 %v88
  %v1769 = vunpack.c.h.b16 %v88
  %v1770 = vunpack.c.l.b16 %v89
  %v1771 = vunpack.c.h.b16 %v89
  %v1772 = vunpack.c.l.b16 %v90
  %v1773 = vunpack.c.h.b16 %v90
  %v1774 = vunpack.c.l.b16 %v91
  %v1775 = vunpack.c.h.b16 %v91
  %v1776 = vunpack.c.l.b16 %v92
  %v1777 = vunpack.c.h.b16 %v92
  %v1778 = vunpack.c.l.b16 %v93
  %v1779 = vunpack.c.h.b16 %v93
  %v1780 = vunpack.c.l.b16 %v94
  %v1781 = vunpack.c.h.b16 %v94
  %v1782 = vunpack.c.l.b16 %v95
  %v1783 = vunpack.c.h.b16 %v95
  %v1784 = vunpack.c.l.b16 %v96
  %v1785 = vunpack.c.h.b16 %v96
  %v1786 = vunpack.c.l.b16 %v97
  %v1787 = vunpack.c.h.b16 %v97
  %v1788 = vunpack.c.l.b16 %v98
  %v1789 = vunpack.c.h.b16 %v98
  %v1790 = vunpack.c.l.b16 %v99
  %v1791 = vunpack.c.h.b16 %v99
  %v1792 = vunpack.c.l.b16 %v100
  %v1793 = vunpack.c.h.b16 %v100
  %v1794 = vunpack.c.l.b16 %v101
  %v1795 = vunpack.c.h.b16 %v101
  %v1796 = vunpack.c.l.b16 %v102
  %v1797 = vunpack.c.h.b16 %v102
  %v1798 = vunpack.c.l.b16 %v103
  %v1799 = vunpack.c.h.b16 %v103
  %v1800 = vunpack.c.l.b16 %v104
  %v1801 = vunpack.c.h.b16 %v104
  %v1802 = vunpack.c.l.b16 %v105
  %v1803 = vunpack.c.h.b16 %v105
  %v1804 = vunpack.c.l.b16 %v106
  %v1805 = vunpack.c.h.b16 %v106
  %v1806 = vunpack.c.l.b16 %v107
  %v1807 = vunpack.c.h.b16 %v107
  %v1808 = vunpack.c.l.b16 %v108
  %v1809 = vunpack.c.h.b16 %v108
  %v1810 = vunpack.c.l.b16 %v109
  %v1811 = vunpack.c.h.b16 %v109
  %v1812 = vunpack.c.l.b16 %v110
  %v1813 = vunpack.c.h.b16 %v110
  %v1814 = vunpack.c.l.b16 %v111
  %v1815 = vunpack.c.h.b16 %v111
  %v1816 = vunpack.c.l.b16 %v112
  %v1817 = vunpack.c.h.b16 %v112
  %v1818 = vunpack.c.l.b16 %v113
  %v1819 = vunpack.c.h.b16 %v113
  %v1820 = vunpack.c.l.b16 %v114
  %v1821 = vunpack.c.h.b16 %v114
  %v1822 = vunpack.c.l.b16 %v115
  %v1823 = vunpack.c.h.b16 %v115
  %v1824 = vunpack.c.l.b16 %v116
  %v1825 = vunpack.c.h.b16 %v116
  %v1826 = vunpack.c.l.b16 %v117
  %v1827 = vunpack.c.h.b16 %v117
  %v1828 = vunpack.c.l.b16 %v118
  %v1829 = vunpack.c.h.b16 %v118
  %v1830 = vunpack.c.l.b16 %v119
  %v1831 = vunpack.c.h.b16 %v119
  %v1832 = vunpack.c.l.b16 %v120
  %v1833 = vunpack.c.h.b16 %v120
  %v1834 = vunpack.c.l.b16 %v121
  %v1835 = vunpack.c.h.b16 %v121
  %v1836 = vunpack.c.l.b16 %v122
  %v1837 = vunpack.c.h.b16 %v122
  %v1838 = vunpack.c.l.b16 %v123
  %v1839 = vunpack.c.h.b16 %v123
  %v1840 = vunpack.c.l.b16 %v124
  %v1841 = vunpack.c.h.b16 %v124
  %v1842 = vunpack.c.l.b16 %v125
  %v1843 = vunpack.c.h.b16 %v125
  %v1844 = vunpack.c.l.b16 %v126
  %v1845 = vunpack.c.h.b16 %v126
  %v1846 = vunpack.c.l.b16 %v127
  %v1847 = vunpack.c.h.b16 %v127
  %v1848 = vunpack.c.l.b16 %v128
  %v1849 = vunpack.c.h.b16 %v128
  %v1850 = vunpack.c.l.b16 %v129
  %v1851 = vunpack.c.h.b16 %v129
  %v1852 = vunpack.c.l.b16 %v130
  %v1853 = vunpack.c.h.b16 %v130
  %v1854 = vunpack.c.l.b16 %v131
  %v1855 = vunpack.c.h.b16 %v131
  %v1856 = vunpack.c.l.b16 %v132
  %v1857 = vunpack.c.h.b16 %v132
  %v1858 = vunpack.c.l.b16 %v133
  %v1859 = vunpack.c.h.b16 %v133
  %v1860 = vunpack.c.l.b16 %v134
  %v1861 = vunpack.c.h.b16 %v134
  %v1862 = vunpack.c.l.b16 %v135
  %v1863 = vunpack.c.h.b16 %v135
  %v1864 = vunpack.c.l.b16 %v136
  %v1865 = vunpack.c.h.b16 %v136
  %v1866 = vunpack.c.l.b16 %v137
  %v1867 = vunpack.c.h.b16 %v137
  %v1868 = vunpack.c.l.b16 %v138
  %v1869 = vunpack.c.h.b16 %v138
  %v1870 = vunpack.c.l.b16 %v139
  %v1871 = vunpack.c.h.b16 %v139
  %v1872 = vunpack.c.l.b16 %v140
  %v1873 = vunpack.c.h.b16 %v140
  %v1874 = vunpack.c.l.b16 %v141
  %v1875 = vunpack.c.h.b16 %v141
  %v1876 = vunpack.c.l.b16 %v142
  %v1877 = vunpack.c.h.b16 %v142
  %v1878 = vunpack.c.l.b16 %v143
  %v1879 = vunpack.c.h.b16 %v143
  %v1880 = vunpack.c.l.b16 %v144
  %v1881 = vunpack.c.h.b16 %v144
  %v1882 = vunpack.c.l.b16 %v145
  %v1883 = vunpack.c.h.b16 %v145
  %v1884 = vunpack.c.l.b16 %v146
  %v1885 = vunpack.c.h.b16 %v146
  %v1886 = vunpack.c.l.b16 %v147
  %v1887 = vunpack.c.h.b16 %v147
  %v1888 = vunpack.c.l.b16 %v148
  %v1889 = vunpack.c.h.b16 %v148
  %v1890 = vunpack.c.l.b16 %v149
  %v1891 = vunpack.c.h.b16 %v149
  %v1892 = vunpack.c.l.b16 %v150
  %v1893 = vunpack.c.h.b16 %v150
  %v1894 = vunpack.c.l.b16 %v151
  %v1895 = vunpack.c.h.b16 %v151
  %v1896 = vunpack.c.l.b16 %v152
  %v1897 = vunpack.c.h.b16 %v152
  %v1898 = vunpack.c.l.b16 %v153
  %v1899 = vunpack.c.h.b16 %v153
  %v1900 = vunpack.c.l.b16 %v154
  %v1901 = vunpack.c.h.b16 %v154
  %v1902 = vunpack.c.l.b16 %v155
  %v1903 = vunpack.c.h.b16 %v155
  %v1904 = vunpack.c.l.b16 %v156
  %v1905 = vunpack.c.h.b16 %v156
  %v1906 = vunpack.c.l.b16 %v157
  %v1907 = vunpack.c.h.b16 %v157
  %v1908 = vunpack.c.l.b16 %v158
  %v1909 = vunpack.c.h.b16 %v158
  %v1910 = vunpack.c.l.b16 %v159
  %v1911 = vunpack.c.h.b16 %v159
  %v1912 = vunpack.c.l.b16 %v160
  %v1913 = vunpack.c.h.b16 %v160
  %v1914 = vunpack.c.l.b16 %v161
  %v1915 = vunpack.c.h.b16 %v161
  %v1916 = vunpack.c.l.b16 %v162
  %v1917 = vunpack.c.h.b16 %v162
  %v1918 = vunpack.c.l.b16 %v163
  %v1919 = vunpack.c.h.b16 %v163
  %v1920 = vunpack.c.l.b16 %v164
  %v1921 = vunpack.c.h.b16 %v164
  %v1922 = vunpack.c.l.b16 %v165
  %v1923 = vunpack.c.h.b16 %v165
  %v1924 = vunpack.c.l.b16 %v166
  %v1925 = vunpack.c.h.b16 %v166
  %v1926 = vunpack.c.l.b16 %v167
  %v1927 = vunpack.c.h.b16 %v167
  %v1928 = vunpack.c.l.b16 %v168
  %v1929 = vunpack.c.h.b16 %v168
  %v1930 = vunpack.c.l.b16 %v169
  %v1931 = vunpack.c.h.b16 %v169
  %v1932 = vunpack.c.l.b16 %v170
  %v1933 = vunpack.c.h.b16 %v170
  %v1934 = vunpack.c.l.b16 %v171
  %v1935 = vunpack.c.h.b16 %v171
  %v1936 = vunpack.c.l.b16 %v172
  %v1937 = vunpack.c.h.b16 %v172
  %v1938 = vunpack.c.l.b16 %v173
  %v1939 = vunpack.c.h.b16 %v173
  %v1940 = vunpack.c.l.b16 %v174
  %v1941 = vunpack.c.h.b16 %v174
  %v1942 = vunpack.c.l.b16 %v175
  %v1943 = vunpack.c.h.b16 %v175
  %v1944 = vunpack.c.l.b16 %v176
  %v1945 = vunpack.c.h.b16 %v176
  %v1946 = vunpack.c.l.b16 %v177
  %v1947 = vunpack.c.h.b16 %v177
  %v1948 = vunpack.c.l.b16 %v178
  %v1949 = vunpack.c.h.b16 %v178
  %v1950 = vunpack.c.l.b16 %v179
  %v1951 = vunpack.c.h.b16 %v179
  %v1952 = vunpack.c.l.b16 %v180
  %v1953 = vunpack.c.h.b16 %v180
  %v1954 = vunpack.c.l.b16 %v181
  %v1955 = vunpack.c.h.b16 %v181
  %v1956 = vunpack.c.l.b16 %v182
  %v1957 = vunpack.c.h.b16 %v182
  %v1958 = vunpack.c.l.b16 %v183
  %v1959 = vunpack.c.h.b16 %v183
  %v1960 = vunpack.c.l.b16 %v184
  %v1961 = vunpack.c.h.b16 %v184
  %v1962 = vunpack.c.l.b16 %v185
  %v1963 = vunpack.c.h.b16 %v185
  %v1964 = vunpack.c.l.b16 %v186
  %v1965 = vunpack.c.h.b16 %v186
  %v1966 = vunpack.c.l.b16 %v187
  %v1967 = vunpack.c.h.b16 %v187
  %v1968 = vunpack.c.l.b16 %v188
  %v1969 = vunpack.c.h.b16 %v188
  %v1970 = vunpack.c.l.b16 %v189
  %v1971 = vunpack.c.h.b16 %v189
  %v1972 = vunpack.c.l.b16 %v190
  %v1973 = vunpack.c.h.b16 %v190
  %v1974 = vunpack.c.l.b16 %v191
  %v1975 = vunpack.c.h.b16 %v191
  %v1976 = vunpack.c.l.b16 %v192
  %v1977 = vunpack.c.h.b16 %v192
  %v1978 = vunpack.c.l.b16 %v193
  %v1979 = vunpack.c.h.b16 %v193
  %v1980 = vunpack.c.l.b16 %v194
  %v1981 = vunpack.c.h.b16 %v194
  %v1982 = vunpack.c.l.b16 %v195
  %v1983 = vunpack.c.h.b16 %v195
  %v1984 = vunpack.c.l.b16 %v196
  %v1985 = vunpack.c.h.b16 %v196
  %v1986 = vunpack.c.l.b16 %v197
  %v1987 = vunpack.c.h.b16 %v197
  %v1988 = vunpack.c.l.b16 %v198
  %v1989 = vunpack.c.h.b16 %v198
  %v1990 = vunpack.c.l.b16 %v199
  %v1991 = vunpack.c.h.b16 %v199
  %v1992 = vunpack.c.l.b16 %v200
  %v1993 = vunpack.c.h.b16 %v200
  %v1994 = vunpack.c.l.b16 %v201
  %v1995 = vunpack.c.h.b16 %v201
  %v1996 = vunpack.c.l.b16 %v202
  %v1997 = vunpack.c.h.b16 %v202
  %v1998 = vunpack.c.l.b16 %v203
  %v1999 = vunpack.c.h.b16 %v203
  %v2000 = vunpack.c.l.b16 %v204
  %v2001 = vunpack.c.h.b16 %v204
  %v2002 = vunpack.c.l.b16 %v205
  %v2003 = vunpack.c.h.b16 %v205
  %v2004 = vunpack.c.l.b16 %v206
  %v2005 = vunpack.c.h.b16 %v206
  %v2006 = vunpack.c.l.b16 %v207
  %v2007 = vunpack.c.h.b16 %v207
  %v2008 = vunpack.c.l.b16 %v208
  %v2009 = vunpack.c.h.b16 %v208
  %v2010 = vunpack.c.l.b16 %v209
  %v2011 = vunpack.c.h.b16 %v209
  %v2012 = vunpack.c.l.b16 %v210
  %v2013 = vunpack.c.h.b16 %v210
  %v2014 = vunpack.c.l.b16 %v211
  %v2015 = vunpack.c.h.b16 %v211
  %v2016 = vunpack.c.l.b16 %v212
  %v2017 = vunpack.c.h.b16 %v212
  %v2018 = vunpack.c.l.b16 %v213
  %v2019 = vunpack.c.h.b16 %v213
  %v2020 = vunpack.c.l.b16 %v214
  %v2021 = vunpack.c.h.b16 %v214
  %v2022 = vunpack.c.l.b16 %v215
  %v2023 = vunpack.c.h.b16 %v215
  %v2024 = vunpack.c.l.b16 %v216
  %v2025 = vunpack.c.h.b16 %v216
  %v2026 = vunpack.c.l.b16 %v217
  %v2027 = vunpack.c.h.b16 %v217
  %v2028 = vunpack.c.l.b16 %v218
  %v2029 = vunpack.c.h.b16 %v218
  %v2030 = vunpack.c.l.b16 %v219
  %v2031 = vunpack.c.h.b16 %v219
  %v2032 = vunpack.c.l.b16 %v220
  %v2033 = vunpack.c.h.b16 %v220
  %v2034 = vunpack.c.l.b16 %v221
  %v2035 = vunpack.c.h.b16 %v221
  %v2036 = vunpack.c.l.b16 %v222
  %v2037 = vunpack.c.h.b16 %v222
  %v2038 = vunpack.c.l.b16 %v223
  %v2039 = vunpack.c.h.b16 %v223
  %v2040 = vunpack.c.l.b16 %v224
  %v2041 = vunpack.c.h.b16 %v224
  %v2042 = vunpack.c.l.b16 %v225
  %v2043 = vunpack.c.h.b16 %v225
  %v2044 = vunpack.c.l.b16 %v226
  %v2045 = vunpack.c.h.b16 %v226
  %v2046 = vunpack.c.l.b16 %v227
  %v2047 = vunpack.c.h.b16 %v227
  %v2048 = vunpack.c.l.b16 %v228
  %v2049 = vunpack.c.h.b16 %v228
  %v2050 = vunpack.c.l.b16 %v229
  %v2051 = vunpack.c.h.b16 %v229
  %v2052 = vunpack.c.l.b16 %v230
  %v2053 = vunpack.c.h.b16 %v230
  %v2054 = vunpack.c.l.b16 %v231
  %v2055 = vunpack.c.h.b16 %v231
  %v2056 = vunpack.c.l.b16 %v232
  %v2057 = vunpack.c.h.b16 %v232
  %v2058 = vunpack.c.l.b16 %v233
  %v2059 = vunpack.c.h.b16 %v233
  %v2060 = vunpack.c.l.b16 %v234
  %v2061 = vunpack.c.h.b16 %v234
  %v2062 = vunpack.c.l.b16 %v235
  %v2063 = vunpack.c.h.b16 %v235
  %v2064 = vunpack.c.l.b16 %v236
  %v2065 = vunpack.c.h.b16 %v236
  %v2066 = vunpack.c.l.b16 %v237
  %v2067 = vunpack.c.h.b16 %v237
  %v2068 = vunpack.c.l.b16 %v238
  %v2069 = vunpack.c.h.b16 %v238
  %v2070 = vunpack.c.l.b16 %v239
  %v2071 = vunpack.c.h.b16 %v239
  %v2072 = vunpack.c.l.b16 %v240
  %v2073 = vunpack.c.h.b16 %v240
  %v2074 = vunpack.c.l.b16 %v241
  %v2075 = vunpack.c.h.b16 %v241
  %v2076 = vunpack.c.l.b16 %v242
  %v2077 = vunpack.c.h.b16 %v242
  %v2078 = vunpack.c.l.b16 %v243
  %v2079 = vunpack.c.h.b16 %v243
  %v2080 = vunpack.c.l.b16 %v244
  %v2081 = vunpack.c.h.b16 %v244
  %v2082 = vunpack.c.l.b16 %v245
  %v2083 = vunpack.c.h.b16 %v245
  %v2084 = vunpack.c.l.b16 %v246
  %v2085 = vunpack.c.h.b16 %v246
  %v2086 = vunpack.c.l.b16 %v247
  %v2087 = vunpack.c.h.b16 %v247
  %v2088 = vunpack.c.l.b16 %v248
  %v2089 = vunpack.c.h.b16 %v248
  %v2090 = vunpack.c.l.b16 %v249
  %v2091 = vunpack.c.h.b16 %v249
  %v2092 = vunpack.c.l.b16 %v250
  %v2093 = vunpack.c.h.b16 %v250
  %v2094 = vunpack.c.l.b16 %v251
  %v2095 = vunpack.c.h.b16 %v251
  %v2096 = vunpack.c.l.b16 %v252
  %v2097 = vunpack.c.h.b16 %v252
  %v2098 = vunpack.c.l.b16 %v253
  %v2099 = vunpack.c.h.b16 %v253
  %v2100 = vunpack.c.l.b16 %v254
  %v2101 = vunpack.c.h.b16 %v254
  %v2102 = vunpack.c.l.b16 %v255
  %v2103 = vunpack.c.h.b16 %v255
  %v2104 = vunpack.c.l.b16 %v256
  %v2105 = vunpack.c.h.b16 %v256
  %v2106 = vunpack.c.l.b16 %v257
  %v2107 = vunpack.c.h.b16 %v257
  %v2108 = vunpack.c.l.b16 %v258
  %v2109 = vunpack.c.h.b16 %v258
  %v2110 = vunpack.c.l.b16 %v259
  %v2111 = vunpack.c.h.b16 %v259
  %v2112 = vunpack.c.l.b16 %v260
  %v2113 = vunpack.c.h.b16 %v260
  %v2114 = vunpack.c.l.b16 %v261
  %v2115 = vunpack.c.h.b16 %v261
  %v2116 = vunpack.c.l.b16 %v262
  %v2117 = vunpack.c.h.b16 %v262
  %v2118 = vunpack.c.l.b16 %v263
  %v2119 = vunpack.c.h.b16 %v263
  %v2120 = vunpack.c.l.b16 %v264
  %v2121 = vunpack.c.h.b16 %v264
  %v2122 = vunpack.c.l.b16 %v265
  %v2123 = vunpack.c.h.b16 %v265
  %v2124 = vunpack.c.l.b16 %v266
  %v2125 = vunpack.c.h.b16 %v266
  %v2126 = vunpack.c.l.b16 %v267
  %v2127 = vunpack.c.h.b16 %v267
  %v2128 = vunpack.c.l.b16 %v268
  %v2129 = vunpack.c.h.b16 %v268
  %v2130 = vunpack.c.l.b16 %v269
  %v2131 = vunpack.c.h.b16 %v269
  %v2132 = vunpack.c.l.b16 %v270
  %v2133 = vunpack.c.h.b16 %v270
  %v2134 = vunpack.c.l.b16 %v271
  %v2135 = vunpack.c.h.b16 %v271
  %v2136 = vunpack.c.l.b16 %v272
  %v2137 = vunpack.c.h.b16 %v272
  %v2138 = vunpack.c.l.b16 %v273
  %v2139 = vunpack.c.h.b16 %v273
  %v2140 = vunpack.c.l.b16 %v274
  %v2141 = vunpack.c.h.b16 %v274
  %v2142 = vunpack.c.l.b16 %v275
  %v2143 = vunpack.c.h.b16 %v275
  %v2144 = vunpack.c.l.b16 %v276
  %v2145 = vunpack.c.h.b16 %v276
  %v2146 = vunpack.c.l.b16 %v277
  %v2147 = vunpack.c.h.b16 %v277
  %v2148 = vunpack.c.l.b16 %v278
  %v2149 = vunpack.c.h.b16 %v278
  %v2150 = vunpack.c.l.b16 %v279
  %v2151 = vunpack.c.h.b16 %v279
  %v2152 = vunpack.c.l.b16 %v280
  %v2153 = vunpack.c.h.b16 %v280
  %v2154 = vunpack.c.l.b16 %v281
  %v2155 = vunpack.c.h.b16 %v281
  %v2156 = vunpack.c.l.b16 %v282
  %v2157 = vunpack.c.h.b16 %v282
  %v2158 = vunpack.c.l.b16 %v283
  %v2159 = vunpack.c.h.b16 %v283
  %v2160 = vunpack.c.l.b16 %v284
  %v2161 = vunpack.c.h.b16 %v284
  %v2162 = vunpack.c.l.b16 %v285
  %v2163 = vunpack.c.h.b16 %v285
  %v2164 = vunpack.c.l.b16 %v286
  %v2165 = vunpack.c.h.b16 %v286
  %v2166 = vunpack.c.l.b16 %v287
  %v2167 = vunpack.c.h.b16 %v287
  %v2168 = vunpack.c.l.b16 %v288
  %v2169 = vunpack.c.h.b16 %v288
  %v2170 = vunpack.c.l.b16 %v289
  %v2171 = vunpack.c.h.b16 %v289
  %v2172 = vunpack.c.l.b16 %v290
  %v2173 = vunpack.c.h.b16 %v290
  %v2174 = vunpack.c.l.b16 %v291
  %v2175 = vunpack.c.h.b16 %v291
  %v2176 = vunpack.c.l.b16 %v292
  %v2177 = vunpack.c.h.b16 %v292
  %v2178 = vunpack.c.l.b16 %v293
  %v2179 = vunpack.c.h.b16 %v293
  %v2180 = vunpack.c.l.b16 %v294
  %v2181 = vunpack.c.h.b16 %v294
  %v2182 = vunpack.c.l.b16 %v295
  %v2183 = vunpack.c.h.b16 %v295
  %v2184 = vunpack.c.l.b16 %v296
  %v2185 = vunpack.c.h.b16 %v296
  %v2186 = vunpack.c.l.b16 %v297
  %v2187 = vunpack.c.h.b16 %v297
  %v2188 = vunpack.c.l.b16 %v298
  %v2189 = vunpack.c.h.b16 %v298
  %v2190 = vunpack.c.l.b16 %v299
  %v2191 = vunpack.c.h.b16 %v299
  %v2192 = vunpack.c.l.b16 %v300
  %v2193 = vunpack.c.h.b16 %v300
  %v2194 = vunpack.c.l.b16 %v301
  %v2195 = vunpack.c.h.b16 %v301
  %v2196 = vunpack.c.l.b16 %v302
  %v2197 = vunpack.c.h.b16 %v302
  %v2198 = vunpack.c.l.b16 %v303
  %v2199 = vunpack.c.h.b16 %v303
  %v2200 = vunpack.c.l.b16 %v304
  %v2201 = vunpack.c.h.b16 %v304
  %v2202 = vunpack.c.l.b16 %v305
  %v2203 = vunpack.c.h.b16 %v305
  %v2204 = vunpack.c.l.b16 %v306
  %v2205 = vunpack.c.h.b16 %v306
  %v2206 = vunpack.c.l.b16 %v307
  %v2207 = vunpack.c.h.b16 %v307
  %v2208 = vunpack.c.l.b16 %v308
  %v2209 = vunpack.c.h.b16 %v308
  %v2210 = vunpack.c.l.b16 %v309
  %v2211 = vunpack.c.h.b16 %v309
  %v2212 = vunpack.c.l.b16 %v310
  %v2213 = vunpack.c.h.b16 %v310
  %v2214 = vunpack.c.l.b16 %v311
  %v2215 = vunpack.c.h.b16 %v311
  %v2216 = vunpack.c.l.b16 %v312
  %v2217 = vunpack.c.h.b16 %v312
  %v2218 = vunpack.c.l.b16 %v313
  %v2219 = vunpack.c.h.b16 %v313
  %v2220 = vunpack.c.l.b16 %v314
  %v2221 = vunpack.c.h.b16 %v314
  %v2222 = vunpack.c.l.b16 %v315
  %v2223 = vunpack.c.h.b16 %v315
  %v2224 = vunpack.c.l.b16 %v316
  %v2225 = vunpack.c.h.b16 %v316
  %v2226 = vunpack.c.l.b16 %v317
  %v2227 = vunpack.c.h.b16 %v317
  %v2228 = vunpack.c.l.b16 %v318
  %v2229 = vunpack.c.h.b16 %v318
  %v2230 = vunpack.c.l.b16 %v319
  %v2231 = vunpack.c.h.b16 %v319
  %v2232 = vunpack.c.l.b16 %v320
  %v2233 = vunpack.c.h.b16 %v320
  %v2234 = vunpack.c.l.b16 %v321
  %v2235 = vunpack.c.h.b16 %v321
  %v2236 = vunpack.c.l.b16 %v322
  %v2237 = vunpack.c.h.b16 %v322
  %v2238 = vunpack.c.l.b16 %v323
  %v2239 = vunpack.c.h.b16 %v323
  %v2240 = vunpack.c.l.b16 %v324
  %v2241 = vunpack.c.h.b16 %v324
  %v2242 = vunpack.c.l.b16 %v325
  %v2243 = vunpack.c.h.b16 %v325
  %v2244 = vunpack.c.l.b16 %v326
  %v2245 = vunpack.c.h.b16 %v326
  %v2246 = vunpack.c.l.b16 %v327
  %v2247 = vunpack.c.h.b16 %v327
  %v2248 = vunpack.c.l.b16 %v328
  %v2249 = vunpack.c.h.b16 %v328
  %v2250 = vunpack.c.l.b16 %v329
  %v2251 = vunpack.c.h.b16 %v329
  %v2252 = vunpack.c.l.b16 %v330
  %v2253 = vunpack.c.h.b16 %v330
  %v2254 = vunpack.c.l.b16 %v331
  %v2255 = vunpack.c.h.b16 %v331
  %v2256 = vunpack.c.l.b16 %v332
  %v2257 = vunpack.c.h.b16 %v332
  %v2258 = vunpack.c.l.b16 %v333
  %v2259 = vunpack.c.h.b16 %v333
  %v2260 = vunpack.c.l.b16 %v334
  %v2261 = vunpack.c.h.b16 %v334
  %v2262 = vunpack.c.l.b16 %v335
  %v2263 = vunpack.c.h.b16 %v335
  %v2264 = vunpack.c.l.b16 %v336
  %v2265 = vunpack.c.h.b16 %v336
  %v2266 = vunpack.c.l.b16 %v337
  %v2267 = vunpack.c.h.b16 %v337
  %v2268 = vunpack.c.l.b16 %v338
  %v2269 = vunpack.c.h.b16 %v338
  %v2270 = vunpack.c.l.b16 %v339
  %v2271 = vunpack.c.h.b16 %v339
  %v2272 = vunpack.c.l.b16 %v340
  %v2273 = vunpack.c.h.b16 %v340
  %v2274 = vunpack.c.l.b16 %v341
  %v2275 = vunpack.c.h.b16 %v341
  %v2276 = vunpack.c.l.b16 %v342
  %v2277 = vunpack.c.h.b16 %v342
  %v2278 = vunpack.c.l.b16 %v343
  %v2279 = vunpack.c.h.b16 %v343
  %v2280 = vunpack.c.l.b16 %v344
  %v2281 = vunpack.c.h.b16 %v344
  %v2282 = vunpack.c.l.b16 %v345
  %v2283 = vunpack.c.h.b16 %v345
  %v2284 = vunpack.c.l.b16 %v346
  %v2285 = vunpack.c.h.b16 %v346
  %v2286 = vunpack.c.l.b16 %v347
  %v2287 = vunpack.c.h.b16 %v347
  %v2288 = vunpack.c.l.b16 %v348
  %v2289 = vunpack.c.h.b16 %v348
  %v2290 = vunpack.c.l.b16 %v349
  %v2291 = vunpack.c.h.b16 %v349
  %v2292 = vunpack.c.l.b16 %v350
  %v2293 = vunpack.c.h.b16 %v350
  %v2294 = vunpack.c.l.b16 %v351
  %v2295 = vunpack.c.h.b16 %v351
  %v2296 = vunpack.c.l.b16 %v352
  %v2297 = vunpack.c.h.b16 %v352
  %v2298 = vunpack.c.l.b16 %v353
  %v2299 = vunpack.c.h.b16 %v353
  %v2300 = vunpack.c.l.b16 %v354
  %v2301 = vunpack.c.h.b16 %v354
  %v2302 = vunpack.c.l.b16 %v355
  %v2303 = vunpack.c.h.b16 %v355
  %v2304 = vunpack.c.l.b16 %v356
  %v2305 = vunpack.c.h.b16 %v356
  %v2306 = vunpack.c.l.b16 %v357
  %v2307 = vunpack.c.h.b16 %v357
  %v2308 = vunpack.c.l.b16 %v358
  %v2309 = vunpack.c.h.b16 %v358
  %v2310 = vunpack.c.l.b16 %v359
  %v2311 = vunpack.c.h.b16 %v359
  %v2312 = vunpack.c.l.b16 %v360
  %v2313 = vunpack.c.h.b16 %v360
  %v2314 = vunpack.c.l.b16 %v361
  %v2315 = vunpack.c.h.b16 %v361
  %v2316 = vunpack.c.l.b16 %v362
  %v2317 = vunpack.c.h.b16 %v362
  %v2318 = vunpack.c.l.b16 %v363
  %v2319 = vunpack.c.h.b16 %v363
  %v2320 = vunpack.c.l.b16 %v364
  %v2321 = vunpack.c.h.b16 %v364
  %v2322 = vunpack.c.l.b16 %v365
  %v2323 = vunpack.c.h.b16 %v365
  %v2324 = vunpack.c.l.b16 %v366
  %v2325 = vunpack.c.h.b16 %v366
  %v2326 = vunpack.c.l.b16 %v367
  %v2327 = vunpack.c.h.b16 %v367
  %v2328 = vunpack.c.l.b16 %v368
  %v2329 = vunpack.c.h.b16 %v368
  %v2330 = vunpack.c.l.b16 %v369
  %v2331 = vunpack.c.h.b16 %v369
  %v2332 = vunpack.c.l.b16 %v370
  %v2333 = vunpack.c.h.b16 %v370
  %v2334 = vunpack.c.l.b16 %v371
  %v2335 = vunpack.c.h.b16 %v371
  %v2336 = vunpack.c.l.b16 %v372
  %v2337 = vunpack.c.h.b16 %v372
  %v2338 = vunpack.c.l.b16 %v373
  %v2339 = vunpack.c.h.b16 %v373
  %v2340 = vunpack.c.l.b16 %v374
  %v2341 = vunpack.c.h.b16 %v374
  %v2342 = vunpack.c.l.b16 %v375
  %v2343 = vunpack.c.h.b16 %v375
  %v2344 = vunpack.c.l.b16 %v376
  %v2345 = vunpack.c.h.b16 %v376
  %v2346 = vunpack.c.l.b16 %v377
  %v2347 = vunpack.c.h.b16 %v377
  %v2348 = vunpack.c.l.b16 %v378
  %v2349 = vunpack.c.h.b16 %v378
  %v2350 = vunpack.c.l.b16 %v379
  %v2351 = vunpack.c.h.b16 %v379
  %v2352 = vunpack.c.l.b16 %v380
  %v2353 = vunpack.c.h.b16 %v380
  %v2354 = vunpack.c.l.b16 %v381
  %v2355 = vunpack.c.h.b16 %v381
  %v2356 = vunpack.c.l.b16 %v382
  %v2357 = vunpack.c.h.b16 %v382
  %v2358 = vunpack.c.l.b16 %v383
  %v2359 = vunpack.c.h.b16 %v383
  %v2360 = vunpack.c.l.b16 %v384
  %v2361 = vunpack.c.h.b16 %v384
  %v2362 = vunpack.c.l.b16 %v385
  %v2363 = vunpack.c.h.b16 %v385
  %v2364 = vunpack.c.l.b16 %v386
  %v2365 = vunpack.c.h.b16 %v386
  %v2366 = vunpack.c.l.b16 %v387
  %v2367 = vunpack.c.h.b16 %v387
  %v2368 = vunpack.c.l.b16 %v388
  %v2369 = vunpack.c.h.b16 %v388
  %v2370 = vunpack.c.l.b16 %v389
  %v2371 = vunpack.c.h.b16 %v389
  %v2372 = vunpack.c.l.b16 %v390
  %v2373 = vunpack.c.h.b16 %v390
  %v2374 = vunpack.c.l.b16 %v391
  %v2375 = vunpack.c.h.b16 %v391
  %v2376 = vunpack.c.l.b16 %v392
  %v2377 = vunpack.c.h.b16 %v392
  %v2378 = vunpack.c.l.b16 %v393
  %v2379 = vunpack.c.h.b16 %v393
  %v2380 = vunpack.c.l.b16 %v394
  %v2381 = vunpack.c.h.b16 %v394
  %v2382 = vunpack.c.l.b16 %v395
  %v2383 = vunpack.c.h.b16 %v395
  %v2384 = vunpack.c.l.b16 %v396
  %v2385 = vunpack.c.h.b16 %v396
  %v2386 = vunpack.c.l.b16 %v397
  %v2387 = vunpack.c.h.b16 %v397
  %v2388 = vunpack.c.l.b16 %v398
  %v2389 = vunpack.c.h.b16 %v398
  %v2390 = vunpack.c.l.b16 %v399
  %v2391 = vunpack.c.h.b16 %v399
  %v2392 = vunpack.c.l.b16 %v400
  %v2393 = vunpack.c.h.b16 %v400
  %v2394 = vunpack.c.l.b16 %v401
  %v2395 = vunpack.c.h.b16 %v401
  %v2396 = vunpack.c.l.b16 %v402
  %v2397 = vunpack.c.h.b16 %v402
  %v2398 = vunpack.c.l.b16 %v403
  %v2399 = vunpack.c.h.b16 %v403
  %v2400 = vunpack.c.l.b16 %v404
  %v2401 = vunpack.c.h.b16 %v404
  %v2402 = vunpack.c.l.b16 %v405
  %v2403 = vunpack.c.h.b16 %v405
  %v2404 = vunpack.c.l.b16 %v406
  %v2405 = vunpack.c.h.b16 %v406
  %v2406 = vunpack.c.l.b16 %v407
  %v2407 = vunpack.c.h.b16 %v407
  %v2408 = vunpack.c.l.b16 %v408
  %v2409 = vunpack.c.h.b16 %v408
  %v2410 = vunpack.c.l.b16 %v409
  %v2411 = vunpack.c.h.b16 %v409
  %v2412 = vunpack.c.l.b16 %v410
  %v2413 = vunpack.c.h.b16 %v410
  %v2414 = vunpack.c.l.b16 %v411
  %v2415 = vunpack.c.h.b16 %v411
  %v2416 = vunpack.c.l.b16 %v412
  %v2417 = vunpack.c.h.b16 %v412
  %v2418 = vunpack.c.l.b16 %v413
  %v2419 = vunpack.c.h.b16 %v413
  %v2420 = vunpack.c.l.b16 %v414
  %v2421 = vunpack.c.h.b16 %v414
  %v2422 = vpack.c.b16 %v1672, %v1622
  %v2423 = vpack.c.b16 %v1673, %v1623
  %v2424 = vpack.c.b16 %v1674, %v1624
  %v2425 = vpack.c.b16 %v1675, %v1625
  %v2426 = vpack.c.b16 %v1676, %v1626
  %v2427 = vpack.c.b16 %v1677, %v1627
  %v2428 = vpack.c.b16 %v1678, %v1628
  %v2429 = vpack.c.b16 %v1679, %v1629
  %v2430 = vpack.c.b16 %v1680, %v1630
  %v2431 = vpack.c.b16 %v1681, %v1631
  %v2432 = vpack.c.b16 %v1682, %v1632
  %v2433 = vpack.c.b16 %v1683, %v1633
  %v2434 = vpack.c.b16 %v1684, %v1634
  %v2435 = vpack.c.b16 %v1685, %v1635
  %v2436 = vpack.c.b16 %v1686, %v1636
  %v2437 = vpack.c.b16 %v1687, %v1637
  %v2438 = vpack.c.b16 %v1688, %v1638
  %v2439 = vpack.c.b16 %v1689, %v1639
  %v2440 = vpack.c.b16 %v1690, %v1640
  %v2441 = vpack.c.b16 %v1691, %v1641
  %v2442 = vpack.c.b16 %v1692, %v1642
  %v2443 = vpack.c.b16 %v1693, %v1643
  %v2444 = vpack.c.b16 %v1694, %v1644
  %v2445 = vpack.c.b16 %v1695, %v1645
  %v2446 = vpack.c.b16 %v1696, %v1646
  %v2447 = vpack.c.b16 %v1697, %v1647
  %v2448 = vpack.c.b16 %v1698, %v1648
  %v2449 = vpack.c.b16 %v1699, %v1649
  %v2450 = vpack.c.b16 %v1700, %v1650
  %v2451 = vpack.c.b16 %v1701, %v1651
  %v2452 = vpack.c.b16 %v1702, %v1652
  %v2453 = vpack.c.b16 %v1703, %v1653
  %v2454 = vpack.c.b16 %v1704, %v1654
  %v2455 = vpack.c.b16 %v1705, %v1655
  %v2456 = vpack.c.b16 %v1706, %v1656
  %v2457 = vpack.c.b16 %v1707, %v1657
  %v2458 = vpack.c.b16 %v1708, %v1658
  %v2459 = vpack.c.b16 %v1709, %v1659
  %v2460 = vpack.c.b16 %v1710, %v1660
  %v2461 = vpack.c.b16 %v1711, %v1661
  %v2462 = vpack.c.b16 %v1712, %v1662
  %v2463 = vpack.c.b16 %v1713, %v1663
  %v2464 = vpack.c.b16 %v1714, %v1664
  %v2465 = vpack.c.b16 %v1715, %v1665
  %v2466 = vpack.c.b16 %v1716, %v1666
  %v2467 = vpack.c.b16 %v1717, %v1667
  %v2468 = vpack.c.b16 %v1718, %v1668
  %v2469 = vpack.c.b16 %v1719, %v1669
  %v2470 = vpack.c.b16 %v1720, %v1670
  %v2471 = vpack.c.b16 %v1721, %v1671
  %v2472 = vpack.c.b16 %v1772, %v1722
  %v2473 = vpack.c.b16 %v1773, %v1723
  %v2474 = vpack.c.b16 %v1774, %v1724
  %v2475 = vpack.c.b16 %v1775, %v1725
  %v2476 = vpack.c.b16 %v1776, %v1726
  %v2477 = vpack.c.b16 %v1777, %v1727
  %v2478 = vpack.c.b16 %v1778, %v1728
  %v2479 = vpack.c.b16 %v1779, %v1729
  %v2480 = vpack.c.b16 %v1780, %v1730
  %v2481 = vpack.c.b16 %v1781, %v1731
  %v2482 = vpack.c.b16 %v1782, %v1732
  %v2483 = vpack.c.b16 %v1783, %v1733
  %v2484 = vpack.c.b16 %v1784, %v1734
  %v2485 = vpack.c.b16 %v1785, %v1735
  %v2486 = vpack.c.b16 %v1786, %v1736
  %v2487 = vpack.c.b16 %v1787, %v1737
  %v2488 = vpack.c.b16 %v1788, %v1738
  %v2489 = vpack.c.b16 %v1789, %v1739
  %v2490 = vpack.c.b16 %v1790, %v1740
  %v2491 = vpack.c.b16 %v1791, %v1741
  %v2492 = vpack.c.b16 %v1792, %v1742
  %v2493 = vpack.c.b16 %v1793, %v1743
  %v2494 = vpack.c.b16 %v1794, %v1744
  %v2495 = vpack.c.b16 %v1795, %v1745
  %v2496 = vpack.c.b16 %v1796, %v1746
  %v2497 = vpack.c.b16 %v1797, %v1747
  %v2498 = vpack.c.b16 %v1798, %v1748
  %v2499 = vpack.c.b16 %v1799, %v1749
  %v2500 = vpack.c.b16 %v1800, %v1750
  %v2501 = vpack.c.b16 %v1801, %v1751
  %v2502 = vpack.c.b16 %v1802, %v1752
  %v2503 = vpack.c.b16 %v1803, %v1753
  %v2504 = vpack.c.b16 %v1804, %v1754
  %v2505 = vpack.c.b16 %v1805, %v1755
  %v2506 = vpack.c.b16 %v1806, %v1756
  %v2507 = vpack.c.b16 %v1807, %v1757
  %v2508 = vpack.c.b16 %v1808, %v1758
  %v2509 = vpack.c.b16 %v1809, %v1759
  %v2510 = vpack.c.b16 %v1810, %v1760
  %v2511 = vpack.c.b16 %v1811, %v1761
  %v2512 = vpack.c.b16 %v1812, %v1762
  %v2513 = vpack.c.b16 %v1813, %v1763
  %v2514 = vpack.c.b16 %v1814, %v1764
  %v2515 = vpack.c.b16 %v1815, %v1765
  %v2516 = vpack.c.b16 %v1816, %v1766
  %v2517 = vpack.c.b16 %v1817, %v1767
  %v2518 = vpack.c.b16 %v1818, %v1768
  %v2519 = vpack.c.b16 %v1819, %v1769
  %v2520 = vpack.c.b16 %v1820, %v1770
  %v2521 = vpack.c.b16 %v1821, %v1771
  %v2522 = vpack.c.b16 %v1872, %v1822
  %v2523 = vpack.c.b16 %v1873, %v1823
  %v2524 = vpack.c.b16 %v1874, %v1824
  %v2525 = vpack.c.b16 %v1875, %v1825
  %v2526 = vpack.c.b16 %v1876, %v1826
  %v2527 = vpack.c.b16 %v1877, %v1827
  %v2528 = vpack.c.b16 %v1878, %v1828
  %v2529 = vpack.c.b16 %v1879, %v1829
  %v2530 = vpack.c.b16 %v1880, %v1830
  %v2531 = vpack.c.b16 %v1881, %v1831
  %v2532 = vpack.c.b16 %v1882, %v1832
  %v2533 = vpack.c.b16 %v1883, %v1833
  %v2534 = vpack.c.b16 %v1884, %v1834
  %v2535 = vpack.c.b16 %v1885, %v1835
  %v2536 = vpack.c.b16 %v1886, %v1836
  %v2537 = vpack.c.b16 %v1887, %v1837
  %v2538 = vpack.c.b16 %v1888, %v1838
  %v2539 = vpack.c.b16 %v1889, %v1839
  %v2540 = vpack.c.b16 %v1890, %v1840
  %v2541 = vpack.c.b16 %v1891, %v1841
  %v2542 = vpack.c.b16 %v1892, %v1842
  %v2543 = vpack.c.b16 %v1893, %v1843
  %v2544 = vpack.c.b16 %v1894, %v1844
  %v2545 = vpack.c.b16 %v1895, %v1845
  %v2546 = vpack.c.b16 %v1896, %v1846
  %v2547 = vpack.c.b16 %v1897, %v1847
  %v2548 = vpack.c.b16 %v1898, %v1848
  %v2549 = vpack.c.b16 %v1899, %v1849
  %v2550 = vpack.c.b16 %v1900, %v1850
  %v2551 = vpack.c.b16 %v1901, %v1851
  %v2552 = vpack.c.b16 %v1902, %v1852
  %v2553 = vpack.c.b16 %v1903, %v1853
  %v2554 = vpack.c.b16 %v1904, %v1854
  %v2555 = vpack.c.b16 %v1905, %v1855
  %v2556 = vpack.c.b16 %v1906, %v1856
  %v2557 = vpack.c.b16 %v1907, %v1857
  %v2558 = vpack.c.b16 %v1908, %v1858
  %v2559 = vpack.c.b16 %v1909, %v1859
  %v2560 = vpack.c.b16 %v1910, %v1860
  %v2561 = vpack.c.b16 %v1911, %v1861
  %v2562 = vpack.c.b16 %v1912, %v1862
  %v2563 = vpack.c.b16 %v1913, %v1863
  %v2564 = vpack.c.b16 %v1914, %v1864
  %v2565 = vpack.c.b16 %v1915, %v1865
  %v2566 = vpack.c.b16 %v1916, %v1866
  %v2567 = vpack.c.b16 %v1917, %v1867
  %v2568 = vpack.c.b16 %v1918, %v1868
  %v2569 = vpack.c.b16 %v1919, %v1869
  %v2570 = vpack.c.b16 %v1920, %v1870
  %v2571 = vpack.c.b16 %v1921, %v1871
  %v2572 = vpack.c.b16 %v1972, %v1922
  %v2573 = vpack.c.b16 %v1973, %v1923
  %v2574 = vpack.c.b16 %v1974, %v1924
  %v2575 = vpack.c.b16 %v1975, %v1925
  %v2576 = vpack.c.b16 %v1976, %v1926
  %v2577 = vpack.c.b16 %v1977, %v1927
  %v2578 = vpack.c.b16 %v1978, %v1928
  %v2579 = vpack.c.b16 %v1979, %v1929
  %v2580 = vpack.c.b16 %v1980, %v1930
  %v2581 = vpack.c.b16 %v1981, %v1931
  %v2582 = vpack.c.b16 %v1982, %v1932
  %v2583 = vpack.c.b16 %v1983, %v1933
  %v2584 = vpack.c.b16 %v1984, %v1934
  %v2585 = vpack.c.b16 %v1985, %v1935
  %v2586 = vpack.c.b16 %v1986, %v1936
  %v2587 = vpack.c.b16 %v1987, %v1937
  %v2588 = vpack.c.b16 %v1988, %v1938
  %v2589 = vpack.c.b16 %v1989, %v1939
  %v2590 = vpack.c.b16 %v1990, %v1940
  %v2591 = vpack.c.b16 %v1991, %v1941
  %v2592 = vpack.c.b16 %v1992, %v1942
  %v2593 = vpack.c.b16 %v1993, %v1943
  %v2594 = vpack.c.b16 %v1994, %v1944
  %v2595 = vpack.c.b16 %v1995, %v1945
  %v2596 = vpack.c.b16 %v1996, %v1946
  %v2597 = vpack.c.b16 %v1997, %v1947
  %v2598 = vpack.c.b16 %v1998, %v1948
  %v2599 = vpack.c.b16 %v1999, %v1949
  %v2600 = vpack.c.b16 %v2000, %v1950
  %v2601 = vpack.c.b16 %v2001, %v1951
  %v2602 = vpack.c.b16 %v2002, %v1952
  %v2603 = vpack.c.b16 %v2003, %v1953
  %v2604 = vpack.c.b16 %v2004, %v1954
  %v2605 = vpack.c.b16 %v2005, %v1955
  %v2606 = vpack.c.b16 %v2006, %v1956
  %v2607 = vpack.c.b16 %v2007, %v1957
  %v2608 = vpack.c.b16 %v2008, %v1958
  %v2609 = vpack.c.b16 %v2009, %v1959
  %v2610 = vpack.c.b16 %v2010, %v1960
  %v2611 = vpack.c.b16 %v2011, %v1961
  %v2612 = vpack.c.b16 %v2012, %v1962
  %v2613 = vpack.c.b16 %v2013, %v1963
  %v2614 = vpack.c.b16 %v2014, %v1964
  %v2615 = vpack.c.b16 %v2015, %v1965
  %v2616 = vpack.c.b16 %v2016, %v1966
  %v2617 = vpack.c.b16 %v2017, %v1967
  %v2618 = vpack.c.b16 %v2018, %v1968
  %v2619 = vpack.c.b16 %v2019, %v1969
  %v2620 = vpack.c.b16 %v2020, %v1970
  %v2621 = vpack.c.b16 %v2021, %v1971
  %v2622 = vpack.c.b16 %v2072, %v2022
  %v2623 = vpack.c.b16 %v2073, %v2023
  %v2624 = vpack.c.b16 %v2074, %v2024
  %v2625 = vpack.c.b16 %v2075, %v2025
  %v2626 = vpack.c.b16 %v2076, %v2026
  %v2627 = vpack.c.b16 %v2077, %v2027
  %v2628 = vpack.c.b16 %v2078, %v2028
  %v2629 = vpack.c.b16 %v2079, %v2029
  %v2630 = vpack.c.b16 %v2080, %v2030
  %v2631 = vpack.c.b16 %v2081, %v2031
  %v2632 = vpack.c.b16 %v2082, %v2032
  %v2633 = vpack.c.b16 %v2083, %v2033
  %v2634 = vpack.c.b16 %v2084, %v2034
  %v2635 = vpack.c.b16 %v2085, %v2035
  %v2636 = vpack.c.b16 %v2086, %v2036
  %v2637 = vpack.c.b16 %v2087, %v2037
  %v2638 = vpack.c.b16 %v2088, %v2038
  %v2639 = vpack.c.b16 %v2089, %v2039
  %v2640 = vpack.c.b16 %v2090, %v2040
  %v2641 = vpack.c.b16 %v2091, %v2041
  %v2642 = vpack.c.b16 %v2092, %v2042
  %v2643 = vpack.c.b16 %v2093, %v2043
  %v2644 = vpack.c.b16 %v2094, %v2044
  %v2645 = vpack.c.b16 %v2095, %v2045
  %v2646 = vpack.c.b16 %v2096, %v2046
  %v2647 = vpack.c.b16 %v2097, %v2047
  %v2648 = vpack.c.b16 %v2098, %v2048
  %v2649 = vpack.c.b16 %v2099, %v2049
  %v2650 = vpack.c.b16 %v2100, %v2050
  %v2651 = vpack.c.b16 %v2101, %v2051
  %v2652 = vpack.c.b16 %v2102, %v2052
  %v2653 = vpack.c.b16 %v2103, %v2053
  %v2654 = vpack.c.b16 %v2104, %v2054
  %v2655 = vpack.c.b16 %v2105, %v2055
  %v2656 = vpack.c.b16 %v2106, %v2056
  %v2657 = vpack.c.b16 %v2107, %v2057
  %v2658 = vpack.c.b16 %v2108, %v2058
  %v2659 = vpack.c.b16 %v2109, %v2059
  %v2660 = vpack.c.b16 %v2110, %v2060
  %v2661 = vpack.c.b16 %v2111, %v2061
  %v2662 = vpack.c.b16 %v2112, %v2062
  %v2663 = vpack.c.b16 %v2113, %v2063
  %v2664 = vpack.c.b16 %v2114, %v2064
  %v2665 = vpack.c.b16 %v2115, %v2065
  %v2666 = vpack.c.b16 %v2116, %v2066
  %v2667 = vpack.c.b16 %v2117, %v2067
  %v2668 = vpack.c.b16 %v2118, %v2068
  %v2669 = vpack.c.b16 %v2119, %v2069
  %v2670 = vpack.c.b16 %v2120, %v2070
  %v2671 = vpack.c.b16 %v2121, %v2071
  %v2672 = vpack.c.b16 %v2172, %v2122
  %v2673 = vpack.c.b16 %v2173, %v2123
  %v2674 = vpack.c.b16 %v2174, %v2124
  %v2675 = vpack.c.b16 %v2175, %v2125
  %v2676 = vpack.c.b16 %v2176, %v2126
  %v2677 = vpack.c.b16 %v2177, %v2127
  %v2678 = vpack.c.b16 %v2178, %v2128
  %v2679 = vpack.c.b16 %v2179, %v2129
  %v2680 = vpack.c.b16 %v2180, %v2130
  %v2681 = vpack.c.b16 %v2181, %v2131
  %v2682 = vpack.c.b16 %v2182, %v2132
  %v2683 = vpack.c.b16 %v2183, %v2133
  %v2684 = vpack.c.b16 %v2184, %v2134
  %v2685 = vpack.c.b16 %v2185, %v2135
  %v2686 = vpack.c.b16 %v2186, %v2136
  %v2687 = vpack.c.b16 %v2187, %v2137
  %v2688 = vpack.c.b16 %v2188, %v2138
  %v2689 = vpack.c.b16 %v2189, %v2139
  %v2690 = vpack.c.b16 %v2190, %v2140
  %v2691 = vpack.c.b16 %v2191, %v2141
  %v2692 = vpack.c.b16 %v2192, %v2142
  %v2693 = vpack.c.b16 %v2193, %v2143
  %v2694 = vpack.c.b16 %v2194, %v2144
  %v2695 = vpack.c.b16 %v2195, %v2145
  %v2696 = vpack.c.b16 %v2196, %v2146
  %v2697 = vpack.c.b16 %v2197, %v2147
  %v2698 = vpack.c.b16 %v2198, %v2148
  %v2699 = vpack.c.b16 %v2199, %v2149
  %v2700 = vpack.c.b16 %v2200, %v2150
  %v2701 = vpack.c.b16 %v2201, %v2151
  %v2702 = vpack.c.b16 %v2202, %v2152
  %v2703 = vpack.c.b16 %v2203, %v2153
  %v2704 = vpack.c.b16 %v2204, %v2154
  %v2705 = vpack.c.b16 %v2205, %v2155
  %v2706 = vpack.c.b16 %v2206, %v2156
  %v2707 = vpack.c.b16 %v2207, %v2157
  %v2708 = vpack.c.b16 %v2208, %v2158
  %v2709 = vpack.c.b16 %v2209, %v2159
  %v2710 = vpack.c.b16 %v2210, %v2160
  %v2711 = vpack.c.b16 %v2211, %v2161
  %v2712 = vpack.c.b16 %v2212, %v2162
  %v2713 = vpack.c.b16 %v2213, %v2163
  %v2714 = vpack.c.b16 %v2214, %v2164
  %v2715 = vpack.c.b16 %v2215, %v2165
  %v2716 = vpack.c.b16 %v2216, %v2166
  %v2717 = vpack.c.b16 %v2217, %v2167
  %v2718 = vpack.c.b16 %v2218, %v2168
  %v2719 = vpack.c.b16 %v2219, %v2169
  %v2720 = vpack.c.b16 %v2220, %v2170
  %v2721 = vpack.c.b16 %v2221, %v2171
  %v2722 = vpack.c.b16 %v2272, %v2222
  %v2723 = vpack.c.b16 %v2273, %v2223
  %v2724 = vpack.c.b16 %v2274, %v2224
  %v2725 = vpack.c.b16 %v2275, %v2225
  %v2726 = vpack.c.b16 %v2276, %v2226
  %v2727 = vpack.c.b16 %v2277, %v2227
  %v2728 = vpack.c.b16 %v2278, %v2228
  %v2729 = vpack.c.b16 %v2279, %v2229
  %v2730 = vpack.c.b16 %v2280, %v2230
  %v2731 = vpack.c.b16 %v2281, %v2231
  %v2732 = vpack.c.b16 %v2282, %v2232
  %v2733 = vpack.c.b16 %v2283, %v2233
  %v2734 = vpack.c.b16 %v2284, %v2234
  %v2735 = vpack.c.b16 %v2285, %v2235
  %v2736 = vpack.c.b16 %v2286, %v2236
  %v2737 = vpack.c.b16 %v2287, %v2237
  %v2738 = vpack.c.b16 %v2288, %v2238
  %v2739 = vpack.c.b16 %v2289, %v2239
  %v2740 = vpack.c.b16 %v2290, %v2240
  %v2741 = vpack.c.b16 %v2291, %v2241
  %v2742 = vpack.c.b16 %v2292, %v2242
  %v2743 = vpack.c.b16 %v2293, %v2243
  %v2744 = vpack.c.b16 %v2294, %v2244
  %v2745 = vpack.c.b16 %v2295, %v2245
  %v2746 = vpack.c.b16 %v2296, %v2246
  %v2747 = vpack.c.b16 %v2297, %v2247
  %v2748 = vpack.c.b16 %v2298, %v2248
  %v2749 = vpack.c.b16 %v2299, %v2249
  %v2750 = vpack.c.b16 %v2300, %v2250
  %v2751 = vpack.c.b16 %v2301, %v2251
  %v2752 = vpack.c.b16 %v2302, %v2252
  %v2753 = vpack.c.b16 %v2303, %v2253
  %v2754 = vpack.c.b16 %v2304, %v2254
  %v2755 = vpack.c.b16 %v2305, %v2255
  %v2756 = vpack.c.b16 %v2306, %v2256
  %v2757 = vpack.c.b16 %v2307, %v2257
  %v2758 = vpack.c.b16 %v2308, %v2258
  %v2759 = vpack.c.b16 %v2309, %v2259
  %v2760 = vpack.c.b16 %v2310, %v2260
  %v2761 = vpack.c.b16 %v2311, %v2261
  %v2762 = vpack.c.b16 %v2312, %v2262
  %v2763 = vpack.c.b16 %v2313, %v2263
  %v2764 = vpack.c.b16 %v2314, %v2264
  %v2765 = vpack.c.b16 %v2315, %v2265
  %v2766 = vpack.c.b16 %v2316, %v2266
  %v2767 = vpack.c.b16 %v2317, %v2267
  %v2768 = vpack.c.b16 %v2318, %v2268
  %v2769 = vpack.c.b16 %v2319, %v2269
  %v2770 = vpack.c.b16 %v2320, %v2270
  %v2771 = vpack.c.b16 %v2321, %v2271
  %v2772 = vpack.c.b16 %v2372, %v2322
  %v2773 = vpack.c.b16 %v2373, %v2323
  %v2774 = vpack.c.b16 %v2374, %v2324
  %v2775 = vpack.c.b16 %v2375, %v2325
  %v2776 = vpack.c.b16 %v2376, %v2326
  %v2777 = vpack.c.b16 %v2377, %v2327
  %v2778 = vpack.c.b16 %v2378, %v2328
  %v2779 = vpack.c.b16 %v2379, %v2329
  %v2780 = vpack.c.b16 %v2380, %v2330
  %v2781 = vpack.c.b16 %v2381, %v2331
  %v2782 = vpack.c.b16 %v2382, %v2332
  %v2783 = vpack.c.b16 %v2383, %v2333
  %v2784 = vpack.c.b16 %v2384, %v2334
  %v2785 = vpack.c.b16 %v2385, %v2335
  %v2786 = vpack.c.b16 %v2386, %v2336
  %v2787 = vpack.c.b16 %v2387, %v2337
  %v2788 = vpack.c.b16 %v2388, %v2338
  %v2789 = vpack.c.b16 %v2389, %v2339
  %v2790 = vpack.c.b16 %v2390, %v2340
  %v2791 = vpack.c.b16 %v2391, %v2341
  %v2792 = vpack.c.b16 %v2392, %v2342
  %v2793 = vpack.c.b16 %v2393, %v2343
  %v2794 = vpack.c.b16 %v2394, %v2344
  %v2795 = vpack.c.b16 %v2395, %v2345
  %v2796 = vpack.c.b16 %v2396, %v2346
  %v2797 = vpack.c.b16 %v2397, %v2347
  %v2798 = vpack.c.b16 %v2398, %v2348
  %v2799 = vpack.c.b16 %v2399, %v2349
  %v2800 = vpack.c.b16 %v2400, %v2350
  %v2801 = vpack.c.b16 %v2401, %v2351
  %v2802 = vpack.c.b16 %v2402, %v2352
  %v2803 = vpack.c.b16 %v2403, %v2353
  %v2804 = vpack.c.b16 %v2404, %v2354
  %v2805 = vpack.c.b16 %v2405, %v2355
  %v2806 = vpack.c.b16 %v2406, %v2356
  %v2807 = vpack.c.b16 %v2407, %v2357
  %v2808 = vpack.c.b16 %v2408, %v2358
  %v2809 = vpack.c.b16 %v2409, %v2359
  %v2810 = vpack.c.b16 %v2410, %v2360
  %v2811 = vpack.c.b16 %v2411, %v2361
  %v2812 = vpack.c.b16 %v2412, %v2362
  %v2813 = vpack.c.b16 %v2413, %v2363
  %v2814 = vpack.c.b16 %v2414, %v2364
  %v2815 = vpack.c.b16 %v2415, %v2365
  %v2816 = vpack.c.b16 %v2416, %v2366
  %v2817 = vpack.c.b16 %v2417, %v2367
  %v2818 = vpack.c.b16 %v2418, %v2368
  %v2819 = vpack.c.b16 %v2419, %v2369
  %v2820 = vpack.c.b16 %v2420, %v2370
  %v2821 = vpack.c.b16 %v2421, %v2371
  %v4022 = vunpack.c.l.b16 %v415
  %v4023 = vunpack.c.l.b16 %v416
  %v4024 = vunpack.c.l.b16 %v417
  %v4025 = vunpack.c.l.b16 %v418
  %v4026 = vunpack.c.l.b16 %v419
  %v4027 = vunpack.c.l.b16 %v420
  %v4028 = vunpack.c.l.b16 %v421
  %v4029 = vunpack.c.l.b16 %v422
  %v4030 = vunpack.c.l.b16 %v423
  %v4031 = vunpack.c.l.b16 %v424
  %v4032 = vunpack.c.l.b16 %v425
  %v4033 = vunpack.c.l.b16 %v426
  %v4034 = vunpack.c.l.b16 %v427
  %v4035 = vunpack.c.l.b16 %v428
  %v4036 = vunpack.c.l.b16 %v429
  %v4037 = vunpack.c.l.b16 %v430
  %v4038 = vunpack.c.l.b16 %v431
  %v4039 = vunpack.c.l.b16 %v432
  %v4040 = vunpack.c.l.b16 %v433
  %v4041 = vunpack.c.l.b16 %v434
  %v4042 = vunpack.c.l.b16 %v435
  %v4043 = vunpack.c.l.b16 %v436
  %v4044 = vunpack.c.l.b16 %v437
  %v4045 = vunpack.c.l.b16 %v438
  %v4046 = vunpack.c.l.b16 %v439
  %v4047 = vunpack.c.l.b16 %v440
  %v4048 = vunpack.c.l.b16 %v441
  %v4049 = vunpack.c.l.b16 %v442
  %v4050 = vunpack.c.l.b16 %v443
  %v4051 = vunpack.c.l.b16 %v444
  %v4052 = vunpack.c.l.b16 %v445
  %v4053 = vunpack.c.l.b16 %v446
  %v4054 = vunpack.c.l.b16 %v447
  %v4055 = vunpack.c.l.b16 %v448
  %v4056 = vunpack.c.l.b16 %v449
  %v4057 = vunpack.c.l.b16 %v450
  %v4058 = vunpack.c.l.b16 %v451
  %v4059 = vunpack.c.l.b16 %v452
  %v4060 = vunpack.c.l.b16 %v453
  %v4061 = vunpack.c.l.b16 %v454
  %v4062 = vunpack.c.l.b16 %v455
  %v4063 = vunpack.c.l.b16 %v456
  %v4064 = vunpack.c.l.b16 %v457
  %v4065 = vunpack.c.l.b16 %v458
  %v4066 = vunpack.c.l.b16 %v459
  %v4067 = vunpack.c.l.b16 %v460
  %v4068 = vunpack.c.l.b16 %v461
  %v4069 = vunpack.c.l.b16 %v462
  %v4070 = vunpack.c.l.b16 %v463
  %v4071 = vunpack.c.l.b16 %v464
  %v4072 = vunpack.c.l.b16 %v465
  %v4073 = vunpack.c.l.b16 %v466
  %v4074 = vunpack.c.l.b16 %v467
  %v4075 = vunpack.c.l.b16 %v468
  %v4076 = vunpack.c.l.b16 %v469
  %v4077 = vunpack.c.l.b16 %v470
  %v4078 = vunpack.c.l.b16 %v471
  %v4079 = vunpack.c.l.b16 %v472
  %v4080 = vunpack.c.l.b16 %v473
  %v4081 = vunpack.c.l.b16 %v474
  %v4082 = vunpack.c.l.b16 %v475
  %v4083 = vunpack.c.l.b16 %v476
  %v4084 = vunpack.c.l.b16 %v477
  %v4085 = vunpack.c.l.b16 %v478
  %v4086 = vunpack.c.l.b16 %v479
  %v4087 = vunpack.c.l.b16 %v480
  %v4088 = vunpack.c.l.b16 %v481
  %v4089 = vunpack.c.l.b16 %v482
  %v4090 = vunpack.c.l.b16 %v483
  %v4091 = vunpack.c.l.b16 %v484
  %v4092 = vunpack.c.l.b16 %v485
  %v4093 = vunpack.c.l.b16 %v486
  %v4094 = vunpack.c.l.b16 %v487
  %v4095 = vunpack.c.l.b16 %v488
  %v4096 = vunpack.c.l.b16 %v489
  %v4097 = vunpack.c.l.b16 %v490
  %v4098 = vunpack.c.l.b16 %v491
  %v4099 = vunpack.c.l.b16 %v492
  %v4100 = vunpack.c.l.b16 %v493
  %v4101 = vunpack.c.l.b16 %v494
  %v4102 = vunpack.c.l.b16 %v495
  %v4103 = vunpack.c.l.b16 %v496
  %v4104 = vunpack.c.l.b16 %v497
  %v4105 = vunpack.c.l.b16 %v498
  %v4106 = vunpack.c.l.b16 %v499
  %v4107 = vunpack.c.l.b16 %v500
  %v4108 = vunpack.c.l.b16 %v501
  %v4109 = vunpack.c.l.b16 %v502
  %v4110 = vunpack.c.l.b16 %v503
  %v4111 = vunpack.c.l.b16 %v504
  %v4112 = vunpack.c.l.b16 %v505
  %v4113 = vunpack.c.l.b16 %v506
  %v4114 = vunpack.c.l.b16 %v507
  %v4115 = vunpack.c.l.b16 %v508
  %v4116 = vunpack.c.l.b16 %v509
  %v4117 = vunpack.c.l.b16 %v510
  %v4118 = vunpack.c.l.b16 %v511
  %v4119 = vunpack.c.l.b16 %v512
  %v4120 = vunpack.c.l.b16 %v513
  %v4121 = vunpack.c.l.b16 %v514
  %v4122 = vunpack.c.l.b16 %v515
  %v4123 = vunpack.c.l.b16 %v516
  %v4124 = vunpack.c.l.b16 %v517
  %v4125 = vunpack.c.l.b16 %v518
  %v4126 = vunpack.c.l.b16 %v519
  %v4127 = vunpack.c.l.b16 %v520
  %v4128 = vunpack.c.l.b16 %v521
  %v4129 = vunpack.c.l.b16 %v522
  %v4130 = vunpack.c.l.b16 %v523
  %v4131 = vunpack.c.l.b16 %v524
  %v4132 = vunpack.c.l.b16 %v525
  %v4133 = vunpack.c.l.b16 %v526
  %v4134 = vunpack.c.l.b16 %v527
  %v4135 = vunpack.c.l.b16 %v528
  %v4136 = vunpack.c.l.b16 %v529
  %v4137 = vunpack.c.l.b16 %v530
  %v4138 = vunpack.c.l.b16 %v531
  %v4139 = vunpack.c.l.b16 %v532
  %v4140 = vunpack.c.l.b16 %v533
  %v4141 = vunpack.c.l.b16 %v534
  %v4142 = vunpack.c.l.b16 %v535
  %v4143 = vunpack.c.l.b16 %v536
  %v4144 = vunpack.c.l.b16 %v537
  %v4145 = vunpack.c.l.b16 %v538
  %v4146 = vunpack.c.l.b16 %v539
  %v4147 = vunpack.c.l.b16 %v540
  %v4148 = vunpack.c.l.b16 %v541
  %v4149 = vunpack.c.l.b16 %v542
  %v4150 = vunpack.c.l.b16 %v543
  %v4151 = vunpack.c.l.b16 %v544
  %v4152 = vunpack.c.l.b16 %v545
  %v4153 = vunpack.c.l.b16 %v546
  %v4154 = vunpack.c.l.b16 %v547
  %v4155 = vunpack.c.l.b16 %v548
  %v4156 = vunpack.c.l.b16 %v549
  %v4157 = vunpack.c.l.b16 %v550
  %v4158 = vunpack.c.l.b16 %v551
  %v4159 = vunpack.c.l.b16 %v552
  %v4160 = vunpack.c.l.b16 %v553
  %v4161 = vunpack.c.l.b16 %v554
  %v4162 = vunpack.c.l.b16 %v555
  %v4163 = vunpack.c.l.b16 %v556
  %v4164 = vunpack.c.l.b16 %v557
  %v4165 = vunpack.c.l.b16 %v558
  %v4166 = vunpack.c.l.b16 %v559
  %v4167 = vunpack.c.l.b16 %v560
  %v4168 = vunpack.c.l.b16 %v561
  %v4169 = vunpack.c.l.b16 %v562
  %v4170 = vunpack.c.l.b16 %v563
  %v4171 = vunpack.c.l.b16 %v564
  %v4172 = vunpack.c.l.b16 %v565
  %v4173 = vunpack.c.l.b16 %v566
  %v4174 = vunpack.c.l.b16 %v567
  %v4175 = vunpack.c.l.b16 %v568
  %v4176 = vunpack.c.l.b16 %v569
  %v4177 = vunpack.c.l.b16 %v570
  %v4178 = vunpack.c.l.b16 %v571
  %v4179 = vunpack.c.l.b16 %v572
  %v4180 = vunpack.c.l.b16 %v573
  %v4181 = vunpack.c.l.b16 %v574
  %v4182 = vunpack.c.l.b16 %v575
  %v4183 = vunpack.c.l.b16 %v576
  %v4184 = vunpack.c.l.b16 %v577
  %v4185 = vunpack.c.l.b16 %v578
  %v4186 = vunpack.c.l.b16 %v579
  %v4187 = vunpack.c.l.b16 %v580
  %v4188 = vunpack.c.l.b16 %v581
  %v4189 = vunpack.c.l.b16 %v582
  %v4190 = vunpack.c.l.b16 %v583
  %v4191 = vunpack.c.l.b16 %v584
  %v4192 = vunpack.c.l.b16 %v585
  %v4193 = vunpack.c.l.b16 %v586
  %v4194 = vunpack.c.l.b16 %v587
  %v4195 = vunpack.c.l.b16 %v588
  %v4196 = vunpack.c.l.b16 %v589
  %v4197 = vunpack.c.l.b16 %v590
  %v4198 = vunpack.c.l.b16 %v591
  %v4199 = vunpack.c.l.b16 %v592
  %v4200 = vunpack.c.l.b16 %v593
  %v4201 = vunpack.c.l.b16 %v594
  %v4202 = vunpack.c.l.b16 %v595
  %v4203 = vunpack.c.l.b16 %v596
  %v4204 = vunpack.c.l.b16 %v597
  %v4205 = vunpack.c.l.b16 %v598
  %v4206 = vunpack.c.l.b16 %v599
  %v4207 = vunpack.c.l.b16 %v600
  %v4208 = vunpack.c.l.b16 %v601
  %v4209 = vunpack.c.l.b16 %v602
  %v4210 = vunpack.c.l.b16 %v603
  %v4211 = vunpack.c.l.b16 %v604
  %v4212 = vunpack.c.l.b16 %v605
  %v4213 = vunpack.c.l.b16 %v606
  %v4214 = vunpack.c.l.b16 %v607
  %v4215 = vunpack.c.l.b16 %v608
  %v4216 = vunpack.c.l.b16 %v609
  %v4217 = vunpack.c.l.b16 %v610
  %v4218 = vunpack.c.l.b16 %v611
  %v4219 = vunpack.c.l.b16 %v612
  %v4220 = vunpack.c.l.b16 %v613
  %v4221 = vunpack.c.l.b16 %v614
  %v4222 = vunpack.c.l.b16 %v615
  %v4223 = vunpack.c.l.b16 %v616
  %v4224 = vunpack.c.l.b16 %v617
  %v4225 = vunpack.c.l.b16 %v618
  %v4226 = vunpack.c.l.b16 %v619
  %v4227 = vunpack.c.l.b16 %v620
  %v4228 = vunpack.c.l.b16 %v621
  %v4229 = vunpack.c.l.b16 %v622
  %v4230 = vunpack.c.l.b16 %v623
  %v4231 = vunpack.c.l.b16 %v624
  %v4232 = vunpack.c.l.b16 %v625
  %v4233 = vunpack.c.l.b16 %v626
  %v4234 = vunpack.c.l.b16 %v627
  %v4235 = vunpack.c.l.b16 %v628
  %v4236 = vunpack.c.l.b16 %v629
  %v4237 = vunpack.c.l.b16 %v630
  %v4238 = vunpack.c.l.b16 %v631
  %v4239 = vunpack.c.l.b16 %v632
  %v4240 = vunpack.c.l.b16 %v633
  %v4241 = vunpack.c.l.b16 %v634
  %v4242 = vunpack.c.l.b16 %v635
  %v4243 = vunpack.c.l.b16 %v636
  %v4244 = vunpack.c.l.b16 %v637
  %v4245 = vunpack.c.l.b16 %v638
  %v4246 = vunpack.c.l.b16 %v639
  %v4247 = vunpack.c.l.b16 %v640
  %v4248 = vunpack.c.l.b16 %v641
  %v4249 = vunpack.c.l.b16 %v642
  %v4250 = vunpack.c.l.b16 %v643
  %v4251 = vunpack.c.l.b16 %v644
  %v4252 = vunpack.c.l.b16 %v645
  %v4253 = vunpack.c.l.b16 %v646
  %v4254 = vunpack.c.l.b16 %v647
  %v4255 = vunpack.c.l.b16 %v648
  %v4256 = vunpack.c.l.b16 %v649
  %v4257 = vunpack.c.l.b16 %v650
  %v4258 = vunpack.c.l.b16 %v651
  %v4259 = vunpack.c.l.b16 %v652
  %v4260 = vunpack.c.l.b16 %v653
  %v4261 = vunpack.c.l.b16 %v654
  %v4262 = vunpack.c.l.b16 %v655
  %v4263 = vunpack.c.l.b16 %v656
  %v4264 = vunpack.c.l.b16 %v657
  %v4265 = vunpack.c.l.b16 %v658
  %v4266 = vunpack.c.l.b16 %v659
  %v4267 = vunpack.c.l.b16 %v660
  %v4268 = vunpack.c.l.b16 %v661
  %v4269 = vunpack.c.l.b16 %v662
  %v4270 = vunpack.c.l.b16 %v663
  %v4271 = vunpack.c.l.b16 %v664
  %v4272 = vunpack.c.l.b16 %v665
  %v4273 = vunpack.c.l.b16 %v666
  %v4274 = vunpack.c.l.b16 %v667
  %v4275 = vunpack.c.l.b16 %v668
  %v4276 = vunpack.c.l.b16 %v669
  %v4277 = vunpack.c.l.b16 %v670
  %v4278 = vunpack.c.l.b16 %v671
  %v4279 = vunpack.c.l.b16 %v672
  %v4280 = vunpack.c.l.b16 %v673
  %v4281 = vunpack.c.l.b16 %v674
  %v4282 = vunpack.c.l.b16 %v675
  %v4283 = vunpack.c.l.b16 %v676
  %v4284 = vunpack.c.l.b16 %v677
  %v4285 = vunpack.c.l.b16 %v678
  %v4286 = vunpack.c.l.b16 %v679
  %v4287 = vunpack.c.l.b16 %v680
  %v4288 = vunpack.c.l.b16 %v681
  %v4289 = vunpack.c.l.b16 %v682
  %v4290 = vunpack.c.l.b16 %v683
  %v4291 = vunpack.c.l.b16 %v684
  %v4292 = vunpack.c.l.b16 %v685
  %v4293 = vunpack.c.l.b16 %v686
  %v4294 = vunpack.c.l.b16 %v687
  %v4295 = vunpack.c.l.b16 %v688
  %v4296 = vunpack.c.l.b16 %v689
  %v4297 = vunpack.c.l.b16 %v690
  %v4298 = vunpack.c.l.b16 %v691
  %v4299 = vunpack.c.l.b16 %v692
  %v4300 = vunpack.c.l.b16 %v693
  %v4301 = vunpack.c.l.b16 %v694
  %v4302 = vunpack.c.l.b16 %v695
  %v4303 = vunpack.c.l.b16 %v696
  %v4304 = vunpack.c.l.b16 %v697
  %v4305 = vunpack.c.l.b16 %v698
  %v4306 = vunpack.c.l.b16 %v699
  %v4307 = vunpack.c.l.b16 %v700
  %v4308 = vunpack.c.l.b16 %v701
  %v4309 = vunpack.c.l.b16 %v702
  %v4310 = vunpack.c.l.b16 %v703
  %v4311 = vunpack.c.l.b16 %v704
  %v4312 = vunpack.c.l.b16 %v705
  %v4313 = vunpack.c.l.b16 %v706
  %v4314 = vunpack.c.l.b16 %v707
  %v4315 = vunpack.c.l.b16 %v708
  %v4316 = vunpack.c.l.b16 %v709
  %v4317 = vunpack.c.l.b16 %v710
  %v4318 = vunpack.c.l.b16 %v711
  %v4319 = vunpack.c.l.b16 %v712
  %v4320 = vunpack.c.l.b16 %v713
  %v4321 = vunpack.c.l.b16 %v714
  %v4322 = vunpack.c.l.b16 %v715
  %v4323 = vunpack.c.l.b16 %v716
  %v4324 = vunpack.c.l.b16 %v717
  %v4325 = vunpack.c.l.b16 %v718
  %v4326 = vunpack.c.l.b16 %v719
  %v4327 = vunpack.c.l.b16 %v720
  %v4328 = vunpack.c.l.b16 %v721
  %v4329 = vunpack.c.l.b16 %v722
  %v4330 = vunpack.c.l.b16 %v723
  %v4331 = vunpack.c.l.b16 %v724
  %v4332 = vunpack.c.l.b16 %v725
  %v4333 = vunpack.c.l.b16 %v726
  %v4334 = vunpack.c.l.b16 %v727
  %v4335 = vunpack.c.l.b16 %v728
  %v4336 = vunpack.c.l.b16 %v729
  %v4337 = vunpack.c.l.b16 %v730
  %v4338 = vunpack.c.l.b16 %v731
  %v4339 = vunpack.c.l.b16 %v732
  %v4340 = vunpack.c.l.b16 %v733
  %v4341 = vunpack.c.l.b16 %v734
  %v4342 = vunpack.c.l.b16 %v735
  %v4343 = vunpack.c.l.b16 %v736
  %v4344 = vunpack.c.l.b16 %v737
  %v4345 = vunpack.c.l.b16 %v738
  %v4346 = vunpack.c.l.b16 %v739
  %v4347 = vunpack.c.l.b16 %v740
  %v4348 = vunpack.c.l.b16 %v741
  %v4349 = vunpack.c.l.b16 %v742
  %v4350 = vunpack.c.l.b16 %v743
  %v4351 = vunpack.c.l.b16 %v744
  %v4352 = vunpack.c.l.b16 %v745
  %v4353 = vunpack.c.l.b16 %v746
  %v4354 = vunpack.c.l.b16 %v747
  %v4355 = vunpack.c.l.b16 %v748
  %v4356 = vunpack.c.l.b16 %v749
  %v4357 = vunpack.c.l.b16 %v750
  %v4358 = vunpack.c.l.b16 %v751
  %v4359 = vunpack.c.l.b16 %v752
  %v4360 = vunpack.c.l.b16 %v753
  %v4361 = vunpack.c.l.b16 %v754
  %v4362 = vunpack.c.l.b16 %v755
  %v4363 = vunpack.c.l.b16 %v756
  %v4364 = vunpack.c.l.b16 %v757
  %v4365 = vunpack.c.l.b16 %v758
  %v4366 = vunpack.c.l.b16 %v759
  %v4367 = vunpack.c.l.b16 %v760
  %v4368 = vunpack.c.l.b16 %v761
  %v4369 = vunpack.c.l.b16 %v762
  %v4370 = vunpack.c.l.b16 %v763
  %v4371 = vunpack.c.l.b16 %v764
  %v4372 = vunpack.c.l.b16 %v765
  %v4373 = vunpack.c.l.b16 %v766
  %v4374 = vunpack.c.l.b16 %v767
  %v4375 = vunpack.c.l.b16 %v768
  %v4376 = vunpack.c.l.b16 %v769
  %v4377 = vunpack.c.l.b16 %v770
  %v4378 = vunpack.c.l.b16 %v771
  %v4379 = vunpack.c.l.b16 %v772
  %v4380 = vunpack.c.l.b16 %v773
  %v4381 = vunpack.c.l.b16 %v774
  %v4382 = vunpack.c.l.b16 %v775
  %v4383 = vunpack.c.l.b16 %v776
  %v4384 = vunpack.c.l.b16 %v777
  %v4385 = vunpack.c.l.b16 %v778
  %v4386 = vunpack.c.l.b16 %v779
  %v4387 = vunpack.c.l.b16 %v780
  %v4388 = vunpack.c.l.b16 %v781
  %v4389 = vunpack.c.l.b16 %v782
  %v4390 = vunpack.c.l.b16 %v783
  %v4391 = vunpack.c.l.b16 %v784
  %v4392 = vunpack.c.l.b16 %v785
  %v4393 = vunpack.c.l.b16 %v786
  %v4394 = vunpack.c.l.b16 %v787
  %v4395 = vunpack.c.l.b16 %v788
  %v4396 = vunpack.c.l.b16 %v789
  %v4397 = vunpack.c.l.b16 %v790
  %v4398 = vunpack.c.l.b16 %v791
  %v4399 = vunpack.c.l.b16 %v792
  %v4400 = vunpack.c.l.b16 %v793
  %v4401 = vunpack.c.l.b16 %v794
  %v4402 = vunpack.c.l.b16 %v795
  %v4403 = vunpack.c.l.b16 %v796
  %v4404 = vunpack.c.l.b16 %v797
  %v4405 = vunpack.c.l.b16 %v798
  %v4406 = vunpack.c.l.b16 %v799
  %v4407 = vunpack.c.l.b16 %v800
  %v4408 = vunpack.c.l.b16 %v801
  %v4409 = vunpack.c.l.b16 %v802
  %v4410 = vunpack.c.l.b16 %v803
  %v4411 = vunpack.c.l.b16 %v804
  %v4412 = vunpack.c.l.b16 %v805
  %v4413 = vunpack.c.l.b16 %v806
  %v4414 = vunpack.c.l.b16 %v807
  %v4415 = vunpack.c.l.b16 %v808
  %v4416 = vunpack.c.l.b16 %v809
  %v4417 = vunpack.c.l.b16 %v810
  %v4418 = vunpack.c.l.b16 %v811
  %v4419 = vunpack.c.l.b16 %v812
  %v4420 = vunpack.c.l.b16 %v813
  %v4421 = vunpack.c.l.b16 %v814
  %v4422 = vunpack.c.l.b16 %v815
  %v4423 = vunpack.c.l.b16 %v816
  %v4424 = vunpack.c.l.b16 %v817
  %v4425 = vunpack.c.l.b16 %v818
  %v4426 = vunpack.c.l.b16 %v819
  %v4427 = vunpack.c.l.b16 %v820
  %v4428 = vunpack.c.l.b16 %v821
  %v4429 = vunpack.c.l.b16 %v822
  %v4430 = vunpack.c.l.b16 %v823
  %v4431 = vunpack.c.l.b16 %v824
  %v4432 = vunpack.c.l.b16 %v825
  %v4433 = vunpack.c.l.b16 %v826
  %v4434 = vunpack.c.l.b16 %v827
  %v4435 = vunpack.c.l.b16 %v828
  %v4436 = vunpack.c.l.b16 %v829
  %v4437 = vunpack.c.l.b16 %v830
  %v4438 = vunpack.c.l.b16 %v831
  %v4439 = vunpack.c.l.b16 %v832
  %v4440 = vunpack.c.l.b16 %v833
  %v4441 = vunpack.c.l.b16 %v834
  %v4442 = vunpack.c.l.b16 %v835
  %v4443 = vunpack.c.l.b16 %v836
  %v4444 = vunpack.c.l.b16 %v837
  %v4445 = vunpack.c.l.b16 %v838
  %v4446 = vunpack.c.l.b16 %v839
  %v4447 = vunpack.c.l.b16 %v840
  %v4448 = vunpack.c.l.b16 %v841
  %v4449 = vunpack.c.l.b16 %v842
  %v4450 = vunpack.c.l.b16 %v843
  %v4451 = vunpack.c.l.b16 %v844
  %v4452 = vunpack.c.l.b16 %v845
  %v4453 = vunpack.c.l.b16 %v846
  %v4454 = vunpack.c.l.b16 %v847
  %v4455 = vunpack.c.l.b16 %v848
  %v4456 = vunpack.c.l.b16 %v849
  %v4457 = vunpack.c.l.b16 %v850
  %v4458 = vunpack.c.l.b16 %v851
  %v4459 = vunpack.c.l.b16 %v852
  %v4460 = vunpack.c.l.b16 %v853
  %v4461 = vunpack.c.l.b16 %v854
  %v4462 = vunpack.c.l.b16 %v855
  %v4463 = vunpack.c.l.b16 %v856
  %v4464 = vunpack.c.l.b16 %v857
  %v4465 = vunpack.c.l.b16 %v858
  %v4466 = vunpack.c.l.b16 %v859
  %v4467 = vunpack.c.l.b16 %v860
  %v4468 = vunpack.c.l.b16 %v861
  %v4469 = vunpack.c.l.b16 %v862
  %v4470 = vunpack.c.l.b16 %v863
  %v4471 = vunpack.c.l.b16 %v864
  %v4472 = vunpack.c.l.b16 %v865
  %v4473 = vunpack.c.l.b16 %v866
  %v4474 = vunpack.c.l.b16 %v867
  %v4475 = vunpack.c.l.b16 %v868
  %v4476 = vunpack.c.l.b16 %v869
  %v4477 = vunpack.c.l.b16 %v870
  %v4478 = vunpack.c.l.b16 %v871
  %v4479 = vunpack.c.l.b16 %v872
  %v4480 = vunpack.c.l.b16 %v873
  %v4481 = vunpack.c.l.b16 %v874
  %v4482 = vunpack.c.l.b16 %v875
  %v4483 = vunpack.c.l.b16 %v876
  %v4484 = vunpack.c.l.b16 %v877
  %v4485 = vunpack.c.l.b16 %v878
  %v4486 = vunpack.c.l.b16 %v879
  %v4487 = vunpack.c.l.b16 %v880
  %v4488 = vunpack.c.l.b16 %v881
  %v4489 = vunpack.c.l.b16 %v882
  %v4490 = vunpack.c.l.b16 %v883
  %v4491 = vunpack.c.l.b16 %v884
  %v4492 = vunpack.c.l.b16 %v885
  %v4493 = vunpack.c.l.b16 %v886
  %v4494 = vunpack.c.l.b16 %v887
  %v4495 = vunpack.c.l.b16 %v888
  %v4496 = vunpack.c.l.b16 %v889
  %v4497 = vunpack.c.l.b16 %v890
  %v4498 = vunpack.c.l.b16 %v891
  %v4499 = vunpack.c.l.b16 %v892
  %v4500 = vunpack.c.l.b16 %v893
  %v4501 = vunpack.c.l.b16 %v894
  %v4502 = vunpack.c.l.b16 %v895
  %v4503 = vunpack.c.l.b16 %v896
  %v4504 = vunpack.c.l.b16 %v897
  %v4505 = vunpack.c.l.b16 %v898
  %v4506 = vunpack.c.l.b16 %v899
  %v4507 = vunpack.c.l.b16 %v900
  %v4508 = vunpack.c.l.b16 %v901
  %v4509 = vunpack.c.l.b16 %v902
  %v4510 = vunpack.c.l.b16 %v903
  %v4511 = vunpack.c.l.b16 %v904
  %v4512 = vunpack.c.l.b16 %v905
  %v4513 = vunpack.c.l.b16 %v906
  %v4514 = vunpack.c.l.b16 %v907
  %v4515 = vunpack.c.l.b16 %v908
  %v4516 = vunpack.c.l.b16 %v909
  %v4517 = vunpack.c.l.b16 %v910
  %v4518 = vunpack.c.l.b16 %v911
  %v4519 = vunpack.c.l.b16 %v912
  %v4520 = vunpack.c.l.b16 %v913
  %v4521 = vunpack.c.l.b16 %v914
  %v4522 = vunpack.c.l.b16 %v915
  %v4523 = vunpack.c.l.b16 %v916
  %v4524 = vunpack.c.l.b16 %v917
  %v4525 = vunpack.c.l.b16 %v918
  %v4526 = vunpack.c.l.b16 %v919
  %v4527 = vunpack.c.l.b16 %v920
  %v4528 = vunpack.c.l.b16 %v921
  %v4529 = vunpack.c.l.b16 %v922
  %v4530 = vunpack.c.l.b16 %v923
  %v4531 = vunpack.c.l.b16 %v924
  %v4532 = vunpack.c.l.b16 %v925
  %v4533 = vunpack.c.l.b16 %v926
  %v4534 = vunpack.c.l.b16 %v927
  %v4535 = vunpack.c.l.b16 %v928
  %v4536 = vunpack.c.l.b16 %v929
  %v4537 = vunpack.c.l.b16 %v930
  %v4538 = vunpack.c.l.b16 %v931
  %v4539 = vunpack.c.l.b16 %v932
  %v4540 = vunpack.c.l.b16 %v933
  %v4541 = vunpack.c.l.b16 %v934
  %v4542 = vunpack.c.l.b16 %v935
  %v4543 = vunpack.c.l.b16 %v936
  %v4544 = vunpack.c.l.b16 %v937
  %v4545 = vunpack.c.l.b16 %v938
  %v4546 = vunpack.c.l.b16 %v939
  %v4547 = vunpack.c.l.b16 %v940
  %v4548 = vunpack.c.l.b16 %v941
  %v4549 = vunpack.c.l.b16 %v942
  %v4550 = vunpack.c.l.b16 %v943
  %v4551 = vunpack.c.l.b16 %v944
  %v4552 = vunpack.c.l.b16 %v945
  %v4553 = vunpack.c.l.b16 %v946
  %v4554 = vunpack.c.l.b16 %v947
  %v4555 = vunpack.c.l.b16 %v948
  %v4556 = vunpack.c.l.b16 %v949
  %v4557 = vunpack.c.l.b16 %v950
  %v4558 = vunpack.c.l.b16 %v951
  %v4559 = vunpack.c.l.b16 %v952
  %v4560 = vunpack.c.l.b16 %v953
  %v4561 = vunpack.c.l.b16 %v954
  %v4562 = vunpack.c.l.b16 %v955
  %v4563 = vunpack.c.l.b16 %v956
  %v4564 = vunpack.c.l.b16 %v957
  %v4565 = vunpack.c.l.b16 %v958
  %v4566 = vunpack.c.l.b16 %v959
  %v4567 = vunpack.c.l.b16 %v960
  %v4568 = vunpack.c.l.b16 %v961
  %v4569 = vunpack.c.l.b16 %v962
  %v4570 = vunpack.c.l.b16 %v963
  %v4571 = vunpack.c.l.b16 %v964
  %v4572 = vunpack.c.l.b16 %v965
  %v4573 = vunpack.c.l.b16 %v966
  %v4574 = vunpack.c.l.b16 %v967
  %v4575 = vunpack.c.l.b16 %v968
  %v4576 = vunpack.c.l.b16 %v969
  %v4577 = vunpack.c.l.b16 %v970
  %v4578 = vunpack.c.l.b16 %v971
  %v4579 = vunpack.c.l.b16 %v972
  %v4580 = vunpack.c.l.b16 %v973
  %v4581 = vunpack.c.l.b16 %v974
  %v4582 = vunpack.c.l.b16 %v975
  %v4583 = vunpack.c.l.b16 %v976
  %v4584 = vunpack.c.l.b16 %v977
  %v4585 = vunpack.c.l.b16 %v978
  %v4586 = vunpack.c.l.b16 %v979
  %v4587 = vunpack.c.l.b16 %v980
  %v4588 = vunpack.c.l.b16 %v981
  %v4589 = vunpack.c.l.b16 %v982
  %v4590 = vunpack.c.l.b16 %v983
  %v4591 = vunpack.c.l.b16 %v984
  %v4592 = vunpack.c.l.b16 %v985
  %v4593 = vunpack.c.l.b16 %v986
  %v4594 = vunpack.c.l.b16 %v987
  %v4595 = vunpack.c.l.b16 %v988
  %v4596 = vunpack.c.l.b16 %v989
  %v4597 = vunpack.c.l.b16 %v990
  %v4598 = vunpack.c.l.b16 %v991
  %v4599 = vunpack.c.l.b16 %v992
  %v4600 = vunpack.c.l.b16 %v993
  %v4601 = vunpack.c.l.b16 %v994
  %v4602 = vunpack.c.l.b16 %v995
  %v4603 = vunpack.c.l.b16 %v996
  %v4604 = vunpack.c.l.b16 %v997
  %v4605 = vunpack.c.l.b16 %v998
  %v4606 = vunpack.c.l.b16 %v999
  %v4607 = vunpack.c.l.b16 %v1000
  %v4608 = vunpack.c.l.b16 %v1001
  %v4609 = vunpack.c.l.b16 %v1002
  %v4610 = vunpack.c.l.b16 %v1003
  %v4611 = vunpack.c.l.b16 %v1004
  %v4612 = vunpack.c.l.b16 %v1005
  %v4613 = vunpack.c.l.b16 %v1006
  %v4614 = vunpack.c.l.b16 %v1007
  %v4615 = vunpack.c.l.b16 %v1008
  %v4616 = vunpack.c.l.b16 %v1009
  %v4617 = vunpack.c.l.b16 %v1010
  %v4618 = vunpack.c.l.b16 %v1011
  %v4619 = vunpack.c.l.b16 %v1012
  %v4620 = vunpack.c.l.b16 %v1013
  %v4621 = vunpack.c.l.b16 %v1014
  %v4622 = vunpack.c.l.b16 %v1015
  %v4623 = vunpack.c.l.b16 %v1016
  %v4624 = vunpack.c.l.b16 %v1017
  %v4625 = vunpack.c.l.b16 %v1018
  %v4626 = vunpack.c.l.b16 %v1019
  %v4627 = vunpack.c.l.b16 %v1020
  %v4628 = vunpack.c.l.b16 %v1021
  %v4629 = vunpack.c.l.b16 %v1022
  %v4630 = vunpack.c.l.b16 %v1023
  %v4631 = vunpack.c.l.b16 %v1024
  %v4632 = vunpack.c.l.b16 %v1025
  %v4633 = vunpack.c.l.b16 %v1026
  %v4634 = vunpack.c.l.b16 %v1027
  %v4635 = vunpack.c.l.b16 %v1028
  %v4636 = vunpack.c.l.b16 %v1029
  %v4637 = vunpack.c.l.b16 %v1030
  %v4638 = vunpack.c.l.b16 %v1031
  %v4639 = vunpack.c.l.b16 %v1032
  %v4640 = vunpack.c.l.b16 %v1033
  %v4641 = vunpack.c.l.b16 %v1034
  %v4642 = vunpack.c.l.b16 %v1035
  %v4643 = vunpack.c.l.b16 %v1036
  %v4644 = vunpack.c.l.b16 %v1037
  %v4645 = vunpack.c.l.b16 %v1038
  %v4646 = vunpack.c.l.b16 %v1039
  %v4647 = vunpack.c.l.b16 %v1040
  %v4648 = vunpack.c.l.b16 %v1041
  %v4649 = vunpack.c.l.b16 %v1042
  %v4650 = vunpack.c.l.b16 %v1043
  %v4651 = vunpack.c.l.b16 %v1044
  %v4652 = vunpack.c.l.b16 %v1045
  %v4653 = vunpack.c.l.b16 %v1046
  %v4654 = vunpack.c.l.b16 %v1047
  %v4655 = vunpack.c.l.b16 %v1048
  %v4656 = vunpack.c.l.b16 %v1049
  %v4657 = vunpack.c.l.b16 %v1050
  %v4658 = vunpack.c.l.b16 %v1051
  %v4659 = vunpack.c.l.b16 %v1052
  %v4660 = vunpack.c.l.b16 %v1053
  %v4661 = vunpack.c.l.b16 %v1054
  %v4662 = vunpack.c.l.b16 %v1055
  %v4663 = vunpack.c.l.b16 %v1056
  %v4664 = vunpack.c.l.b16 %v1057
  %v4665 = vunpack.c.l.b16 %v1058
  %v4666 = vunpack.c.l.b16 %v1059
  %v4667 = vunpack.c.l.b16 %v1060
  %v4668 = vunpack.c.l.b16 %v1061
  %v4669 = vunpack.c.l.b16 %v1062
  %v4670 = vunpack.c.l.b16 %v1063
  %v4671 = vunpack.c.l.b16 %v1064
  %v4672 = vunpack.c.l.b16 %v1065
  %v4673 = vunpack.c.l.b16 %v1066
  %v4674 = vunpack.c.l.b16 %v1067
  %v4675 = vunpack.c.l.b16 %v1068
  %v4676 = vunpack.c.l.b16 %v1069
  %v4677 = vunpack.c.l.b16 %v1070
  %v4678 = vunpack.c.l.b16 %v1071
  %v4679 = vunpack.c.l.b16 %v1072
  %v4680 = vunpack.c.l.b16 %v1073
  %v4681 = vunpack.c.l.b16 %v1074
  %v4682 = vunpack.c.l.b16 %v1075
  %v4683 = vunpack.c.l.b16 %v1076
  %v4684 = vunpack.c.l.b16 %v1077
  %v4685 = vunpack.c.l.b16 %v1078
  %v4686 = vunpack.c.l.b16 %v1079
  %v4687 = vunpack.c.l.b16 %v1080
  %v4688 = vunpack.c.l.b16 %v1081
  %v4689 = vunpack.c.l.b16 %v1082
  %v4690 = vunpack.c.l.b16 %v1083
  %v4691 = vunpack.c.l.b16 %v1084
  %v4692 = vunpack.c.l.b16 %v1085
  %v4693 = vunpack.c.l.b16 %v1086
  %v4694 = vunpack.c.l.b16 %v1087
  %v4695 = vunpack.c.l.b16 %v1088
  %v4696 = vunpack.c.l.b16 %v1089
  %v4697 = vunpack.c.l.b16 %v1090
  %v4698 = vunpack.c.l.b16 %v1091
  %v4699 = vunpack.c.l.b16 %v1092
  %v4700 = vunpack.c.l.b16 %v1093
  %v4701 = vunpack.c.l.b16 %v1094
  %v4702 = vunpack.c.l.b16 %v1095
  %v4703 = vunpack.c.l.b16 %v1096
  %v4704 = vunpack.c.l.b16 %v1097
  %v4705 = vunpack.c.l.b16 %v1098
  %v4706 = vunpack.c.l.b16 %v1099
  %v4707 = vunpack.c.l.b16 %v1100
  %v4708 = vunpack.c.l.b16 %v1101
  %v4709 = vunpack.c.l.b16 %v1102
  %v4710 = vunpack.c.l.b16 %v1103
  %v4711 = vunpack.c.l.b16 %v1104
  %v4712 = vunpack.c.l.b16 %v1105
  %v4713 = vunpack.c.l.b16 %v1106
  %v4714 = vunpack.c.l.b16 %v1107
  %v4715 = vunpack.c.l.b16 %v1108
  %v4716 = vunpack.c.l.b16 %v1109
  %v4717 = vunpack.c.l.b16 %v1110
  %v4718 = vunpack.c.l.b16 %v1111
  %v4719 = vunpack.c.l.b16 %v1112
  %v4720 = vunpack.c.l.b16 %v1113
  %v4721 = vunpack.c.l.b16 %v1114
  %v4722 = vunpack.c.l.b16 %v1115
  %v4723 = vunpack.c.l.b16 %v1116
  %v4724 = vunpack.c.l.b16 %v1117
  %v4725 = vunpack.c.l.b16 %v1118
  %v4726 = vunpack.c.l.b16 %v1119
  %v4727 = vunpack.c.l.b16 %v1120
  %v4728 = vunpack.c.l.b16 %v1121
  %v4729 = vunpack.c.l.b16 %v1122
  %v4730 = vunpack.c.l.b16 %v1123
  %v4731 = vunpack.c.l.b16 %v1124
  %v4732 = vunpack.c.l.b16 %v1125
  %v4733 = vunpack.c.l.b16 %v1126
  %v4734 = vunpack.c.l.b16 %v1127
  %v4735 = vunpack.c.l.b16 %v1128
  %v4736 = vunpack.c.l.b16 %v1129
  %v4737 = vunpack.c.l.b16 %v1130
  %v4738 = vunpack.c.l.b16 %v1131
  %v4739 = vunpack.c.l.b16 %v1132
  %v4740 = vunpack.c.l.b16 %v1133
  %v4741 = vunpack.c.l.b16 %v1134
  %v4742 = vunpack.c.l.b16 %v1135
  %v4743 = vunpack.c.l.b16 %v1136
  %v4744 = vunpack.c.l.b16 %v1137
  %v4745 = vunpack.c.l.b16 %v1138
  %v4746 = vunpack.c.l.b16 %v1139
  %v4747 = vunpack.c.l.b16 %v1140
  %v4748 = vunpack.c.l.b16 %v1141
  %v4749 = vunpack.c.l.b16 %v1142
  %v4750 = vunpack.c.l.b16 %v1143
  %v4751 = vunpack.c.l.b16 %v1144
  %v4752 = vunpack.c.l.b16 %v1145
  %v4753 = vunpack.c.l.b16 %v1146
  %v4754 = vunpack.c.l.b16 %v1147
  %v4755 = vunpack.c.l.b16 %v1148
  %v4756 = vunpack.c.l.b16 %v1149
  %v4757 = vunpack.c.l.b16 %v1150
  %v4758 = vunpack.c.l.b16 %v1151
  %v4759 = vunpack.c.l.b16 %v1152
  %v4760 = vunpack.c.l.b16 %v1153
  %v4761 = vunpack.c.l.b16 %v1154
  %v4762 = vunpack.c.l.b16 %v1155
  %v4763 = vunpack.c.l.b16 %v1156
  %v4764 = vunpack.c.l.b16 %v1157
  %v4765 = vunpack.c.l.b16 %v1158
  %v4766 = vunpack.c.l.b16 %v1159
  %v4767 = vunpack.c.l.b16 %v1160
  %v4768 = vunpack.c.l.b16 %v1161
  %v4769 = vunpack.c.l.b16 %v1162
  %v4770 = vunpack.c.l.b16 %v1163
  %v4771 = vunpack.c.l.b16 %v1164
  %v4772 = vunpack.c.l.b16 %v1165
  %v4773 = vunpack.c.l.b16 %v1166
  %v4774 = vunpack.c.l.b16 %v1167
  %v4775 = vunpack.c.l.b16 %v1168
  %v4776 = vunpack.c.l.b16 %v1169
  %v4777 = vunpack.c.l.b16 %v1170
  %v4778 = vunpack.c.l.b16 %v1171
  %v4779 = vunpack.c.l.b16 %v1172
  %v4780 = vunpack.c.l.b16 %v1173
  %v4781 = vunpack.c.l.b16 %v1174
  %v4782 = vunpack.c.l.b16 %v1175
  %v4783 = vunpack.c.l.b16 %v1176
  %v4784 = vunpack.c.l.b16 %v1177
  %v4785 = vunpack.c.l.b16 %v1178
  %v4786 = vunpack.c.l.b16 %v1179
  %v4787 = vunpack.c.l.b16 %v1180
  %v4788 = vunpack.c.l.b16 %v1181
  %v4789 = vunpack.c.l.b16 %v1182
  %v4790 = vunpack.c.l.b16 %v1183
  %v4791 = vunpack.c.l.b16 %v1184
  %v4792 = vunpack.c.l.b16 %v1185
  %v4793 = vunpack.c.l.b16 %v1186
  %v4794 = vunpack.c.l.b16 %v1187
  %v4795 = vunpack.c.l.b16 %v1188
  %v4796 = vunpack.c.l.b16 %v1189
  %v4797 = vunpack.c.l.b16 %v1190
  %v4798 = vunpack.c.l.b16 %v1191
  %v4799 = vunpack.c.l.b16 %v1192
  %v4800 = vunpack.c.l.b16 %v1193
  %v4801 = vunpack.c.l.b16 %v1194
  %v4802 = vunpack.c.l.b16 %v1195
  %v4803 = vunpack.c.l.b16 %v1196
  %v4804 = vunpack.c.l.b16 %v1197
  %v4805 = vunpack.c.l.b16 %v1198
  %v4806 = vunpack.c.l.b16 %v1199
  %v4807 = vunpack.c.l.b16 %v1200
  %v4808 = vunpack.c.l.b16 %v1201
  %v4809 = vunpack.c.l.b16 %v1202
  %v4810 = vunpack.c.l.b16 %v1203
  %v4811 = vunpack.c.l.b16 %v1204
  %v4812 = vunpack.c.l.b16 %v1205
  %v4813 = vunpack.c.l.b16 %v1206
  %v4814 = vunpack.c.l.b16 %v1207
  %v4815 = vunpack.c.l.b16 %v1208
  %v4816 = vunpack.c.l.b16 %v1209
  %v4817 = vunpack.c.l.b16 %v1210
  %v4818 = vunpack.c.l.b16 %v1211
  %v4819 = vunpack.c.l.b16 %v1212
  %v4820 = vunpack.c.l.b16 %v1213
  %v4821 = vunpack.c.l.b16 %v1214
  %v4822 = vpack.c.b16 %v4023, %v4022
  %v4823 = vpack.c.b16 %v4025, %v4024
  %v4824 = vpack.c.b16 %v4027, %v4026
  %v4825 = vpack.c.b16 %v4029, %v4028
  %v4826 = vpack.c.b16 %v4031, %v4030
  %v4827 = vpack.c.b16 %v4033, %v4032
  %v4828 = vpack.c.b16 %v4035, %v4034
  %v4829 = vpack.c.b16 %v4037, %v4036
  %v4830 = vpack.c.b16 %v4039, %v4038
  %v4831 = vpack.c.b16 %v4041, %v4040
  %v4832 = vpack.c.b16 %v4043, %v4042
  %v4833 = vpack.c.b16 %v4045, %v4044
  %v4834 = vpack.c.b16 %v4047, %v4046
  %v4835 = vpack.c.b16 %v4049, %v4048
  %v4836 = vpack.c.b16 %v4051, %v4050
  %v4837 = vpack.c.b16 %v4053, %v4052
  %v4838 = vpack.c.b16 %v4055, %v4054
  %v4839 = vpack.c.b16 %v4057, %v4056
  %v4840 = vpack.c.b16 %v4059, %v4058
  %v4841 = vpack.c.b16 %v4061, %v4060
  %v4842 = vpack.c.b16 %v4063, %v4062
  %v4843 = vpack.c.b16 %v4065, %v4064
  %v4844 = vpack.c.b16 %v4067, %v4066
  %v4845 = vpack.c.b16 %v4069, %v4068
  %v4846 = vpack.c.b16 %v4071, %v4070
  %v4847 = vpack.c.b16 %v4073, %v4072
  %v4848 = vpack.c.b16 %v4075, %v4074
  %v4849 = vpack.c.b16 %v4077, %v4076
  %v4850 = vpack.c.b16 %v4079, %v4078
  %v4851 = vpack.c.b16 %v4081, %v4080
  %v4852 = vpack.c.b16 %v4083, %v4082
  %v4853 = vpack.c.b16 %v4085, %v4084
  %v4854 = vpack.c.b16 %v4087, %v4086
  %v4855 = vpack.c.b16 %v4089, %v4088
  %v4856 = vpack.c.b16 %v4091, %v4090
  %v4857 = vpack.c.b16 %v4093, %v4092
  %v4858 = vpack.c.b16 %v4095, %v4094
  %v4859 = vpack.c.b16 %v4097, %v4096
  %v4860 = vpack.c.b16 %v4099, %v4098
  %v4861 = vpack.c.b16 %v4101, %v4100
  %v4862 = vpack.c.b16 %v4103, %v4102
  %v4863 = vpack.c.b16 %v4105, %v4104
  %v4864 = vpack.c.b16 %v4107, %v4106
  %v4865 = vpack.c.b16 %v4109, %v4108
  %v4866 = vpack.c.b16 %v4111, %v4110
  %v4867 = vpack.c.b16 %v4113, %v4112
  %v4868 = vpack.c.b16 %v4115, %v4114
  %v4869 = vpack.c.b16 %v4117, %v4116
  %v4870 = vpack.c.b16 %v4119, %v4118
  %v4871 = vpack.c.b16 %v4121, %v4120
  %v4872 = vpack.c.b16 %v4123, %v4122
  %v4873 = vpack.c.b16 %v4125, %v4124
  %v4874 = vpack.c.b16 %v4127, %v4126
  %v4875 = vpack.c.b16 %v4129, %v4128
  %v4876 = vpack.c.b16 %v4131, %v4130
  %v4877 = vpack.c.b16 %v4133, %v4132
  %v4878 = vpack.c.b16 %v4135, %v4134
  %v4879 = vpack.c.b16 %v4137, %v4136
  %v4880 = vpack.c.b16 %v4139, %v4138
  %v4881 = vpack.c.b16 %v4141, %v4140
  %v4882 = vpack.c.b16 %v4143, %v4142
  %v4883 = vpack.c.b16 %v4145, %v4144
  %v4884 = vpack.c.b16 %v4147, %v4146
  %v4885 = vpack.c.b16 %v4149, %v4148
  %v4886 = vpack.c.b16 %v4151, %v4150
  %v4887 = vpack.c.b16 %v4153, %v4152
  %v4888 = vpack.c.b16 %v4155, %v4154
  %v4889 = vpack.c.b16 %v4157, %v4156
  %v4890 = vpack.c.b16 %v4159, %v4158
  %v4891 = vpack.c.b16 %v4161, %v4160
  %v4892 = vpack.c.b16 %v4163, %v4162
  %v4893 = vpack.c.b16 %v4165, %v4164
  %v4894 = vpack.c.b16 %v4167, %v4166
  %v4895 = vpack.c.b16 %v4169, %v4168
  %v4896 = vpack.c.b16 %v4171, %v4170
  %v4897 = vpack.c.b16 %v4173, %v4172
  %v4898 = vpack.c.b16 %v4175, %v4174
  %v4899 = vpack.c.b16 %v4177, %v4176
  %v4900 = vpack.c.b16 %v4179, %v4178
  %v4901 = vpack.c.b16 %v4181, %v4180
  %v4902 = vpack.c.b16 %v4183, %v4182
  %v4903 = vpack.c.b16 %v4185, %v4184
  %v4904 = vpack.c.b16 %v4187, %v4186
  %v4905 = vpack.c.b16 %v4189, %v4188
  %v4906 = vpack.c.b16 %v4191, %v4190
  %v4907 = vpack.c.b16 %v4193, %v4192
  %v4908 = vpack.c.b16 %v4195, %v4194
  %v4909 = vpack.c.b16 %v4197, %v4196
  %v4910 = vpack.c.b16 %v4199, %v4198
  %v4911 = vpack.c.b16 %v4201, %v4200
  %v4912 = vpack.c.b16 %v4203, %v4202
  %v4913 = vpack.c.b16 %v4205, %v4204
  %v4914 = vpack.c.b16 %v4207, %v4206
  %v4915 = vpack.c.b16 %v4209, %v4208
  %v4916 = vpack.c.b16 %v4211, %v4210
  %v4917 = vpack.c.b16 %v4213, %v4212
  %v4918 = vpack.c.b16 %v4215, %v4214
  %v4919 = vpack.c.b16 %v4217, %v4216
  %v4920 = vpack.c.b16 %v4219, %v4218
  %v4921 = vpack.c.b16 %v4221, %v4220
  %v4922 = vpack.c.b16 %v4223, %v4222
  %v4923 = vpack.c.b16 %v4225, %v4224
  %v4924 = vpack.c.b16 %v4227, %v4226
  %v4925 = vpack.c.b16 %v4229, %v4228
  %v4926 = vpack.c.b16 %v4231, %v4230
  %v4927 = vpack.c.b16 %v4233, %v4232
  %v4928 = vpack.c.b16 %v4235, %v4234
  %v4929 = vpack.c.b16 %v4237, %v4236
  %v4930 = vpack.c.b16 %v4239, %v4238
  %v4931 = vpack.c.b16 %v4241, %v4240
  %v4932 = vpack.c.b16 %v4243, %v4242
  %v4933 = vpack.c.b16 %v4245, %v4244
  %v4934 = vpack.c.b16 %v4247, %v4246
  %v4935 = vpack.c.b16 %v4249, %v4248
  %v4936 = vpack.c.b16 %v4251, %v4250
  %v4937 = vpack.c.b16 %v4253, %v4252
  %v4938 = vpack.c.b16 %v4255, %v4254
  %v4939 = vpack.c.b16 %v4257, %v4256
  %v4940 = vpack.c.b16 %v4259, %v4258
  %v4941 = vpack.c.b16 %v4261, %v4260
  %v4942 = vpack.c.b16 %v4263, %v4262
  %v4943 = vpack.c.b16 %v4265, %v4264
  %v4944 = vpack.c.b16 %v4267, %v4266
  %v4945 = vpack.c.b16 %v4269, %v4268
  %v4946 = vpack.c.b16 %v4271, %v4270
  %v4947 = vpack.c.b16 %v4273, %v4272
  %v4948 = vpack.c.b16 %v4275, %v4274
  %v4949 = vpack.c.b16 %v4277, %v4276
  %v4950 = vpack.c.b16 %v4279, %v4278
  %v4951 = vpack.c.b16 %v4281, %v4280
  %v4952 = vpack.c.b16 %v4283, %v4282
  %v4953 = vpack.c.b16 %v4285, %v4284
  %v4954 = vpack.c.b16 %v4287, %v4286
  %v4955 = vpack.c.b16 %v4289, %v4288
  %v4956 = vpack.c.b16 %v4291, %v4290
  %v4957 = vpack.c.b16 %v4293, %v4292
  %v4958 = vpack.c.b16 %v4295, %v4294
  %v4959 = vpack.c.b16 %v4297, %v4296
  %v4960 = vpack.c.b16 %v4299, %v4298
  %v4961 = vpack.c.b16 %v4301, %v4300
  %v4962 = vpack.c.b16 %v4303, %v4302
  %v4963 = vpack.c.b16 %v4305, %v4304
  %v4964 = vpack.c.b16 %v4307, %v4306
  %v4965 = vpack.c.b16 %v4309, %v4308
  %v4966 = vpack.c.b16 %v4311, %v4310
  %v4967 = vpack.c.b16 %v4313, %v4312
  %v4968 = vpack.c.b16 %v4315, %v4314
  %v4969 = vpack.c.b16 %v4317, %v4316
  %v4970 = vpack.c.b16 %v4319, %v4318
  %v4971 = vpack.c.b16 %v4321, %v4320
  %v4972 = vpack.c.b16 %v4323, %v4322
  %v4973 = vpack.c.b16 %v4325, %v4324
  %v4974 = vpack.c.b16 %v4327, %v4326
  %v4975 = vpack.c.b16 %v4329, %v4328
  %v4976 = vpack.c.b16 %v4331, %v4330
  %v4977 = vpack.c.b16 %v4333, %v4332
  %v4978 = vpack.c.b16 %v4335, %v4334
  %v4979 = vpack.c.b16 %v4337, %v4336
  %v4980 = vpack.c.b16 %v4339, %v4338
  %v4981 = vpack.c.b16 %v4341, %v4340
  %v4982 = vpack.c.b16 %v4343, %v4342
  %v4983 = vpack.c.b16 %v4345, %v4344
  %v4984 = vpack.c.b16 %v4347, %v4346
  %v4985 = vpack.c.b16 %v4349, %v4348
  %v4986 = vpack.c.b16 %v4351, %v4350
  %v4987 = vpack.c.b16 %v4353, %v4352
  %v4988 = vpack.c.b16 %v4355, %v4354
  %v4989 = vpack.c.b16 %v4357, %v4356
  %v4990 = vpack.c.b16 %v4359, %v4358
  %v4991 = vpack.c.b16 %v4361, %v4360
  %v4992 = vpack.c.b16 %v4363, %v4362
  %v4993 = vpack.c.b16 %v4365, %v4364
  %v4994 = vpack.c.b16 %v4367, %v4366
  %v4995 = vpack.c.b16 %v4369, %v4368
  %v4996 = vpack.c.b16 %v4371, %v4370
  %v4997 = vpack.c.b16 %v4373, %v4372
  %v4998 = vpack.c.b16 %v4375, %v4374
  %v4999 = vpack.c.b16 %v4377, %v4376
  %v5000 = vpack.c.b16 %v4379, %v4378
  %v5001 = vpack.c.b16 %v4381, %v4380
  %v5002 = vpack.c.b16 %v4383, %v4382
  %v5003 = vpack.c.b16 %v4385, %v4384
  %v5004 = vpack.c.b16 %v4387, %v4386
  %v5005 = vpack.c.b16 %v4389, %v4388
  %v5006 = vpack.c.b16 %v4391, %v4390
  %v5007 = vpack.c.b16 %v4393, %v4392
  %v5008 = vpack.c.b16 %v4395, %v4394
  %v5009 = vpack.c.b16 %v4397, %v4396
  %v5010 = vpack.c.b16 %v4399, %v4398
  %v5011 = vpack.c.b16 %v4401, %v4400
  %v5012 = vpack.c.b16 %v4403, %v4402
  %v5013 = vpack.c.b16 %v4405, %v4404
  %v5014 = vpack.c.b16 %v4407, %v4406
  %v5015 = vpack.c.b16 %v4409, %v4408
  %v5016 = vpack.c.b16 %v4411, %v4410
  %v5017 = vpack.c.b16 %v4413, %v4412
  %v5018 = vpack.c.b16 %v4415, %v4414
  %v5019 = vpack.c.b16 %v4417, %v4416
  %v5020 = vpack.c.b16 %v4419, %v4418
  %v5021 = vpack.c.b16 %v4421, %v4420
  %v5022 = vpack.c.b16 %v4423, %v4422
  %v5023 = vpack.c.b16 %v4425, %v4424
  %v5024 = vpack.c.b16 %v4427, %v4426
  %v5025 = vpack.c.b16 %v4429, %v4428
  %v5026 = vpack.c.b16 %v4431, %v4430
  %v5027 = vpack.c.b16 %v4433, %v4432
  %v5028 = vpack.c.b16 %v4435, %v4434
  %v5029 = vpack.c.b16 %v4437, %v4436
  %v5030 = vpack.c.b16 %v4439, %v4438
  %v5031 = vpack.c.b16 %v4441, %v4440
  %v5032 = vpack.c.b16 %v4443, %v4442
  %v5033 = vpack.c.b16 %v4445, %v4444
  %v5034 = vpack.c.b16 %v4447, %v4446
  %v5035 = vpack.c.b16 %v4449, %v4448
  %v5036 = vpack.c.b16 %v4451, %v4450
  %v5037 = vpack.c.b16 %v4453, %v4452
  %v5038 = vpack.c.b16 %v4455, %v4454
  %v5039 = vpack.c.b16 %v4457, %v4456
  %v5040 = vpack.c.b16 %v4459, %v4458
  %v5041 = vpack.c.b16 %v4461, %v4460
  %v5042 = vpack.c.b16 %v4463, %v4462
  %v5043 = vpack.c.b16 %v4465, %v4464
  %v5044 = vpack.c.b16 %v4467, %v4466
  %v5045 = vpack.c.b16 %v4469, %v4468
  %v5046 = vpack.c.b16 %v4471, %v4470
  %v5047 = vpack.c.b16 %v4473, %v4472
  %v5048 = vpack.c.b16 %v4475, %v4474
  %v5049 = vpack.c.b16 %v4477, %v4476
  %v5050 = vpack.c.b16 %v4479, %v4478
  %v5051 = vpack.c.b16 %v4481, %v4480
  %v5052 = vpack.c.b16 %v4483, %v4482
  %v5053 = vpack.c.b16 %v4485, %v4484
  %v5054 = vpack.c.b16 %v4487, %v4486
  %v5055 = vpack.c.b16 %v4489, %v4488
  %v5056 = vpack.c.b16 %v4491, %v4490
  %v5057 = vpack.c.b16 %v4493, %v4492
  %v5058 = vpack.c.b16 %v4495, %v4494
  %v5059 = vpack.c.b16 %v4497, %v4496
  %v5060 = vpack.c.b16 %v4499, %v4498
  %v5061 = vpack.c.b16 %v4501, %v4500
  %v5062 = vpack.c.b16 %v4503, %v4502
  %v5063 = vpack.c.b16 %v4505, %v4504
  %v5064 = vpack.c.b16 %v4507, %v4506
  %v5065 = vpack.c.b16 %v4509, %v4508
  %v5066 = vpack.c.b16 %v4511, %v4510
  %v5067 = vpack.c.b16 %v4513, %v4512
  %v5068 = vpack.c.b16 %v4515, %v4514
  %v5069 = vpack.c.b16 %v4517, %v4516
  %v5070 = vpack.c.b16 %v4519, %v4518
  %v5071 = vpack.c.b16 %v4521, %v4520
  %v5072 = vpack.c.b16 %v4523, %v4522
  %v5073 = vpack.c.b16 %v4525, %v4524
  %v5074 = vpack.c.b16 %v4527, %v4526
  %v5075 = vpack.c.b16 %v4529, %v4528
  %v5076 = vpack.c.b16 %v4531, %v4530
  %v5077 = vpack.c.b16 %v4533, %v4532
  %v5078 = vpack.c.b16 %v4535, %v4534
  %v5079 = vpack.c.b16 %v4537, %v4536
  %v5080 = vpack.c.b16 %v4539, %v4538
  %v5081 = vpack.c.b16 %v4541, %v4540
  %v5082 = vpack.c.b16 %v4543, %v4542
  %v5083 = vpack.c.b16 %v4545, %v4544
  %v5084 = vpack.c.b16 %v4547, %v4546
  %v5085 = vpack.c.b16 %v4549, %v4548
  %v5086 = vpack.c.b16 %v4551, %v4550
  %v5087 = vpack.c.b16 %v4553, %v4552
  %v5088 = vpack.c.b16 %v4555, %v4554
  %v5089 = vpack.c.b16 %v4557, %v4556
  %v5090 = vpack.c.b16 %v4559, %v4558
  %v5091 = vpack.c.b16 %v4561, %v4560
  %v5092 = vpack.c.b16 %v4563, %v4562
  %v5093 = vpack.c.b16 %v4565, %v4564
  %v5094 = vpack.c.b16 %v4567, %v4566
  %v5095 = vpack.c.b16 %v4569, %v4568
  %v5096 = vpack.c.b16 %v4571, %v4570
  %v5097 = vpack.c.b16 %v4573, %v4572
  %v5098 = vpack.c.b16 %v4575, %v4574
  %v5099 = vpack.c.b16 %v4577, %v4576
  %v5100 = vpack.c.b16 %v4579, %v4578
  %v5101 = vpack.c.b16 %v4581, %v4580
  %v5102 = vpack.c.b16 %v4583, %v4582
  %v5103 = vpack.c.b16 %v4585, %v4584
  %v5104 = vpack.c.b16 %v4587, %v4586
  %v5105 = vpack.c.b16 %v4589, %v4588
  %v5106 = vpack.c.b16 %v4591, %v4590
  %v5107 = vpack.c.b16 %v4593, %v4592
  %v5108 = vpack.c.b16 %v4595, %v4594
  %v5109 = vpack.c.b16 %v4597, %v4596
  %v5110 = vpack.c.b16 %v4599, %v4598
  %v5111 = vpack.c.b16 %v4601, %v4600
  %v5112 = vpack.c.b16 %v4603, %v4602
  %v5113 = vpack.c.b16 %v4605, %v4604
  %v5114 = vpack.c.b16 %v4607, %v4606
  %v5115 = vpack.c.b16 %v4609, %v4608
  %v5116 = vpack.c.b16 %v4611, %v4610
  %v5117 = vpack.c.b16 %v4613, %v4612
  %v5118 = vpack.c.b16 %v4615, %v4614
  %v5119 = vpack.c.b16 %v4617, %v4616
  %v5120 = vpack.c.b16 %v4619, %v4618
  %v5121 = vpack.c.b16 %v4621, %v4620
  %v5122 = vpack.c.b16 %v4623, %v4622
  %v5123 = vpack.c.b16 %v4625, %v4624
  %v5124 = vpack.c.b16 %v4627, %v4626
  %v5125 = vpack.c.b16 %v4629, %v4628
  %v5126 = vpack.c.b16 %v4631, %v4630
  %v5127 = vpack.c.b16 %v4633, %v4632
  %v5128 = vpack.c.b16 %v4635, %v4634
  %v5129 = vpack.c.b16 %v4637, %v4636
  %v5130 = vpack.c.b16 %v4639, %v4638
  %v5131 = vpack.c.b16 %v4641, %v4640
  %v5132 = vpack.c.b16 %v4643, %v4642
  %v5133 = vpack.c.b16 %v4645, %v4644
  %v5134 = vpack.c.b16 %v4647, %v4646
  %v5135 = vpack.c.b16 %v4649, %v4648
  %v5136 = vpack.c.b16 %v4651, %v4650
  %v5137 = vpack.c.b16 %v4653, %v4652
  %v5138 = vpack.c.b16 %v4655, %v4654
  %v5139 = vpack.c.b16 %v4657, %v4656
  %v5140 = vpack.c.b16 %v4659, %v4658
  %v5141 = vpack.c.b16 %v4661, %v4660
  %v5142 = vpack.c.b16 %v4663, %v4662
  %v5143 = vpack.c.b16 %v4665, %v4664
  %v5144 = vpack.c.b16 %v4667, %v4666
  %v5145 = vpack.c.b16 %v4669, %v4668
  %v5146 = vpack.c.b16 %v4671, %v4670
  %v5147 = vpack.c.b16 %v4673, %v4672
  %v5148 = vpack.c.b16 %v4675, %v4674
  %v5149 = vpack.c.b16 %v4677, %v4676
  %v5150 = vpack.c.b16 %v4679, %v4678
  %v5151 = vpack.c.b16 %v4681, %v4680
  %v5152 = vpack.c.b16 %v4683, %v4682
  %v5153 = vpack.c.b16 %v4685, %v4684
  %v5154 = vpack.c.b16 %v4687, %v4686
  %v5155 = vpack.c.b16 %v4689, %v4688
  %v5156 = vpack.c.b16 %v4691, %v4690
  %v5157 = vpack.c.b16 %v4693, %v4692
  %v5158 = vpack.c.b16 %v4695, %v4694
  %v5159 = vpack.c.b16 %v4697, %v4696
  %v5160 = vpack.c.b16 %v4699, %v4698
  %v5161 = vpack.c.b16 %v4701, %v4700
  %v5162 = vpack.c.b16 %v4703, %v4702
  %v5163 = vpack.c.b16 %v4705, %v4704
  %v5164 = vpack.c.b16 %v4707, %v4706
  %v5165 = vpack.c.b16 %v4709, %v4708
  %v5166 = vpack.c.b16 %v4711, %v4710
  %v5167 = vpack.c.b16 %v4713, %v4712
  %v5168 = vpack.c.b16 %v4715, %v4714
  %v5169 = vpack.c.b16 %v4717, %v4716
  %v5170 = vpack.c.b16 %v4719, %v4718
  %v5171 = vpack.c.b16 %v4721, %v4720
  %v5172 = vpack.c.b16 %v4723, %v4722
  %v5173 = vpack.c.b16 %v4725, %v4724
  %v5174 = vpack.c.b16 %v4727, %v4726
  %v5175 = vpack.c.b16 %v4729, %v4728
  %v5176 = vpack.c.b16 %v4731, %v4730
  %v5177 = vpack.c.b16 %v4733, %v4732
  %v5178 = vpack.c.b16 %v4735, %v4734
  %v5179 = vpack.c.b16 %v4737, %v4736
  %v5180 = vpack.c.b16 %v4739, %v4738
  %v5181 = vpack.c.b16 %v4741, %v4740
  %v5182 = vpack.c.b16 %v4743, %v4742
  %v5183 = vpack.c.b16 %v4745, %v4744
  %v5184 = vpack.c.b16 %v4747, %v4746
  %v5185 = vpack.c.b16 %v4749, %v4748
  %v5186 = vpack.c.b16 %v4751, %v4750
  %v5187 = vpack.c.b16 %v4753, %v4752
  %v5188 = vpack.c.b16 %v4755, %v4754
  %v5189 = vpack.c.b16 %v4757, %v4756
  %v5190 = vpack.c.b16 %v4759, %v4758
  %v5191 = vpack.c.b16 %v4761, %v4760
  %v5192 = vpack.c.b16 %v4763, %v4762
  %v5193 = vpack.c.b16 %v4765, %v4764
  %v5194 = vpack.c.b16 %v4767, %v4766
  %v5195 = vpack.c.b16 %v4769, %v4768
  %v5196 = vpack.c.b16 %v4771, %v4770
  %v5197 = vpack.c.b16 %v4773, %v4772
  %v5198 = vpack.c.b16 %v4775, %v4774
  %v5199 = vpack.c.b16 %v4777, %v4776
  %v5200 = vpack.c.b16 %v4779, %v4778
  %v5201 = vpack.c.b16 %v4781, %v4780
  %v5202 = vpack.c.b16 %v4783, %v4782
  %v5203 = vpack.c.b16 %v4785, %v4784
  %v5204 = vpack.c.b16 %v4787, %v4786
  %v5205 = vpack.c.b16 %v4789, %v4788
  %v5206 = vpack.c.b16 %v4791, %v4790
  %v5207 = vpack.c.b16 %v4793, %v4792
  %v5208 = vpack.c.b16 %v4795, %v4794
  %v5209 = vpack.c.b16 %v4797, %v4796
  %v5210 = vpack.c.b16 %v4799, %v4798
  %v5211 = vpack.c.b16 %v4801, %v4800
  %v5212 = vpack.c.b16 %v4803, %v4802
  %v5213 = vpack.c.b16 %v4805, %v4804
  %v5214 = vpack.c.b16 %v4807, %v4806
  %v5215 = vpack.c.b16 %v4809, %v4808
  %v5216 = vpack.c.b16 %v4811, %v4810
  %v5217 = vpack.c.b16 %v4813, %v4812
  %v5218 = vpack.c.b16 %v4815, %v4814
  %v5219 = vpack.c.b16 %v4817, %v4816
  %v5220 = vpack.c.b16 %v4819, %v4818
  %v5221 = vpack.c.b16 %v4821, %v4820
  %5622 = vmatprep.subr.bf16.mxu0 0
  %5623 = vmatpush1.bf16.msra.mxu0 %v4822
  %5624 = vmatprep.subr.bf16.mxu0 0
  %5625 = vmatpush1.bf16.msra.mxu0 %v4823
  %5626 = vmatprep.subr.bf16.mxu0 0
  %5627 = vmatpush1.bf16.msra.mxu0 %v4824
  %5628 = vmatprep.subr.bf16.mxu0 0
  %5629 = vmatpush1.bf16.msra.mxu0 %v4825
  %5630 = vmatprep.subr.bf16.mxu0 0
  %5631 = vmatpush1.bf16.msra.mxu0 %v4826
  %5632 = vmatprep.subr.bf16.mxu0 0
  %5633 = vmatpush1.bf16.msra.mxu0 %v4827
  %5634 = vmatprep.subr.bf16.mxu0 0
  %5635 = vmatpush1.bf16.msra.mxu0 %v4828
  %5636 = vmatprep.subr.bf16.mxu0 0
  %5637 = vmatpush1.bf16.msra.mxu0 %v4829
  %5638 = vmatprep.subr.bf16.mxu0 0
  %5639 = vmatpush1.bf16.msra.mxu0 %v4830
  %5640 = vmatprep.subr.bf16.mxu0 0
  %5641 = vmatpush1.bf16.msra.mxu0 %v4831
  %5642 = vmatprep.subr.bf16.mxu0 0
  %5643 = vmatpush1.bf16.msra.mxu0 %v4832
  %5644 = vmatprep.subr.bf16.mxu0 0
  %5645 = vmatpush1.bf16.msra.mxu0 %v4833
  %5646 = vmatprep.subr.bf16.mxu0 0
  %5647 = vmatpush1.bf16.msra.mxu0 %v4834
  %5648 = vmatprep.subr.bf16.mxu0 0
  %5649 = vmatpush1.bf16.msra.mxu0 %v4835
  %5650 = vmatprep.subr.bf16.mxu0 0
  %5651 = vmatpush1.bf16.msra.mxu0 %v4836
  %5652 = vmatprep.subr.bf16.mxu0 0
  %5653 = vmatpush1.bf16.msra.mxu0 %v4837
  %5654 = vmatprep.mubr.bf16.mxu0 %v2423
  %5655 = vmatmul.mubr.bf16.gmra.mrb[0].mxu0 %v2422
  %v5656 = vpop.f32.mrb[0].mxu0
  %v5657 = vadd.f32 %v1220, %v5656
  %v5658 = vpop.f32.mrb[0].mxu0
  %v5659 = vpop.f32.mrb[0].mxu0
  %v5660 = vadd.f32 %v1220, %v5659
  %v5661 = vpop.f32.mrb[0].mxu0
  %5662 = vmatprep.mubr.bf16.mxu0 %v2473
  %5663 = vmatmul.mubr.bf16.gmra.mrb[0].mxu0 %v2472
  %v5664 = vpop.f32.mrb[0].mxu0
  %v5665 = vadd.f32 %v1220, %v5664
  %v5666 = vpop.f32.mrb[0].mxu0
  %v5667 = vpop.f32.mrb[0].mxu0
  %v5668 = vadd.f32 %v1220, %v5667
  %v5669 = vpop.f32.mrb[0].mxu0
  %5670 = vmatprep.mubr.bf16.mxu0 %v2523
  %5671 = vmatmul.mubr.bf16.gmra.mrb[0].mxu0 %v2522
  %v5672 = vpop.f32.mrb[0].mxu0
  %v5673 = vadd.f32 %v1220, %v5672
  %v5674 = vpop.f32.mrb[0].mxu0
  %v5675 = vpop.f32.mrb[0].mxu0
  %v5676 = vadd.f32 %v1220, %v5675
  %v5677 = vpop.f32.mrb[0].mxu0
  %5678 = vmatprep.mubr.bf16.mxu0 %v2573
  %5679 = vmatmul.mubr.bf16.gmra.mrb[0].mxu0 %v2572
  %v5680 = vpop.f32.mrb[0].mxu0
  %v5681 = vadd.f32 %v1220, %v5680
  %v5682 = vpop.f32.mrb[0].mxu0
  %v5683 = vpop.f32.mrb[0].mxu0
  %v5684 = vadd.f32 %v1220, %v5683
  %v5685 = vpop.f32.mrb[0].mxu0
  %5686 = vmatprep.mubr.bf16.mxu0 %v2623
  %5687 = vmatmul.mubr.bf16.gmra.mrb[0].mxu0 %v2622
  %v5688 = vpop.f32.mrb[0].mxu0
  %v5689 = vadd.f32 %v1220, %v5688
  %v5690 = vpop.f32.mrb[0].mxu0
  %v5691 = vpop.f32.mrb[0].mxu0
  %v5692 = vadd.f32 %v1220, %v5691
  %v5693 = vpop.f32.mrb[0].mxu0
  %5694 = vmatprep.mubr.bf16.mxu0 %v2673
  %5695 = vmatmul.mubr.bf16.gmra.mrb[0].mxu0 %v2672
  %v5696 = vpop.f32.mrb[0].mxu0
  %v5697 = vadd.f32 %v1220, %v5696
  %v5698 = vpop.f32.mrb[0].mxu0
  %v5699 = vpop.f32.mrb[0].mxu0
  %v5700 = vadd.f32 %v1220, %v5699
  %v5701 = vpop.f32.mrb[0].mxu0
  %5702 = vmatprep.mubr.bf16.mxu0 %v2723
  %5703 = vmatmul.mubr.bf16.gmra.mrb[0].mxu0 %v2722
  %v5704 = vpop.f32.mrb[0].mxu0
  %v5705 = vadd.f32 %v1220, %v5704
  %v5706 = vpop.f32.mrb[0].mxu0
  %v5707 = vpop.f32.mrb[0].mxu0
  %v5708 = vadd.f32 %v1220, %v5707
  %v5709 = vpop.f32.mrb[0].mxu0
  %5710 = vmatprep.mubr.bf16.mxu0 %v2773
  %5711 = vmatmul.mubr.bf16.gmra.mrb[0].mxu0 %v2772
  %v5712 = vpop.f32.mrb[0].mxu0
  %v5713 = vadd.f32 %v1220, %v5712
  %v5714 = vpop.f32.mrb[0].mxu0
  %v5715 = vpop.f32.mrb[0].mxu0
  %v5716 = vadd.f32 %v1220, %v5715
  %v5717 = vpop.f32.mrb[0].mxu0
  %5718 = vdwg.mxu0
  %5719 = vmatprep.subr.bf16.mxu0 0
  %5720 = vmatpush1.bf16.msra.mxu0 %v4838
  %5721 = vmatprep.subr.bf16.mxu0 0
  %5722 = vmatpush1.bf16.msra.mxu0 %v4839
  %5723 = vmatprep.subr.bf16.mxu0 0
  %5724 = vmatpush1.bf16.msra.mxu0 %v4840
  %5725 = vmatprep.subr.bf16.mxu0 0
  %5726 = vmatpush1.bf16.msra.mxu0 %v4841
  %5727 = vmatprep.subr.bf16.mxu0 0
  %5728 = vmatpush1.bf16.msra.mxu0 %v4842
  %5729 = vmatprep.subr.bf16.mxu0 0
  %5730 = vmatpush1.bf16.msra.mxu0 %v4843
  %5731 = vmatprep.subr.bf16.mxu0 0
  %5732 = vmatpush1.bf16.msra.mxu0 %v4844
  %5733 = vmatprep.subr.bf16.mxu0 0
  %5734 = vmatpush1.bf16.msra.mxu0 %v4845
  %5735 = vmatprep.subr.bf16.mxu0 0
  %5736 = vmatpush1.bf16.msra.mxu0 %v4846
  %5737 = vmatprep.subr.bf16.mxu0 0
  %5738 = vmatpush1.bf16.msra.mxu0 %v4847
  %5739 = vmatprep.subr.bf16.mxu0 0
  %5740 = vmatpush1.bf16.msra.mxu0 %v4848
  %5741 = vmatprep.subr.bf16.mxu0 0
  %5742 = vmatpush1.bf16.msra.mxu0 %v4849
  %5743 = vmatprep.subr.bf16.mxu0 0
  %5744 = vmatpush1.bf16.msra.mxu0 %v4850
  %5745 = vmatprep.subr.bf16.mxu0 0
  %5746 = vmatpush1.bf16.msra.mxu0 %v4851
  %5747 = vmatprep.subr.bf16.mxu0 0
  %5748 = vmatpush1.bf16.msra.mxu0 %v4852
  %5749 = vmatprep.subr.bf16.mxu0 0
  %5750 = vmatpush1.bf16.msra.mxu0 %v4853
  %5751 = vmatprep.mubr.bf16.mxu0 %v2425
  %5752 = vmatmul.mubr.bf16.gmra.mrb[0].mxu0 %v2424
  %v5753 = vpop.f32.mrb[0].mxu0
  %v5754 = vadd.f32 %v5657, %v5753
  %v5755 = vpop.f32.mrb[0].mxu0
  %v5756 = vpop.f32.mrb[0].mxu0
  %v5757 = vadd.f32 %v5660, %v5756
  %v5758 = vpop.f32.mrb[0].mxu0
  %5759 = vmatprep.mubr.bf16.mxu0 %v2475
  %5760 = vmatmul.mubr.bf16.gmra.mrb[0].mxu0 %v2474
  %v5761 = vpop.f32.mrb[0].mxu0
  %v5762 = vadd.f32 %v5665, %v5761
  %v5763 = vpop.f32.mrb[0].mxu0
  %v5764 = vpop.f32.mrb[0].mxu0
  %v5765 = vadd.f32 %v5668, %v5764
  %v5766 = vpop.f32.mrb[0].mxu0
  %5767 = vmatprep.mubr.bf16.mxu0 %v2525
  %5768 = vmatmul.mubr.bf16.gmra.mrb[0].mxu0 %v2524
  %v5769 = vpop.f32.mrb[0].mxu0
  %v5770 = vadd.f32 %v5673, %v5769
  %v5771 = vpop.f32.mrb[0].mxu0
  %v5772 = vpop.f32.mrb[0].mxu0
  %v5773 = vadd.f32 %v5676, %v5772
  %v5774 = vpop.f32.mrb[0].mxu0
  %5775 = vmatprep.mubr.bf16.mxu0 %v2575
  %5776 = vmatmul.mubr.bf16.gmra.mrb[0].mxu0 %v2574
  %v5777 = vpop.f32.mrb[0].mxu0
  %v5778 = vadd.f32 %v5681, %v5777
  %v5779 = vpop.f32.mrb[0].mxu0
  %v5780 = vpop.f32.mrb[0].mxu0
  %v5781 = vadd.f32 %v5684, %v5780
  %v5782 = vpop.f32.mrb[0].mxu0
  %5783 = vmatprep.mubr.bf16.mxu0 %v2625
  %5784 = vmatmul.mubr.bf16.gmra.mrb[0].mxu0 %v2624
  %v5785 = vpop.f32.mrb[0].mxu0
  %v5786 = vadd.f32 %v5689, %v5785
  %v5787 = vpop.f32.mrb[0].mxu0
  %v5788 = vpop.f32.mrb[0].mxu0
  %v5789 = vadd.f32 %v5692, %v5788
  %v5790 = vpop.f32.mrb[0].mxu0
  %5791 = vmatprep.mubr.bf16.mxu0 %v2675
  %5792 = vmatmul.mubr.bf16.gmra.mrb[0].mxu0 %v2674
  %v5793 = vpop.f32.mrb[0].mxu0
  %v5794 = vadd.f32 %v5697, %v5793
  %v5795 = vpop.f32.mrb[0].mxu0
  %v5796 = vpop.f32.mrb[0].mxu0
  %v5797 = vadd.f32 %v5700, %v5796
  %v5798 = vpop.f32.mrb[0].mxu0
  %5799 = vmatprep.mubr.bf16.mxu0 %v2725
  %5800 = vmatmul.mubr.bf16.gmra.mrb[0].mxu0 %v2724
  %v5801 = vpop.f32.mrb[0].mxu0
  %v5802 = vadd.f32 %v5705, %v5801
  %v5803 = vpop.f32.mrb[0].mxu0
  %v5804 = vpop.f32.mrb[0].mxu0
  %v5805 = vadd.f32 %v5708, %v5804
  %v5806 = vpop.f32.mrb[0].mxu0
  %5807 = vmatprep.mubr.bf16.mxu0 %v2775
  %5808 = vmatmul.mubr.bf16.gmra.mrb[0].mxu0 %v2774
  %v5809 = vpop.f32.mrb[0].mxu0
  %v5810 = vadd.f32 %v5713, %v5809
  %v5811 = vpop.f32.mrb[0].mxu0
  %v5812 = vpop.f32.mrb[0].mxu0
  %v5813 = vadd.f32 %v5716, %v5812
  %v5814 = vpop.f32.mrb[0].mxu0
  %5815 = vdwg.mxu0
  %5816 = vmatprep.subr.bf16.mxu0 0
  %5817 = vmatpush1.bf16.msra.mxu0 %v4854
  %5818 = vmatprep.subr.bf16.mxu0 0
  %5819 = vmatpush1.bf16.msra.mxu0 %v4855
  %5820 = vmatprep.subr.bf16.mxu0 0
  %5821 = vmatpush1.bf16.msra.mxu0 %v4856
  %5822 = vmatprep.subr.bf16.mxu0 0
  %5823 = vmatpush1.bf16.msra.mxu0 %v4857
  %5824 = vmatprep.subr.bf16.mxu0 0
  %5825 = vmatpush1.bf16.msra.mxu0 %v4858
  %5826 = vmatprep.subr.bf16.mxu0 0
  %5827 = vmatpush1.bf16.msra.mxu0 %v4859
  %5828 = vmatprep.subr.bf16.mxu0 0
  %5829 = vmatpush1.bf16.msra.mxu0 %v4860
  %5830 = vmatprep.subr.bf16.mxu0 0
  %5831 = vmatpush1.bf16.msra.mxu0 %v4861
  %5832 = vmatprep.subr.bf16.mxu0 0
  %5833 = vmatpush1.bf16.msra.mxu0 %v4862
  %5834 = vmatprep.subr.bf16.mxu0 0
  %5835 = vmatpush1.bf16.msra.mxu0 %v4863
  %5836 = vmatprep.subr.bf16.mxu0 0
  %5837 = vmatpush1.bf16.msra.mxu0 %v4864
  %5838 = vmatprep.subr.bf16.mxu0 0
  %5839 = vmatpush1.bf16.msra.mxu0 %v4865
  %5840 = vmatprep.subr.bf16.mxu0 0
  %5841 = vmatpush1.bf16.msra.mxu0 %v4866
  %5842 = vmatprep.subr.bf16.mxu0 0
  %5843 = vmatpush1.bf16.msra.mxu0 %v4867
  %5844 = vmatprep.subr.bf16.mxu0 0
  %5845 = vmatpush1.bf16.msra.mxu0 %v4868
  %5846 = vmatprep.subr.bf16.mxu0 0
  %5847 = vmatpush1.bf16.msra.mxu0 %v4869
  %5848 = vmatprep.mubr.bf16.mxu0 %v2427
  %5849 = vmatmul.mubr.bf16.gmra.mrb[0].mxu0 %v2426
  %v5850 = vpop.f32.mrb[0].mxu0
  %v5851 = vadd.f32 %v5754, %v5850
  %v5852 = vpop.f32.mrb[0].mxu0
  %v5853 = vpop.f32.mrb[0].mxu0
  %v5854 = vadd.f32 %v5757, %v5853
  %v5855 = vpop.f32.mrb[0].mxu0
  %5856 = vmatprep.mubr.bf16.mxu0 %v2477
  %5857 = vmatmul.mubr.bf16.gmra.mrb[0].mxu0 %v2476
  %v5858 = vpop.f32.mrb[0].mxu0
  %v5859 = vadd.f32 %v5762, %v5858
  %v5860 = vpop.f32.mrb[0].mxu0
  %v5861 = vpop.f32.mrb[0].mxu0
  %v5862 = vadd.f32 %v5765, %v5861
  %v5863 = vpop.f32.mrb[0].mxu0
  %5864 = vmatprep.mubr.bf16.mxu0 %v2527
  %5865 = vmatmul.mubr.bf16.gmra.mrb[0].mxu0 %v2526
  %v5866 = vpop.f32.mrb[0].mxu0
  %v5867 = vadd.f32 %v5770, %v5866
  %v5868 = vpop.f32.mrb[0].mxu0
  %v5869 = vpop.f32.mrb[0].mxu0
  %v5870 = vadd.f32 %v5773, %v5869
  %v5871 = vpop.f32.mrb[0].mxu0
  %5872 = vmatprep.mubr.bf16.mxu0 %v2577
  %5873 = vmatmul.mubr.bf16.gmra.mrb[0].mxu0 %v2576
  %v5874 = vpop.f32.mrb[0].mxu0
  %v5875 = vadd.f32 %v5778, %v5874
  %v5876 = vpop.f32.mrb[0].mxu0
  %v5877 = vpop.f32.mrb[0].mxu0
  %v5878 = vadd.f32 %v5781, %v5877
  %v5879 = vpop.f32.mrb[0].mxu0
  %5880 = vmatprep.mubr.bf16.mxu0 %v2627
  %5881 = vmatmul.mubr.bf16.gmra.mrb[0].mxu0 %v2626
  %v5882 = vpop.f32.mrb[0].mxu0
  %v5883 = vadd.f32 %v5786, %v5882
  %v5884 = vpop.f32.mrb[0].mxu0
  %v5885 = vpop.f32.mrb[0].mxu0
  %v5886 = vadd.f32 %v5789, %v5885
  %v5887 = vpop.f32.mrb[0].mxu0
  %5888 = vmatprep.mubr.bf16.mxu0 %v2677
  %5889 = vmatmul.mubr.bf16.gmra.mrb[0].mxu0 %v2676
  %v5890 = vpop.f32.mrb[0].mxu0
  %v5891 = vadd.f32 %v5794, %v5890
  %v5892 = vpop.f32.mrb[0].mxu0
  %v5893 = vpop.f32.mrb[0].mxu0
  %v5894 = vadd.f32 %v5797, %v5893
  %v5895 = vpop.f32.mrb[0].mxu0
  %5896 = vmatprep.mubr.bf16.mxu0 %v2727
  %5897 = vmatmul.mubr.bf16.gmra.mrb[0].mxu0 %v2726
  %v5898 = vpop.f32.mrb[0].mxu0
  %v5899 = vadd.f32 %v5802, %v5898
  %v5900 = vpop.f32.mrb[0].mxu0
  %v5901 = vpop.f32.mrb[0].mxu0
  %v5902 = vadd.f32 %v5805, %v5901
  %v5903 = vpop.f32.mrb[0].mxu0
  %5904 = vmatprep.mubr.bf16.mxu0 %v2777
  %5905 = vmatmul.mubr.bf16.gmra.mrb[0].mxu0 %v2776
  %v5906 = vpop.f32.mrb[0].mxu0
  %v5907 = vadd.f32 %v5810, %v5906
  %v5908 = vpop.f32.mrb[0].mxu0
  %v5909 = vpop.f32.mrb[0].mxu0
  %v5910 = vadd.f32 %v5813, %v5909
  %v5911 = vpop.f32.mrb[0].mxu0
  %5912 = vdwg.mxu0
  %5913 = vmatprep.subr.bf16.mxu0 0
  %5914 = vmatpush1.bf16.msra.mxu0 %v4870
  %5915 = vmatprep.subr.bf16.mxu0 0
  %5916 = vmatpush1.bf16.msra.mxu0 %v4871
  %5917 = vmatprep.subr.bf16.mxu0 0
  %5918 = vmatpush1.bf16.msra.mxu0 %v4872
  %5919 = vmatprep.subr.bf16.mxu0 0
  %5920 = vmatpush1.bf16.msra.mxu0 %v4873
  %5921 = vmatprep.subr.bf16.mxu0 0
  %5922 = vmatpush1.bf16.msra.mxu0 %v4874
  %5923 = vmatprep.subr.bf16.mxu0 0
  %5924 = vmatpush1.bf16.msra.mxu0 %v4875
  %5925 = vmatprep.subr.bf16.mxu0 0
  %5926 = vmatpush1.bf16.msra.mxu0 %v4876
  %5927 = vmatprep.subr.bf16.mxu0 0
  %5928 = vmatpush1.bf16.msra.mxu0 %v4877
  %5929 = vmatprep.subr.bf16.mxu0 0
  %5930 = vmatpush1.bf16.msra.mxu0 %v4878
  %5931 = vmatprep.subr.bf16.mxu0 0
  %5932 = vmatpush1.bf16.msra.mxu0 %v4879
  %5933 = vmatprep.subr.bf16.mxu0 0
  %5934 = vmatpush1.bf16.msra.mxu0 %v4880
  %5935 = vmatprep.subr.bf16.mxu0 0
  %5936 = vmatpush1.bf16.msra.mxu0 %v4881
  %5937 = vmatprep.subr.bf16.mxu0 0
  %5938 = vmatpush1.bf16.msra.mxu0 %v4882
  %5939 = vmatprep.subr.bf16.mxu0 0
  %5940 = vmatpush1.bf16.msra.mxu0 %v4883
  %5941 = vmatprep.subr.bf16.mxu0 0
  %5942 = vmatpush1.bf16.msra.mxu0 %v4884
  %5943 = vmatprep.subr.bf16.mxu0 0
  %5944 = vmatpush1.bf16.msra.mxu0 %v4885
  %5945 = vmatprep.mubr.bf16.mxu0 %v2429
  %5946 = vmatmul.mubr.bf16.gmra.mrb[0].mxu0 %v2428
  %v5947 = vpop.f32.mrb[0].mxu0
  %v5948 = vadd.f32 %v5851, %v5947
  %v5949 = vpop.f32.mrb[0].mxu0
  %v5950 = vpop.f32.mrb[0].mxu0
  %v5951 = vadd.f32 %v5854, %v5950
  %v5952 = vpop.f32.mrb[0].mxu0
  %5953 = vmatprep.mubr.bf16.mxu0 %v2479
  %5954 = vmatmul.mubr.bf16.gmra.mrb[0].mxu0 %v2478
  %v5955 = vpop.f32.mrb[0].mxu0
  %v5956 = vadd.f32 %v5859, %v5955
  %v5957 = vpop.f32.mrb[0].mxu0
  %v5958 = vpop.f32.mrb[0].mxu0
  %v5959 = vadd.f32 %v5862, %v5958
  %v5960 = vpop.f32.mrb[0].mxu0
  %5961 = vmatprep.mubr.bf16.mxu0 %v2529
  %5962 = vmatmul.mubr.bf16.gmra.mrb[0].mxu0 %v2528
  %v5963 = vpop.f32.mrb[0].mxu0
  %v5964 = vadd.f32 %v5867, %v5963
  %v5965 = vpop.f32.mrb[0].mxu0
  %v5966 = vpop.f32.mrb[0].mxu0
  %v5967 = vadd.f32 %v5870, %v5966
  %v5968 = vpop.f32.mrb[0].mxu0
  %5969 = vmatprep.mubr.bf16.mxu0 %v2579
  %5970 = vmatmul.mubr.bf16.gmra.mrb[0].mxu0 %v2578
  %v5971 = vpop.f32.mrb[0].mxu0
  %v5972 = vadd.f32 %v5875, %v5971
  %v5973 = vpop.f32.mrb[0].mxu0
  %v5974 = vpop.f32.mrb[0].mxu0
  %v5975 = vadd.f32 %v5878, %v5974
  %v5976 = vpop.f32.mrb[0].mxu0
  %5977 = vmatprep.mubr.bf16.mxu0 %v2629
  %5978 = vmatmul.mubr.bf16.gmra.mrb[0].mxu0 %v2628
  %v5979 = vpop.f32.mrb[0].mxu0
  %v5980 = vadd.f32 %v5883, %v5979
  %v5981 = vpop.f32.mrb[0].mxu0
  %v5982 = vpop.f32.mrb[0].mxu0
  %v5983 = vadd.f32 %v5886, %v5982
  %v5984 = vpop.f32.mrb[0].mxu0
  %5985 = vmatprep.mubr.bf16.mxu0 %v2679
  %5986 = vmatmul.mubr.bf16.gmra.mrb[0].mxu0 %v2678
  %v5987 = vpop.f32.mrb[0].mxu0
  %v5988 = vadd.f32 %v5891, %v5987
  %v5989 = vpop.f32.mrb[0].mxu0
  %v5990 = vpop.f32.mrb[0].mxu0
  %v5991 = vadd.f32 %v5894, %v5990
  %v5992 = vpop.f32.mrb[0].mxu0
  %5993 = vmatprep.mubr.bf16.mxu0 %v2729
  %5994 = vmatmul.mubr.bf16.gmra.mrb[0].mxu0 %v2728
  %v5995 = vpop.f32.mrb[0].mxu0
  %v5996 = vadd.f32 %v5899, %v5995
  %v5997 = vpop.f32.mrb[0].mxu0
  %v5998 = vpop.f32.mrb[0].mxu0
  %v5999 = vadd.f32 %v5902, %v5998
  %v6000 = vpop.f32.mrb[0].mxu0
  %6001 = vmatprep.mubr.bf16.mxu0 %v2779
  %6002 = vmatmul.mubr.bf16.gmra.mrb[0].mxu0 %v2778
  %v6003 = vpop.f32.mrb[0].mxu0
  %v6004 = vadd.f32 %v5907, %v6003
  %v6005 = vpop.f32.mrb[0].mxu0
  %v6006 = vpop.f32.mrb[0].mxu0
  %v6007 = vadd.f32 %v5910, %v6006
  %v6008 = vpop.f32.mrb[0].mxu0
  %6009 = vdwg.mxu0
  %6010 = vmatprep.subr.bf16.mxu0 0
  %6011 = vmatpush1.bf16.msra.mxu0 %v4886
  %6012 = vmatprep.subr.bf16.mxu0 0
  %6013 = vmatpush1.bf16.msra.mxu0 %v4887
  %6014 = vmatprep.subr.bf16.mxu0 0
  %6015 = vmatpush1.bf16.msra.mxu0 %v4888
  %6016 = vmatprep.subr.bf16.mxu0 0
  %6017 = vmatpush1.bf16.msra.mxu0 %v4889
  %6018 = vmatprep.subr.bf16.mxu0 0
  %6019 = vmatpush1.bf16.msra.mxu0 %v4890
  %6020 = vmatprep.subr.bf16.mxu0 0
  %6021 = vmatpush1.bf16.msra.mxu0 %v4891
  %6022 = vmatprep.subr.bf16.mxu0 0
  %6023 = vmatpush1.bf16.msra.mxu0 %v4892
  %6024 = vmatprep.subr.bf16.mxu0 0
  %6025 = vmatpush1.bf16.msra.mxu0 %v4893
  %6026 = vmatprep.subr.bf16.mxu0 0
  %6027 = vmatpush1.bf16.msra.mxu0 %v4894
  %6028 = vmatprep.subr.bf16.mxu0 0
  %6029 = vmatpush1.bf16.msra.mxu0 %v4895
  %6030 = vmatprep.subr.bf16.mxu0 0
  %6031 = vmatpush1.bf16.msra.mxu0 %v4896
  %6032 = vmatprep.subr.bf16.mxu0 0
  %6033 = vmatpush1.bf16.msra.mxu0 %v4897
  %6034 = vmatprep.subr.bf16.mxu0 0
  %6035 = vmatpush1.bf16.msra.mxu0 %v4898
  %6036 = vmatprep.subr.bf16.mxu0 0
  %6037 = vmatpush1.bf16.msra.mxu0 %v4899
  %6038 = vmatprep.subr.bf16.mxu0 0
  %6039 = vmatpush1.bf16.msra.mxu0 %v4900
  %6040 = vmatprep.subr.bf16.mxu0 0
  %6041 = vmatpush1.bf16.msra.mxu0 %v4901
  %6042 = vmatprep.mubr.bf16.mxu0 %v2431
  %6043 = vmatmul.mubr.bf16.gmra.mrb[0].mxu0 %v2430
  %v6044 = vpop.f32.mrb[0].mxu0
  %v6045 = vadd.f32 %v5948, %v6044
  %v6046 = vpop.f32.mrb[0].mxu0
  %v6047 = vpop.f32.mrb[0].mxu0
  %v6048 = vadd.f32 %v5951, %v6047
  %v6049 = vpop.f32.mrb[0].mxu0
  %6050 = vmatprep.mubr.bf16.mxu0 %v2481
  %6051 = vmatmul.mubr.bf16.gmra.mrb[0].mxu0 %v2480
  %v6052 = vpop.f32.mrb[0].mxu0
  %v6053 = vadd.f32 %v5956, %v6052
  %v6054 = vpop.f32.mrb[0].mxu0
  %v6055 = vpop.f32.mrb[0].mxu0
  %v6056 = vadd.f32 %v5959, %v6055
  %v6057 = vpop.f32.mrb[0].mxu0
  %6058 = vmatprep.mubr.bf16.mxu0 %v2531
  %6059 = vmatmul.mubr.bf16.gmra.mrb[0].mxu0 %v2530
  %v6060 = vpop.f32.mrb[0].mxu0
  %v6061 = vadd.f32 %v5964, %v6060
  %v6062 = vpop.f32.mrb[0].mxu0
  %v6063 = vpop.f32.mrb[0].mxu0
  %v6064 = vadd.f32 %v5967, %v6063
  %v6065 = vpop.f32.mrb[0].mxu0
  %6066 = vmatprep.mubr.bf16.mxu0 %v2581
  %6067 = vmatmul.mubr.bf16.gmra.mrb[0].mxu0 %v2580
  %v6068 = vpop.f32.mrb[0].mxu0
  %v6069 = vadd.f32 %v5972, %v6068
  %v6070 = vpop.f32.mrb[0].mxu0
  %v6071 = vpop.f32.mrb[0].mxu0
  %v6072 = vadd.f32 %v5975, %v6071
  %v6073 = vpop.f32.mrb[0].mxu0
  %6074 = vmatprep.mubr.bf16.mxu0 %v2631
  %6075 = vmatmul.mubr.bf16.gmra.mrb[0].mxu0 %v2630
  %v6076 = vpop.f32.mrb[0].mxu0
  %v6077 = vadd.f32 %v5980, %v6076
  %v6078 = vpop.f32.mrb[0].mxu0
  %v6079 = vpop.f32.mrb[0].mxu0
  %v6080 = vadd.f32 %v5983, %v6079
  %v6081 = vpop.f32.mrb[0].mxu0
  %6082 = vmatprep.mubr.bf16.mxu0 %v2681
  %6083 = vmatmul.mubr.bf16.gmra.mrb[0].mxu0 %v2680
  %v6084 = vpop.f32.mrb[0].mxu0
  %v6085 = vadd.f32 %v5988, %v6084
  %v6086 = vpop.f32.mrb[0].mxu0
  %v6087 = vpop.f32.mrb[0].mxu0
  %v6088 = vadd.f32 %v5991, %v6087
  %v6089 = vpop.f32.mrb[0].mxu0
  %6090 = vmatprep.mubr.bf16.mxu0 %v2731
  %6091 = vmatmul.mubr.bf16.gmra.mrb[0].mxu0 %v2730
  %v6092 = vpop.f32.mrb[0].mxu0
  %v6093 = vadd.f32 %v5996, %v6092
  %v6094 = vpop.f32.mrb[0].mxu0
  %v6095 = vpop.f32.mrb[0].mxu0
  %v6096 = vadd.f32 %v5999, %v6095
  %v6097 = vpop.f32.mrb[0].mxu0
  %6098 = vmatprep.mubr.bf16.mxu0 %v2781
  %6099 = vmatmul.mubr.bf16.gmra.mrb[0].mxu0 %v2780
  %v6100 = vpop.f32.mrb[0].mxu0
  %v6101 = vadd.f32 %v6004, %v6100
  %v6102 = vpop.f32.mrb[0].mxu0
  %v6103 = vpop.f32.mrb[0].mxu0
  %v6104 = vadd.f32 %v6007, %v6103
  %v6105 = vpop.f32.mrb[0].mxu0
  %6106 = vdwg.mxu0
  %6107 = vmatprep.subr.bf16.mxu0 0
  %6108 = vmatpush1.bf16.msra.mxu0 %v4902
  %6109 = vmatprep.subr.bf16.mxu0 0
  %6110 = vmatpush1.bf16.msra.mxu0 %v4903
  %6111 = vmatprep.subr.bf16.mxu0 0
  %6112 = vmatpush1.bf16.msra.mxu0 %v4904
  %6113 = vmatprep.subr.bf16.mxu0 0
  %6114 = vmatpush1.bf16.msra.mxu0 %v4905
  %6115 = vmatprep.subr.bf16.mxu0 0
  %6116 = vmatpush1.bf16.msra.mxu0 %v4906
  %6117 = vmatprep.subr.bf16.mxu0 0
  %6118 = vmatpush1.bf16.msra.mxu0 %v4907
  %6119 = vmatprep.subr.bf16.mxu0 0
  %6120 = vmatpush1.bf16.msra.mxu0 %v4908
  %6121 = vmatprep.subr.bf16.mxu0 0
  %6122 = vmatpush1.bf16.msra.mxu0 %v4909
  %6123 = vmatprep.subr.bf16.mxu0 0
  %6124 = vmatpush1.bf16.msra.mxu0 %v4910
  %6125 = vmatprep.subr.bf16.mxu0 0
  %6126 = vmatpush1.bf16.msra.mxu0 %v4911
  %6127 = vmatprep.subr.bf16.mxu0 0
  %6128 = vmatpush1.bf16.msra.mxu0 %v4912
  %6129 = vmatprep.subr.bf16.mxu0 0
  %6130 = vmatpush1.bf16.msra.mxu0 %v4913
  %6131 = vmatprep.subr.bf16.mxu0 0
  %6132 = vmatpush1.bf16.msra.mxu0 %v4914
  %6133 = vmatprep.subr.bf16.mxu0 0
  %6134 = vmatpush1.bf16.msra.mxu0 %v4915
  %6135 = vmatprep.subr.bf16.mxu0 0
  %6136 = vmatpush1.bf16.msra.mxu0 %v4916
  %6137 = vmatprep.subr.bf16.mxu0 0
  %6138 = vmatpush1.bf16.msra.mxu0 %v4917
  %6139 = vmatprep.mubr.bf16.mxu0 %v2433
  %6140 = vmatmul.mubr.bf16.gmra.mrb[0].mxu0 %v2432
  %v6141 = vpop.f32.mrb[0].mxu0
  %v6142 = vadd.f32 %v6045, %v6141
  %v6143 = vpop.f32.mrb[0].mxu0
  %v6144 = vpop.f32.mrb[0].mxu0
  %v6145 = vadd.f32 %v6048, %v6144
  %v6146 = vpop.f32.mrb[0].mxu0
  %6147 = vmatprep.mubr.bf16.mxu0 %v2483
  %6148 = vmatmul.mubr.bf16.gmra.mrb[0].mxu0 %v2482
  %v6149 = vpop.f32.mrb[0].mxu0
  %v6150 = vadd.f32 %v6053, %v6149
  %v6151 = vpop.f32.mrb[0].mxu0
  %v6152 = vpop.f32.mrb[0].mxu0
  %v6153 = vadd.f32 %v6056, %v6152
  %v6154 = vpop.f32.mrb[0].mxu0
  %6155 = vmatprep.mubr.bf16.mxu0 %v2533
  %6156 = vmatmul.mubr.bf16.gmra.mrb[0].mxu0 %v2532
  %v6157 = vpop.f32.mrb[0].mxu0
  %v6158 = vadd.f32 %v6061, %v6157
  %v6159 = vpop.f32.mrb[0].mxu0
  %v6160 = vpop.f32.mrb[0].mxu0
  %v6161 = vadd.f32 %v6064, %v6160
  %v6162 = vpop.f32.mrb[0].mxu0
  %6163 = vmatprep.mubr.bf16.mxu0 %v2583
  %6164 = vmatmul.mubr.bf16.gmra.mrb[0].mxu0 %v2582
  %v6165 = vpop.f32.mrb[0].mxu0
  %v6166 = vadd.f32 %v6069, %v6165
  %v6167 = vpop.f32.mrb[0].mxu0
  %v6168 = vpop.f32.mrb[0].mxu0
  %v6169 = vadd.f32 %v6072, %v6168
  %v6170 = vpop.f32.mrb[0].mxu0
  %6171 = vmatprep.mubr.bf16.mxu0 %v2633
  %6172 = vmatmul.mubr.bf16.gmra.mrb[0].mxu0 %v2632
  %v6173 = vpop.f32.mrb[0].mxu0
  %v6174 = vadd.f32 %v6077, %v6173
  %v6175 = vpop.f32.mrb[0].mxu0
  %v6176 = vpop.f32.mrb[0].mxu0
  %v6177 = vadd.f32 %v6080, %v6176
  %v6178 = vpop.f32.mrb[0].mxu0
  %6179 = vmatprep.mubr.bf16.mxu0 %v2683
  %6180 = vmatmul.mubr.bf16.gmra.mrb[0].mxu0 %v2682
  %v6181 = vpop.f32.mrb[0].mxu0
  %v6182 = vadd.f32 %v6085, %v6181
  %v6183 = vpop.f32.mrb[0].mxu0
  %v6184 = vpop.f32.mrb[0].mxu0
  %v6185 = vadd.f32 %v6088, %v6184
  %v6186 = vpop.f32.mrb[0].mxu0
  %6187 = vmatprep.mubr.bf16.mxu0 %v2733
  %6188 = vmatmul.mubr.bf16.gmra.mrb[0].mxu0 %v2732
  %v6189 = vpop.f32.mrb[0].mxu0
  %v6190 = vadd.f32 %v6093, %v6189
  %v6191 = vpop.f32.mrb[0].mxu0
  %v6192 = vpop.f32.mrb[0].mxu0
  %v6193 = vadd.f32 %v6096, %v6192
  %v6194 = vpop.f32.mrb[0].mxu0
  %6195 = vmatprep.mubr.bf16.mxu0 %v2783
  %6196 = vmatmul.mubr.bf16.gmra.mrb[0].mxu0 %v2782
  %v6197 = vpop.f32.mrb[0].mxu0
  %v6198 = vadd.f32 %v6101, %v6197
  %v6199 = vpop.f32.mrb[0].mxu0
  %v6200 = vpop.f32.mrb[0].mxu0
  %v6201 = vadd.f32 %v6104, %v6200
  %v6202 = vpop.f32.mrb[0].mxu0
  %6203 = vdwg.mxu0
  %6204 = vmatprep.subr.bf16.mxu0 0
  %6205 = vmatpush1.bf16.msra.mxu0 %v4918
  %6206 = vmatprep.subr.bf16.mxu0 0
  %6207 = vmatpush1.bf16.msra.mxu0 %v4919
  %6208 = vmatprep.subr.bf16.mxu0 0
  %6209 = vmatpush1.bf16.msra.mxu0 %v4920
  %6210 = vmatprep.subr.bf16.mxu0 0
  %6211 = vmatpush1.bf16.msra.mxu0 %v4921
  %6212 = vmatprep.subr.bf16.mxu0 0
  %6213 = vmatpush1.bf16.msra.mxu0 %v4922
  %6214 = vmatprep.subr.bf16.mxu0 0
  %6215 = vmatpush1.bf16.msra.mxu0 %v4923
  %6216 = vmatprep.subr.bf16.mxu0 0
  %6217 = vmatpush1.bf16.msra.mxu0 %v4924
  %6218 = vmatprep.subr.bf16.mxu0 0
  %6219 = vmatpush1.bf16.msra.mxu0 %v4925
  %6220 = vmatprep.subr.bf16.mxu0 0
  %6221 = vmatpush1.bf16.msra.mxu0 %v4926
  %6222 = vmatprep.subr.bf16.mxu0 0
  %6223 = vmatpush1.bf16.msra.mxu0 %v4927
  %6224 = vmatprep.subr.bf16.mxu0 0
  %6225 = vmatpush1.bf16.msra.mxu0 %v4928
  %6226 = vmatprep.subr.bf16.mxu0 0
  %6227 = vmatpush1.bf16.msra.mxu0 %v4929
  %6228 = vmatprep.subr.bf16.mxu0 0
  %6229 = vmatpush1.bf16.msra.mxu0 %v4930
  %6230 = vmatprep.subr.bf16.mxu0 0
  %6231 = vmatpush1.bf16.msra.mxu0 %v4931
  %6232 = vmatprep.subr.bf16.mxu0 0
  %6233 = vmatpush1.bf16.msra.mxu0 %v4932
  %6234 = vmatprep.subr.bf16.mxu0 0
  %6235 = vmatpush1.bf16.msra.mxu0 %v4933
  %6236 = vmatprep.mubr.bf16.mxu0 %v2435
  %6237 = vmatmul.mubr.bf16.gmra.mrb[0].mxu0 %v2434
  %v6238 = vpop.f32.mrb[0].mxu0
  %v6239 = vadd.f32 %v6142, %v6238
  %v6240 = vpop.f32.mrb[0].mxu0
  %v6241 = vpop.f32.mrb[0].mxu0
  %v6242 = vadd.f32 %v6145, %v6241
  %v6243 = vpop.f32.mrb[0].mxu0
  %6244 = vmatprep.mubr.bf16.mxu0 %v2485
  %6245 = vmatmul.mubr.bf16.gmra.mrb[0].mxu0 %v2484
  %v6246 = vpop.f32.mrb[0].mxu0
  %v6247 = vadd.f32 %v6150, %v6246
  %v6248 = vpop.f32.mrb[0].mxu0
  %v6249 = vpop.f32.mrb[0].mxu0
  %v6250 = vadd.f32 %v6153, %v6249
  %v6251 = vpop.f32.mrb[0].mxu0
  %6252 = vmatprep.mubr.bf16.mxu0 %v2535
  %6253 = vmatmul.mubr.bf16.gmra.mrb[0].mxu0 %v2534
  %v6254 = vpop.f32.mrb[0].mxu0
  %v6255 = vadd.f32 %v6158, %v6254
  %v6256 = vpop.f32.mrb[0].mxu0
  %v6257 = vpop.f32.mrb[0].mxu0
  %v6258 = vadd.f32 %v6161, %v6257
  %v6259 = vpop.f32.mrb[0].mxu0
  %6260 = vmatprep.mubr.bf16.mxu0 %v2585
  %6261 = vmatmul.mubr.bf16.gmra.mrb[0].mxu0 %v2584
  %v6262 = vpop.f32.mrb[0].mxu0
  %v6263 = vadd.f32 %v6166, %v6262
  %v6264 = vpop.f32.mrb[0].mxu0
  %v6265 = vpop.f32.mrb[0].mxu0
  %v6266 = vadd.f32 %v6169, %v6265
  %v6267 = vpop.f32.mrb[0].mxu0
  %6268 = vmatprep.mubr.bf16.mxu0 %v2635
  %6269 = vmatmul.mubr.bf16.gmra.mrb[0].mxu0 %v2634
  %v6270 = vpop.f32.mrb[0].mxu0
  %v6271 = vadd.f32 %v6174, %v6270
  %v6272 = vpop.f32.mrb[0].mxu0
  %v6273 = vpop.f32.mrb[0].mxu0
  %v6274 = vadd.f32 %v6177, %v6273
  %v6275 = vpop.f32.mrb[0].mxu0
  %6276 = vmatprep.mubr.bf16.mxu0 %v2685
  %6277 = vmatmul.mubr.bf16.gmra.mrb[0].mxu0 %v2684
  %v6278 = vpop.f32.mrb[0].mxu0
  %v6279 = vadd.f32 %v6182, %v6278
  %v6280 = vpop.f32.mrb[0].mxu0
  %v6281 = vpop.f32.mrb[0].mxu0
  %v6282 = vadd.f32 %v6185, %v6281
  %v6283 = vpop.f32.mrb[0].mxu0
  %6284 = vmatprep.mubr.bf16.mxu0 %v2735
  %6285 = vmatmul.mubr.bf16.gmra.mrb[0].mxu0 %v2734
  %v6286 = vpop.f32.mrb[0].mxu0
  %v6287 = vadd.f32 %v6190, %v6286
  %v6288 = vpop.f32.mrb[0].mxu0
  %v6289 = vpop.f32.mrb[0].mxu0
  %v6290 = vadd.f32 %v6193, %v6289
  %v6291 = vpop.f32.mrb[0].mxu0
  %6292 = vmatprep.mubr.bf16.mxu0 %v2785
  %6293 = vmatmul.mubr.bf16.gmra.mrb[0].mxu0 %v2784
  %v6294 = vpop.f32.mrb[0].mxu0
  %v6295 = vadd.f32 %v6198, %v6294
  %v6296 = vpop.f32.mrb[0].mxu0
  %v6297 = vpop.f32.mrb[0].mxu0
  %v6298 = vadd.f32 %v6201, %v6297
  %v6299 = vpop.f32.mrb[0].mxu0
  %6300 = vdwg.mxu0
  %6301 = vmatprep.subr.bf16.mxu0 0
  %6302 = vmatpush1.bf16.msra.mxu0 %v4934
  %6303 = vmatprep.subr.bf16.mxu0 0
  %6304 = vmatpush1.bf16.msra.mxu0 %v4935
  %6305 = vmatprep.subr.bf16.mxu0 0
  %6306 = vmatpush1.bf16.msra.mxu0 %v4936
  %6307 = vmatprep.subr.bf16.mxu0 0
  %6308 = vmatpush1.bf16.msra.mxu0 %v4937
  %6309 = vmatprep.subr.bf16.mxu0 0
  %6310 = vmatpush1.bf16.msra.mxu0 %v4938
  %6311 = vmatprep.subr.bf16.mxu0 0
  %6312 = vmatpush1.bf16.msra.mxu0 %v4939
  %6313 = vmatprep.subr.bf16.mxu0 0
  %6314 = vmatpush1.bf16.msra.mxu0 %v4940
  %6315 = vmatprep.subr.bf16.mxu0 0
  %6316 = vmatpush1.bf16.msra.mxu0 %v4941
  %6317 = vmatprep.subr.bf16.mxu0 0
  %6318 = vmatpush1.bf16.msra.mxu0 %v4942
  %6319 = vmatprep.subr.bf16.mxu0 0
  %6320 = vmatpush1.bf16.msra.mxu0 %v4943
  %6321 = vmatprep.subr.bf16.mxu0 0
  %6322 = vmatpush1.bf16.msra.mxu0 %v4944
  %6323 = vmatprep.subr.bf16.mxu0 0
  %6324 = vmatpush1.bf16.msra.mxu0 %v4945
  %6325 = vmatprep.subr.bf16.mxu0 0
  %6326 = vmatpush1.bf16.msra.mxu0 %v4946
  %6327 = vmatprep.subr.bf16.mxu0 0
  %6328 = vmatpush1.bf16.msra.mxu0 %v4947
  %6329 = vmatprep.subr.bf16.mxu0 0
  %6330 = vmatpush1.bf16.msra.mxu0 %v4948
  %6331 = vmatprep.subr.bf16.mxu0 0
  %6332 = vmatpush1.bf16.msra.mxu0 %v4949
  %6333 = vmatprep.mubr.bf16.mxu0 %v2437
  %6334 = vmatmul.mubr.bf16.gmra.mrb[0].mxu0 %v2436
  %v6335 = vpop.f32.mrb[0].mxu0
  %v6336 = vadd.f32 %v6239, %v6335
  %v6337 = vpop.f32.mrb[0].mxu0
  %v6338 = vpop.f32.mrb[0].mxu0
  %v6339 = vadd.f32 %v6242, %v6338
  %v6340 = vpop.f32.mrb[0].mxu0
  %6341 = vmatprep.mubr.bf16.mxu0 %v2487
  %6342 = vmatmul.mubr.bf16.gmra.mrb[0].mxu0 %v2486
  %v6343 = vpop.f32.mrb[0].mxu0
  %v6344 = vadd.f32 %v6247, %v6343
  %v6345 = vpop.f32.mrb[0].mxu0
  %v6346 = vpop.f32.mrb[0].mxu0
  %v6347 = vadd.f32 %v6250, %v6346
  %v6348 = vpop.f32.mrb[0].mxu0
  %6349 = vmatprep.mubr.bf16.mxu0 %v2537
  %6350 = vmatmul.mubr.bf16.gmra.mrb[0].mxu0 %v2536
  %v6351 = vpop.f32.mrb[0].mxu0
  %v6352 = vadd.f32 %v6255, %v6351
  %v6353 = vpop.f32.mrb[0].mxu0
  %v6354 = vpop.f32.mrb[0].mxu0
  %v6355 = vadd.f32 %v6258, %v6354
  %v6356 = vpop.f32.mrb[0].mxu0
  %6357 = vmatprep.mubr.bf16.mxu0 %v2587
  %6358 = vmatmul.mubr.bf16.gmra.mrb[0].mxu0 %v2586
  %v6359 = vpop.f32.mrb[0].mxu0
  %v6360 = vadd.f32 %v6263, %v6359
  %v6361 = vpop.f32.mrb[0].mxu0
  %v6362 = vpop.f32.mrb[0].mxu0
  %v6363 = vadd.f32 %v6266, %v6362
  %v6364 = vpop.f32.mrb[0].mxu0
  %6365 = vmatprep.mubr.bf16.mxu0 %v2637
  %6366 = vmatmul.mubr.bf16.gmra.mrb[0].mxu0 %v2636
  %v6367 = vpop.f32.mrb[0].mxu0
  %v6368 = vadd.f32 %v6271, %v6367
  %v6369 = vpop.f32.mrb[0].mxu0
  %v6370 = vpop.f32.mrb[0].mxu0
  %v6371 = vadd.f32 %v6274, %v6370
  %v6372 = vpop.f32.mrb[0].mxu0
  %6373 = vmatprep.mubr.bf16.mxu0 %v2687
  %6374 = vmatmul.mubr.bf16.gmra.mrb[0].mxu0 %v2686
  %v6375 = vpop.f32.mrb[0].mxu0
  %v6376 = vadd.f32 %v6279, %v6375
  %v6377 = vpop.f32.mrb[0].mxu0
  %v6378 = vpop.f32.mrb[0].mxu0
  %v6379 = vadd.f32 %v6282, %v6378
  %v6380 = vpop.f32.mrb[0].mxu0
  %6381 = vmatprep.mubr.bf16.mxu0 %v2737
  %6382 = vmatmul.mubr.bf16.gmra.mrb[0].mxu0 %v2736
  %v6383 = vpop.f32.mrb[0].mxu0
  %v6384 = vadd.f32 %v6287, %v6383
  %v6385 = vpop.f32.mrb[0].mxu0
  %v6386 = vpop.f32.mrb[0].mxu0
  %v6387 = vadd.f32 %v6290, %v6386
  %v6388 = vpop.f32.mrb[0].mxu0
  %6389 = vmatprep.mubr.bf16.mxu0 %v2787
  %6390 = vmatmul.mubr.bf16.gmra.mrb[0].mxu0 %v2786
  %v6391 = vpop.f32.mrb[0].mxu0
  %v6392 = vadd.f32 %v6295, %v6391
  %v6393 = vpop.f32.mrb[0].mxu0
  %v6394 = vpop.f32.mrb[0].mxu0
  %v6395 = vadd.f32 %v6298, %v6394
  %v6396 = vpop.f32.mrb[0].mxu0
  %6397 = vdwg.mxu0
  %6398 = vmatprep.subr.bf16.mxu0 0
  %6399 = vmatpush1.bf16.msra.mxu0 %v4950
  %6400 = vmatprep.subr.bf16.mxu0 0
  %6401 = vmatpush1.bf16.msra.mxu0 %v4951
  %6402 = vmatprep.subr.bf16.mxu0 0
  %6403 = vmatpush1.bf16.msra.mxu0 %v4952
  %6404 = vmatprep.subr.bf16.mxu0 0
  %6405 = vmatpush1.bf16.msra.mxu0 %v4953
  %6406 = vmatprep.subr.bf16.mxu0 0
  %6407 = vmatpush1.bf16.msra.mxu0 %v4954
  %6408 = vmatprep.subr.bf16.mxu0 0
  %6409 = vmatpush1.bf16.msra.mxu0 %v4955
  %6410 = vmatprep.subr.bf16.mxu0 0
  %6411 = vmatpush1.bf16.msra.mxu0 %v4956
  %6412 = vmatprep.subr.bf16.mxu0 0
  %6413 = vmatpush1.bf16.msra.mxu0 %v4957
  %6414 = vmatprep.subr.bf16.mxu0 0
  %6415 = vmatpush1.bf16.msra.mxu0 %v4958
  %6416 = vmatprep.subr.bf16.mxu0 0
  %6417 = vmatpush1.bf16.msra.mxu0 %v4959
  %6418 = vmatprep.subr.bf16.mxu0 0
  %6419 = vmatpush1.bf16.msra.mxu0 %v4960
  %6420 = vmatprep.subr.bf16.mxu0 0
  %6421 = vmatpush1.bf16.msra.mxu0 %v4961
  %6422 = vmatprep.subr.bf16.mxu0 0
  %6423 = vmatpush1.bf16.msra.mxu0 %v4962
  %6424 = vmatprep.subr.bf16.mxu0 0
  %6425 = vmatpush1.bf16.msra.mxu0 %v4963
  %6426 = vmatprep.subr.bf16.mxu0 0
  %6427 = vmatpush1.bf16.msra.mxu0 %v4964
  %6428 = vmatprep.subr.bf16.mxu0 0
  %6429 = vmatpush1.bf16.msra.mxu0 %v4965
  %6430 = vmatprep.mubr.bf16.mxu0 %v2439
  %6431 = vmatmul.mubr.bf16.gmra.mrb[0].mxu0 %v2438
  %v6432 = vpop.f32.mrb[0].mxu0
  %v6433 = vadd.f32 %v6336, %v6432
  %v6434 = vpop.f32.mrb[0].mxu0
  %v6435 = vpop.f32.mrb[0].mxu0
  %v6436 = vadd.f32 %v6339, %v6435
  %v6437 = vpop.f32.mrb[0].mxu0
  %6438 = vmatprep.mubr.bf16.mxu0 %v2489
  %6439 = vmatmul.mubr.bf16.gmra.mrb[0].mxu0 %v2488
  %v6440 = vpop.f32.mrb[0].mxu0
  %v6441 = vadd.f32 %v6344, %v6440
  %v6442 = vpop.f32.mrb[0].mxu0
  %v6443 = vpop.f32.mrb[0].mxu0
  %v6444 = vadd.f32 %v6347, %v6443
  %v6445 = vpop.f32.mrb[0].mxu0
  %6446 = vmatprep.mubr.bf16.mxu0 %v2539
  %6447 = vmatmul.mubr.bf16.gmra.mrb[0].mxu0 %v2538
  %v6448 = vpop.f32.mrb[0].mxu0
  %v6449 = vadd.f32 %v6352, %v6448
  %v6450 = vpop.f32.mrb[0].mxu0
  %v6451 = vpop.f32.mrb[0].mxu0
  %v6452 = vadd.f32 %v6355, %v6451
  %v6453 = vpop.f32.mrb[0].mxu0
  %6454 = vmatprep.mubr.bf16.mxu0 %v2589
  %6455 = vmatmul.mubr.bf16.gmra.mrb[0].mxu0 %v2588
  %v6456 = vpop.f32.mrb[0].mxu0
  %v6457 = vadd.f32 %v6360, %v6456
  %v6458 = vpop.f32.mrb[0].mxu0
  %v6459 = vpop.f32.mrb[0].mxu0
  %v6460 = vadd.f32 %v6363, %v6459
  %v6461 = vpop.f32.mrb[0].mxu0
  %6462 = vmatprep.mubr.bf16.mxu0 %v2639
  %6463 = vmatmul.mubr.bf16.gmra.mrb[0].mxu0 %v2638
  %v6464 = vpop.f32.mrb[0].mxu0
  %v6465 = vadd.f32 %v6368, %v6464
  %v6466 = vpop.f32.mrb[0].mxu0
  %v6467 = vpop.f32.mrb[0].mxu0
  %v6468 = vadd.f32 %v6371, %v6467
  %v6469 = vpop.f32.mrb[0].mxu0
  %6470 = vmatprep.mubr.bf16.mxu0 %v2689
  %6471 = vmatmul.mubr.bf16.gmra.mrb[0].mxu0 %v2688
  %v6472 = vpop.f32.mrb[0].mxu0
  %v6473 = vadd.f32 %v6376, %v6472
  %v6474 = vpop.f32.mrb[0].mxu0
  %v6475 = vpop.f32.mrb[0].mxu0
  %v6476 = vadd.f32 %v6379, %v6475
  %v6477 = vpop.f32.mrb[0].mxu0
  %6478 = vmatprep.mubr.bf16.mxu0 %v2739
  %6479 = vmatmul.mubr.bf16.gmra.mrb[0].mxu0 %v2738
  %v6480 = vpop.f32.mrb[0].mxu0
  %v6481 = vadd.f32 %v6384, %v6480
  %v6482 = vpop.f32.mrb[0].mxu0
  %v6483 = vpop.f32.mrb[0].mxu0
  %v6484 = vadd.f32 %v6387, %v6483
  %v6485 = vpop.f32.mrb[0].mxu0
  %6486 = vmatprep.mubr.bf16.mxu0 %v2789
  %6487 = vmatmul.mubr.bf16.gmra.mrb[0].mxu0 %v2788
  %v6488 = vpop.f32.mrb[0].mxu0
  %v6489 = vadd.f32 %v6392, %v6488
  %v6490 = vpop.f32.mrb[0].mxu0
  %v6491 = vpop.f32.mrb[0].mxu0
  %v6492 = vadd.f32 %v6395, %v6491
  %v6493 = vpop.f32.mrb[0].mxu0
  %6494 = vdwg.mxu0
  %6495 = vmatprep.subr.bf16.mxu0 0
  %6496 = vmatpush1.bf16.msra.mxu0 %v4966
  %6497 = vmatprep.subr.bf16.mxu0 0
  %6498 = vmatpush1.bf16.msra.mxu0 %v4967
  %6499 = vmatprep.subr.bf16.mxu0 0
  %6500 = vmatpush1.bf16.msra.mxu0 %v4968
  %6501 = vmatprep.subr.bf16.mxu0 0
  %6502 = vmatpush1.bf16.msra.mxu0 %v4969
  %6503 = vmatprep.subr.bf16.mxu0 0
  %6504 = vmatpush1.bf16.msra.mxu0 %v4970
  %6505 = vmatprep.subr.bf16.mxu0 0
  %6506 = vmatpush1.bf16.msra.mxu0 %v4971
  %6507 = vmatprep.subr.bf16.mxu0 0
  %6508 = vmatpush1.bf16.msra.mxu0 %v4972
  %6509 = vmatprep.subr.bf16.mxu0 0
  %6510 = vmatpush1.bf16.msra.mxu0 %v4973
  %6511 = vmatprep.subr.bf16.mxu0 0
  %6512 = vmatpush1.bf16.msra.mxu0 %v4974
  %6513 = vmatprep.subr.bf16.mxu0 0
  %6514 = vmatpush1.bf16.msra.mxu0 %v4975
  %6515 = vmatprep.subr.bf16.mxu0 0
  %6516 = vmatpush1.bf16.msra.mxu0 %v4976
  %6517 = vmatprep.subr.bf16.mxu0 0
  %6518 = vmatpush1.bf16.msra.mxu0 %v4977
  %6519 = vmatprep.subr.bf16.mxu0 0
  %6520 = vmatpush1.bf16.msra.mxu0 %v4978
  %6521 = vmatprep.subr.bf16.mxu0 0
  %6522 = vmatpush1.bf16.msra.mxu0 %v4979
  %6523 = vmatprep.subr.bf16.mxu0 0
  %6524 = vmatpush1.bf16.msra.mxu0 %v4980
  %6525 = vmatprep.subr.bf16.mxu0 0
  %6526 = vmatpush1.bf16.msra.mxu0 %v4981
  %6527 = vmatprep.mubr.bf16.mxu0 %v2441
  %6528 = vmatmul.mubr.bf16.gmra.mrb[0].mxu0 %v2440
  %v6529 = vpop.f32.mrb[0].mxu0
  %v6530 = vadd.f32 %v6433, %v6529
  %v6531 = vpop.f32.mrb[0].mxu0
  %v6532 = vpop.f32.mrb[0].mxu0
  %v6533 = vadd.f32 %v6436, %v6532
  %v6534 = vpop.f32.mrb[0].mxu0
  %6535 = vmatprep.mubr.bf16.mxu0 %v2491
  %6536 = vmatmul.mubr.bf16.gmra.mrb[0].mxu0 %v2490
  %v6537 = vpop.f32.mrb[0].mxu0
  %v6538 = vadd.f32 %v6441, %v6537
  %v6539 = vpop.f32.mrb[0].mxu0
  %v6540 = vpop.f32.mrb[0].mxu0
  %v6541 = vadd.f32 %v6444, %v6540
  %v6542 = vpop.f32.mrb[0].mxu0
  %6543 = vmatprep.mubr.bf16.mxu0 %v2541
  %6544 = vmatmul.mubr.bf16.gmra.mrb[0].mxu0 %v2540
  %v6545 = vpop.f32.mrb[0].mxu0
  %v6546 = vadd.f32 %v6449, %v6545
  %v6547 = vpop.f32.mrb[0].mxu0
  %v6548 = vpop.f32.mrb[0].mxu0
  %v6549 = vadd.f32 %v6452, %v6548
  %v6550 = vpop.f32.mrb[0].mxu0
  %6551 = vmatprep.mubr.bf16.mxu0 %v2591
  %6552 = vmatmul.mubr.bf16.gmra.mrb[0].mxu0 %v2590
  %v6553 = vpop.f32.mrb[0].mxu0
  %v6554 = vadd.f32 %v6457, %v6553
  %v6555 = vpop.f32.mrb[0].mxu0
  %v6556 = vpop.f32.mrb[0].mxu0
  %v6557 = vadd.f32 %v6460, %v6556
  %v6558 = vpop.f32.mrb[0].mxu0
  %6559 = vmatprep.mubr.bf16.mxu0 %v2641
  %6560 = vmatmul.mubr.bf16.gmra.mrb[0].mxu0 %v2640
  %v6561 = vpop.f32.mrb[0].mxu0
  %v6562 = vadd.f32 %v6465, %v6561
  %v6563 = vpop.f32.mrb[0].mxu0
  %v6564 = vpop.f32.mrb[0].mxu0
  %v6565 = vadd.f32 %v6468, %v6564
  %v6566 = vpop.f32.mrb[0].mxu0
  %6567 = vmatprep.mubr.bf16.mxu0 %v2691
  %6568 = vmatmul.mubr.bf16.gmra.mrb[0].mxu0 %v2690
  %v6569 = vpop.f32.mrb[0].mxu0
  %v6570 = vadd.f32 %v6473, %v6569
  %v6571 = vpop.f32.mrb[0].mxu0
  %v6572 = vpop.f32.mrb[0].mxu0
  %v6573 = vadd.f32 %v6476, %v6572
  %v6574 = vpop.f32.mrb[0].mxu0
  %6575 = vmatprep.mubr.bf16.mxu0 %v2741
  %6576 = vmatmul.mubr.bf16.gmra.mrb[0].mxu0 %v2740
  %v6577 = vpop.f32.mrb[0].mxu0
  %v6578 = vadd.f32 %v6481, %v6577
  %v6579 = vpop.f32.mrb[0].mxu0
  %v6580 = vpop.f32.mrb[0].mxu0
  %v6581 = vadd.f32 %v6484, %v6580
  %v6582 = vpop.f32.mrb[0].mxu0
  %6583 = vmatprep.mubr.bf16.mxu0 %v2791
  %6584 = vmatmul.mubr.bf16.gmra.mrb[0].mxu0 %v2790
  %v6585 = vpop.f32.mrb[0].mxu0
  %v6586 = vadd.f32 %v6489, %v6585
  %v6587 = vpop.f32.mrb[0].mxu0
  %v6588 = vpop.f32.mrb[0].mxu0
  %v6589 = vadd.f32 %v6492, %v6588
  %v6590 = vpop.f32.mrb[0].mxu0
  %6591 = vdwg.mxu0
  %6592 = vmatprep.subr.bf16.mxu0 0
  %6593 = vmatpush1.bf16.msra.mxu0 %v4982
  %6594 = vmatprep.subr.bf16.mxu0 0
  %6595 = vmatpush1.bf16.msra.mxu0 %v4983
  %6596 = vmatprep.subr.bf16.mxu0 0
  %6597 = vmatpush1.bf16.msra.mxu0 %v4984
  %6598 = vmatprep.subr.bf16.mxu0 0
  %6599 = vmatpush1.bf16.msra.mxu0 %v4985
  %6600 = vmatprep.subr.bf16.mxu0 0
  %6601 = vmatpush1.bf16.msra.mxu0 %v4986
  %6602 = vmatprep.subr.bf16.mxu0 0
  %6603 = vmatpush1.bf16.msra.mxu0 %v4987
  %6604 = vmatprep.subr.bf16.mxu0 0
  %6605 = vmatpush1.bf16.msra.mxu0 %v4988
  %6606 = vmatprep.subr.bf16.mxu0 0
  %6607 = vmatpush1.bf16.msra.mxu0 %v4989
  %6608 = vmatprep.subr.bf16.mxu0 0
  %6609 = vmatpush1.bf16.msra.mxu0 %v4990
  %6610 = vmatprep.subr.bf16.mxu0 0
  %6611 = vmatpush1.bf16.msra.mxu0 %v4991
  %6612 = vmatprep.subr.bf16.mxu0 0
  %6613 = vmatpush1.bf16.msra.mxu0 %v4992
  %6614 = vmatprep.subr.bf16.mxu0 0
  %6615 = vmatpush1.bf16.msra.mxu0 %v4993
  %6616 = vmatprep.subr.bf16.mxu0 0
  %6617 = vmatpush1.bf16.msra.mxu0 %v4994
  %6618 = vmatprep.subr.bf16.mxu0 0
  %6619 = vmatpush1.bf16.msra.mxu0 %v4995
  %6620 = vmatprep.subr.bf16.mxu0 0
  %6621 = vmatpush1.bf16.msra.mxu0 %v4996
  %6622 = vmatprep.subr.bf16.mxu0 0
  %6623 = vmatpush1.bf16.msra.mxu0 %v4997
  %6624 = vmatprep.mubr.bf16.mxu0 %v2443
  %6625 = vmatmul.mubr.bf16.gmra.mrb[0].mxu0 %v2442
  %v6626 = vpop.f32.mrb[0].mxu0
  %v6627 = vadd.f32 %v6530, %v6626
  %v6628 = vpop.f32.mrb[0].mxu0
  %v6629 = vpop.f32.mrb[0].mxu0
  %v6630 = vadd.f32 %v6533, %v6629
  %v6631 = vpop.f32.mrb[0].mxu0
  %6632 = vmatprep.mubr.bf16.mxu0 %v2493
  %6633 = vmatmul.mubr.bf16.gmra.mrb[0].mxu0 %v2492
  %v6634 = vpop.f32.mrb[0].mxu0
  %v6635 = vadd.f32 %v6538, %v6634
  %v6636 = vpop.f32.mrb[0].mxu0
  %v6637 = vpop.f32.mrb[0].mxu0
  %v6638 = vadd.f32 %v6541, %v6637
  %v6639 = vpop.f32.mrb[0].mxu0
  %6640 = vmatprep.mubr.bf16.mxu0 %v2543
  %6641 = vmatmul.mubr.bf16.gmra.mrb[0].mxu0 %v2542
  %v6642 = vpop.f32.mrb[0].mxu0
  %v6643 = vadd.f32 %v6546, %v6642
  %v6644 = vpop.f32.mrb[0].mxu0
  %v6645 = vpop.f32.mrb[0].mxu0
  %v6646 = vadd.f32 %v6549, %v6645
  %v6647 = vpop.f32.mrb[0].mxu0
  %6648 = vmatprep.mubr.bf16.mxu0 %v2593
  %6649 = vmatmul.mubr.bf16.gmra.mrb[0].mxu0 %v2592
  %v6650 = vpop.f32.mrb[0].mxu0
  %v6651 = vadd.f32 %v6554, %v6650
  %v6652 = vpop.f32.mrb[0].mxu0
  %v6653 = vpop.f32.mrb[0].mxu0
  %v6654 = vadd.f32 %v6557, %v6653
  %v6655 = vpop.f32.mrb[0].mxu0
  %6656 = vmatprep.mubr.bf16.mxu0 %v2643
  %6657 = vmatmul.mubr.bf16.gmra.mrb[0].mxu0 %v2642
  %v6658 = vpop.f32.mrb[0].mxu0
  %v6659 = vadd.f32 %v6562, %v6658
  %v6660 = vpop.f32.mrb[0].mxu0
  %v6661 = vpop.f32.mrb[0].mxu0
  %v6662 = vadd.f32 %v6565, %v6661
  %v6663 = vpop.f32.mrb[0].mxu0
  %6664 = vmatprep.mubr.bf16.mxu0 %v2693
  %6665 = vmatmul.mubr.bf16.gmra.mrb[0].mxu0 %v2692
  %v6666 = vpop.f32.mrb[0].mxu0
  %v6667 = vadd.f32 %v6570, %v6666
  %v6668 = vpop.f32.mrb[0].mxu0
  %v6669 = vpop.f32.mrb[0].mxu0
  %v6670 = vadd.f32 %v6573, %v6669
  %v6671 = vpop.f32.mrb[0].mxu0
  %6672 = vmatprep.mubr.bf16.mxu0 %v2743
  %6673 = vmatmul.mubr.bf16.gmra.mrb[0].mxu0 %v2742
  %v6674 = vpop.f32.mrb[0].mxu0
  %v6675 = vadd.f32 %v6578, %v6674
  %v6676 = vpop.f32.mrb[0].mxu0
  %v6677 = vpop.f32.mrb[0].mxu0
  %v6678 = vadd.f32 %v6581, %v6677
  %v6679 = vpop.f32.mrb[0].mxu0
  %6680 = vmatprep.mubr.bf16.mxu0 %v2793
  %6681 = vmatmul.mubr.bf16.gmra.mrb[0].mxu0 %v2792
  %v6682 = vpop.f32.mrb[0].mxu0
  %v6683 = vadd.f32 %v6586, %v6682
  %v6684 = vpop.f32.mrb[0].mxu0
  %v6685 = vpop.f32.mrb[0].mxu0
  %v6686 = vadd.f32 %v6589, %v6685
  %v6687 = vpop.f32.mrb[0].mxu0
  %6688 = vdwg.mxu0
  %6689 = vmatprep.subr.bf16.mxu0 0
  %6690 = vmatpush1.bf16.msra.mxu0 %v4998
  %6691 = vmatprep.subr.bf16.mxu0 0
  %6692 = vmatpush1.bf16.msra.mxu0 %v4999
  %6693 = vmatprep.subr.bf16.mxu0 0
  %6694 = vmatpush1.bf16.msra.mxu0 %v5000
  %6695 = vmatprep.subr.bf16.mxu0 0
  %6696 = vmatpush1.bf16.msra.mxu0 %v5001
  %6697 = vmatprep.subr.bf16.mxu0 0
  %6698 = vmatpush1.bf16.msra.mxu0 %v5002
  %6699 = vmatprep.subr.bf16.mxu0 0
  %6700 = vmatpush1.bf16.msra.mxu0 %v5003
  %6701 = vmatprep.subr.bf16.mxu0 0
  %6702 = vmatpush1.bf16.msra.mxu0 %v5004
  %6703 = vmatprep.subr.bf16.mxu0 0
  %6704 = vmatpush1.bf16.msra.mxu0 %v5005
  %6705 = vmatprep.subr.bf16.mxu0 0
  %6706 = vmatpush1.bf16.msra.mxu0 %v5006
  %6707 = vmatprep.subr.bf16.mxu0 0
  %6708 = vmatpush1.bf16.msra.mxu0 %v5007
  %6709 = vmatprep.subr.bf16.mxu0 0
  %6710 = vmatpush1.bf16.msra.mxu0 %v5008
  %6711 = vmatprep.subr.bf16.mxu0 0
  %6712 = vmatpush1.bf16.msra.mxu0 %v5009
  %6713 = vmatprep.subr.bf16.mxu0 0
  %6714 = vmatpush1.bf16.msra.mxu0 %v5010
  %6715 = vmatprep.subr.bf16.mxu0 0
  %6716 = vmatpush1.bf16.msra.mxu0 %v5011
  %6717 = vmatprep.subr.bf16.mxu0 0
  %6718 = vmatpush1.bf16.msra.mxu0 %v5012
  %6719 = vmatprep.subr.bf16.mxu0 0
  %6720 = vmatpush1.bf16.msra.mxu0 %v5013
  %6721 = vmatprep.mubr.bf16.mxu0 %v2445
  %6722 = vmatmul.mubr.bf16.gmra.mrb[0].mxu0 %v2444
  %v6723 = vpop.f32.mrb[0].mxu0
  %v6724 = vadd.f32 %v6627, %v6723
  %v6725 = vpop.f32.mrb[0].mxu0
  %v6726 = vpop.f32.mrb[0].mxu0
  %v6727 = vadd.f32 %v6630, %v6726
  %v6728 = vpop.f32.mrb[0].mxu0
  %6729 = vmatprep.mubr.bf16.mxu0 %v2495
  %6730 = vmatmul.mubr.bf16.gmra.mrb[0].mxu0 %v2494
  %v6731 = vpop.f32.mrb[0].mxu0
  %v6732 = vadd.f32 %v6635, %v6731
  %v6733 = vpop.f32.mrb[0].mxu0
  %v6734 = vpop.f32.mrb[0].mxu0
  %v6735 = vadd.f32 %v6638, %v6734
  %v6736 = vpop.f32.mrb[0].mxu0
  %6737 = vmatprep.mubr.bf16.mxu0 %v2545
  %6738 = vmatmul.mubr.bf16.gmra.mrb[0].mxu0 %v2544
  %v6739 = vpop.f32.mrb[0].mxu0
  %v6740 = vadd.f32 %v6643, %v6739
  %v6741 = vpop.f32.mrb[0].mxu0
  %v6742 = vpop.f32.mrb[0].mxu0
  %v6743 = vadd.f32 %v6646, %v6742
  %v6744 = vpop.f32.mrb[0].mxu0
  %6745 = vmatprep.mubr.bf16.mxu0 %v2595
  %6746 = vmatmul.mubr.bf16.gmra.mrb[0].mxu0 %v2594
  %v6747 = vpop.f32.mrb[0].mxu0
  %v6748 = vadd.f32 %v6651, %v6747
  %v6749 = vpop.f32.mrb[0].mxu0
  %v6750 = vpop.f32.mrb[0].mxu0
  %v6751 = vadd.f32 %v6654, %v6750
  %v6752 = vpop.f32.mrb[0].mxu0
  %6753 = vmatprep.mubr.bf16.mxu0 %v2645
  %6754 = vmatmul.mubr.bf16.gmra.mrb[0].mxu0 %v2644
  %v6755 = vpop.f32.mrb[0].mxu0
  %v6756 = vadd.f32 %v6659, %v6755
  %v6757 = vpop.f32.mrb[0].mxu0
  %v6758 = vpop.f32.mrb[0].mxu0
  %v6759 = vadd.f32 %v6662, %v6758
  %v6760 = vpop.f32.mrb[0].mxu0
  %6761 = vmatprep.mubr.bf16.mxu0 %v2695
  %6762 = vmatmul.mubr.bf16.gmra.mrb[0].mxu0 %v2694
  %v6763 = vpop.f32.mrb[0].mxu0
  %v6764 = vadd.f32 %v6667, %v6763
  %v6765 = vpop.f32.mrb[0].mxu0
  %v6766 = vpop.f32.mrb[0].mxu0
  %v6767 = vadd.f32 %v6670, %v6766
  %v6768 = vpop.f32.mrb[0].mxu0
  %6769 = vmatprep.mubr.bf16.mxu0 %v2745
  %6770 = vmatmul.mubr.bf16.gmra.mrb[0].mxu0 %v2744
  %v6771 = vpop.f32.mrb[0].mxu0
  %v6772 = vadd.f32 %v6675, %v6771
  %v6773 = vpop.f32.mrb[0].mxu0
  %v6774 = vpop.f32.mrb[0].mxu0
  %v6775 = vadd.f32 %v6678, %v6774
  %v6776 = vpop.f32.mrb[0].mxu0
  %6777 = vmatprep.mubr.bf16.mxu0 %v2795
  %6778 = vmatmul.mubr.bf16.gmra.mrb[0].mxu0 %v2794
  %v6779 = vpop.f32.mrb[0].mxu0
  %v6780 = vadd.f32 %v6683, %v6779
  %v6781 = vpop.f32.mrb[0].mxu0
  %v6782 = vpop.f32.mrb[0].mxu0
  %v6783 = vadd.f32 %v6686, %v6782
  %v6784 = vpop.f32.mrb[0].mxu0
  %6785 = vdwg.mxu0
  %6786 = vmatprep.subr.bf16.mxu0 0
  %6787 = vmatpush1.bf16.msra.mxu0 %v5014
  %6788 = vmatprep.subr.bf16.mxu0 0
  %6789 = vmatpush1.bf16.msra.mxu0 %v5015
  %6790 = vmatprep.subr.bf16.mxu0 0
  %6791 = vmatpush1.bf16.msra.mxu0 %v5016
  %6792 = vmatprep.subr.bf16.mxu0 0
  %6793 = vmatpush1.bf16.msra.mxu0 %v5017
  %6794 = vmatprep.subr.bf16.mxu0 0
  %6795 = vmatpush1.bf16.msra.mxu0 %v5018
  %6796 = vmatprep.subr.bf16.mxu0 0
  %6797 = vmatpush1.bf16.msra.mxu0 %v5019
  %6798 = vmatprep.subr.bf16.mxu0 0
  %6799 = vmatpush1.bf16.msra.mxu0 %v5020
  %6800 = vmatprep.subr.bf16.mxu0 0
  %6801 = vmatpush1.bf16.msra.mxu0 %v5021
  %6802 = vmatprep.subr.bf16.mxu0 0
  %6803 = vmatpush1.bf16.msra.mxu0 %v5022
  %6804 = vmatprep.subr.bf16.mxu0 0
  %6805 = vmatpush1.bf16.msra.mxu0 %v5023
  %6806 = vmatprep.subr.bf16.mxu0 0
  %6807 = vmatpush1.bf16.msra.mxu0 %v5024
  %6808 = vmatprep.subr.bf16.mxu0 0
  %6809 = vmatpush1.bf16.msra.mxu0 %v5025
  %6810 = vmatprep.subr.bf16.mxu0 0
  %6811 = vmatpush1.bf16.msra.mxu0 %v5026
  %6812 = vmatprep.subr.bf16.mxu0 0
  %6813 = vmatpush1.bf16.msra.mxu0 %v5027
  %6814 = vmatprep.subr.bf16.mxu0 0
  %6815 = vmatpush1.bf16.msra.mxu0 %v5028
  %6816 = vmatprep.subr.bf16.mxu0 0
  %6817 = vmatpush1.bf16.msra.mxu0 %v5029
  %6818 = vmatprep.mubr.bf16.mxu0 %v2447
  %6819 = vmatmul.mubr.bf16.gmra.mrb[0].mxu0 %v2446
  %v6820 = vpop.f32.mrb[0].mxu0
  %v6821 = vadd.f32 %v6724, %v6820
  %v6822 = vpop.f32.mrb[0].mxu0
  %v6823 = vpop.f32.mrb[0].mxu0
  %v6824 = vadd.f32 %v6727, %v6823
  %v6825 = vpop.f32.mrb[0].mxu0
  %6826 = vmatprep.mubr.bf16.mxu0 %v2497
  %6827 = vmatmul.mubr.bf16.gmra.mrb[0].mxu0 %v2496
  %v6828 = vpop.f32.mrb[0].mxu0
  %v6829 = vadd.f32 %v6732, %v6828
  %v6830 = vpop.f32.mrb[0].mxu0
  %v6831 = vpop.f32.mrb[0].mxu0
  %v6832 = vadd.f32 %v6735, %v6831
  %v6833 = vpop.f32.mrb[0].mxu0
  %6834 = vmatprep.mubr.bf16.mxu0 %v2547
  %6835 = vmatmul.mubr.bf16.gmra.mrb[0].mxu0 %v2546
  %v6836 = vpop.f32.mrb[0].mxu0
  %v6837 = vadd.f32 %v6740, %v6836
  %v6838 = vpop.f32.mrb[0].mxu0
  %v6839 = vpop.f32.mrb[0].mxu0
  %v6840 = vadd.f32 %v6743, %v6839
  %v6841 = vpop.f32.mrb[0].mxu0
  %6842 = vmatprep.mubr.bf16.mxu0 %v2597
  %6843 = vmatmul.mubr.bf16.gmra.mrb[0].mxu0 %v2596
  %v6844 = vpop.f32.mrb[0].mxu0
  %v6845 = vadd.f32 %v6748, %v6844
  %v6846 = vpop.f32.mrb[0].mxu0
  %v6847 = vpop.f32.mrb[0].mxu0
  %v6848 = vadd.f32 %v6751, %v6847
  %v6849 = vpop.f32.mrb[0].mxu0
  %6850 = vmatprep.mubr.bf16.mxu0 %v2647
  %6851 = vmatmul.mubr.bf16.gmra.mrb[0].mxu0 %v2646
  %v6852 = vpop.f32.mrb[0].mxu0
  %v6853 = vadd.f32 %v6756, %v6852
  %v6854 = vpop.f32.mrb[0].mxu0
  %v6855 = vpop.f32.mrb[0].mxu0
  %v6856 = vadd.f32 %v6759, %v6855
  %v6857 = vpop.f32.mrb[0].mxu0
  %6858 = vmatprep.mubr.bf16.mxu0 %v2697
  %6859 = vmatmul.mubr.bf16.gmra.mrb[0].mxu0 %v2696
  %v6860 = vpop.f32.mrb[0].mxu0
  %v6861 = vadd.f32 %v6764, %v6860
  %v6862 = vpop.f32.mrb[0].mxu0
  %v6863 = vpop.f32.mrb[0].mxu0
  %v6864 = vadd.f32 %v6767, %v6863
  %v6865 = vpop.f32.mrb[0].mxu0
  %6866 = vmatprep.mubr.bf16.mxu0 %v2747
  %6867 = vmatmul.mubr.bf16.gmra.mrb[0].mxu0 %v2746
  %v6868 = vpop.f32.mrb[0].mxu0
  %v6869 = vadd.f32 %v6772, %v6868
  %v6870 = vpop.f32.mrb[0].mxu0
  %v6871 = vpop.f32.mrb[0].mxu0
  %v6872 = vadd.f32 %v6775, %v6871
  %v6873 = vpop.f32.mrb[0].mxu0
  %6874 = vmatprep.mubr.bf16.mxu0 %v2797
  %6875 = vmatmul.mubr.bf16.gmra.mrb[0].mxu0 %v2796
  %v6876 = vpop.f32.mrb[0].mxu0
  %v6877 = vadd.f32 %v6780, %v6876
  %v6878 = vpop.f32.mrb[0].mxu0
  %v6879 = vpop.f32.mrb[0].mxu0
  %v6880 = vadd.f32 %v6783, %v6879
  %v6881 = vpop.f32.mrb[0].mxu0
  %6882 = vdwg.mxu0
  %6883 = vmatprep.subr.bf16.mxu0 0
  %6884 = vmatpush1.bf16.msra.mxu0 %v5030
  %6885 = vmatprep.subr.bf16.mxu0 0
  %6886 = vmatpush1.bf16.msra.mxu0 %v5031
  %6887 = vmatprep.subr.bf16.mxu0 0
  %6888 = vmatpush1.bf16.msra.mxu0 %v5032
  %6889 = vmatprep.subr.bf16.mxu0 0
  %6890 = vmatpush1.bf16.msra.mxu0 %v5033
  %6891 = vmatprep.subr.bf16.mxu0 0
  %6892 = vmatpush1.bf16.msra.mxu0 %v5034
  %6893 = vmatprep.subr.bf16.mxu0 0
  %6894 = vmatpush1.bf16.msra.mxu0 %v5035
  %6895 = vmatprep.subr.bf16.mxu0 0
  %6896 = vmatpush1.bf16.msra.mxu0 %v5036
  %6897 = vmatprep.subr.bf16.mxu0 0
  %6898 = vmatpush1.bf16.msra.mxu0 %v5037
  %6899 = vmatprep.subr.bf16.mxu0 0
  %6900 = vmatpush1.bf16.msra.mxu0 %v5038
  %6901 = vmatprep.subr.bf16.mxu0 0
  %6902 = vmatpush1.bf16.msra.mxu0 %v5039
  %6903 = vmatprep.subr.bf16.mxu0 0
  %6904 = vmatpush1.bf16.msra.mxu0 %v5040
  %6905 = vmatprep.subr.bf16.mxu0 0
  %6906 = vmatpush1.bf16.msra.mxu0 %v5041
  %6907 = vmatprep.subr.bf16.mxu0 0
  %6908 = vmatpush1.bf16.msra.mxu0 %v5042
  %6909 = vmatprep.subr.bf16.mxu0 0
  %6910 = vmatpush1.bf16.msra.mxu0 %v5043
  %6911 = vmatprep.subr.bf16.mxu0 0
  %6912 = vmatpush1.bf16.msra.mxu0 %v5044
  %6913 = vmatprep.subr.bf16.mxu0 0
  %6914 = vmatpush1.bf16.msra.mxu0 %v5045
  %6915 = vmatprep.mubr.bf16.mxu0 %v2449
  %6916 = vmatmul.mubr.bf16.gmra.mrb[0].mxu0 %v2448
  %v6917 = vpop.f32.mrb[0].mxu0
  %v6918 = vadd.f32 %v6821, %v6917
  %v6919 = vpop.f32.mrb[0].mxu0
  %v6920 = vpop.f32.mrb[0].mxu0
  %v6921 = vadd.f32 %v6824, %v6920
  %v6922 = vpop.f32.mrb[0].mxu0
  %6923 = vmatprep.mubr.bf16.mxu0 %v2499
  %6924 = vmatmul.mubr.bf16.gmra.mrb[0].mxu0 %v2498
  %v6925 = vpop.f32.mrb[0].mxu0
  %v6926 = vadd.f32 %v6829, %v6925
  %v6927 = vpop.f32.mrb[0].mxu0
  %v6928 = vpop.f32.mrb[0].mxu0
  %v6929 = vadd.f32 %v6832, %v6928
  %v6930 = vpop.f32.mrb[0].mxu0
  %6931 = vmatprep.mubr.bf16.mxu0 %v2549
  %6932 = vmatmul.mubr.bf16.gmra.mrb[0].mxu0 %v2548
  %v6933 = vpop.f32.mrb[0].mxu0
  %v6934 = vadd.f32 %v6837, %v6933
  %v6935 = vpop.f32.mrb[0].mxu0
  %v6936 = vpop.f32.mrb[0].mxu0
  %v6937 = vadd.f32 %v6840, %v6936
  %v6938 = vpop.f32.mrb[0].mxu0
  %6939 = vmatprep.mubr.bf16.mxu0 %v2599
  %6940 = vmatmul.mubr.bf16.gmra.mrb[0].mxu0 %v2598
  %v6941 = vpop.f32.mrb[0].mxu0
  %v6942 = vadd.f32 %v6845, %v6941
  %v6943 = vpop.f32.mrb[0].mxu0
  %v6944 = vpop.f32.mrb[0].mxu0
  %v6945 = vadd.f32 %v6848, %v6944
  %v6946 = vpop.f32.mrb[0].mxu0
  %6947 = vmatprep.mubr.bf16.mxu0 %v2649
  %6948 = vmatmul.mubr.bf16.gmra.mrb[0].mxu0 %v2648
  %v6949 = vpop.f32.mrb[0].mxu0
  %v6950 = vadd.f32 %v6853, %v6949
  %v6951 = vpop.f32.mrb[0].mxu0
  %v6952 = vpop.f32.mrb[0].mxu0
  %v6953 = vadd.f32 %v6856, %v6952
  %v6954 = vpop.f32.mrb[0].mxu0
  %6955 = vmatprep.mubr.bf16.mxu0 %v2699
  %6956 = vmatmul.mubr.bf16.gmra.mrb[0].mxu0 %v2698
  %v6957 = vpop.f32.mrb[0].mxu0
  %v6958 = vadd.f32 %v6861, %v6957
  %v6959 = vpop.f32.mrb[0].mxu0
  %v6960 = vpop.f32.mrb[0].mxu0
  %v6961 = vadd.f32 %v6864, %v6960
  %v6962 = vpop.f32.mrb[0].mxu0
  %6963 = vmatprep.mubr.bf16.mxu0 %v2749
  %6964 = vmatmul.mubr.bf16.gmra.mrb[0].mxu0 %v2748
  %v6965 = vpop.f32.mrb[0].mxu0
  %v6966 = vadd.f32 %v6869, %v6965
  %v6967 = vpop.f32.mrb[0].mxu0
  %v6968 = vpop.f32.mrb[0].mxu0
  %v6969 = vadd.f32 %v6872, %v6968
  %v6970 = vpop.f32.mrb[0].mxu0
  %6971 = vmatprep.mubr.bf16.mxu0 %v2799
  %6972 = vmatmul.mubr.bf16.gmra.mrb[0].mxu0 %v2798
  %v6973 = vpop.f32.mrb[0].mxu0
  %v6974 = vadd.f32 %v6877, %v6973
  %v6975 = vpop.f32.mrb[0].mxu0
  %v6976 = vpop.f32.mrb[0].mxu0
  %v6977 = vadd.f32 %v6880, %v6976
  %v6978 = vpop.f32.mrb[0].mxu0
  %6979 = vdwg.mxu0
  %6980 = vmatprep.subr.bf16.mxu0 0
  %6981 = vmatpush1.bf16.msra.mxu0 %v5046
  %6982 = vmatprep.subr.bf16.mxu0 0
  %6983 = vmatpush1.bf16.msra.mxu0 %v5047
  %6984 = vmatprep.subr.bf16.mxu0 0
  %6985 = vmatpush1.bf16.msra.mxu0 %v5048
  %6986 = vmatprep.subr.bf16.mxu0 0
  %6987 = vmatpush1.bf16.msra.mxu0 %v5049
  %6988 = vmatprep.subr.bf16.mxu0 0
  %6989 = vmatpush1.bf16.msra.mxu0 %v5050
  %6990 = vmatprep.subr.bf16.mxu0 0
  %6991 = vmatpush1.bf16.msra.mxu0 %v5051
  %6992 = vmatprep.subr.bf16.mxu0 0
  %6993 = vmatpush1.bf16.msra.mxu0 %v5052
  %6994 = vmatprep.subr.bf16.mxu0 0
  %6995 = vmatpush1.bf16.msra.mxu0 %v5053
  %6996 = vmatprep.subr.bf16.mxu0 0
  %6997 = vmatpush1.bf16.msra.mxu0 %v5054
  %6998 = vmatprep.subr.bf16.mxu0 0
  %6999 = vmatpush1.bf16.msra.mxu0 %v5055
  %7000 = vmatprep.subr.bf16.mxu0 0
  %7001 = vmatpush1.bf16.msra.mxu0 %v5056
  %7002 = vmatprep.subr.bf16.mxu0 0
  %7003 = vmatpush1.bf16.msra.mxu0 %v5057
  %7004 = vmatprep.subr.bf16.mxu0 0
  %7005 = vmatpush1.bf16.msra.mxu0 %v5058
  %7006 = vmatprep.subr.bf16.mxu0 0
  %7007 = vmatpush1.bf16.msra.mxu0 %v5059
  %7008 = vmatprep.subr.bf16.mxu0 0
  %7009 = vmatpush1.bf16.msra.mxu0 %v5060
  %7010 = vmatprep.subr.bf16.mxu0 0
  %7011 = vmatpush1.bf16.msra.mxu0 %v5061
  %7012 = vmatprep.mubr.bf16.mxu0 %v2451
  %7013 = vmatmul.mubr.bf16.gmra.mrb[0].mxu0 %v2450
  %v7014 = vpop.f32.mrb[0].mxu0
  %v7015 = vadd.f32 %v6918, %v7014
  %v7016 = vpop.f32.mrb[0].mxu0
  %v7017 = vpop.f32.mrb[0].mxu0
  %v7018 = vadd.f32 %v6921, %v7017
  %v7019 = vpop.f32.mrb[0].mxu0
  %7020 = vmatprep.mubr.bf16.mxu0 %v2501
  %7021 = vmatmul.mubr.bf16.gmra.mrb[0].mxu0 %v2500
  %v7022 = vpop.f32.mrb[0].mxu0
  %v7023 = vadd.f32 %v6926, %v7022
  %v7024 = vpop.f32.mrb[0].mxu0
  %v7025 = vpop.f32.mrb[0].mxu0
  %v7026 = vadd.f32 %v6929, %v7025
  %v7027 = vpop.f32.mrb[0].mxu0
  %7028 = vmatprep.mubr.bf16.mxu0 %v2551
  %7029 = vmatmul.mubr.bf16.gmra.mrb[0].mxu0 %v2550
  %v7030 = vpop.f32.mrb[0].mxu0
  %v7031 = vadd.f32 %v6934, %v7030
  %v7032 = vpop.f32.mrb[0].mxu0
  %v7033 = vpop.f32.mrb[0].mxu0
  %v7034 = vadd.f32 %v6937, %v7033
  %v7035 = vpop.f32.mrb[0].mxu0
  %7036 = vmatprep.mubr.bf16.mxu0 %v2601
  %7037 = vmatmul.mubr.bf16.gmra.mrb[0].mxu0 %v2600
  %v7038 = vpop.f32.mrb[0].mxu0
  %v7039 = vadd.f32 %v6942, %v7038
  %v7040 = vpop.f32.mrb[0].mxu0
  %v7041 = vpop.f32.mrb[0].mxu0
  %v7042 = vadd.f32 %v6945, %v7041
  %v7043 = vpop.f32.mrb[0].mxu0
  %7044 = vmatprep.mubr.bf16.mxu0 %v2651
  %7045 = vmatmul.mubr.bf16.gmra.mrb[0].mxu0 %v2650
  %v7046 = vpop.f32.mrb[0].mxu0
  %v7047 = vadd.f32 %v6950, %v7046
  %v7048 = vpop.f32.mrb[0].mxu0
  %v7049 = vpop.f32.mrb[0].mxu0
  %v7050 = vadd.f32 %v6953, %v7049
  %v7051 = vpop.f32.mrb[0].mxu0
  %7052 = vmatprep.mubr.bf16.mxu0 %v2701
  %7053 = vmatmul.mubr.bf16.gmra.mrb[0].mxu0 %v2700
  %v7054 = vpop.f32.mrb[0].mxu0
  %v7055 = vadd.f32 %v6958, %v7054
  %v7056 = vpop.f32.mrb[0].mxu0
  %v7057 = vpop.f32.mrb[0].mxu0
  %v7058 = vadd.f32 %v6961, %v7057
  %v7059 = vpop.f32.mrb[0].mxu0
  %7060 = vmatprep.mubr.bf16.mxu0 %v2751
  %7061 = vmatmul.mubr.bf16.gmra.mrb[0].mxu0 %v2750
  %v7062 = vpop.f32.mrb[0].mxu0
  %v7063 = vadd.f32 %v6966, %v7062
  %v7064 = vpop.f32.mrb[0].mxu0
  %v7065 = vpop.f32.mrb[0].mxu0
  %v7066 = vadd.f32 %v6969, %v7065
  %v7067 = vpop.f32.mrb[0].mxu0
  %7068 = vmatprep.mubr.bf16.mxu0 %v2801
  %7069 = vmatmul.mubr.bf16.gmra.mrb[0].mxu0 %v2800
  %v7070 = vpop.f32.mrb[0].mxu0
  %v7071 = vadd.f32 %v6974, %v7070
  %v7072 = vpop.f32.mrb[0].mxu0
  %v7073 = vpop.f32.mrb[0].mxu0
  %v7074 = vadd.f32 %v6977, %v7073
  %v7075 = vpop.f32.mrb[0].mxu0
  %7076 = vdwg.mxu0
  %7077 = vmatprep.subr.bf16.mxu0 0
  %7078 = vmatpush1.bf16.msra.mxu0 %v5062
  %7079 = vmatprep.subr.bf16.mxu0 0
  %7080 = vmatpush1.bf16.msra.mxu0 %v5063
  %7081 = vmatprep.subr.bf16.mxu0 0
  %7082 = vmatpush1.bf16.msra.mxu0 %v5064
  %7083 = vmatprep.subr.bf16.mxu0 0
  %7084 = vmatpush1.bf16.msra.mxu0 %v5065
  %7085 = vmatprep.subr.bf16.mxu0 0
  %7086 = vmatpush1.bf16.msra.mxu0 %v5066
  %7087 = vmatprep.subr.bf16.mxu0 0
  %7088 = vmatpush1.bf16.msra.mxu0 %v5067
  %7089 = vmatprep.subr.bf16.mxu0 0
  %7090 = vmatpush1.bf16.msra.mxu0 %v5068
  %7091 = vmatprep.subr.bf16.mxu0 0
  %7092 = vmatpush1.bf16.msra.mxu0 %v5069
  %7093 = vmatprep.subr.bf16.mxu0 0
  %7094 = vmatpush1.bf16.msra.mxu0 %v5070
  %7095 = vmatprep.subr.bf16.mxu0 0
  %7096 = vmatpush1.bf16.msra.mxu0 %v5071
  %7097 = vmatprep.subr.bf16.mxu0 0
  %7098 = vmatpush1.bf16.msra.mxu0 %v5072
  %7099 = vmatprep.subr.bf16.mxu0 0
  %7100 = vmatpush1.bf16.msra.mxu0 %v5073
  %7101 = vmatprep.subr.bf16.mxu0 0
  %7102 = vmatpush1.bf16.msra.mxu0 %v5074
  %7103 = vmatprep.subr.bf16.mxu0 0
  %7104 = vmatpush1.bf16.msra.mxu0 %v5075
  %7105 = vmatprep.subr.bf16.mxu0 0
  %7106 = vmatpush1.bf16.msra.mxu0 %v5076
  %7107 = vmatprep.subr.bf16.mxu0 0
  %7108 = vmatpush1.bf16.msra.mxu0 %v5077
  %7109 = vmatprep.mubr.bf16.mxu0 %v2453
  %7110 = vmatmul.mubr.bf16.gmra.mrb[0].mxu0 %v2452
  %v7111 = vpop.f32.mrb[0].mxu0
  %v7112 = vadd.f32 %v7015, %v7111
  %v7113 = vpop.f32.mrb[0].mxu0
  %v7114 = vpop.f32.mrb[0].mxu0
  %v7115 = vadd.f32 %v7018, %v7114
  %v7116 = vpop.f32.mrb[0].mxu0
  %7117 = vmatprep.mubr.bf16.mxu0 %v2503
  %7118 = vmatmul.mubr.bf16.gmra.mrb[0].mxu0 %v2502
  %v7119 = vpop.f32.mrb[0].mxu0
  %v7120 = vadd.f32 %v7023, %v7119
  %v7121 = vpop.f32.mrb[0].mxu0
  %v7122 = vpop.f32.mrb[0].mxu0
  %v7123 = vadd.f32 %v7026, %v7122
  %v7124 = vpop.f32.mrb[0].mxu0
  %7125 = vmatprep.mubr.bf16.mxu0 %v2553
  %7126 = vmatmul.mubr.bf16.gmra.mrb[0].mxu0 %v2552
  %v7127 = vpop.f32.mrb[0].mxu0
  %v7128 = vadd.f32 %v7031, %v7127
  %v7129 = vpop.f32.mrb[0].mxu0
  %v7130 = vpop.f32.mrb[0].mxu0
  %v7131 = vadd.f32 %v7034, %v7130
  %v7132 = vpop.f32.mrb[0].mxu0
  %7133 = vmatprep.mubr.bf16.mxu0 %v2603
  %7134 = vmatmul.mubr.bf16.gmra.mrb[0].mxu0 %v2602
  %v7135 = vpop.f32.mrb[0].mxu0
  %v7136 = vadd.f32 %v7039, %v7135
  %v7137 = vpop.f32.mrb[0].mxu0
  %v7138 = vpop.f32.mrb[0].mxu0
  %v7139 = vadd.f32 %v7042, %v7138
  %v7140 = vpop.f32.mrb[0].mxu0
  %7141 = vmatprep.mubr.bf16.mxu0 %v2653
  %7142 = vmatmul.mubr.bf16.gmra.mrb[0].mxu0 %v2652
  %v7143 = vpop.f32.mrb[0].mxu0
  %v7144 = vadd.f32 %v7047, %v7143
  %v7145 = vpop.f32.mrb[0].mxu0
  %v7146 = vpop.f32.mrb[0].mxu0
  %v7147 = vadd.f32 %v7050, %v7146
  %v7148 = vpop.f32.mrb[0].mxu0
  %7149 = vmatprep.mubr.bf16.mxu0 %v2703
  %7150 = vmatmul.mubr.bf16.gmra.mrb[0].mxu0 %v2702
  %v7151 = vpop.f32.mrb[0].mxu0
  %v7152 = vadd.f32 %v7055, %v7151
  %v7153 = vpop.f32.mrb[0].mxu0
  %v7154 = vpop.f32.mrb[0].mxu0
  %v7155 = vadd.f32 %v7058, %v7154
  %v7156 = vpop.f32.mrb[0].mxu0
  %7157 = vmatprep.mubr.bf16.mxu0 %v2753
  %7158 = vmatmul.mubr.bf16.gmra.mrb[0].mxu0 %v2752
  %v7159 = vpop.f32.mrb[0].mxu0
  %v7160 = vadd.f32 %v7063, %v7159
  %v7161 = vpop.f32.mrb[0].mxu0
  %v7162 = vpop.f32.mrb[0].mxu0
  %v7163 = vadd.f32 %v7066, %v7162
  %v7164 = vpop.f32.mrb[0].mxu0
  %7165 = vmatprep.mubr.bf16.mxu0 %v2803
  %7166 = vmatmul.mubr.bf16.gmra.mrb[0].mxu0 %v2802
  %v7167 = vpop.f32.mrb[0].mxu0
  %v7168 = vadd.f32 %v7071, %v7167
  %v7169 = vpop.f32.mrb[0].mxu0
  %v7170 = vpop.f32.mrb[0].mxu0
  %v7171 = vadd.f32 %v7074, %v7170
  %v7172 = vpop.f32.mrb[0].mxu0
  %7173 = vdwg.mxu0
  %7174 = vmatprep.subr.bf16.mxu0 0
  %7175 = vmatpush1.bf16.msra.mxu0 %v5078
  %7176 = vmatprep.subr.bf16.mxu0 0
  %7177 = vmatpush1.bf16.msra.mxu0 %v5079
  %7178 = vmatprep.subr.bf16.mxu0 0
  %7179 = vmatpush1.bf16.msra.mxu0 %v5080
  %7180 = vmatprep.subr.bf16.mxu0 0
  %7181 = vmatpush1.bf16.msra.mxu0 %v5081
  %7182 = vmatprep.subr.bf16.mxu0 0
  %7183 = vmatpush1.bf16.msra.mxu0 %v5082
  %7184 = vmatprep.subr.bf16.mxu0 0
  %7185 = vmatpush1.bf16.msra.mxu0 %v5083
  %7186 = vmatprep.subr.bf16.mxu0 0
  %7187 = vmatpush1.bf16.msra.mxu0 %v5084
  %7188 = vmatprep.subr.bf16.mxu0 0
  %7189 = vmatpush1.bf16.msra.mxu0 %v5085
  %7190 = vmatprep.subr.bf16.mxu0 0
  %7191 = vmatpush1.bf16.msra.mxu0 %v5086
  %7192 = vmatprep.subr.bf16.mxu0 0
  %7193 = vmatpush1.bf16.msra.mxu0 %v5087
  %7194 = vmatprep.subr.bf16.mxu0 0
  %7195 = vmatpush1.bf16.msra.mxu0 %v5088
  %7196 = vmatprep.subr.bf16.mxu0 0
  %7197 = vmatpush1.bf16.msra.mxu0 %v5089
  %7198 = vmatprep.subr.bf16.mxu0 0
  %7199 = vmatpush1.bf16.msra.mxu0 %v5090
  %7200 = vmatprep.subr.bf16.mxu0 0
  %7201 = vmatpush1.bf16.msra.mxu0 %v5091
  %7202 = vmatprep.subr.bf16.mxu0 0
  %7203 = vmatpush1.bf16.msra.mxu0 %v5092
  %7204 = vmatprep.subr.bf16.mxu0 0
  %7205 = vmatpush1.bf16.msra.mxu0 %v5093
  %7206 = vmatprep.mubr.bf16.mxu0 %v2455
  %7207 = vmatmul.mubr.bf16.gmra.mrb[0].mxu0 %v2454
  %v7208 = vpop.f32.mrb[0].mxu0
  %v7209 = vadd.f32 %v7112, %v7208
  %v7210 = vpop.f32.mrb[0].mxu0
  %v7211 = vpop.f32.mrb[0].mxu0
  %v7212 = vadd.f32 %v7115, %v7211
  %v7213 = vpop.f32.mrb[0].mxu0
  %7214 = vmatprep.mubr.bf16.mxu0 %v2505
  %7215 = vmatmul.mubr.bf16.gmra.mrb[0].mxu0 %v2504
  %v7216 = vpop.f32.mrb[0].mxu0
  %v7217 = vadd.f32 %v7120, %v7216
  %v7218 = vpop.f32.mrb[0].mxu0
  %v7219 = vpop.f32.mrb[0].mxu0
  %v7220 = vadd.f32 %v7123, %v7219
  %v7221 = vpop.f32.mrb[0].mxu0
  %7222 = vmatprep.mubr.bf16.mxu0 %v2555
  %7223 = vmatmul.mubr.bf16.gmra.mrb[0].mxu0 %v2554
  %v7224 = vpop.f32.mrb[0].mxu0
  %v7225 = vadd.f32 %v7128, %v7224
  %v7226 = vpop.f32.mrb[0].mxu0
  %v7227 = vpop.f32.mrb[0].mxu0
  %v7228 = vadd.f32 %v7131, %v7227
  %v7229 = vpop.f32.mrb[0].mxu0
  %7230 = vmatprep.mubr.bf16.mxu0 %v2605
  %7231 = vmatmul.mubr.bf16.gmra.mrb[0].mxu0 %v2604
  %v7232 = vpop.f32.mrb[0].mxu0
  %v7233 = vadd.f32 %v7136, %v7232
  %v7234 = vpop.f32.mrb[0].mxu0
  %v7235 = vpop.f32.mrb[0].mxu0
  %v7236 = vadd.f32 %v7139, %v7235
  %v7237 = vpop.f32.mrb[0].mxu0
  %7238 = vmatprep.mubr.bf16.mxu0 %v2655
  %7239 = vmatmul.mubr.bf16.gmra.mrb[0].mxu0 %v2654
  %v7240 = vpop.f32.mrb[0].mxu0
  %v7241 = vadd.f32 %v7144, %v7240
  %v7242 = vpop.f32.mrb[0].mxu0
  %v7243 = vpop.f32.mrb[0].mxu0
  %v7244 = vadd.f32 %v7147, %v7243
  %v7245 = vpop.f32.mrb[0].mxu0
  %7246 = vmatprep.mubr.bf16.mxu0 %v2705
  %7247 = vmatmul.mubr.bf16.gmra.mrb[0].mxu0 %v2704
  %v7248 = vpop.f32.mrb[0].mxu0
  %v7249 = vadd.f32 %v7152, %v7248
  %v7250 = vpop.f32.mrb[0].mxu0
  %v7251 = vpop.f32.mrb[0].mxu0
  %v7252 = vadd.f32 %v7155, %v7251
  %v7253 = vpop.f32.mrb[0].mxu0
  %7254 = vmatprep.mubr.bf16.mxu0 %v2755
  %7255 = vmatmul.mubr.bf16.gmra.mrb[0].mxu0 %v2754
  %v7256 = vpop.f32.mrb[0].mxu0
  %v7257 = vadd.f32 %v7160, %v7256
  %v7258 = vpop.f32.mrb[0].mxu0
  %v7259 = vpop.f32.mrb[0].mxu0
  %v7260 = vadd.f32 %v7163, %v7259
  %v7261 = vpop.f32.mrb[0].mxu0
  %7262 = vmatprep.mubr.bf16.mxu0 %v2805
  %7263 = vmatmul.mubr.bf16.gmra.mrb[0].mxu0 %v2804
  %v7264 = vpop.f32.mrb[0].mxu0
  %v7265 = vadd.f32 %v7168, %v7264
  %v7266 = vpop.f32.mrb[0].mxu0
  %v7267 = vpop.f32.mrb[0].mxu0
  %v7268 = vadd.f32 %v7171, %v7267
  %v7269 = vpop.f32.mrb[0].mxu0
  %7270 = vdwg.mxu0
  %7271 = vmatprep.subr.bf16.mxu0 0
  %7272 = vmatpush1.bf16.msra.mxu0 %v5094
  %7273 = vmatprep.subr.bf16.mxu0 0
  %7274 = vmatpush1.bf16.msra.mxu0 %v5095
  %7275 = vmatprep.subr.bf16.mxu0 0
  %7276 = vmatpush1.bf16.msra.mxu0 %v5096
  %7277 = vmatprep.subr.bf16.mxu0 0
  %7278 = vmatpush1.bf16.msra.mxu0 %v5097
  %7279 = vmatprep.subr.bf16.mxu0 0
  %7280 = vmatpush1.bf16.msra.mxu0 %v5098
  %7281 = vmatprep.subr.bf16.mxu0 0
  %7282 = vmatpush1.bf16.msra.mxu0 %v5099
  %7283 = vmatprep.subr.bf16.mxu0 0
  %7284 = vmatpush1.bf16.msra.mxu0 %v5100
  %7285 = vmatprep.subr.bf16.mxu0 0
  %7286 = vmatpush1.bf16.msra.mxu0 %v5101
  %7287 = vmatprep.subr.bf16.mxu0 0
  %7288 = vmatpush1.bf16.msra.mxu0 %v5102
  %7289 = vmatprep.subr.bf16.mxu0 0
  %7290 = vmatpush1.bf16.msra.mxu0 %v5103
  %7291 = vmatprep.subr.bf16.mxu0 0
  %7292 = vmatpush1.bf16.msra.mxu0 %v5104
  %7293 = vmatprep.subr.bf16.mxu0 0
  %7294 = vmatpush1.bf16.msra.mxu0 %v5105
  %7295 = vmatprep.subr.bf16.mxu0 0
  %7296 = vmatpush1.bf16.msra.mxu0 %v5106
  %7297 = vmatprep.subr.bf16.mxu0 0
  %7298 = vmatpush1.bf16.msra.mxu0 %v5107
  %7299 = vmatprep.subr.bf16.mxu0 0
  %7300 = vmatpush1.bf16.msra.mxu0 %v5108
  %7301 = vmatprep.subr.bf16.mxu0 0
  %7302 = vmatpush1.bf16.msra.mxu0 %v5109
  %7303 = vmatprep.mubr.bf16.mxu0 %v2457
  %7304 = vmatmul.mubr.bf16.gmra.mrb[0].mxu0 %v2456
  %v7305 = vpop.f32.mrb[0].mxu0
  %v7306 = vadd.f32 %v7209, %v7305
  %v7307 = vpop.f32.mrb[0].mxu0
  %v7308 = vpop.f32.mrb[0].mxu0
  %v7309 = vadd.f32 %v7212, %v7308
  %v7310 = vpop.f32.mrb[0].mxu0
  %7311 = vmatprep.mubr.bf16.mxu0 %v2507
  %7312 = vmatmul.mubr.bf16.gmra.mrb[0].mxu0 %v2506
  %v7313 = vpop.f32.mrb[0].mxu0
  %v7314 = vadd.f32 %v7217, %v7313
  %v7315 = vpop.f32.mrb[0].mxu0
  %v7316 = vpop.f32.mrb[0].mxu0
  %v7317 = vadd.f32 %v7220, %v7316
  %v7318 = vpop.f32.mrb[0].mxu0
  %7319 = vmatprep.mubr.bf16.mxu0 %v2557
  %7320 = vmatmul.mubr.bf16.gmra.mrb[0].mxu0 %v2556
  %v7321 = vpop.f32.mrb[0].mxu0
  %v7322 = vadd.f32 %v7225, %v7321
  %v7323 = vpop.f32.mrb[0].mxu0
  %v7324 = vpop.f32.mrb[0].mxu0
  %v7325 = vadd.f32 %v7228, %v7324
  %v7326 = vpop.f32.mrb[0].mxu0
  %7327 = vmatprep.mubr.bf16.mxu0 %v2607
  %7328 = vmatmul.mubr.bf16.gmra.mrb[0].mxu0 %v2606
  %v7329 = vpop.f32.mrb[0].mxu0
  %v7330 = vadd.f32 %v7233, %v7329
  %v7331 = vpop.f32.mrb[0].mxu0
  %v7332 = vpop.f32.mrb[0].mxu0
  %v7333 = vadd.f32 %v7236, %v7332
  %v7334 = vpop.f32.mrb[0].mxu0
  %7335 = vmatprep.mubr.bf16.mxu0 %v2657
  %7336 = vmatmul.mubr.bf16.gmra.mrb[0].mxu0 %v2656
  %v7337 = vpop.f32.mrb[0].mxu0
  %v7338 = vadd.f32 %v7241, %v7337
  %v7339 = vpop.f32.mrb[0].mxu0
  %v7340 = vpop.f32.mrb[0].mxu0
  %v7341 = vadd.f32 %v7244, %v7340
  %v7342 = vpop.f32.mrb[0].mxu0
  %7343 = vmatprep.mubr.bf16.mxu0 %v2707
  %7344 = vmatmul.mubr.bf16.gmra.mrb[0].mxu0 %v2706
  %v7345 = vpop.f32.mrb[0].mxu0
  %v7346 = vadd.f32 %v7249, %v7345
  %v7347 = vpop.f32.mrb[0].mxu0
  %v7348 = vpop.f32.mrb[0].mxu0
  %v7349 = vadd.f32 %v7252, %v7348
  %v7350 = vpop.f32.mrb[0].mxu0
  %7351 = vmatprep.mubr.bf16.mxu0 %v2757
  %7352 = vmatmul.mubr.bf16.gmra.mrb[0].mxu0 %v2756
  %v7353 = vpop.f32.mrb[0].mxu0
  %v7354 = vadd.f32 %v7257, %v7353
  %v7355 = vpop.f32.mrb[0].mxu0
  %v7356 = vpop.f32.mrb[0].mxu0
  %v7357 = vadd.f32 %v7260, %v7356
  %v7358 = vpop.f32.mrb[0].mxu0
  %7359 = vmatprep.mubr.bf16.mxu0 %v2807
  %7360 = vmatmul.mubr.bf16.gmra.mrb[0].mxu0 %v2806
  %v7361 = vpop.f32.mrb[0].mxu0
  %v7362 = vadd.f32 %v7265, %v7361
  %v7363 = vpop.f32.mrb[0].mxu0
  %v7364 = vpop.f32.mrb[0].mxu0
  %v7365 = vadd.f32 %v7268, %v7364
  %v7366 = vpop.f32.mrb[0].mxu0
  %7367 = vdwg.mxu0
  %7368 = vmatprep.subr.bf16.mxu0 0
  %7369 = vmatpush1.bf16.msra.mxu0 %v5110
  %7370 = vmatprep.subr.bf16.mxu0 0
  %7371 = vmatpush1.bf16.msra.mxu0 %v5111
  %7372 = vmatprep.subr.bf16.mxu0 0
  %7373 = vmatpush1.bf16.msra.mxu0 %v5112
  %7374 = vmatprep.subr.bf16.mxu0 0
  %7375 = vmatpush1.bf16.msra.mxu0 %v5113
  %7376 = vmatprep.subr.bf16.mxu0 0
  %7377 = vmatpush1.bf16.msra.mxu0 %v5114
  %7378 = vmatprep.subr.bf16.mxu0 0
  %7379 = vmatpush1.bf16.msra.mxu0 %v5115
  %7380 = vmatprep.subr.bf16.mxu0 0
  %7381 = vmatpush1.bf16.msra.mxu0 %v5116
  %7382 = vmatprep.subr.bf16.mxu0 0
  %7383 = vmatpush1.bf16.msra.mxu0 %v5117
  %7384 = vmatprep.subr.bf16.mxu0 0
  %7385 = vmatpush1.bf16.msra.mxu0 %v5118
  %7386 = vmatprep.subr.bf16.mxu0 0
  %7387 = vmatpush1.bf16.msra.mxu0 %v5119
  %7388 = vmatprep.subr.bf16.mxu0 0
  %7389 = vmatpush1.bf16.msra.mxu0 %v5120
  %7390 = vmatprep.subr.bf16.mxu0 0
  %7391 = vmatpush1.bf16.msra.mxu0 %v5121
  %7392 = vmatprep.subr.bf16.mxu0 0
  %7393 = vmatpush1.bf16.msra.mxu0 %v5122
  %7394 = vmatprep.subr.bf16.mxu0 0
  %7395 = vmatpush1.bf16.msra.mxu0 %v5123
  %7396 = vmatprep.subr.bf16.mxu0 0
  %7397 = vmatpush1.bf16.msra.mxu0 %v5124
  %7398 = vmatprep.subr.bf16.mxu0 0
  %7399 = vmatpush1.bf16.msra.mxu0 %v5125
  %7400 = vmatprep.mubr.bf16.mxu0 %v2459
  %7401 = vmatmul.mubr.bf16.gmra.mrb[0].mxu0 %v2458
  %v7402 = vpop.f32.mrb[0].mxu0
  %v7403 = vadd.f32 %v7306, %v7402
  %v7404 = vpop.f32.mrb[0].mxu0
  %v7405 = vpop.f32.mrb[0].mxu0
  %v7406 = vadd.f32 %v7309, %v7405
  %v7407 = vpop.f32.mrb[0].mxu0
  %7408 = vmatprep.mubr.bf16.mxu0 %v2509
  %7409 = vmatmul.mubr.bf16.gmra.mrb[0].mxu0 %v2508
  %v7410 = vpop.f32.mrb[0].mxu0
  %v7411 = vadd.f32 %v7314, %v7410
  %v7412 = vpop.f32.mrb[0].mxu0
  %v7413 = vpop.f32.mrb[0].mxu0
  %v7414 = vadd.f32 %v7317, %v7413
  %v7415 = vpop.f32.mrb[0].mxu0
  %7416 = vmatprep.mubr.bf16.mxu0 %v2559
  %7417 = vmatmul.mubr.bf16.gmra.mrb[0].mxu0 %v2558
  %v7418 = vpop.f32.mrb[0].mxu0
  %v7419 = vadd.f32 %v7322, %v7418
  %v7420 = vpop.f32.mrb[0].mxu0
  %v7421 = vpop.f32.mrb[0].mxu0
  %v7422 = vadd.f32 %v7325, %v7421
  %v7423 = vpop.f32.mrb[0].mxu0
  %7424 = vmatprep.mubr.bf16.mxu0 %v2609
  %7425 = vmatmul.mubr.bf16.gmra.mrb[0].mxu0 %v2608
  %v7426 = vpop.f32.mrb[0].mxu0
  %v7427 = vadd.f32 %v7330, %v7426
  %v7428 = vpop.f32.mrb[0].mxu0
  %v7429 = vpop.f32.mrb[0].mxu0
  %v7430 = vadd.f32 %v7333, %v7429
  %v7431 = vpop.f32.mrb[0].mxu0
  %7432 = vmatprep.mubr.bf16.mxu0 %v2659
  %7433 = vmatmul.mubr.bf16.gmra.mrb[0].mxu0 %v2658
  %v7434 = vpop.f32.mrb[0].mxu0
  %v7435 = vadd.f32 %v7338, %v7434
  %v7436 = vpop.f32.mrb[0].mxu0
  %v7437 = vpop.f32.mrb[0].mxu0
  %v7438 = vadd.f32 %v7341, %v7437
  %v7439 = vpop.f32.mrb[0].mxu0
  %7440 = vmatprep.mubr.bf16.mxu0 %v2709
  %7441 = vmatmul.mubr.bf16.gmra.mrb[0].mxu0 %v2708
  %v7442 = vpop.f32.mrb[0].mxu0
  %v7443 = vadd.f32 %v7346, %v7442
  %v7444 = vpop.f32.mrb[0].mxu0
  %v7445 = vpop.f32.mrb[0].mxu0
  %v7446 = vadd.f32 %v7349, %v7445
  %v7447 = vpop.f32.mrb[0].mxu0
  %7448 = vmatprep.mubr.bf16.mxu0 %v2759
  %7449 = vmatmul.mubr.bf16.gmra.mrb[0].mxu0 %v2758
  %v7450 = vpop.f32.mrb[0].mxu0
  %v7451 = vadd.f32 %v7354, %v7450
  %v7452 = vpop.f32.mrb[0].mxu0
  %v7453 = vpop.f32.mrb[0].mxu0
  %v7454 = vadd.f32 %v7357, %v7453
  %v7455 = vpop.f32.mrb[0].mxu0
  %7456 = vmatprep.mubr.bf16.mxu0 %v2809
  %7457 = vmatmul.mubr.bf16.gmra.mrb[0].mxu0 %v2808
  %v7458 = vpop.f32.mrb[0].mxu0
  %v7459 = vadd.f32 %v7362, %v7458
  %v7460 = vpop.f32.mrb[0].mxu0
  %v7461 = vpop.f32.mrb[0].mxu0
  %v7462 = vadd.f32 %v7365, %v7461
  %v7463 = vpop.f32.mrb[0].mxu0
  %7464 = vdwg.mxu0
  %7465 = vmatprep.subr.bf16.mxu0 0
  %7466 = vmatpush1.bf16.msra.mxu0 %v5126
  %7467 = vmatprep.subr.bf16.mxu0 0
  %7468 = vmatpush1.bf16.msra.mxu0 %v5127
  %7469 = vmatprep.subr.bf16.mxu0 0
  %7470 = vmatpush1.bf16.msra.mxu0 %v5128
  %7471 = vmatprep.subr.bf16.mxu0 0
  %7472 = vmatpush1.bf16.msra.mxu0 %v5129
  %7473 = vmatprep.subr.bf16.mxu0 0
  %7474 = vmatpush1.bf16.msra.mxu0 %v5130
  %7475 = vmatprep.subr.bf16.mxu0 0
  %7476 = vmatpush1.bf16.msra.mxu0 %v5131
  %7477 = vmatprep.subr.bf16.mxu0 0
  %7478 = vmatpush1.bf16.msra.mxu0 %v5132
  %7479 = vmatprep.subr.bf16.mxu0 0
  %7480 = vmatpush1.bf16.msra.mxu0 %v5133
  %7481 = vmatprep.subr.bf16.mxu0 0
  %7482 = vmatpush1.bf16.msra.mxu0 %v5134
  %7483 = vmatprep.subr.bf16.mxu0 0
  %7484 = vmatpush1.bf16.msra.mxu0 %v5135
  %7485 = vmatprep.subr.bf16.mxu0 0
  %7486 = vmatpush1.bf16.msra.mxu0 %v5136
  %7487 = vmatprep.subr.bf16.mxu0 0
  %7488 = vmatpush1.bf16.msra.mxu0 %v5137
  %7489 = vmatprep.subr.bf16.mxu0 0
  %7490 = vmatpush1.bf16.msra.mxu0 %v5138
  %7491 = vmatprep.subr.bf16.mxu0 0
  %7492 = vmatpush1.bf16.msra.mxu0 %v5139
  %7493 = vmatprep.subr.bf16.mxu0 0
  %7494 = vmatpush1.bf16.msra.mxu0 %v5140
  %7495 = vmatprep.subr.bf16.mxu0 0
  %7496 = vmatpush1.bf16.msra.mxu0 %v5141
  %7497 = vmatprep.mubr.bf16.mxu0 %v2461
  %7498 = vmatmul.mubr.bf16.gmra.mrb[0].mxu0 %v2460
  %v7499 = vpop.f32.mrb[0].mxu0
  %v7500 = vadd.f32 %v7403, %v7499
  %v7501 = vpop.f32.mrb[0].mxu0
  %v7502 = vpop.f32.mrb[0].mxu0
  %v7503 = vadd.f32 %v7406, %v7502
  %v7504 = vpop.f32.mrb[0].mxu0
  %7505 = vmatprep.mubr.bf16.mxu0 %v2511
  %7506 = vmatmul.mubr.bf16.gmra.mrb[0].mxu0 %v2510
  %v7507 = vpop.f32.mrb[0].mxu0
  %v7508 = vadd.f32 %v7411, %v7507
  %v7509 = vpop.f32.mrb[0].mxu0
  %v7510 = vpop.f32.mrb[0].mxu0
  %v7511 = vadd.f32 %v7414, %v7510
  %v7512 = vpop.f32.mrb[0].mxu0
  %7513 = vmatprep.mubr.bf16.mxu0 %v2561
  %7514 = vmatmul.mubr.bf16.gmra.mrb[0].mxu0 %v2560
  %v7515 = vpop.f32.mrb[0].mxu0
  %v7516 = vadd.f32 %v7419, %v7515
  %v7517 = vpop.f32.mrb[0].mxu0
  %v7518 = vpop.f32.mrb[0].mxu0
  %v7519 = vadd.f32 %v7422, %v7518
  %v7520 = vpop.f32.mrb[0].mxu0
  %7521 = vmatprep.mubr.bf16.mxu0 %v2611
  %7522 = vmatmul.mubr.bf16.gmra.mrb[0].mxu0 %v2610
  %v7523 = vpop.f32.mrb[0].mxu0
  %v7524 = vadd.f32 %v7427, %v7523
  %v7525 = vpop.f32.mrb[0].mxu0
  %v7526 = vpop.f32.mrb[0].mxu0
  %v7527 = vadd.f32 %v7430, %v7526
  %v7528 = vpop.f32.mrb[0].mxu0
  %7529 = vmatprep.mubr.bf16.mxu0 %v2661
  %7530 = vmatmul.mubr.bf16.gmra.mrb[0].mxu0 %v2660
  %v7531 = vpop.f32.mrb[0].mxu0
  %v7532 = vadd.f32 %v7435, %v7531
  %v7533 = vpop.f32.mrb[0].mxu0
  %v7534 = vpop.f32.mrb[0].mxu0
  %v7535 = vadd.f32 %v7438, %v7534
  %v7536 = vpop.f32.mrb[0].mxu0
  %7537 = vmatprep.mubr.bf16.mxu0 %v2711
  %7538 = vmatmul.mubr.bf16.gmra.mrb[0].mxu0 %v2710
  %v7539 = vpop.f32.mrb[0].mxu0
  %v7540 = vadd.f32 %v7443, %v7539
  %v7541 = vpop.f32.mrb[0].mxu0
  %v7542 = vpop.f32.mrb[0].mxu0
  %v7543 = vadd.f32 %v7446, %v7542
  %v7544 = vpop.f32.mrb[0].mxu0
  %7545 = vmatprep.mubr.bf16.mxu0 %v2761
  %7546 = vmatmul.mubr.bf16.gmra.mrb[0].mxu0 %v2760
  %v7547 = vpop.f32.mrb[0].mxu0
  %v7548 = vadd.f32 %v7451, %v7547
  %v7549 = vpop.f32.mrb[0].mxu0
  %v7550 = vpop.f32.mrb[0].mxu0
  %v7551 = vadd.f32 %v7454, %v7550
  %v7552 = vpop.f32.mrb[0].mxu0
  %7553 = vmatprep.mubr.bf16.mxu0 %v2811
  %7554 = vmatmul.mubr.bf16.gmra.mrb[0].mxu0 %v2810
  %v7555 = vpop.f32.mrb[0].mxu0
  %v7556 = vadd.f32 %v7459, %v7555
  %v7557 = vpop.f32.mrb[0].mxu0
  %v7558 = vpop.f32.mrb[0].mxu0
  %v7559 = vadd.f32 %v7462, %v7558
  %v7560 = vpop.f32.mrb[0].mxu0
  %7561 = vdwg.mxu0
  %7562 = vmatprep.subr.bf16.mxu0 0
  %7563 = vmatpush1.bf16.msra.mxu0 %v5142
  %7564 = vmatprep.subr.bf16.mxu0 0
  %7565 = vmatpush1.bf16.msra.mxu0 %v5143
  %7566 = vmatprep.subr.bf16.mxu0 0
  %7567 = vmatpush1.bf16.msra.mxu0 %v5144
  %7568 = vmatprep.subr.bf16.mxu0 0
  %7569 = vmatpush1.bf16.msra.mxu0 %v5145
  %7570 = vmatprep.subr.bf16.mxu0 0
  %7571 = vmatpush1.bf16.msra.mxu0 %v5146
  %7572 = vmatprep.subr.bf16.mxu0 0
  %7573 = vmatpush1.bf16.msra.mxu0 %v5147
  %7574 = vmatprep.subr.bf16.mxu0 0
  %7575 = vmatpush1.bf16.msra.mxu0 %v5148
  %7576 = vmatprep.subr.bf16.mxu0 0
  %7577 = vmatpush1.bf16.msra.mxu0 %v5149
  %7578 = vmatprep.subr.bf16.mxu0 0
  %7579 = vmatpush1.bf16.msra.mxu0 %v5150
  %7580 = vmatprep.subr.bf16.mxu0 0
  %7581 = vmatpush1.bf16.msra.mxu0 %v5151
  %7582 = vmatprep.subr.bf16.mxu0 0
  %7583 = vmatpush1.bf16.msra.mxu0 %v5152
  %7584 = vmatprep.subr.bf16.mxu0 0
  %7585 = vmatpush1.bf16.msra.mxu0 %v5153
  %7586 = vmatprep.subr.bf16.mxu0 0
  %7587 = vmatpush1.bf16.msra.mxu0 %v5154
  %7588 = vmatprep.subr.bf16.mxu0 0
  %7589 = vmatpush1.bf16.msra.mxu0 %v5155
  %7590 = vmatprep.subr.bf16.mxu0 0
  %7591 = vmatpush1.bf16.msra.mxu0 %v5156
  %7592 = vmatprep.subr.bf16.mxu0 0
  %7593 = vmatpush1.bf16.msra.mxu0 %v5157
  %7594 = vmatprep.mubr.bf16.mxu0 %v2463
  %7595 = vmatmul.mubr.bf16.gmra.mrb[0].mxu0 %v2462
  %v7596 = vpop.f32.mrb[0].mxu0
  %v7597 = vadd.f32 %v7500, %v7596
  %v7598 = vpop.f32.mrb[0].mxu0
  %v7599 = vpop.f32.mrb[0].mxu0
  %v7600 = vadd.f32 %v7503, %v7599
  %v7601 = vpop.f32.mrb[0].mxu0
  %7602 = vmatprep.mubr.bf16.mxu0 %v2513
  %7603 = vmatmul.mubr.bf16.gmra.mrb[0].mxu0 %v2512
  %v7604 = vpop.f32.mrb[0].mxu0
  %v7605 = vadd.f32 %v7508, %v7604
  %v7606 = vpop.f32.mrb[0].mxu0
  %v7607 = vpop.f32.mrb[0].mxu0
  %v7608 = vadd.f32 %v7511, %v7607
  %v7609 = vpop.f32.mrb[0].mxu0
  %7610 = vmatprep.mubr.bf16.mxu0 %v2563
  %7611 = vmatmul.mubr.bf16.gmra.mrb[0].mxu0 %v2562
  %v7612 = vpop.f32.mrb[0].mxu0
  %v7613 = vadd.f32 %v7516, %v7612
  %v7614 = vpop.f32.mrb[0].mxu0
  %v7615 = vpop.f32.mrb[0].mxu0
  %v7616 = vadd.f32 %v7519, %v7615
  %v7617 = vpop.f32.mrb[0].mxu0
  %7618 = vmatprep.mubr.bf16.mxu0 %v2613
  %7619 = vmatmul.mubr.bf16.gmra.mrb[0].mxu0 %v2612
  %v7620 = vpop.f32.mrb[0].mxu0
  %v7621 = vadd.f32 %v7524, %v7620
  %v7622 = vpop.f32.mrb[0].mxu0
  %v7623 = vpop.f32.mrb[0].mxu0
  %v7624 = vadd.f32 %v7527, %v7623
  %v7625 = vpop.f32.mrb[0].mxu0
  %7626 = vmatprep.mubr.bf16.mxu0 %v2663
  %7627 = vmatmul.mubr.bf16.gmra.mrb[0].mxu0 %v2662
  %v7628 = vpop.f32.mrb[0].mxu0
  %v7629 = vadd.f32 %v7532, %v7628
  %v7630 = vpop.f32.mrb[0].mxu0
  %v7631 = vpop.f32.mrb[0].mxu0
  %v7632 = vadd.f32 %v7535, %v7631
  %v7633 = vpop.f32.mrb[0].mxu0
  %7634 = vmatprep.mubr.bf16.mxu0 %v2713
  %7635 = vmatmul.mubr.bf16.gmra.mrb[0].mxu0 %v2712
  %v7636 = vpop.f32.mrb[0].mxu0
  %v7637 = vadd.f32 %v7540, %v7636
  %v7638 = vpop.f32.mrb[0].mxu0
  %v7639 = vpop.f32.mrb[0].mxu0
  %v7640 = vadd.f32 %v7543, %v7639
  %v7641 = vpop.f32.mrb[0].mxu0
  %7642 = vmatprep.mubr.bf16.mxu0 %v2763
  %7643 = vmatmul.mubr.bf16.gmra.mrb[0].mxu0 %v2762
  %v7644 = vpop.f32.mrb[0].mxu0
  %v7645 = vadd.f32 %v7548, %v7644
  %v7646 = vpop.f32.mrb[0].mxu0
  %v7647 = vpop.f32.mrb[0].mxu0
  %v7648 = vadd.f32 %v7551, %v7647
  %v7649 = vpop.f32.mrb[0].mxu0
  %7650 = vmatprep.mubr.bf16.mxu0 %v2813
  %7651 = vmatmul.mubr.bf16.gmra.mrb[0].mxu0 %v2812
  %v7652 = vpop.f32.mrb[0].mxu0
  %v7653 = vadd.f32 %v7556, %v7652
  %v7654 = vpop.f32.mrb[0].mxu0
  %v7655 = vpop.f32.mrb[0].mxu0
  %v7656 = vadd.f32 %v7559, %v7655
  %v7657 = vpop.f32.mrb[0].mxu0
  %7658 = vdwg.mxu0
  %7659 = vmatprep.subr.bf16.mxu0 0
  %7660 = vmatpush1.bf16.msra.mxu0 %v5158
  %7661 = vmatprep.subr.bf16.mxu0 0
  %7662 = vmatpush1.bf16.msra.mxu0 %v5159
  %7663 = vmatprep.subr.bf16.mxu0 0
  %7664 = vmatpush1.bf16.msra.mxu0 %v5160
  %7665 = vmatprep.subr.bf16.mxu0 0
  %7666 = vmatpush1.bf16.msra.mxu0 %v5161
  %7667 = vmatprep.subr.bf16.mxu0 0
  %7668 = vmatpush1.bf16.msra.mxu0 %v5162
  %7669 = vmatprep.subr.bf16.mxu0 0
  %7670 = vmatpush1.bf16.msra.mxu0 %v5163
  %7671 = vmatprep.subr.bf16.mxu0 0
  %7672 = vmatpush1.bf16.msra.mxu0 %v5164
  %7673 = vmatprep.subr.bf16.mxu0 0
  %7674 = vmatpush1.bf16.msra.mxu0 %v5165
  %7675 = vmatprep.subr.bf16.mxu0 0
  %7676 = vmatpush1.bf16.msra.mxu0 %v5166
  %7677 = vmatprep.subr.bf16.mxu0 0
  %7678 = vmatpush1.bf16.msra.mxu0 %v5167
  %7679 = vmatprep.subr.bf16.mxu0 0
  %7680 = vmatpush1.bf16.msra.mxu0 %v5168
  %7681 = vmatprep.subr.bf16.mxu0 0
  %7682 = vmatpush1.bf16.msra.mxu0 %v5169
  %7683 = vmatprep.subr.bf16.mxu0 0
  %7684 = vmatpush1.bf16.msra.mxu0 %v5170
  %7685 = vmatprep.subr.bf16.mxu0 0
  %7686 = vmatpush1.bf16.msra.mxu0 %v5171
  %7687 = vmatprep.subr.bf16.mxu0 0
  %7688 = vmatpush1.bf16.msra.mxu0 %v5172
  %7689 = vmatprep.subr.bf16.mxu0 0
  %7690 = vmatpush1.bf16.msra.mxu0 %v5173
  %7691 = vmatprep.mubr.bf16.mxu0 %v2465
  %7692 = vmatmul.mubr.bf16.gmra.mrb[0].mxu0 %v2464
  %v7693 = vpop.f32.mrb[0].mxu0
  %v7694 = vadd.f32 %v7597, %v7693
  %v7695 = vpop.f32.mrb[0].mxu0
  %v7696 = vpop.f32.mrb[0].mxu0
  %v7697 = vadd.f32 %v7600, %v7696
  %v7698 = vpop.f32.mrb[0].mxu0
  %7699 = vmatprep.mubr.bf16.mxu0 %v2515
  %7700 = vmatmul.mubr.bf16.gmra.mrb[0].mxu0 %v2514
  %v7701 = vpop.f32.mrb[0].mxu0
  %v7702 = vadd.f32 %v7605, %v7701
  %v7703 = vpop.f32.mrb[0].mxu0
  %v7704 = vpop.f32.mrb[0].mxu0
  %v7705 = vadd.f32 %v7608, %v7704
  %v7706 = vpop.f32.mrb[0].mxu0
  %7707 = vmatprep.mubr.bf16.mxu0 %v2565
  %7708 = vmatmul.mubr.bf16.gmra.mrb[0].mxu0 %v2564
  %v7709 = vpop.f32.mrb[0].mxu0
  %v7710 = vadd.f32 %v7613, %v7709
  %v7711 = vpop.f32.mrb[0].mxu0
  %v7712 = vpop.f32.mrb[0].mxu0
  %v7713 = vadd.f32 %v7616, %v7712
  %v7714 = vpop.f32.mrb[0].mxu0
  %7715 = vmatprep.mubr.bf16.mxu0 %v2615
  %7716 = vmatmul.mubr.bf16.gmra.mrb[0].mxu0 %v2614
  %v7717 = vpop.f32.mrb[0].mxu0
  %v7718 = vadd.f32 %v7621, %v7717
  %v7719 = vpop.f32.mrb[0].mxu0
  %v7720 = vpop.f32.mrb[0].mxu0
  %v7721 = vadd.f32 %v7624, %v7720
  %v7722 = vpop.f32.mrb[0].mxu0
  %7723 = vmatprep.mubr.bf16.mxu0 %v2665
  %7724 = vmatmul.mubr.bf16.gmra.mrb[0].mxu0 %v2664
  %v7725 = vpop.f32.mrb[0].mxu0
  %v7726 = vadd.f32 %v7629, %v7725
  %v7727 = vpop.f32.mrb[0].mxu0
  %v7728 = vpop.f32.mrb[0].mxu0
  %v7729 = vadd.f32 %v7632, %v7728
  %v7730 = vpop.f32.mrb[0].mxu0
  %7731 = vmatprep.mubr.bf16.mxu0 %v2715
  %7732 = vmatmul.mubr.bf16.gmra.mrb[0].mxu0 %v2714
  %v7733 = vpop.f32.mrb[0].mxu0
  %v7734 = vadd.f32 %v7637, %v7733
  %v7735 = vpop.f32.mrb[0].mxu0
  %v7736 = vpop.f32.mrb[0].mxu0
  %v7737 = vadd.f32 %v7640, %v7736
  %v7738 = vpop.f32.mrb[0].mxu0
  %7739 = vmatprep.mubr.bf16.mxu0 %v2765
  %7740 = vmatmul.mubr.bf16.gmra.mrb[0].mxu0 %v2764
  %v7741 = vpop.f32.mrb[0].mxu0
  %v7742 = vadd.f32 %v7645, %v7741
  %v7743 = vpop.f32.mrb[0].mxu0
  %v7744 = vpop.f32.mrb[0].mxu0
  %v7745 = vadd.f32 %v7648, %v7744
  %v7746 = vpop.f32.mrb[0].mxu0
  %7747 = vmatprep.mubr.bf16.mxu0 %v2815
  %7748 = vmatmul.mubr.bf16.gmra.mrb[0].mxu0 %v2814
  %v7749 = vpop.f32.mrb[0].mxu0
  %v7750 = vadd.f32 %v7653, %v7749
  %v7751 = vpop.f32.mrb[0].mxu0
  %v7752 = vpop.f32.mrb[0].mxu0
  %v7753 = vadd.f32 %v7656, %v7752
  %v7754 = vpop.f32.mrb[0].mxu0
  %7755 = vdwg.mxu0
  %7756 = vmatprep.subr.bf16.mxu0 0
  %7757 = vmatpush1.bf16.msra.mxu0 %v5174
  %7758 = vmatprep.subr.bf16.mxu0 0
  %7759 = vmatpush1.bf16.msra.mxu0 %v5175
  %7760 = vmatprep.subr.bf16.mxu0 0
  %7761 = vmatpush1.bf16.msra.mxu0 %v5176
  %7762 = vmatprep.subr.bf16.mxu0 0
  %7763 = vmatpush1.bf16.msra.mxu0 %v5177
  %7764 = vmatprep.subr.bf16.mxu0 0
  %7765 = vmatpush1.bf16.msra.mxu0 %v5178
  %7766 = vmatprep.subr.bf16.mxu0 0
  %7767 = vmatpush1.bf16.msra.mxu0 %v5179
  %7768 = vmatprep.subr.bf16.mxu0 0
  %7769 = vmatpush1.bf16.msra.mxu0 %v5180
  %7770 = vmatprep.subr.bf16.mxu0 0
  %7771 = vmatpush1.bf16.msra.mxu0 %v5181
  %7772 = vmatprep.subr.bf16.mxu0 0
  %7773 = vmatpush1.bf16.msra.mxu0 %v5182
  %7774 = vmatprep.subr.bf16.mxu0 0
  %7775 = vmatpush1.bf16.msra.mxu0 %v5183
  %7776 = vmatprep.subr.bf16.mxu0 0
  %7777 = vmatpush1.bf16.msra.mxu0 %v5184
  %7778 = vmatprep.subr.bf16.mxu0 0
  %7779 = vmatpush1.bf16.msra.mxu0 %v5185
  %7780 = vmatprep.subr.bf16.mxu0 0
  %7781 = vmatpush1.bf16.msra.mxu0 %v5186
  %7782 = vmatprep.subr.bf16.mxu0 0
  %7783 = vmatpush1.bf16.msra.mxu0 %v5187
  %7784 = vmatprep.subr.bf16.mxu0 0
  %7785 = vmatpush1.bf16.msra.mxu0 %v5188
  %7786 = vmatprep.subr.bf16.mxu0 0
  %7787 = vmatpush1.bf16.msra.mxu0 %v5189
  %7788 = vmatprep.mubr.bf16.mxu0 %v2467
  %7789 = vmatmul.mubr.bf16.gmra.mrb[0].mxu0 %v2466
  %v7790 = vpop.f32.mrb[0].mxu0
  %v7791 = vadd.f32 %v7694, %v7790
  %v7792 = vpop.f32.mrb[0].mxu0
  %v7793 = vpop.f32.mrb[0].mxu0
  %v7794 = vadd.f32 %v7697, %v7793
  %v7795 = vpop.f32.mrb[0].mxu0
  %7796 = vmatprep.mubr.bf16.mxu0 %v2517
  %7797 = vmatmul.mubr.bf16.gmra.mrb[0].mxu0 %v2516
  %v7798 = vpop.f32.mrb[0].mxu0
  %v7799 = vadd.f32 %v7702, %v7798
  %v7800 = vpop.f32.mrb[0].mxu0
  %v7801 = vpop.f32.mrb[0].mxu0
  %v7802 = vadd.f32 %v7705, %v7801
  %v7803 = vpop.f32.mrb[0].mxu0
  %7804 = vmatprep.mubr.bf16.mxu0 %v2567
  %7805 = vmatmul.mubr.bf16.gmra.mrb[0].mxu0 %v2566
  %v7806 = vpop.f32.mrb[0].mxu0
  %v7807 = vadd.f32 %v7710, %v7806
  %v7808 = vpop.f32.mrb[0].mxu0
  %v7809 = vpop.f32.mrb[0].mxu0
  %v7810 = vadd.f32 %v7713, %v7809
  %v7811 = vpop.f32.mrb[0].mxu0
  %7812 = vmatprep.mubr.bf16.mxu0 %v2617
  %7813 = vmatmul.mubr.bf16.gmra.mrb[0].mxu0 %v2616
  %v7814 = vpop.f32.mrb[0].mxu0
  %v7815 = vadd.f32 %v7718, %v7814
  %v7816 = vpop.f32.mrb[0].mxu0
  %v7817 = vpop.f32.mrb[0].mxu0
  %v7818 = vadd.f32 %v7721, %v7817
  %v7819 = vpop.f32.mrb[0].mxu0
  %7820 = vmatprep.mubr.bf16.mxu0 %v2667
  %7821 = vmatmul.mubr.bf16.gmra.mrb[0].mxu0 %v2666
  %v7822 = vpop.f32.mrb[0].mxu0
  %v7823 = vadd.f32 %v7726, %v7822
  %v7824 = vpop.f32.mrb[0].mxu0
  %v7825 = vpop.f32.mrb[0].mxu0
  %v7826 = vadd.f32 %v7729, %v7825
  %v7827 = vpop.f32.mrb[0].mxu0
  %7828 = vmatprep.mubr.bf16.mxu0 %v2717
  %7829 = vmatmul.mubr.bf16.gmra.mrb[0].mxu0 %v2716
  %v7830 = vpop.f32.mrb[0].mxu0
  %v7831 = vadd.f32 %v7734, %v7830
  %v7832 = vpop.f32.mrb[0].mxu0
  %v7833 = vpop.f32.mrb[0].mxu0
  %v7834 = vadd.f32 %v7737, %v7833
  %v7835 = vpop.f32.mrb[0].mxu0
  %7836 = vmatprep.mubr.bf16.mxu0 %v2767
  %7837 = vmatmul.mubr.bf16.gmra.mrb[0].mxu0 %v2766
  %v7838 = vpop.f32.mrb[0].mxu0
  %v7839 = vadd.f32 %v7742, %v7838
  %v7840 = vpop.f32.mrb[0].mxu0
  %v7841 = vpop.f32.mrb[0].mxu0
  %v7842 = vadd.f32 %v7745, %v7841
  %v7843 = vpop.f32.mrb[0].mxu0
  %7844 = vmatprep.mubr.bf16.mxu0 %v2817
  %7845 = vmatmul.mubr.bf16.gmra.mrb[0].mxu0 %v2816
  %v7846 = vpop.f32.mrb[0].mxu0
  %v7847 = vadd.f32 %v7750, %v7846
  %v7848 = vpop.f32.mrb[0].mxu0
  %v7849 = vpop.f32.mrb[0].mxu0
  %v7850 = vadd.f32 %v7753, %v7849
  %v7851 = vpop.f32.mrb[0].mxu0
  %7852 = vdwg.mxu0
  %7853 = vmatprep.subr.bf16.mxu0 0
  %7854 = vmatpush1.bf16.msra.mxu0 %v5190
  %7855 = vmatprep.subr.bf16.mxu0 0
  %7856 = vmatpush1.bf16.msra.mxu0 %v5191
  %7857 = vmatprep.subr.bf16.mxu0 0
  %7858 = vmatpush1.bf16.msra.mxu0 %v5192
  %7859 = vmatprep.subr.bf16.mxu0 0
  %7860 = vmatpush1.bf16.msra.mxu0 %v5193
  %7861 = vmatprep.subr.bf16.mxu0 0
  %7862 = vmatpush1.bf16.msra.mxu0 %v5194
  %7863 = vmatprep.subr.bf16.mxu0 0
  %7864 = vmatpush1.bf16.msra.mxu0 %v5195
  %7865 = vmatprep.subr.bf16.mxu0 0
  %7866 = vmatpush1.bf16.msra.mxu0 %v5196
  %7867 = vmatprep.subr.bf16.mxu0 0
  %7868 = vmatpush1.bf16.msra.mxu0 %v5197
  %7869 = vmatprep.subr.bf16.mxu0 0
  %7870 = vmatpush1.bf16.msra.mxu0 %v5198
  %7871 = vmatprep.subr.bf16.mxu0 0
  %7872 = vmatpush1.bf16.msra.mxu0 %v5199
  %7873 = vmatprep.subr.bf16.mxu0 0
  %7874 = vmatpush1.bf16.msra.mxu0 %v5200
  %7875 = vmatprep.subr.bf16.mxu0 0
  %7876 = vmatpush1.bf16.msra.mxu0 %v5201
  %7877 = vmatprep.subr.bf16.mxu0 0
  %7878 = vmatpush1.bf16.msra.mxu0 %v5202
  %7879 = vmatprep.subr.bf16.mxu0 0
  %7880 = vmatpush1.bf16.msra.mxu0 %v5203
  %7881 = vmatprep.subr.bf16.mxu0 0
  %7882 = vmatpush1.bf16.msra.mxu0 %v5204
  %7883 = vmatprep.subr.bf16.mxu0 0
  %7884 = vmatpush1.bf16.msra.mxu0 %v5205
  %7885 = vmatprep.mubr.bf16.mxu0 %v2469
  %7886 = vmatmul.mubr.bf16.gmra.mrb[0].mxu0 %v2468
  %v7887 = vpop.f32.mrb[0].mxu0
  %v7888 = vadd.f32 %v7791, %v7887
  %v7889 = vpop.f32.mrb[0].mxu0
  %v7890 = vpop.f32.mrb[0].mxu0
  %v7891 = vadd.f32 %v7794, %v7890
  %v7892 = vpop.f32.mrb[0].mxu0
  %7893 = vmatprep.mubr.bf16.mxu0 %v2519
  %7894 = vmatmul.mubr.bf16.gmra.mrb[0].mxu0 %v2518
  %v7895 = vpop.f32.mrb[0].mxu0
  %v7896 = vadd.f32 %v7799, %v7895
  %v7897 = vpop.f32.mrb[0].mxu0
  %v7898 = vpop.f32.mrb[0].mxu0
  %v7899 = vadd.f32 %v7802, %v7898
  %v7900 = vpop.f32.mrb[0].mxu0
  %7901 = vmatprep.mubr.bf16.mxu0 %v2569
  %7902 = vmatmul.mubr.bf16.gmra.mrb[0].mxu0 %v2568
  %v7903 = vpop.f32.mrb[0].mxu0
  %v7904 = vadd.f32 %v7807, %v7903
  %v7905 = vpop.f32.mrb[0].mxu0
  %v7906 = vpop.f32.mrb[0].mxu0
  %v7907 = vadd.f32 %v7810, %v7906
  %v7908 = vpop.f32.mrb[0].mxu0
  %7909 = vmatprep.mubr.bf16.mxu0 %v2619
  %7910 = vmatmul.mubr.bf16.gmra.mrb[0].mxu0 %v2618
  %v7911 = vpop.f32.mrb[0].mxu0
  %v7912 = vadd.f32 %v7815, %v7911
  %v7913 = vpop.f32.mrb[0].mxu0
  %v7914 = vpop.f32.mrb[0].mxu0
  %v7915 = vadd.f32 %v7818, %v7914
  %v7916 = vpop.f32.mrb[0].mxu0
  %7917 = vmatprep.mubr.bf16.mxu0 %v2669
  %7918 = vmatmul.mubr.bf16.gmra.mrb[0].mxu0 %v2668
  %v7919 = vpop.f32.mrb[0].mxu0
  %v7920 = vadd.f32 %v7823, %v7919
  %v7921 = vpop.f32.mrb[0].mxu0
  %v7922 = vpop.f32.mrb[0].mxu0
  %v7923 = vadd.f32 %v7826, %v7922
  %v7924 = vpop.f32.mrb[0].mxu0
  %7925 = vmatprep.mubr.bf16.mxu0 %v2719
  %7926 = vmatmul.mubr.bf16.gmra.mrb[0].mxu0 %v2718
  %v7927 = vpop.f32.mrb[0].mxu0
  %v7928 = vadd.f32 %v7831, %v7927
  %v7929 = vpop.f32.mrb[0].mxu0
  %v7930 = vpop.f32.mrb[0].mxu0
  %v7931 = vadd.f32 %v7834, %v7930
  %v7932 = vpop.f32.mrb[0].mxu0
  %7933 = vmatprep.mubr.bf16.mxu0 %v2769
  %7934 = vmatmul.mubr.bf16.gmra.mrb[0].mxu0 %v2768
  %v7935 = vpop.f32.mrb[0].mxu0
  %v7936 = vadd.f32 %v7839, %v7935
  %v7937 = vpop.f32.mrb[0].mxu0
  %v7938 = vpop.f32.mrb[0].mxu0
  %v7939 = vadd.f32 %v7842, %v7938
  %v7940 = vpop.f32.mrb[0].mxu0
  %7941 = vmatprep.mubr.bf16.mxu0 %v2819
  %7942 = vmatmul.mubr.bf16.gmra.mrb[0].mxu0 %v2818
  %v7943 = vpop.f32.mrb[0].mxu0
  %v7944 = vadd.f32 %v7847, %v7943
  %v7945 = vpop.f32.mrb[0].mxu0
  %v7946 = vpop.f32.mrb[0].mxu0
  %v7947 = vadd.f32 %v7850, %v7946
  %v7948 = vpop.f32.mrb[0].mxu0
  %7949 = vdwg.mxu0
  %7950 = vmatprep.subr.bf16.mxu0 0
  %7951 = vmatpush1.bf16.msra.mxu0 %v5206
  %7952 = vmatprep.subr.bf16.mxu0 0
  %7953 = vmatpush1.bf16.msra.mxu0 %v5207
  %7954 = vmatprep.subr.bf16.mxu0 0
  %7955 = vmatpush1.bf16.msra.mxu0 %v5208
  %7956 = vmatprep.subr.bf16.mxu0 0
  %7957 = vmatpush1.bf16.msra.mxu0 %v5209
  %7958 = vmatprep.subr.bf16.mxu0 0
  %7959 = vmatpush1.bf16.msra.mxu0 %v5210
  %7960 = vmatprep.subr.bf16.mxu0 0
  %7961 = vmatpush1.bf16.msra.mxu0 %v5211
  %7962 = vmatprep.subr.bf16.mxu0 0
  %7963 = vmatpush1.bf16.msra.mxu0 %v5212
  %7964 = vmatprep.subr.bf16.mxu0 0
  %7965 = vmatpush1.bf16.msra.mxu0 %v5213
  %7966 = vmatprep.subr.bf16.mxu0 0
  %7967 = vmatpush1.bf16.msra.mxu0 %v5214
  %7968 = vmatprep.subr.bf16.mxu0 0
  %7969 = vmatpush1.bf16.msra.mxu0 %v5215
  %7970 = vmatprep.subr.bf16.mxu0 0
  %7971 = vmatpush1.bf16.msra.mxu0 %v5216
  %7972 = vmatprep.subr.bf16.mxu0 0
  %7973 = vmatpush1.bf16.msra.mxu0 %v5217
  %7974 = vmatprep.subr.bf16.mxu0 0
  %7975 = vmatpush1.bf16.msra.mxu0 %v5218
  %7976 = vmatprep.subr.bf16.mxu0 0
  %7977 = vmatpush1.bf16.msra.mxu0 %v5219
  %7978 = vmatprep.subr.bf16.mxu0 0
  %7979 = vmatpush1.bf16.msra.mxu0 %v5220
  %7980 = vmatprep.subr.bf16.mxu0 0
  %7981 = vmatpush1.bf16.msra.mxu0 %v5221
  %7982 = vmatprep.mubr.bf16.mxu0 %v2471
  %7983 = vmatmul.mubr.bf16.gmra.mrb[0].mxu0 %v2470
  %v7984 = vpop.f32.mrb[0].mxu0
  %v7985 = vadd.f32 %v7888, %v7984
  %v7986 = vpop.f32.mrb[0].mxu0
  %v7987 = vpop.f32.mrb[0].mxu0
  %v7988 = vadd.f32 %v7891, %v7987
  %v7989 = vpop.f32.mrb[0].mxu0
  %7990 = vmatprep.mubr.bf16.mxu0 %v2521
  %7991 = vmatmul.mubr.bf16.gmra.mrb[0].mxu0 %v2520
  %v7992 = vpop.f32.mrb[0].mxu0
  %v7993 = vadd.f32 %v7896, %v7992
  %v7994 = vpop.f32.mrb[0].mxu0
  %v7995 = vpop.f32.mrb[0].mxu0
  %v7996 = vadd.f32 %v7899, %v7995
  %v7997 = vpop.f32.mrb[0].mxu0
  %7998 = vmatprep.mubr.bf16.mxu0 %v2571
  %7999 = vmatmul.mubr.bf16.gmra.mrb[0].mxu0 %v2570
  %v8000 = vpop.f32.mrb[0].mxu0
  %v8001 = vadd.f32 %v7904, %v8000
  %v8002 = vpop.f32.mrb[0].mxu0
  %v8003 = vpop.f32.mrb[0].mxu0
  %v8004 = vadd.f32 %v7907, %v8003
  %v8005 = vpop.f32.mrb[0].mxu0
  %8006 = vmatprep.mubr.bf16.mxu0 %v2621
  %8007 = vmatmul.mubr.bf16.gmra.mrb[0].mxu0 %v2620
  %v8008 = vpop.f32.mrb[0].mxu0
  %v8009 = vadd.f32 %v7912, %v8008
  %v8010 = vpop.f32.mrb[0].mxu0
  %v8011 = vpop.f32.mrb[0].mxu0
  %v8012 = vadd.f32 %v7915, %v8011
  %v8013 = vpop.f32.mrb[0].mxu0
  %8014 = vmatprep.mubr.bf16.mxu0 %v2671
  %8015 = vmatmul.mubr.bf16.gmra.mrb[0].mxu0 %v2670
  %v8016 = vpop.f32.mrb[0].mxu0
  %v8017 = vadd.f32 %v7920, %v8016
  %v8018 = vpop.f32.mrb[0].mxu0
  %v8019 = vpop.f32.mrb[0].mxu0
  %v8020 = vadd.f32 %v7923, %v8019
  %v8021 = vpop.f32.mrb[0].mxu0
  %8022 = vmatprep.mubr.bf16.mxu0 %v2721
  %8023 = vmatmul.mubr.bf16.gmra.mrb[0].mxu0 %v2720
  %v8024 = vpop.f32.mrb[0].mxu0
  %v8025 = vadd.f32 %v7928, %v8024
  %v8026 = vpop.f32.mrb[0].mxu0
  %v8027 = vpop.f32.mrb[0].mxu0
  %v8028 = vadd.f32 %v7931, %v8027
  %v8029 = vpop.f32.mrb[0].mxu0
  %8030 = vmatprep.mubr.bf16.mxu0 %v2771
  %8031 = vmatmul.mubr.bf16.gmra.mrb[0].mxu0 %v2770
  %v8032 = vpop.f32.mrb[0].mxu0
  %v8033 = vadd.f32 %v7936, %v8032
  %v8034 = vpop.f32.mrb[0].mxu0
  %v8035 = vpop.f32.mrb[0].mxu0
  %v8036 = vadd.f32 %v7939, %v8035
  %v8037 = vpop.f32.mrb[0].mxu0
  %8038 = vmatprep.mubr.bf16.mxu0 %v2821
  %8039 = vmatmul.mubr.bf16.gmra.mrb[0].mxu0 %v2820
  %v8040 = vpop.f32.mrb[0].mxu0
  %v8041 = vadd.f32 %v7944, %v8040
  %v8042 = vpop.f32.mrb[0].mxu0
  %v8043 = vpop.f32.mrb[0].mxu0
  %v8044 = vadd.f32 %v7947, %v8043
  %v8045 = vpop.f32.mrb[0].mxu0
  %8046 = vdwg.mxu0
  %v8047 = vmax.f32 %v7985, 0.0
  %v8048 = vmax.f32 %v7988, 0.0
  %v8049 = vmax.f32 %v7993, 0.0
  %v8050 = vmax.f32 %v7996, 0.0
  %v8051 = vmax.f32 %v8001, 0.0
  %v8052 = vmax.f32 %v8004, 0.0
  %v8053 = vmax.f32 %v8009, 0.0
  %v8054 = vmax.f32 %v8012, 0.0
  %v8055 = vmax.f32 %v8017, 0.0
  %v8056 = vmax.f32 %v8020, 0.0
  %v8057 = vmax.f32 %v8025, 0.0
  %v8058 = vmax.f32 %v8028, 0.0
  %v8059 = vmax.f32 %v8033, 0.0
  %v8060 = vmax.f32 %v8036, 0.0
  %v8061 = vmax.f32 %v8041, 0.0
  %v8062 = vmax.f32 %v8044, 0.0
  %8063 = vst [vmem:[%s3] sm:$0xff] %v8047
  %8064 = vst [vmem:[%s3 + $0x8] sm:$0xff] %v8048
  %8065 = vst [vmem:[%s3 + $0x10] sm:$0xff] %v8049
  %8066 = vst [vmem:[%s3 + $0x18] sm:$0xff] %v8050
  %8067 = vst [vmem:[%s3 + $0x20] sm:$0xff] %v8051
  %8068 = vst [vmem:[%s3 + $0x28] sm:$0xff] %v8052
  %8069 = vst [vmem:[%s3 + $0x30] sm:$0xff] %v8053
  %8070 = vst [vmem:[%s3 + $0x38] sm:$0xff] %v8054
  %8071 = vst [vmem:[%s3 + $0x40] sm:$0xff] %v8055
  %8072 = vst [vmem:[%s3 + $0x48] sm:$0xff] %v8056
  %8073 = vst [vmem:[%s3 + $0x50] sm:$0xff] %v8057
  %8074 = vst [vmem:[%s3 + $0x58] sm:$0xff] %v8058
  %8075 = vst [vmem:[%s3 + $0x60] sm:$0xff] %v8059
  %8076 = vst [vmem:[%s3 + $0x68] sm:$0xff] %v8060
  %8077 = vst [vmem:[%s3 + $0x70] sm:$0xff] %v8061
  %8078 = vst [vmem:[%s3 + $0x78] sm:$0xff] %v8062
  // Predicated region
  $region14: #{generator_forward.2} parent=0 // pred_check
    _
  $region15: #{generator_forward.2} parent=0 // pred_check_branch
    %8080 = sbr.rel (0) target = $region17
  $region16: #{generator_forward.2} parent=0 // pred_region
    _
  $region17: #{generator_forward.2} parent=0 // pred_fallthru
    _
  // Predicated region
  $region18: #{generator_forward.2} parent=0 // pred_check
    _
  $region19: #{generator_forward.2} parent=0 // pred_check_branch
    %8082 = sbr.rel (0) target = $region21
  $region20: #{generator_forward.2} parent=0 // pred_region
    _
  $region21: #{generator_forward.2} parent=0 // pred_fallthru
    _

// kernel: generator_forward.3
$region0: #{generator_forward.3}
  #allocation0 [shape = 'u32[]', space=smem, size = 0x4, offset = 0x4, fixed_abs, tag = 'smem constant byte address 0x4 - core index']
  #allocation1 [shape = 'u32[144,128]{1,0:T(1,128)}', space=vmem, size = 0x12000, scoped, tag = 'internal scratch']
  %s0 = inlined_call_operand.vmem [shape: bf16[248,3200], index: 0, kind: input, shape index: {}]
  %s1 = inlined_call_operand.vmem [shape: bf16[3200,64], index: 1, kind: input, shape index: {}]
  %s2 = inlined_call_operand.vmem [shape: f32[1,64], index: 2, kind: input, shape index: {}]
  %s3 = inlined_call_operand.vmem [shape: bf16[64,64], index: 3, kind: input, shape index: {}]
  %s4 = inlined_call_operand.vmem [shape: f32[248,64], index: 4, kind: output, shape index: {}]
  %s5 = sld [smem:[#allocation0]]
  $region26: #{generator_forward.3} parent=0
    _
  %s7 = ssub.s32 1, %s5
  %s8 = scalar_select 0, %s7, %s5
  // Predicated region
  $region2: #{generator_forward.3} parent=0 // pred_check
    _
  $region3: #{generator_forward.3} parent=0 // pred_check_branch
    %10 = sbr.rel (0) target = $region5
  $region4: #{generator_forward.3} parent=0 // pred_region
    _
  $region5: #{generator_forward.3} parent=0 // pred_fallthru
    _
  // Predicated region
  $region6: #{generator_forward.3} parent=0 // pred_check
    _
  $region7: #{generator_forward.3} parent=0 // pred_check_branch
    %12 = sbr.rel (0) target = $region9
  $region8: #{generator_forward.3} parent=0 // pred_region
    _
  $region9: #{generator_forward.3} parent=0 // pred_fallthru
    _
  // Predicated region
  $region10: #{generator_forward.3} parent=0 // pred_check
    _
  $region11: #{generator_forward.3} parent=0 // pred_check_branch
    %14 = sbr.rel (0) target = $region13
  $region12: #{generator_forward.3} parent=0 // pred_region
    _
  $region13: #{generator_forward.3} parent=0 // pred_fallthru
    _
  // Predicated region
  $region14: #{generator_forward.3} parent=0 // pred_check
    _
  $region15: #{generator_forward.3} parent=0 // pred_check_branch
    %16 = sbr.rel (0) target = $region17
  $region16: #{generator_forward.3} parent=0 // pred_region
    _
  $region17: #{generator_forward.3} parent=0 // pred_fallthru
    _
  %v18 = vld [vmem:[%s0] sm:$0xff]
  %v19 = vld [vmem:[%s0 + $0x8] sm:$0xff]
  %v20 = vld [vmem:[%s0 + $0x10] sm:$0xff]
  %v21 = vld [vmem:[%s0 + $0x18] sm:$0xff]
  %v22 = vld [vmem:[%s0 + $0x20] sm:$0xff]
  %v23 = vld [vmem:[%s0 + $0x28] sm:$0xff]
  %v24 = vld [vmem:[%s0 + $0x30] sm:$0xff]
  %v25 = vld [vmem:[%s0 + $0x38] sm:$0xff]
  %v26 = vld [vmem:[%s0 + $0x40] sm:$0xff]
  %v27 = vld [vmem:[%s0 + $0x48] sm:$0xff]
  %v28 = vld [vmem:[%s0 + $0x50] sm:$0xff]
  %v29 = vld [vmem:[%s0 + $0x58] sm:$0xff]
  %v30 = vld [vmem:[%s0 + $0x60] sm:$0xf]
  %v31 = vld [vmem:[%s0 + $0x64] sm:$0xff]
  %v32 = vld [vmem:[%s0 + $0x6c] sm:$0xff]
  %v33 = vld [vmem:[%s0 + $0x74] sm:$0xff]
  %v34 = vld [vmem:[%s0 + $0x7c] sm:$0xff]
  %v35 = vld [vmem:[%s0 + $0x84] sm:$0xff]
  %v36 = vld [vmem:[%s0 + $0x8c] sm:$0xff]
  %v37 = vld [vmem:[%s0 + $0x94] sm:$0xff]
  %v38 = vld [vmem:[%s0 + $0x9c] sm:$0xff]
  %v39 = vld [vmem:[%s0 + $0xa4] sm:$0xff]
  %v40 = vld [vmem:[%s0 + $0xac] sm:$0xff]
  %v41 = vld [vmem:[%s0 + $0xb4] sm:$0xff]
  %v42 = vld [vmem:[%s0 + $0xbc] sm:$0xff]
  %v43 = vld [vmem:[%s0 + $0xc4] sm:$0xf]
  %v44 = vld [vmem:[%s0 + $0xc8] sm:$0xff]
  %v45 = vld [vmem:[%s0 + $0xd0] sm:$0xff]
  %v46 = vld [vmem:[%s0 + $0xd8] sm:$0xff]
  %v47 = vld [vmem:[%s0 + $0xe0] sm:$0xff]
  %v48 = vld [vmem:[%s0 + $0xe8] sm:$0xff]
  %v49 = vld [vmem:[%s0 + $0xf0] sm:$0xff]
  %v50 = vld [vmem:[%s0 + $0xf8] sm:$0xff]
  %v51 = vld [vmem:[%s0 + $0x100] sm:$0xff]
  %v52 = vld [vmem:[%s0 + $0x108] sm:$0xff]
  %v53 = vld [vmem:[%s0 + $0x110] sm:$0xff]
  %v54 = vld [vmem:[%s0 + $0x118] sm:$0xff]
  %v55 = vld [vmem:[%s0 + $0x120] sm:$0xff]
  %v56 = vld [vmem:[%s0 + $0x128] sm:$0xf]
  %v57 = vld [vmem:[%s0 + $0x12c] sm:$0xff]
  %v58 = vld [vmem:[%s0 + $0x134] sm:$0xff]
  %v59 = vld [vmem:[%s0 + $0x13c] sm:$0xff]
  %v60 = vld [vmem:[%s0 + $0x144] sm:$0xff]
  %v61 = vld [vmem:[%s0 + $0x14c] sm:$0xff]
  %v62 = vld [vmem:[%s0 + $0x154] sm:$0xff]
  %v63 = vld [vmem:[%s0 + $0x15c] sm:$0xff]
  %v64 = vld [vmem:[%s0 + $0x164] sm:$0xff]
  %v65 = vld [vmem:[%s0 + $0x16c] sm:$0xff]
  %v66 = vld [vmem:[%s0 + $0x174] sm:$0xff]
  %v67 = vld [vmem:[%s0 + $0x17c] sm:$0xff]
  %v68 = vld [vmem:[%s0 + $0x184] sm:$0xff]
  %v69 = vld [vmem:[%s0 + $0x18c] sm:$0xf]
  %v70 = vld [vmem:[%s0 + $0x190] sm:$0xff]
  %v71 = vld [vmem:[%s0 + $0x198] sm:$0xff]
  %v72 = vld [vmem:[%s0 + $0x1a0] sm:$0xff]
  %v73 = vld [vmem:[%s0 + $0x1a8] sm:$0xff]
  %v74 = vld [vmem:[%s0 + $0x1b0] sm:$0xff]
  %v75 = vld [vmem:[%s0 + $0x1b8] sm:$0xff]
  %v76 = vld [vmem:[%s0 + $0x1c0] sm:$0xff]
  %v77 = vld [vmem:[%s0 + $0x1c8] sm:$0xff]
  %v78 = vld [vmem:[%s0 + $0x1d0] sm:$0xff]
  %v79 = vld [vmem:[%s0 + $0x1d8] sm:$0xff]
  %v80 = vld [vmem:[%s0 + $0x1e0] sm:$0xff]
  %v81 = vld [vmem:[%s0 + $0x1e8] sm:$0xff]
  %v82 = vld [vmem:[%s0 + $0x1f0] sm:$0xf]
  %v83 = vld [vmem:[%s0 + $0x1f4] sm:$0xff]
  %v84 = vld [vmem:[%s0 + $0x1fc] sm:$0xff]
  %v85 = vld [vmem:[%s0 + $0x204] sm:$0xff]
  %v86 = vld [vmem:[%s0 + $0x20c] sm:$0xff]
  %v87 = vld [vmem:[%s0 + $0x214] sm:$0xff]
  %v88 = vld [vmem:[%s0 + $0x21c] sm:$0xff]
  %v89 = vld [vmem:[%s0 + $0x224] sm:$0xff]
  %v90 = vld [vmem:[%s0 + $0x22c] sm:$0xff]
  %v91 = vld [vmem:[%s0 + $0x234] sm:$0xff]
  %v92 = vld [vmem:[%s0 + $0x23c] sm:$0xff]
  %v93 = vld [vmem:[%s0 + $0x244] sm:$0xff]
  %v94 = vld [vmem:[%s0 + $0x24c] sm:$0xff]
  %v95 = vld [vmem:[%s0 + $0x254] sm:$0xf]
  %v96 = vld [vmem:[%s0 + $0x258] sm:$0xff]
  %v97 = vld [vmem:[%s0 + $0x260] sm:$0xff]
  %v98 = vld [vmem:[%s0 + $0x268] sm:$0xff]
  %v99 = vld [vmem:[%s0 + $0x270] sm:$0xff]
  %v100 = vld [vmem:[%s0 + $0x278] sm:$0xff]
  %v101 = vld [vmem:[%s0 + $0x280] sm:$0xff]
  %v102 = vld [vmem:[%s0 + $0x288] sm:$0xff]
  %v103 = vld [vmem:[%s0 + $0x290] sm:$0xff]
  %v104 = vld [vmem:[%s0 + $0x298] sm:$0xff]
  %v105 = vld [vmem:[%s0 + $0x2a0] sm:$0xff]
  %v106 = vld [vmem:[%s0 + $0x2a8] sm:$0xff]
  %v107 = vld [vmem:[%s0 + $0x2b0] sm:$0xff]
  %v108 = vld [vmem:[%s0 + $0x2b8] sm:$0xf]
  %v109 = vld [vmem:[%s0 + $0x2bc] sm:$0xff]
  %v110 = vld [vmem:[%s0 + $0x2c4] sm:$0xff]
  %v111 = vld [vmem:[%s0 + $0x2cc] sm:$0xff]
  %v112 = vld [vmem:[%s0 + $0x2d4] sm:$0xff]
  %v113 = vld [vmem:[%s0 + $0x2dc] sm:$0xff]
  %v114 = vld [vmem:[%s0 + $0x2e4] sm:$0xff]
  %v115 = vld [vmem:[%s0 + $0x2ec] sm:$0xff]
  %v116 = vld [vmem:[%s0 + $0x2f4] sm:$0xff]
  %v117 = vld [vmem:[%s0 + $0x2fc] sm:$0xff]
  %v118 = vld [vmem:[%s0 + $0x304] sm:$0xff]
  %v119 = vld [vmem:[%s0 + $0x30c] sm:$0xff]
  %v120 = vld [vmem:[%s0 + $0x314] sm:$0xff]
  %v121 = vld [vmem:[%s0 + $0x31c] sm:$0xf]
  %v122 = vld [vmem:[%s0 + $0x320] sm:$0xff]
  %v123 = vld [vmem:[%s0 + $0x328] sm:$0xff]
  %v124 = vld [vmem:[%s0 + $0x330] sm:$0xff]
  %v125 = vld [vmem:[%s0 + $0x338] sm:$0xff]
  %v126 = vld [vmem:[%s0 + $0x340] sm:$0xff]
  %v127 = vld [vmem:[%s0 + $0x348] sm:$0xff]
  %v128 = vld [vmem:[%s0 + $0x350] sm:$0xff]
  %v129 = vld [vmem:[%s0 + $0x358] sm:$0xff]
  %v130 = vld [vmem:[%s0 + $0x360] sm:$0xff]
  %v131 = vld [vmem:[%s0 + $0x368] sm:$0xff]
  %v132 = vld [vmem:[%s0 + $0x370] sm:$0xff]
  %v133 = vld [vmem:[%s0 + $0x378] sm:$0xff]
  %v134 = vld [vmem:[%s0 + $0x380] sm:$0xf]
  %v135 = vld [vmem:[%s0 + $0x384] sm:$0xff]
  %v136 = vld [vmem:[%s0 + $0x38c] sm:$0xff]
  %v137 = vld [vmem:[%s0 + $0x394] sm:$0xff]
  %v138 = vld [vmem:[%s0 + $0x39c] sm:$0xff]
  %v139 = vld [vmem:[%s0 + $0x3a4] sm:$0xff]
  %v140 = vld [vmem:[%s0 + $0x3ac] sm:$0xff]
  %v141 = vld [vmem:[%s0 + $0x3b4] sm:$0xff]
  %v142 = vld [vmem:[%s0 + $0x3bc] sm:$0xff]
  %v143 = vld [vmem:[%s0 + $0x3c4] sm:$0xff]
  %v144 = vld [vmem:[%s0 + $0x3cc] sm:$0xff]
  %v145 = vld [vmem:[%s0 + $0x3d4] sm:$0xff]
  %v146 = vld [vmem:[%s0 + $0x3dc] sm:$0xff]
  %v147 = vld [vmem:[%s0 + $0x3e4] sm:$0xf]
  %v148 = vld [vmem:[%s0 + $0x3e8] sm:$0xff]
  %v149 = vld [vmem:[%s0 + $0x3f0] sm:$0xff]
  %v150 = vld [vmem:[%s0 + $0x3f8] sm:$0xff]
  %v151 = vld [vmem:[%s0 + $0x400] sm:$0xff]
  %v152 = vld [vmem:[%s0 + $0x408] sm:$0xff]
  %v153 = vld [vmem:[%s0 + $0x410] sm:$0xff]
  %v154 = vld [vmem:[%s0 + $0x418] sm:$0xff]
  %v155 = vld [vmem:[%s0 + $0x420] sm:$0xff]
  %v156 = vld [vmem:[%s0 + $0x428] sm:$0xff]
  %v157 = vld [vmem:[%s0 + $0x430] sm:$0xff]
  %v158 = vld [vmem:[%s0 + $0x438] sm:$0xff]
  %v159 = vld [vmem:[%s0 + $0x440] sm:$0xff]
  %v160 = vld [vmem:[%s0 + $0x448] sm:$0xf]
  %v161 = vld [vmem:[%s0 + $0x44c] sm:$0xff]
  %v162 = vld [vmem:[%s0 + $0x454] sm:$0xff]
  %v163 = vld [vmem:[%s0 + $0x45c] sm:$0xff]
  %v164 = vld [vmem:[%s0 + $0x464] sm:$0xff]
  %v165 = vld [vmem:[%s0 + $0x46c] sm:$0xff]
  %v166 = vld [vmem:[%s0 + $0x474] sm:$0xff]
  %v167 = vld [vmem:[%s0 + $0x47c] sm:$0xff]
  %v168 = vld [vmem:[%s0 + $0x484] sm:$0xff]
  %v169 = vld [vmem:[%s0 + $0x48c] sm:$0xff]
  %v170 = vld [vmem:[%s0 + $0x494] sm:$0xff]
  %v171 = vld [vmem:[%s0 + $0x49c] sm:$0xff]
  %v172 = vld [vmem:[%s0 + $0x4a4] sm:$0xff]
  %v173 = vld [vmem:[%s0 + $0x4ac] sm:$0xf]
  %v174 = vld [vmem:[%s0 + $0x4b0] sm:$0xff]
  %v175 = vld [vmem:[%s0 + $0x4b8] sm:$0xff]
  %v176 = vld [vmem:[%s0 + $0x4c0] sm:$0xff]
  %v177 = vld [vmem:[%s0 + $0x4c8] sm:$0xff]
  %v178 = vld [vmem:[%s0 + $0x4d0] sm:$0xff]
  %v179 = vld [vmem:[%s0 + $0x4d8] sm:$0xff]
  %v180 = vld [vmem:[%s0 + $0x4e0] sm:$0xff]
  %v181 = vld [vmem:[%s0 + $0x4e8] sm:$0xff]
  %v182 = vld [vmem:[%s0 + $0x4f0] sm:$0xff]
  %v183 = vld [vmem:[%s0 + $0x4f8] sm:$0xff]
  %v184 = vld [vmem:[%s0 + $0x500] sm:$0xff]
  %v185 = vld [vmem:[%s0 + $0x508] sm:$0xff]
  %v186 = vld [vmem:[%s0 + $0x510] sm:$0xf]
  %v187 = vld [vmem:[%s0 + $0x514] sm:$0xff]
  %v188 = vld [vmem:[%s0 + $0x51c] sm:$0xff]
  %v189 = vld [vmem:[%s0 + $0x524] sm:$0xff]
  %v190 = vld [vmem:[%s0 + $0x52c] sm:$0xff]
  %v191 = vld [vmem:[%s0 + $0x534] sm:$0xff]
  %v192 = vld [vmem:[%s0 + $0x53c] sm:$0xff]
  %v193 = vld [vmem:[%s0 + $0x544] sm:$0xff]
  %v194 = vld [vmem:[%s0 + $0x54c] sm:$0xff]
  %v195 = vld [vmem:[%s0 + $0x554] sm:$0xff]
  %v196 = vld [vmem:[%s0 + $0x55c] sm:$0xff]
  %v197 = vld [vmem:[%s0 + $0x564] sm:$0xff]
  %v198 = vld [vmem:[%s0 + $0x56c] sm:$0xff]
  %v199 = vld [vmem:[%s0 + $0x574] sm:$0xf]
  %v200 = vld [vmem:[%s0 + $0x578] sm:$0xff]
  %v201 = vld [vmem:[%s0 + $0x580] sm:$0xff]
  %v202 = vld [vmem:[%s0 + $0x588] sm:$0xff]
  %v203 = vld [vmem:[%s0 + $0x590] sm:$0xff]
  %v204 = vld [vmem:[%s0 + $0x598] sm:$0xff]
  %v205 = vld [vmem:[%s0 + $0x5a0] sm:$0xff]
  %v206 = vld [vmem:[%s0 + $0x5a8] sm:$0xff]
  %v207 = vld [vmem:[%s0 + $0x5b0] sm:$0xff]
  %v208 = vld [vmem:[%s0 + $0x5b8] sm:$0xff]
  %v209 = vld [vmem:[%s0 + $0x5c0] sm:$0xff]
  %v210 = vld [vmem:[%s0 + $0x5c8] sm:$0xff]
  %v211 = vld [vmem:[%s0 + $0x5d0] sm:$0xff]
  %v212 = vld [vmem:[%s0 + $0x5d8] sm:$0xf]
  %v213 = vld [vmem:[%s0 + $0x5dc] sm:$0xff]
  %v214 = vld [vmem:[%s0 + $0x5e4] sm:$0xff]
  %v215 = vld [vmem:[%s0 + $0x5ec] sm:$0xff]
  %v216 = vld [vmem:[%s0 + $0x5f4] sm:$0xff]
  %v217 = vld [vmem:[%s0 + $0x5fc] sm:$0xff]
  %v218 = vld [vmem:[%s0 + $0x604] sm:$0xff]
  %v219 = vld [vmem:[%s0 + $0x60c] sm:$0xff]
  %v220 = vld [vmem:[%s0 + $0x614] sm:$0xff]
  %v221 = vld [vmem:[%s0 + $0x61c] sm:$0xff]
  %v222 = vld [vmem:[%s0 + $0x624] sm:$0xff]
  %v223 = vld [vmem:[%s0 + $0x62c] sm:$0xff]
  %v224 = vld [vmem:[%s0 + $0x634] sm:$0xff]
  %v225 = vld [vmem:[%s0 + $0x63c] sm:$0xf]
  %v226 = vld [vmem:[%s0 + $0x640] sm:$0xff]
  %v227 = vld [vmem:[%s0 + $0x648] sm:$0xff]
  %v228 = vld [vmem:[%s0 + $0x650] sm:$0xff]
  %v229 = vld [vmem:[%s0 + $0x658] sm:$0xff]
  %v230 = vld [vmem:[%s0 + $0x660] sm:$0xff]
  %v231 = vld [vmem:[%s0 + $0x668] sm:$0xff]
  %v232 = vld [vmem:[%s0 + $0x670] sm:$0xff]
  %v233 = vld [vmem:[%s0 + $0x678] sm:$0xff]
  %v234 = vld [vmem:[%s0 + $0x680] sm:$0xff]
  %v235 = vld [vmem:[%s0 + $0x688] sm:$0xff]
  %v236 = vld [vmem:[%s0 + $0x690] sm:$0xff]
  %v237 = vld [vmem:[%s0 + $0x698] sm:$0xff]
  %v238 = vld [vmem:[%s0 + $0x6a0] sm:$0xf]
  %v239 = vld [vmem:[%s0 + $0x6a4] sm:$0xff]
  %v240 = vld [vmem:[%s0 + $0x6ac] sm:$0xff]
  %v241 = vld [vmem:[%s0 + $0x6b4] sm:$0xff]
  %v242 = vld [vmem:[%s0 + $0x6bc] sm:$0xff]
  %v243 = vld [vmem:[%s0 + $0x6c4] sm:$0xff]
  %v244 = vld [vmem:[%s0 + $0x6cc] sm:$0xff]
  %v245 = vld [vmem:[%s0 + $0x6d4] sm:$0xff]
  %v246 = vld [vmem:[%s0 + $0x6dc] sm:$0xff]
  %v247 = vld [vmem:[%s0 + $0x6e4] sm:$0xff]
  %v248 = vld [vmem:[%s0 + $0x6ec] sm:$0xff]
  %v249 = vld [vmem:[%s0 + $0x6f4] sm:$0xff]
  %v250 = vld [vmem:[%s0 + $0x6fc] sm:$0xff]
  %v251 = vld [vmem:[%s0 + $0x704] sm:$0xf]
  %v252 = vld [vmem:[%s0 + $0x708] sm:$0xff]
  %v253 = vld [vmem:[%s0 + $0x710] sm:$0xff]
  %v254 = vld [vmem:[%s0 + $0x718] sm:$0xff]
  %v255 = vld [vmem:[%s0 + $0x720] sm:$0xff]
  %v256 = vld [vmem:[%s0 + $0x728] sm:$0xff]
  %v257 = vld [vmem:[%s0 + $0x730] sm:$0xff]
  %v258 = vld [vmem:[%s0 + $0x738] sm:$0xff]
  %v259 = vld [vmem:[%s0 + $0x740] sm:$0xff]
  %v260 = vld [vmem:[%s0 + $0x748] sm:$0xff]
  %v261 = vld [vmem:[%s0 + $0x750] sm:$0xff]
  %v262 = vld [vmem:[%s0 + $0x758] sm:$0xff]
  %v263 = vld [vmem:[%s0 + $0x760] sm:$0xff]
  %v264 = vld [vmem:[%s0 + $0x768] sm:$0xf]
  %v265 = vld [vmem:[%s0 + $0x76c] sm:$0xff]
  %v266 = vld [vmem:[%s0 + $0x774] sm:$0xff]
  %v267 = vld [vmem:[%s0 + $0x77c] sm:$0xff]
  %v268 = vld [vmem:[%s0 + $0x784] sm:$0xff]
  %v269 = vld [vmem:[%s0 + $0x78c] sm:$0xff]
  %v270 = vld [vmem:[%s0 + $0x794] sm:$0xff]
  %v271 = vld [vmem:[%s0 + $0x79c] sm:$0xff]
  %v272 = vld [vmem:[%s0 + $0x7a4] sm:$0xff]
  %v273 = vld [vmem:[%s0 + $0x7ac] sm:$0xff]
  %v274 = vld [vmem:[%s0 + $0x7b4] sm:$0xff]
  %v275 = vld [vmem:[%s0 + $0x7bc] sm:$0xff]
  %v276 = vld [vmem:[%s0 + $0x7c4] sm:$0xff]
  %v277 = vld [vmem:[%s0 + $0x7cc] sm:$0xf]
  %v278 = vld [vmem:[%s0 + $0x7d0] sm:$0xff]
  %v279 = vld [vmem:[%s0 + $0x7d8] sm:$0xff]
  %v280 = vld [vmem:[%s0 + $0x7e0] sm:$0xff]
  %v281 = vld [vmem:[%s0 + $0x7e8] sm:$0xff]
  %v282 = vld [vmem:[%s0 + $0x7f0] sm:$0xff]
  %v283 = vld [vmem:[%s0 + $0x7f8] sm:$0xff]
  %v284 = vld [vmem:[%s0 + $0x800] sm:$0xff]
  %v285 = vld [vmem:[%s0 + $0x808] sm:$0xff]
  %v286 = vld [vmem:[%s0 + $0x810] sm:$0xff]
  %v287 = vld [vmem:[%s0 + $0x818] sm:$0xff]
  %v288 = vld [vmem:[%s0 + $0x820] sm:$0xff]
  %v289 = vld [vmem:[%s0 + $0x828] sm:$0xff]
  %v290 = vld [vmem:[%s0 + $0x830] sm:$0xf]
  %v291 = vld [vmem:[%s0 + $0x834] sm:$0xff]
  %v292 = vld [vmem:[%s0 + $0x83c] sm:$0xff]
  %v293 = vld [vmem:[%s0 + $0x844] sm:$0xff]
  %v294 = vld [vmem:[%s0 + $0x84c] sm:$0xff]
  %v295 = vld [vmem:[%s0 + $0x854] sm:$0xff]
  %v296 = vld [vmem:[%s0 + $0x85c] sm:$0xff]
  %v297 = vld [vmem:[%s0 + $0x864] sm:$0xff]
  %v298 = vld [vmem:[%s0 + $0x86c] sm:$0xff]
  %v299 = vld [vmem:[%s0 + $0x874] sm:$0xff]
  %v300 = vld [vmem:[%s0 + $0x87c] sm:$0xff]
  %v301 = vld [vmem:[%s0 + $0x884] sm:$0xff]
  %v302 = vld [vmem:[%s0 + $0x88c] sm:$0xff]
  %v303 = vld [vmem:[%s0 + $0x894] sm:$0xf]
  %v304 = vld [vmem:[%s0 + $0x898] sm:$0xff]
  %v305 = vld [vmem:[%s0 + $0x8a0] sm:$0xff]
  %v306 = vld [vmem:[%s0 + $0x8a8] sm:$0xff]
  %v307 = vld [vmem:[%s0 + $0x8b0] sm:$0xff]
  %v308 = vld [vmem:[%s0 + $0x8b8] sm:$0xff]
  %v309 = vld [vmem:[%s0 + $0x8c0] sm:$0xff]
  %v310 = vld [vmem:[%s0 + $0x8c8] sm:$0xff]
  %v311 = vld [vmem:[%s0 + $0x8d0] sm:$0xff]
  %v312 = vld [vmem:[%s0 + $0x8d8] sm:$0xff]
  %v313 = vld [vmem:[%s0 + $0x8e0] sm:$0xff]
  %v314 = vld [vmem:[%s0 + $0x8e8] sm:$0xff]
  %v315 = vld [vmem:[%s0 + $0x8f0] sm:$0xff]
  %v316 = vld [vmem:[%s0 + $0x8f8] sm:$0xf]
  %v317 = vld [vmem:[%s0 + $0x8fc] sm:$0xff]
  %v318 = vld [vmem:[%s0 + $0x904] sm:$0xff]
  %v319 = vld [vmem:[%s0 + $0x90c] sm:$0xff]
  %v320 = vld [vmem:[%s0 + $0x914] sm:$0xff]
  %v321 = vld [vmem:[%s0 + $0x91c] sm:$0xff]
  %v322 = vld [vmem:[%s0 + $0x924] sm:$0xff]
  %v323 = vld [vmem:[%s0 + $0x92c] sm:$0xff]
  %v324 = vld [vmem:[%s0 + $0x934] sm:$0xff]
  %v325 = vld [vmem:[%s0 + $0x93c] sm:$0xff]
  %v326 = vld [vmem:[%s0 + $0x944] sm:$0xff]
  %v327 = vld [vmem:[%s0 + $0x94c] sm:$0xff]
  %v328 = vld [vmem:[%s0 + $0x954] sm:$0xff]
  %v329 = vld [vmem:[%s0 + $0x95c] sm:$0xf]
  %v330 = vld [vmem:[%s0 + $0x960] sm:$0xff]
  %v331 = vld [vmem:[%s0 + $0x968] sm:$0xff]
  %v332 = vld [vmem:[%s0 + $0x970] sm:$0xff]
  %v333 = vld [vmem:[%s0 + $0x978] sm:$0xff]
  %v334 = vld [vmem:[%s0 + $0x980] sm:$0xff]
  %v335 = vld [vmem:[%s0 + $0x988] sm:$0xff]
  %v336 = vld [vmem:[%s0 + $0x990] sm:$0xff]
  %v337 = vld [vmem:[%s0 + $0x998] sm:$0xff]
  %v338 = vld [vmem:[%s0 + $0x9a0] sm:$0xff]
  %v339 = vld [vmem:[%s0 + $0x9a8] sm:$0xff]
  %v340 = vld [vmem:[%s0 + $0x9b0] sm:$0xff]
  %v341 = vld [vmem:[%s0 + $0x9b8] sm:$0xff]
  %v342 = vld [vmem:[%s0 + $0x9c0] sm:$0xf]
  %v343 = vld [vmem:[%s0 + $0x9c4] sm:$0xff]
  %v344 = vld [vmem:[%s0 + $0x9cc] sm:$0xff]
  %v345 = vld [vmem:[%s0 + $0x9d4] sm:$0xff]
  %v346 = vld [vmem:[%s0 + $0x9dc] sm:$0xff]
  %v347 = vld [vmem:[%s0 + $0x9e4] sm:$0xff]
  %v348 = vld [vmem:[%s0 + $0x9ec] sm:$0xff]
  %v349 = vld [vmem:[%s0 + $0x9f4] sm:$0xff]
  %v350 = vld [vmem:[%s0 + $0x9fc] sm:$0xff]
  %v351 = vld [vmem:[%s0 + $0xa04] sm:$0xff]
  %v352 = vld [vmem:[%s0 + $0xa0c] sm:$0xff]
  %v353 = vld [vmem:[%s0 + $0xa14] sm:$0xff]
  %v354 = vld [vmem:[%s0 + $0xa1c] sm:$0xff]
  %v355 = vld [vmem:[%s0 + $0xa24] sm:$0xf]
  %v356 = vld [vmem:[%s0 + $0xa28] sm:$0xff]
  %v357 = vld [vmem:[%s0 + $0xa30] sm:$0xff]
  %v358 = vld [vmem:[%s0 + $0xa38] sm:$0xff]
  %v359 = vld [vmem:[%s0 + $0xa40] sm:$0xff]
  %v360 = vld [vmem:[%s0 + $0xa48] sm:$0xff]
  %v361 = vld [vmem:[%s0 + $0xa50] sm:$0xff]
  %v362 = vld [vmem:[%s0 + $0xa58] sm:$0xff]
  %v363 = vld [vmem:[%s0 + $0xa60] sm:$0xff]
  %v364 = vld [vmem:[%s0 + $0xa68] sm:$0xff]
  %v365 = vld [vmem:[%s0 + $0xa70] sm:$0xff]
  %v366 = vld [vmem:[%s0 + $0xa78] sm:$0xff]
  %v367 = vld [vmem:[%s0 + $0xa80] sm:$0xff]
  %v368 = vld [vmem:[%s0 + $0xa88] sm:$0xf]
  %v369 = vld [vmem:[%s0 + $0xa8c] sm:$0xff]
  %v370 = vld [vmem:[%s0 + $0xa94] sm:$0xff]
  %v371 = vld [vmem:[%s0 + $0xa9c] sm:$0xff]
  %v372 = vld [vmem:[%s0 + $0xaa4] sm:$0xff]
  %v373 = vld [vmem:[%s0 + $0xaac] sm:$0xff]
  %v374 = vld [vmem:[%s0 + $0xab4] sm:$0xff]
  %v375 = vld [vmem:[%s0 + $0xabc] sm:$0xff]
  %v376 = vld [vmem:[%s0 + $0xac4] sm:$0xff]
  %v377 = vld [vmem:[%s0 + $0xacc] sm:$0xff]
  %v378 = vld [vmem:[%s0 + $0xad4] sm:$0xff]
  %v379 = vld [vmem:[%s0 + $0xadc] sm:$0xff]
  %v380 = vld [vmem:[%s0 + $0xae4] sm:$0xff]
  %v381 = vld [vmem:[%s0 + $0xaec] sm:$0xf]
  %v382 = vld [vmem:[%s0 + $0xaf0] sm:$0xff]
  %v383 = vld [vmem:[%s0 + $0xaf8] sm:$0xff]
  %v384 = vld [vmem:[%s0 + $0xb00] sm:$0xff]
  %v385 = vld [vmem:[%s0 + $0xb08] sm:$0xff]
  %v386 = vld [vmem:[%s0 + $0xb10] sm:$0xff]
  %v387 = vld [vmem:[%s0 + $0xb18] sm:$0xff]
  %v388 = vld [vmem:[%s0 + $0xb20] sm:$0xff]
  %v389 = vld [vmem:[%s0 + $0xb28] sm:$0xff]
  %v390 = vld [vmem:[%s0 + $0xb30] sm:$0xff]
  %v391 = vld [vmem:[%s0 + $0xb38] sm:$0xff]
  %v392 = vld [vmem:[%s0 + $0xb40] sm:$0xff]
  %v393 = vld [vmem:[%s0 + $0xb48] sm:$0xff]
  %v394 = vld [vmem:[%s0 + $0xb50] sm:$0xf]
  %v395 = vld [vmem:[%s0 + $0xb54] sm:$0xff]
  %v396 = vld [vmem:[%s0 + $0xb5c] sm:$0xff]
  %v397 = vld [vmem:[%s0 + $0xb64] sm:$0xff]
  %v398 = vld [vmem:[%s0 + $0xb6c] sm:$0xff]
  %v399 = vld [vmem:[%s0 + $0xb74] sm:$0xff]
  %v400 = vld [vmem:[%s0 + $0xb7c] sm:$0xff]
  %v401 = vld [vmem:[%s0 + $0xb84] sm:$0xff]
  %v402 = vld [vmem:[%s0 + $0xb8c] sm:$0xff]
  %v403 = vld [vmem:[%s0 + $0xb94] sm:$0xff]
  %v404 = vld [vmem:[%s0 + $0xb9c] sm:$0xff]
  %v405 = vld [vmem:[%s0 + $0xba4] sm:$0xff]
  %v406 = vld [vmem:[%s0 + $0xbac] sm:$0xff]
  %v407 = vld [vmem:[%s0 + $0xbb4] sm:$0xf]
  %v408 = vld [vmem:[%s0 + $0xbb8] sm:$0xff]
  %v409 = vld [vmem:[%s0 + $0xbc0] sm:$0xff]
  %v410 = vld [vmem:[%s0 + $0xbc8] sm:$0xff]
  %v411 = vld [vmem:[%s0 + $0xbd0] sm:$0xff]
  %v412 = vld [vmem:[%s0 + $0xbd8] sm:$0xff]
  %v413 = vld [vmem:[%s0 + $0xbe0] sm:$0xff]
  %v414 = vld [vmem:[%s0 + $0xbe8] sm:$0xff]
  %v415 = vld [vmem:[%s0 + $0xbf0] sm:$0xff]
  %v416 = vld [vmem:[%s0 + $0xbf8] sm:$0xff]
  %v417 = vld [vmem:[%s0 + $0xc00] sm:$0xff]
  %v418 = vld [vmem:[%s0 + $0xc08] sm:$0xff]
  %v419 = vld [vmem:[%s0 + $0xc10] sm:$0xff]
  %v420 = vld [vmem:[%s0 + $0xc18] sm:$0xf]
  %v421 = vld [vmem:[%s1] sm:$0xf]
  %v422 = vld [vmem:[%s1 + $0x4] sm:$0xf]
  %v423 = vld [vmem:[%s1 + $0x8] sm:$0xf]
  %v424 = vld [vmem:[%s1 + $0xc] sm:$0xf]
  %v425 = vld [vmem:[%s1 + $0x10] sm:$0xf]
  %v426 = vld [vmem:[%s1 + $0x14] sm:$0xf]
  %v427 = vld [vmem:[%s1 + $0x18] sm:$0xf]
  %v428 = vld [vmem:[%s1 + $0x1c] sm:$0xf]
  %v429 = vld [vmem:[%s1 + $0x20] sm:$0xf]
  %v430 = vld [vmem:[%s1 + $0x24] sm:$0xf]
  %v431 = vld [vmem:[%s1 + $0x28] sm:$0xf]
  %v432 = vld [vmem:[%s1 + $0x2c] sm:$0xf]
  %v433 = vld [vmem:[%s1 + $0x30] sm:$0xf]
  %v434 = vld [vmem:[%s1 + $0x34] sm:$0xf]
  %v435 = vld [vmem:[%s1 + $0x38] sm:$0xf]
  %v436 = vld [vmem:[%s1 + $0x3c] sm:$0xf]
  %v437 = vld [vmem:[%s1 + $0x40] sm:$0xf]
  %v438 = vld [vmem:[%s1 + $0x44] sm:$0xf]
  %v439 = vld [vmem:[%s1 + $0x48] sm:$0xf]
  %v440 = vld [vmem:[%s1 + $0x4c] sm:$0xf]
  %v441 = vld [vmem:[%s1 + $0x50] sm:$0xf]
  %v442 = vld [vmem:[%s1 + $0x54] sm:$0xf]
  %v443 = vld [vmem:[%s1 + $0x58] sm:$0xf]
  %v444 = vld [vmem:[%s1 + $0x5c] sm:$0xf]
  %v445 = vld [vmem:[%s1 + $0x60] sm:$0xf]
  %v446 = vld [vmem:[%s1 + $0x64] sm:$0xf]
  %v447 = vld [vmem:[%s1 + $0x68] sm:$0xf]
  %v448 = vld [vmem:[%s1 + $0x6c] sm:$0xf]
  %v449 = vld [vmem:[%s1 + $0x70] sm:$0xf]
  %v450 = vld [vmem:[%s1 + $0x74] sm:$0xf]
  %v451 = vld [vmem:[%s1 + $0x78] sm:$0xf]
  %v452 = vld [vmem:[%s1 + $0x7c] sm:$0xf]
  %v453 = vld [vmem:[%s1 + $0x80] sm:$0xf]
  %v454 = vld [vmem:[%s1 + $0x84] sm:$0xf]
  %v455 = vld [vmem:[%s1 + $0x88] sm:$0xf]
  %v456 = vld [vmem:[%s1 + $0x8c] sm:$0xf]
  %v457 = vld [vmem:[%s1 + $0x90] sm:$0xf]
  %v458 = vld [vmem:[%s1 + $0x94] sm:$0xf]
  %v459 = vld [vmem:[%s1 + $0x98] sm:$0xf]
  %v460 = vld [vmem:[%s1 + $0x9c] sm:$0xf]
  %v461 = vld [vmem:[%s1 + $0xa0] sm:$0xf]
  %v462 = vld [vmem:[%s1 + $0xa4] sm:$0xf]
  %v463 = vld [vmem:[%s1 + $0xa8] sm:$0xf]
  %v464 = vld [vmem:[%s1 + $0xac] sm:$0xf]
  %v465 = vld [vmem:[%s1 + $0xb0] sm:$0xf]
  %v466 = vld [vmem:[%s1 + $0xb4] sm:$0xf]
  %v467 = vld [vmem:[%s1 + $0xb8] sm:$0xf]
  %v468 = vld [vmem:[%s1 + $0xbc] sm:$0xf]
  %v469 = vld [vmem:[%s1 + $0xc0] sm:$0xf]
  %v470 = vld [vmem:[%s1 + $0xc4] sm:$0xf]
  %v471 = vld [vmem:[%s1 + $0xc8] sm:$0xf]
  %v472 = vld [vmem:[%s1 + $0xcc] sm:$0xf]
  %v473 = vld [vmem:[%s1 + $0xd0] sm:$0xf]
  %v474 = vld [vmem:[%s1 + $0xd4] sm:$0xf]
  %v475 = vld [vmem:[%s1 + $0xd8] sm:$0xf]
  %v476 = vld [vmem:[%s1 + $0xdc] sm:$0xf]
  %v477 = vld [vmem:[%s1 + $0xe0] sm:$0xf]
  %v478 = vld [vmem:[%s1 + $0xe4] sm:$0xf]
  %v479 = vld [vmem:[%s1 + $0xe8] sm:$0xf]
  %v480 = vld [vmem:[%s1 + $0xec] sm:$0xf]
  %v481 = vld [vmem:[%s1 + $0xf0] sm:$0xf]
  %v482 = vld [vmem:[%s1 + $0xf4] sm:$0xf]
  %v483 = vld [vmem:[%s1 + $0xf8] sm:$0xf]
  %v484 = vld [vmem:[%s1 + $0xfc] sm:$0xf]
  %v485 = vld [vmem:[%s1 + $0x100] sm:$0xf]
  %v486 = vld [vmem:[%s1 + $0x104] sm:$0xf]
  %v487 = vld [vmem:[%s1 + $0x108] sm:$0xf]
  %v488 = vld [vmem:[%s1 + $0x10c] sm:$0xf]
  %v489 = vld [vmem:[%s1 + $0x110] sm:$0xf]
  %v490 = vld [vmem:[%s1 + $0x114] sm:$0xf]
  %v491 = vld [vmem:[%s1 + $0x118] sm:$0xf]
  %v492 = vld [vmem:[%s1 + $0x11c] sm:$0xf]
  %v493 = vld [vmem:[%s1 + $0x120] sm:$0xf]
  %v494 = vld [vmem:[%s1 + $0x124] sm:$0xf]
  %v495 = vld [vmem:[%s1 + $0x128] sm:$0xf]
  %v496 = vld [vmem:[%s1 + $0x12c] sm:$0xf]
  %v497 = vld [vmem:[%s1 + $0x130] sm:$0xf]
  %v498 = vld [vmem:[%s1 + $0x134] sm:$0xf]
  %v499 = vld [vmem:[%s1 + $0x138] sm:$0xf]
  %v500 = vld [vmem:[%s1 + $0x13c] sm:$0xf]
  %v501 = vld [vmem:[%s1 + $0x140] sm:$0xf]
  %v502 = vld [vmem:[%s1 + $0x144] sm:$0xf]
  %v503 = vld [vmem:[%s1 + $0x148] sm:$0xf]
  %v504 = vld [vmem:[%s1 + $0x14c] sm:$0xf]
  %v505 = vld [vmem:[%s1 + $0x150] sm:$0xf]
  %v506 = vld [vmem:[%s1 + $0x154] sm:$0xf]
  %v507 = vld [vmem:[%s1 + $0x158] sm:$0xf]
  %v508 = vld [vmem:[%s1 + $0x15c] sm:$0xf]
  %v509 = vld [vmem:[%s1 + $0x160] sm:$0xf]
  %v510 = vld [vmem:[%s1 + $0x164] sm:$0xf]
  %v511 = vld [vmem:[%s1 + $0x168] sm:$0xf]
  %v512 = vld [vmem:[%s1 + $0x16c] sm:$0xf]
  %v513 = vld [vmem:[%s1 + $0x170] sm:$0xf]
  %v514 = vld [vmem:[%s1 + $0x174] sm:$0xf]
  %v515 = vld [vmem:[%s1 + $0x178] sm:$0xf]
  %v516 = vld [vmem:[%s1 + $0x17c] sm:$0xf]
  %v517 = vld [vmem:[%s1 + $0x180] sm:$0xf]
  %v518 = vld [vmem:[%s1 + $0x184] sm:$0xf]
  %v519 = vld [vmem:[%s1 + $0x188] sm:$0xf]
  %v520 = vld [vmem:[%s1 + $0x18c] sm:$0xf]
  %v521 = vld [vmem:[%s1 + $0x190] sm:$0xf]
  %v522 = vld [vmem:[%s1 + $0x194] sm:$0xf]
  %v523 = vld [vmem:[%s1 + $0x198] sm:$0xf]
  %v524 = vld [vmem:[%s1 + $0x19c] sm:$0xf]
  %v525 = vld [vmem:[%s1 + $0x1a0] sm:$0xf]
  %v526 = vld [vmem:[%s1 + $0x1a4] sm:$0xf]
  %v527 = vld [vmem:[%s1 + $0x1a8] sm:$0xf]
  %v528 = vld [vmem:[%s1 + $0x1ac] sm:$0xf]
  %v529 = vld [vmem:[%s1 + $0x1b0] sm:$0xf]
  %v530 = vld [vmem:[%s1 + $0x1b4] sm:$0xf]
  %v531 = vld [vmem:[%s1 + $0x1b8] sm:$0xf]
  %v532 = vld [vmem:[%s1 + $0x1bc] sm:$0xf]
  %v533 = vld [vmem:[%s1 + $0x1c0] sm:$0xf]
  %v534 = vld [vmem:[%s1 + $0x1c4] sm:$0xf]
  %v535 = vld [vmem:[%s1 + $0x1c8] sm:$0xf]
  %v536 = vld [vmem:[%s1 + $0x1cc] sm:$0xf]
  %v537 = vld [vmem:[%s1 + $0x1d0] sm:$0xf]
  %v538 = vld [vmem:[%s1 + $0x1d4] sm:$0xf]
  %v539 = vld [vmem:[%s1 + $0x1d8] sm:$0xf]
  %v540 = vld [vmem:[%s1 + $0x1dc] sm:$0xf]
  %v541 = vld [vmem:[%s1 + $0x1e0] sm:$0xf]
  %v542 = vld [vmem:[%s1 + $0x1e4] sm:$0xf]
  %v543 = vld [vmem:[%s1 + $0x1e8] sm:$0xf]
  %v544 = vld [vmem:[%s1 + $0x1ec] sm:$0xf]
  %v545 = vld [vmem:[%s1 + $0x1f0] sm:$0xf]
  %v546 = vld [vmem:[%s1 + $0x1f4] sm:$0xf]
  %v547 = vld [vmem:[%s1 + $0x1f8] sm:$0xf]
  %v548 = vld [vmem:[%s1 + $0x1fc] sm:$0xf]
  %v549 = vld [vmem:[%s1 + $0x200] sm:$0xf]
  %v550 = vld [vmem:[%s1 + $0x204] sm:$0xf]
  %v551 = vld [vmem:[%s1 + $0x208] sm:$0xf]
  %v552 = vld [vmem:[%s1 + $0x20c] sm:$0xf]
  %v553 = vld [vmem:[%s1 + $0x210] sm:$0xf]
  %v554 = vld [vmem:[%s1 + $0x214] sm:$0xf]
  %v555 = vld [vmem:[%s1 + $0x218] sm:$0xf]
  %v556 = vld [vmem:[%s1 + $0x21c] sm:$0xf]
  %v557 = vld [vmem:[%s1 + $0x220] sm:$0xf]
  %v558 = vld [vmem:[%s1 + $0x224] sm:$0xf]
  %v559 = vld [vmem:[%s1 + $0x228] sm:$0xf]
  %v560 = vld [vmem:[%s1 + $0x22c] sm:$0xf]
  %v561 = vld [vmem:[%s1 + $0x230] sm:$0xf]
  %v562 = vld [vmem:[%s1 + $0x234] sm:$0xf]
  %v563 = vld [vmem:[%s1 + $0x238] sm:$0xf]
  %v564 = vld [vmem:[%s1 + $0x23c] sm:$0xf]
  %v565 = vld [vmem:[%s1 + $0x240] sm:$0xf]
  %v566 = vld [vmem:[%s1 + $0x244] sm:$0xf]
  %v567 = vld [vmem:[%s1 + $0x248] sm:$0xf]
  %v568 = vld [vmem:[%s1 + $0x24c] sm:$0xf]
  %v569 = vld [vmem:[%s1 + $0x250] sm:$0xf]
  %v570 = vld [vmem:[%s1 + $0x254] sm:$0xf]
  %v571 = vld [vmem:[%s1 + $0x258] sm:$0xf]
  %v572 = vld [vmem:[%s1 + $0x25c] sm:$0xf]
  %v573 = vld [vmem:[%s1 + $0x260] sm:$0xf]
  %v574 = vld [vmem:[%s1 + $0x264] sm:$0xf]
  %v575 = vld [vmem:[%s1 + $0x268] sm:$0xf]
  %v576 = vld [vmem:[%s1 + $0x26c] sm:$0xf]
  %v577 = vld [vmem:[%s1 + $0x270] sm:$0xf]
  %v578 = vld [vmem:[%s1 + $0x274] sm:$0xf]
  %v579 = vld [vmem:[%s1 + $0x278] sm:$0xf]
  %v580 = vld [vmem:[%s1 + $0x27c] sm:$0xf]
  %v581 = vld [vmem:[%s1 + $0x280] sm:$0xf]
  %v582 = vld [vmem:[%s1 + $0x284] sm:$0xf]
  %v583 = vld [vmem:[%s1 + $0x288] sm:$0xf]
  %v584 = vld [vmem:[%s1 + $0x28c] sm:$0xf]
  %v585 = vld [vmem:[%s1 + $0x290] sm:$0xf]
  %v586 = vld [vmem:[%s1 + $0x294] sm:$0xf]
  %v587 = vld [vmem:[%s1 + $0x298] sm:$0xf]
  %v588 = vld [vmem:[%s1 + $0x29c] sm:$0xf]
  %v589 = vld [vmem:[%s1 + $0x2a0] sm:$0xf]
  %v590 = vld [vmem:[%s1 + $0x2a4] sm:$0xf]
  %v591 = vld [vmem:[%s1 + $0x2a8] sm:$0xf]
  %v592 = vld [vmem:[%s1 + $0x2ac] sm:$0xf]
  %v593 = vld [vmem:[%s1 + $0x2b0] sm:$0xf]
  %v594 = vld [vmem:[%s1 + $0x2b4] sm:$0xf]
  %v595 = vld [vmem:[%s1 + $0x2b8] sm:$0xf]
  %v596 = vld [vmem:[%s1 + $0x2bc] sm:$0xf]
  %v597 = vld [vmem:[%s1 + $0x2c0] sm:$0xf]
  %v598 = vld [vmem:[%s1 + $0x2c4] sm:$0xf]
  %v599 = vld [vmem:[%s1 + $0x2c8] sm:$0xf]
  %v600 = vld [vmem:[%s1 + $0x2cc] sm:$0xf]
  %v601 = vld [vmem:[%s1 + $0x2d0] sm:$0xf]
  %v602 = vld [vmem:[%s1 + $0x2d4] sm:$0xf]
  %v603 = vld [vmem:[%s1 + $0x2d8] sm:$0xf]
  %v604 = vld [vmem:[%s1 + $0x2dc] sm:$0xf]
  %v605 = vld [vmem:[%s1 + $0x2e0] sm:$0xf]
  %v606 = vld [vmem:[%s1 + $0x2e4] sm:$0xf]
  %v607 = vld [vmem:[%s1 + $0x2e8] sm:$0xf]
  %v608 = vld [vmem:[%s1 + $0x2ec] sm:$0xf]
  %v609 = vld [vmem:[%s1 + $0x2f0] sm:$0xf]
  %v610 = vld [vmem:[%s1 + $0x2f4] sm:$0xf]
  %v611 = vld [vmem:[%s1 + $0x2f8] sm:$0xf]
  %v612 = vld [vmem:[%s1 + $0x2fc] sm:$0xf]
  %v613 = vld [vmem:[%s1 + $0x300] sm:$0xf]
  %v614 = vld [vmem:[%s1 + $0x304] sm:$0xf]
  %v615 = vld [vmem:[%s1 + $0x308] sm:$0xf]
  %v616 = vld [vmem:[%s1 + $0x30c] sm:$0xf]
  %v617 = vld [vmem:[%s1 + $0x310] sm:$0xf]
  %v618 = vld [vmem:[%s1 + $0x314] sm:$0xf]
  %v619 = vld [vmem:[%s1 + $0x318] sm:$0xf]
  %v620 = vld [vmem:[%s1 + $0x31c] sm:$0xf]
  %v621 = vld [vmem:[%s1 + $0x320] sm:$0xf]
  %v622 = vld [vmem:[%s1 + $0x324] sm:$0xf]
  %v623 = vld [vmem:[%s1 + $0x328] sm:$0xf]
  %v624 = vld [vmem:[%s1 + $0x32c] sm:$0xf]
  %v625 = vld [vmem:[%s1 + $0x330] sm:$0xf]
  %v626 = vld [vmem:[%s1 + $0x334] sm:$0xf]
  %v627 = vld [vmem:[%s1 + $0x338] sm:$0xf]
  %v628 = vld [vmem:[%s1 + $0x33c] sm:$0xf]
  %v629 = vld [vmem:[%s1 + $0x340] sm:$0xf]
  %v630 = vld [vmem:[%s1 + $0x344] sm:$0xf]
  %v631 = vld [vmem:[%s1 + $0x348] sm:$0xf]
  %v632 = vld [vmem:[%s1 + $0x34c] sm:$0xf]
  %v633 = vld [vmem:[%s1 + $0x350] sm:$0xf]
  %v634 = vld [vmem:[%s1 + $0x354] sm:$0xf]
  %v635 = vld [vmem:[%s1 + $0x358] sm:$0xf]
  %v636 = vld [vmem:[%s1 + $0x35c] sm:$0xf]
  %v637 = vld [vmem:[%s1 + $0x360] sm:$0xf]
  %v638 = vld [vmem:[%s1 + $0x364] sm:$0xf]
  %v639 = vld [vmem:[%s1 + $0x368] sm:$0xf]
  %v640 = vld [vmem:[%s1 + $0x36c] sm:$0xf]
  %v641 = vld [vmem:[%s1 + $0x370] sm:$0xf]
  %v642 = vld [vmem:[%s1 + $0x374] sm:$0xf]
  %v643 = vld [vmem:[%s1 + $0x378] sm:$0xf]
  %v644 = vld [vmem:[%s1 + $0x37c] sm:$0xf]
  %v645 = vld [vmem:[%s1 + $0x380] sm:$0xf]
  %v646 = vld [vmem:[%s1 + $0x384] sm:$0xf]
  %v647 = vld [vmem:[%s1 + $0x388] sm:$0xf]
  %v648 = vld [vmem:[%s1 + $0x38c] sm:$0xf]
  %v649 = vld [vmem:[%s1 + $0x390] sm:$0xf]
  %v650 = vld [vmem:[%s1 + $0x394] sm:$0xf]
  %v651 = vld [vmem:[%s1 + $0x398] sm:$0xf]
  %v652 = vld [vmem:[%s1 + $0x39c] sm:$0xf]
  %v653 = vld [vmem:[%s1 + $0x3a0] sm:$0xf]
  %v654 = vld [vmem:[%s1 + $0x3a4] sm:$0xf]
  %v655 = vld [vmem:[%s1 + $0x3a8] sm:$0xf]
  %v656 = vld [vmem:[%s1 + $0x3ac] sm:$0xf]
  %v657 = vld [vmem:[%s1 + $0x3b0] sm:$0xf]
  %v658 = vld [vmem:[%s1 + $0x3b4] sm:$0xf]
  %v659 = vld [vmem:[%s1 + $0x3b8] sm:$0xf]
  %v660 = vld [vmem:[%s1 + $0x3bc] sm:$0xf]
  %v661 = vld [vmem:[%s1 + $0x3c0] sm:$0xf]
  %v662 = vld [vmem:[%s1 + $0x3c4] sm:$0xf]
  %v663 = vld [vmem:[%s1 + $0x3c8] sm:$0xf]
  %v664 = vld [vmem:[%s1 + $0x3cc] sm:$0xf]
  %v665 = vld [vmem:[%s1 + $0x3d0] sm:$0xf]
  %v666 = vld [vmem:[%s1 + $0x3d4] sm:$0xf]
  %v667 = vld [vmem:[%s1 + $0x3d8] sm:$0xf]
  %v668 = vld [vmem:[%s1 + $0x3dc] sm:$0xf]
  %v669 = vld [vmem:[%s1 + $0x3e0] sm:$0xf]
  %v670 = vld [vmem:[%s1 + $0x3e4] sm:$0xf]
  %v671 = vld [vmem:[%s1 + $0x3e8] sm:$0xf]
  %v672 = vld [vmem:[%s1 + $0x3ec] sm:$0xf]
  %v673 = vld [vmem:[%s1 + $0x3f0] sm:$0xf]
  %v674 = vld [vmem:[%s1 + $0x3f4] sm:$0xf]
  %v675 = vld [vmem:[%s1 + $0x3f8] sm:$0xf]
  %v676 = vld [vmem:[%s1 + $0x3fc] sm:$0xf]
  %v677 = vld [vmem:[%s1 + $0x400] sm:$0xf]
  %v678 = vld [vmem:[%s1 + $0x404] sm:$0xf]
  %v679 = vld [vmem:[%s1 + $0x408] sm:$0xf]
  %v680 = vld [vmem:[%s1 + $0x40c] sm:$0xf]
  %v681 = vld [vmem:[%s1 + $0x410] sm:$0xf]
  %v682 = vld [vmem:[%s1 + $0x414] sm:$0xf]
  %v683 = vld [vmem:[%s1 + $0x418] sm:$0xf]
  %v684 = vld [vmem:[%s1 + $0x41c] sm:$0xf]
  %v685 = vld [vmem:[%s1 + $0x420] sm:$0xf]
  %v686 = vld [vmem:[%s1 + $0x424] sm:$0xf]
  %v687 = vld [vmem:[%s1 + $0x428] sm:$0xf]
  %v688 = vld [vmem:[%s1 + $0x42c] sm:$0xf]
  %v689 = vld [vmem:[%s1 + $0x430] sm:$0xf]
  %v690 = vld [vmem:[%s1 + $0x434] sm:$0xf]
  %v691 = vld [vmem:[%s1 + $0x438] sm:$0xf]
  %v692 = vld [vmem:[%s1 + $0x43c] sm:$0xf]
  %v693 = vld [vmem:[%s1 + $0x440] sm:$0xf]
  %v694 = vld [vmem:[%s1 + $0x444] sm:$0xf]
  %v695 = vld [vmem:[%s1 + $0x448] sm:$0xf]
  %v696 = vld [vmem:[%s1 + $0x44c] sm:$0xf]
  %v697 = vld [vmem:[%s1 + $0x450] sm:$0xf]
  %v698 = vld [vmem:[%s1 + $0x454] sm:$0xf]
  %v699 = vld [vmem:[%s1 + $0x458] sm:$0xf]
  %v700 = vld [vmem:[%s1 + $0x45c] sm:$0xf]
  %v701 = vld [vmem:[%s1 + $0x460] sm:$0xf]
  %v702 = vld [vmem:[%s1 + $0x464] sm:$0xf]
  %v703 = vld [vmem:[%s1 + $0x468] sm:$0xf]
  %v704 = vld [vmem:[%s1 + $0x46c] sm:$0xf]
  %v705 = vld [vmem:[%s1 + $0x470] sm:$0xf]
  %v706 = vld [vmem:[%s1 + $0x474] sm:$0xf]
  %v707 = vld [vmem:[%s1 + $0x478] sm:$0xf]
  %v708 = vld [vmem:[%s1 + $0x47c] sm:$0xf]
  %v709 = vld [vmem:[%s1 + $0x480] sm:$0xf]
  %v710 = vld [vmem:[%s1 + $0x484] sm:$0xf]
  %v711 = vld [vmem:[%s1 + $0x488] sm:$0xf]
  %v712 = vld [vmem:[%s1 + $0x48c] sm:$0xf]
  %v713 = vld [vmem:[%s1 + $0x490] sm:$0xf]
  %v714 = vld [vmem:[%s1 + $0x494] sm:$0xf]
  %v715 = vld [vmem:[%s1 + $0x498] sm:$0xf]
  %v716 = vld [vmem:[%s1 + $0x49c] sm:$0xf]
  %v717 = vld [vmem:[%s1 + $0x4a0] sm:$0xf]
  %v718 = vld [vmem:[%s1 + $0x4a4] sm:$0xf]
  %v719 = vld [vmem:[%s1 + $0x4a8] sm:$0xf]
  %v720 = vld [vmem:[%s1 + $0x4ac] sm:$0xf]
  %v721 = vld [vmem:[%s1 + $0x4b0] sm:$0xf]
  %v722 = vld [vmem:[%s1 + $0x4b4] sm:$0xf]
  %v723 = vld [vmem:[%s1 + $0x4b8] sm:$0xf]
  %v724 = vld [vmem:[%s1 + $0x4bc] sm:$0xf]
  %v725 = vld [vmem:[%s1 + $0x4c0] sm:$0xf]
  %v726 = vld [vmem:[%s1 + $0x4c4] sm:$0xf]
  %v727 = vld [vmem:[%s1 + $0x4c8] sm:$0xf]
  %v728 = vld [vmem:[%s1 + $0x4cc] sm:$0xf]
  %v729 = vld [vmem:[%s1 + $0x4d0] sm:$0xf]
  %v730 = vld [vmem:[%s1 + $0x4d4] sm:$0xf]
  %v731 = vld [vmem:[%s1 + $0x4d8] sm:$0xf]
  %v732 = vld [vmem:[%s1 + $0x4dc] sm:$0xf]
  %v733 = vld [vmem:[%s1 + $0x4e0] sm:$0xf]
  %v734 = vld [vmem:[%s1 + $0x4e4] sm:$0xf]
  %v735 = vld [vmem:[%s1 + $0x4e8] sm:$0xf]
  %v736 = vld [vmem:[%s1 + $0x4ec] sm:$0xf]
  %v737 = vld [vmem:[%s1 + $0x4f0] sm:$0xf]
  %v738 = vld [vmem:[%s1 + $0x4f4] sm:$0xf]
  %v739 = vld [vmem:[%s1 + $0x4f8] sm:$0xf]
  %v740 = vld [vmem:[%s1 + $0x4fc] sm:$0xf]
  %v741 = vld [vmem:[%s1 + $0x500] sm:$0xf]
  %v742 = vld [vmem:[%s1 + $0x504] sm:$0xf]
  %v743 = vld [vmem:[%s1 + $0x508] sm:$0xf]
  %v744 = vld [vmem:[%s1 + $0x50c] sm:$0xf]
  %v745 = vld [vmem:[%s1 + $0x510] sm:$0xf]
  %v746 = vld [vmem:[%s1 + $0x514] sm:$0xf]
  %v747 = vld [vmem:[%s1 + $0x518] sm:$0xf]
  %v748 = vld [vmem:[%s1 + $0x51c] sm:$0xf]
  %v749 = vld [vmem:[%s1 + $0x520] sm:$0xf]
  %v750 = vld [vmem:[%s1 + $0x524] sm:$0xf]
  %v751 = vld [vmem:[%s1 + $0x528] sm:$0xf]
  %v752 = vld [vmem:[%s1 + $0x52c] sm:$0xf]
  %v753 = vld [vmem:[%s1 + $0x530] sm:$0xf]
  %v754 = vld [vmem:[%s1 + $0x534] sm:$0xf]
  %v755 = vld [vmem:[%s1 + $0x538] sm:$0xf]
  %v756 = vld [vmem:[%s1 + $0x53c] sm:$0xf]
  %v757 = vld [vmem:[%s1 + $0x540] sm:$0xf]
  %v758 = vld [vmem:[%s1 + $0x544] sm:$0xf]
  %v759 = vld [vmem:[%s1 + $0x548] sm:$0xf]
  %v760 = vld [vmem:[%s1 + $0x54c] sm:$0xf]
  %v761 = vld [vmem:[%s1 + $0x550] sm:$0xf]
  %v762 = vld [vmem:[%s1 + $0x554] sm:$0xf]
  %v763 = vld [vmem:[%s1 + $0x558] sm:$0xf]
  %v764 = vld [vmem:[%s1 + $0x55c] sm:$0xf]
  %v765 = vld [vmem:[%s1 + $0x560] sm:$0xf]
  %v766 = vld [vmem:[%s1 + $0x564] sm:$0xf]
  %v767 = vld [vmem:[%s1 + $0x568] sm:$0xf]
  %v768 = vld [vmem:[%s1 + $0x56c] sm:$0xf]
  %v769 = vld [vmem:[%s1 + $0x570] sm:$0xf]
  %v770 = vld [vmem:[%s1 + $0x574] sm:$0xf]
  %v771 = vld [vmem:[%s1 + $0x578] sm:$0xf]
  %v772 = vld [vmem:[%s1 + $0x57c] sm:$0xf]
  %v773 = vld [vmem:[%s1 + $0x580] sm:$0xf]
  %v774 = vld [vmem:[%s1 + $0x584] sm:$0xf]
  %v775 = vld [vmem:[%s1 + $0x588] sm:$0xf]
  %v776 = vld [vmem:[%s1 + $0x58c] sm:$0xf]
  %v777 = vld [vmem:[%s1 + $0x590] sm:$0xf]
  %v778 = vld [vmem:[%s1 + $0x594] sm:$0xf]
  %v779 = vld [vmem:[%s1 + $0x598] sm:$0xf]
  %v780 = vld [vmem:[%s1 + $0x59c] sm:$0xf]
  %v781 = vld [vmem:[%s1 + $0x5a0] sm:$0xf]
  %v782 = vld [vmem:[%s1 + $0x5a4] sm:$0xf]
  %v783 = vld [vmem:[%s1 + $0x5a8] sm:$0xf]
  %v784 = vld [vmem:[%s1 + $0x5ac] sm:$0xf]
  %v785 = vld [vmem:[%s1 + $0x5b0] sm:$0xf]
  %v786 = vld [vmem:[%s1 + $0x5b4] sm:$0xf]
  %v787 = vld [vmem:[%s1 + $0x5b8] sm:$0xf]
  %v788 = vld [vmem:[%s1 + $0x5bc] sm:$0xf]
  %v789 = vld [vmem:[%s1 + $0x5c0] sm:$0xf]
  %v790 = vld [vmem:[%s1 + $0x5c4] sm:$0xf]
  %v791 = vld [vmem:[%s1 + $0x5c8] sm:$0xf]
  %v792 = vld [vmem:[%s1 + $0x5cc] sm:$0xf]
  %v793 = vld [vmem:[%s1 + $0x5d0] sm:$0xf]
  %v794 = vld [vmem:[%s1 + $0x5d4] sm:$0xf]
  %v795 = vld [vmem:[%s1 + $0x5d8] sm:$0xf]
  %v796 = vld [vmem:[%s1 + $0x5dc] sm:$0xf]
  %v797 = vld [vmem:[%s1 + $0x5e0] sm:$0xf]
  %v798 = vld [vmem:[%s1 + $0x5e4] sm:$0xf]
  %v799 = vld [vmem:[%s1 + $0x5e8] sm:$0xf]
  %v800 = vld [vmem:[%s1 + $0x5ec] sm:$0xf]
  %v801 = vld [vmem:[%s1 + $0x5f0] sm:$0xf]
  %v802 = vld [vmem:[%s1 + $0x5f4] sm:$0xf]
  %v803 = vld [vmem:[%s1 + $0x5f8] sm:$0xf]
  %v804 = vld [vmem:[%s1 + $0x5fc] sm:$0xf]
  %v805 = vld [vmem:[%s1 + $0x600] sm:$0xf]
  %v806 = vld [vmem:[%s1 + $0x604] sm:$0xf]
  %v807 = vld [vmem:[%s1 + $0x608] sm:$0xf]
  %v808 = vld [vmem:[%s1 + $0x60c] sm:$0xf]
  %v809 = vld [vmem:[%s1 + $0x610] sm:$0xf]
  %v810 = vld [vmem:[%s1 + $0x614] sm:$0xf]
  %v811 = vld [vmem:[%s1 + $0x618] sm:$0xf]
  %v812 = vld [vmem:[%s1 + $0x61c] sm:$0xf]
  %v813 = vld [vmem:[%s1 + $0x620] sm:$0xf]
  %v814 = vld [vmem:[%s1 + $0x624] sm:$0xf]
  %v815 = vld [vmem:[%s1 + $0x628] sm:$0xf]
  %v816 = vld [vmem:[%s1 + $0x62c] sm:$0xf]
  %v817 = vld [vmem:[%s1 + $0x630] sm:$0xf]
  %v818 = vld [vmem:[%s1 + $0x634] sm:$0xf]
  %v819 = vld [vmem:[%s1 + $0x638] sm:$0xf]
  %v820 = vld [vmem:[%s1 + $0x63c] sm:$0xf]
  %v821 = vld [vmem:[%s2] sm:$0x1]
  %v823 = vlaneseq
  %v824 = vshrl.u32 %v823, 7
  %v825 = vsub.s32 0, %v824
  %v826 = vrot.slane %v821, %v825
  %v1231 = vunpack.c.l.b16 %v18
  %v1232 = vunpack.c.h.b16 %v18
  %v1233 = vunpack.c.l.b16 %v19
  %v1234 = vunpack.c.h.b16 %v19
  %v1235 = vunpack.c.l.b16 %v20
  %v1236 = vunpack.c.h.b16 %v20
  %v1237 = vunpack.c.l.b16 %v21
  %v1238 = vunpack.c.h.b16 %v21
  %v1239 = vunpack.c.l.b16 %v22
  %v1240 = vunpack.c.h.b16 %v22
  %v1241 = vunpack.c.l.b16 %v23
  %v1242 = vunpack.c.h.b16 %v23
  %v1243 = vunpack.c.l.b16 %v24
  %v1244 = vunpack.c.h.b16 %v24
  %v1245 = vunpack.c.l.b16 %v25
  %v1246 = vunpack.c.h.b16 %v25
  %v1247 = vunpack.c.l.b16 %v26
  %v1248 = vunpack.c.h.b16 %v26
  %v1249 = vunpack.c.l.b16 %v27
  %v1250 = vunpack.c.h.b16 %v27
  %v1251 = vunpack.c.l.b16 %v28
  %v1252 = vunpack.c.h.b16 %v28
  %v1253 = vunpack.c.l.b16 %v29
  %v1254 = vunpack.c.h.b16 %v29
  %v1255 = vunpack.c.l.b16 %v30
  %v1256 = vunpack.c.l.b16 %v31
  %v1257 = vunpack.c.h.b16 %v31
  %v1258 = vunpack.c.l.b16 %v32
  %v1259 = vunpack.c.h.b16 %v32
  %v1260 = vunpack.c.l.b16 %v33
  %v1261 = vunpack.c.h.b16 %v33
  %v1262 = vunpack.c.l.b16 %v34
  %v1263 = vunpack.c.h.b16 %v34
  %v1264 = vunpack.c.l.b16 %v35
  %v1265 = vunpack.c.h.b16 %v35
  %v1266 = vunpack.c.l.b16 %v36
  %v1267 = vunpack.c.h.b16 %v36
  %v1268 = vunpack.c.l.b16 %v37
  %v1269 = vunpack.c.h.b16 %v37
  %v1270 = vunpack.c.l.b16 %v38
  %v1271 = vunpack.c.h.b16 %v38
  %v1272 = vunpack.c.l.b16 %v39
  %v1273 = vunpack.c.h.b16 %v39
  %v1274 = vunpack.c.l.b16 %v40
  %v1275 = vunpack.c.h.b16 %v40
  %v1276 = vunpack.c.l.b16 %v41
  %v1277 = vunpack.c.h.b16 %v41
  %v1278 = vunpack.c.l.b16 %v42
  %v1279 = vunpack.c.h.b16 %v42
  %v1280 = vunpack.c.l.b16 %v43
  %v1281 = vunpack.c.l.b16 %v44
  %v1282 = vunpack.c.h.b16 %v44
  %v1283 = vunpack.c.l.b16 %v45
  %v1284 = vunpack.c.h.b16 %v45
  %v1285 = vunpack.c.l.b16 %v46
  %v1286 = vunpack.c.h.b16 %v46
  %v1287 = vunpack.c.l.b16 %v47
  %v1288 = vunpack.c.h.b16 %v47
  %v1289 = vunpack.c.l.b16 %v48
  %v1290 = vunpack.c.h.b16 %v48
  %v1291 = vunpack.c.l.b16 %v49
  %v1292 = vunpack.c.h.b16 %v49
  %v1293 = vunpack.c.l.b16 %v50
  %v1294 = vunpack.c.h.b16 %v50
  %v1295 = vunpack.c.l.b16 %v51
  %v1296 = vunpack.c.h.b16 %v51
  %v1297 = vunpack.c.l.b16 %v52
  %v1298 = vunpack.c.h.b16 %v52
  %v1299 = vunpack.c.l.b16 %v53
  %v1300 = vunpack.c.h.b16 %v53
  %v1301 = vunpack.c.l.b16 %v54
  %v1302 = vunpack.c.h.b16 %v54
  %v1303 = vunpack.c.l.b16 %v55
  %v1304 = vunpack.c.h.b16 %v55
  %v1305 = vunpack.c.l.b16 %v56
  %v1306 = vunpack.c.l.b16 %v57
  %v1307 = vunpack.c.h.b16 %v57
  %v1308 = vunpack.c.l.b16 %v58
  %v1309 = vunpack.c.h.b16 %v58
  %v1310 = vunpack.c.l.b16 %v59
  %v1311 = vunpack.c.h.b16 %v59
  %v1312 = vunpack.c.l.b16 %v60
  %v1313 = vunpack.c.h.b16 %v60
  %v1314 = vunpack.c.l.b16 %v61
  %v1315 = vunpack.c.h.b16 %v61
  %v1316 = vunpack.c.l.b16 %v62
  %v1317 = vunpack.c.h.b16 %v62
  %v1318 = vunpack.c.l.b16 %v63
  %v1319 = vunpack.c.h.b16 %v63
  %v1320 = vunpack.c.l.b16 %v64
  %v1321 = vunpack.c.h.b16 %v64
  %v1322 = vunpack.c.l.b16 %v65
  %v1323 = vunpack.c.h.b16 %v65
  %v1324 = vunpack.c.l.b16 %v66
  %v1325 = vunpack.c.h.b16 %v66
  %v1326 = vunpack.c.l.b16 %v67
  %v1327 = vunpack.c.h.b16 %v67
  %v1328 = vunpack.c.l.b16 %v68
  %v1329 = vunpack.c.h.b16 %v68
  %v1330 = vunpack.c.l.b16 %v69
  %v1331 = vunpack.c.l.b16 %v70
  %v1332 = vunpack.c.h.b16 %v70
  %v1333 = vunpack.c.l.b16 %v71
  %v1334 = vunpack.c.h.b16 %v71
  %v1335 = vunpack.c.l.b16 %v72
  %v1336 = vunpack.c.h.b16 %v72
  %v1337 = vunpack.c.l.b16 %v73
  %v1338 = vunpack.c.h.b16 %v73
  %v1339 = vunpack.c.l.b16 %v74
  %v1340 = vunpack.c.h.b16 %v74
  %v1341 = vunpack.c.l.b16 %v75
  %v1342 = vunpack.c.h.b16 %v75
  %v1343 = vunpack.c.l.b16 %v76
  %v1344 = vunpack.c.h.b16 %v76
  %v1345 = vunpack.c.l.b16 %v77
  %v1346 = vunpack.c.h.b16 %v77
  %v1347 = vunpack.c.l.b16 %v78
  %v1348 = vunpack.c.h.b16 %v78
  %v1349 = vunpack.c.l.b16 %v79
  %v1350 = vunpack.c.h.b16 %v79
  %v1351 = vunpack.c.l.b16 %v80
  %v1352 = vunpack.c.h.b16 %v80
  %v1353 = vunpack.c.l.b16 %v81
  %v1354 = vunpack.c.h.b16 %v81
  %v1355 = vunpack.c.l.b16 %v82
  %v1356 = vunpack.c.l.b16 %v83
  %v1357 = vunpack.c.h.b16 %v83
  %v1358 = vunpack.c.l.b16 %v84
  %v1359 = vunpack.c.h.b16 %v84
  %v1360 = vunpack.c.l.b16 %v85
  %v1361 = vunpack.c.h.b16 %v85
  %v1362 = vunpack.c.l.b16 %v86
  %v1363 = vunpack.c.h.b16 %v86
  %v1364 = vunpack.c.l.b16 %v87
  %v1365 = vunpack.c.h.b16 %v87
  %v1366 = vunpack.c.l.b16 %v88
  %v1367 = vunpack.c.h.b16 %v88
  %v1368 = vunpack.c.l.b16 %v89
  %v1369 = vunpack.c.h.b16 %v89
  %v1370 = vunpack.c.l.b16 %v90
  %v1371 = vunpack.c.h.b16 %v90
  %v1372 = vunpack.c.l.b16 %v91
  %v1373 = vunpack.c.h.b16 %v91
  %v1374 = vunpack.c.l.b16 %v92
  %v1375 = vunpack.c.h.b16 %v92
  %v1376 = vunpack.c.l.b16 %v93
  %v1377 = vunpack.c.h.b16 %v93
  %v1378 = vunpack.c.l.b16 %v94
  %v1379 = vunpack.c.h.b16 %v94
  %v1380 = vunpack.c.l.b16 %v95
  %v1381 = vunpack.c.l.b16 %v96
  %v1382 = vunpack.c.h.b16 %v96
  %v1383 = vunpack.c.l.b16 %v97
  %v1384 = vunpack.c.h.b16 %v97
  %v1385 = vunpack.c.l.b16 %v98
  %v1386 = vunpack.c.h.b16 %v98
  %v1387 = vunpack.c.l.b16 %v99
  %v1388 = vunpack.c.h.b16 %v99
  %v1389 = vunpack.c.l.b16 %v100
  %v1390 = vunpack.c.h.b16 %v100
  %v1391 = vunpack.c.l.b16 %v101
  %v1392 = vunpack.c.h.b16 %v101
  %v1393 = vunpack.c.l.b16 %v102
  %v1394 = vunpack.c.h.b16 %v102
  %v1395 = vunpack.c.l.b16 %v103
  %v1396 = vunpack.c.h.b16 %v103
  %v1397 = vunpack.c.l.b16 %v104
  %v1398 = vunpack.c.h.b16 %v104
  %v1399 = vunpack.c.l.b16 %v105
  %v1400 = vunpack.c.h.b16 %v105
  %v1401 = vunpack.c.l.b16 %v106
  %v1402 = vunpack.c.h.b16 %v106
  %v1403 = vunpack.c.l.b16 %v107
  %v1404 = vunpack.c.h.b16 %v107
  %v1405 = vunpack.c.l.b16 %v108
  %v1406 = vunpack.c.l.b16 %v109
  %v1407 = vunpack.c.h.b16 %v109
  %v1408 = vunpack.c.l.b16 %v110
  %v1409 = vunpack.c.h.b16 %v110
  %v1410 = vunpack.c.l.b16 %v111
  %v1411 = vunpack.c.h.b16 %v111
  %v1412 = vunpack.c.l.b16 %v112
  %v1413 = vunpack.c.h.b16 %v112
  %v1414 = vunpack.c.l.b16 %v113
  %v1415 = vunpack.c.h.b16 %v113
  %v1416 = vunpack.c.l.b16 %v114
  %v1417 = vunpack.c.h.b16 %v114
  %v1418 = vunpack.c.l.b16 %v115
  %v1419 = vunpack.c.h.b16 %v115
  %v1420 = vunpack.c.l.b16 %v116
  %v1421 = vunpack.c.h.b16 %v116
  %v1422 = vunpack.c.l.b16 %v117
  %v1423 = vunpack.c.h.b16 %v117
  %v1424 = vunpack.c.l.b16 %v118
  %v1425 = vunpack.c.h.b16 %v118
  %v1426 = vunpack.c.l.b16 %v119
  %v1427 = vunpack.c.h.b16 %v119
  %v1428 = vunpack.c.l.b16 %v120
  %v1429 = vunpack.c.h.b16 %v120
  %v1430 = vunpack.c.l.b16 %v121
  %v1431 = vunpack.c.l.b16 %v122
  %v1432 = vunpack.c.h.b16 %v122
  %v1433 = vunpack.c.l.b16 %v123
  %v1434 = vunpack.c.h.b16 %v123
  %v1435 = vunpack.c.l.b16 %v124
  %v1436 = vunpack.c.h.b16 %v124
  %v1437 = vunpack.c.l.b16 %v125
  %v1438 = vunpack.c.h.b16 %v125
  %v1439 = vunpack.c.l.b16 %v126
  %v1440 = vunpack.c.h.b16 %v126
  %v1441 = vunpack.c.l.b16 %v127
  %v1442 = vunpack.c.h.b16 %v127
  %v1443 = vunpack.c.l.b16 %v128
  %v1444 = vunpack.c.h.b16 %v128
  %v1445 = vunpack.c.l.b16 %v129
  %v1446 = vunpack.c.h.b16 %v129
  %v1447 = vunpack.c.l.b16 %v130
  %v1448 = vunpack.c.h.b16 %v130
  %v1449 = vunpack.c.l.b16 %v131
  %v1450 = vunpack.c.h.b16 %v131
  %v1451 = vunpack.c.l.b16 %v132
  %v1452 = vunpack.c.h.b16 %v132
  %v1453 = vunpack.c.l.b16 %v133
  %v1454 = vunpack.c.h.b16 %v133
  %v1455 = vunpack.c.l.b16 %v134
  %v1456 = vunpack.c.l.b16 %v135
  %v1457 = vunpack.c.h.b16 %v135
  %v1458 = vunpack.c.l.b16 %v136
  %v1459 = vunpack.c.h.b16 %v136
  %v1460 = vunpack.c.l.b16 %v137
  %v1461 = vunpack.c.h.b16 %v137
  %v1462 = vunpack.c.l.b16 %v138
  %v1463 = vunpack.c.h.b16 %v138
  %v1464 = vunpack.c.l.b16 %v139
  %v1465 = vunpack.c.h.b16 %v139
  %v1466 = vunpack.c.l.b16 %v140
  %v1467 = vunpack.c.h.b16 %v140
  %v1468 = vunpack.c.l.b16 %v141
  %v1469 = vunpack.c.h.b16 %v141
  %v1470 = vunpack.c.l.b16 %v142
  %v1471 = vunpack.c.h.b16 %v142
  %v1472 = vunpack.c.l.b16 %v143
  %v1473 = vunpack.c.h.b16 %v143
  %v1474 = vunpack.c.l.b16 %v144
  %v1475 = vunpack.c.h.b16 %v144
  %v1476 = vunpack.c.l.b16 %v145
  %v1477 = vunpack.c.h.b16 %v145
  %v1478 = vunpack.c.l.b16 %v146
  %v1479 = vunpack.c.h.b16 %v146
  %v1480 = vunpack.c.l.b16 %v147
  %v1481 = vunpack.c.l.b16 %v148
  %v1482 = vunpack.c.h.b16 %v148
  %v1483 = vunpack.c.l.b16 %v149
  %v1484 = vunpack.c.h.b16 %v149
  %v1485 = vunpack.c.l.b16 %v150
  %v1486 = vunpack.c.h.b16 %v150
  %v1487 = vunpack.c.l.b16 %v151
  %v1488 = vunpack.c.h.b16 %v151
  %v1489 = vunpack.c.l.b16 %v152
  %v1490 = vunpack.c.h.b16 %v152
  %v1491 = vunpack.c.l.b16 %v153
  %v1492 = vunpack.c.h.b16 %v153
  %v1493 = vunpack.c.l.b16 %v154
  %v1494 = vunpack.c.h.b16 %v154
  %v1495 = vunpack.c.l.b16 %v155
  %v1496 = vunpack.c.h.b16 %v155
  %v1497 = vunpack.c.l.b16 %v156
  %v1498 = vunpack.c.h.b16 %v156
  %v1499 = vunpack.c.l.b16 %v157
  %v1500 = vunpack.c.h.b16 %v157
  %v1501 = vunpack.c.l.b16 %v158
  %v1502 = vunpack.c.h.b16 %v158
  %v1503 = vunpack.c.l.b16 %v159
  %v1504 = vunpack.c.h.b16 %v159
  %v1505 = vunpack.c.l.b16 %v160
  %v1506 = vunpack.c.l.b16 %v161
  %v1507 = vunpack.c.h.b16 %v161
  %v1508 = vunpack.c.l.b16 %v162
  %v1509 = vunpack.c.h.b16 %v162
  %v1510 = vunpack.c.l.b16 %v163
  %v1511 = vunpack.c.h.b16 %v163
  %v1512 = vunpack.c.l.b16 %v164
  %v1513 = vunpack.c.h.b16 %v164
  %v1514 = vunpack.c.l.b16 %v165
  %v1515 = vunpack.c.h.b16 %v165
  %v1516 = vunpack.c.l.b16 %v166
  %v1517 = vunpack.c.h.b16 %v166
  %v1518 = vunpack.c.l.b16 %v167
  %v1519 = vunpack.c.h.b16 %v167
  %v1520 = vunpack.c.l.b16 %v168
  %v1521 = vunpack.c.h.b16 %v168
  %v1522 = vunpack.c.l.b16 %v169
  %v1523 = vunpack.c.h.b16 %v169
  %v1524 = vunpack.c.l.b16 %v170
  %v1525 = vunpack.c.h.b16 %v170
  %v1526 = vunpack.c.l.b16 %v171
  %v1527 = vunpack.c.h.b16 %v171
  %v1528 = vunpack.c.l.b16 %v172
  %v1529 = vunpack.c.h.b16 %v172
  %v1530 = vunpack.c.l.b16 %v173
  %v1531 = vunpack.c.l.b16 %v174
  %v1532 = vunpack.c.h.b16 %v174
  %v1533 = vunpack.c.l.b16 %v175
  %v1534 = vunpack.c.h.b16 %v175
  %v1535 = vunpack.c.l.b16 %v176
  %v1536 = vunpack.c.h.b16 %v176
  %v1537 = vunpack.c.l.b16 %v177
  %v1538 = vunpack.c.h.b16 %v177
  %v1539 = vunpack.c.l.b16 %v178
  %v1540 = vunpack.c.h.b16 %v178
  %v1541 = vunpack.c.l.b16 %v179
  %v1542 = vunpack.c.h.b16 %v179
  %v1543 = vunpack.c.l.b16 %v180
  %v1544 = vunpack.c.h.b16 %v180
  %v1545 = vunpack.c.l.b16 %v181
  %v1546 = vunpack.c.h.b16 %v181
  %v1547 = vunpack.c.l.b16 %v182
  %v1548 = vunpack.c.h.b16 %v182
  %v1549 = vunpack.c.l.b16 %v183
  %v1550 = vunpack.c.h.b16 %v183
  %v1551 = vunpack.c.l.b16 %v184
  %v1552 = vunpack.c.h.b16 %v184
  %v1553 = vunpack.c.l.b16 %v185
  %v1554 = vunpack.c.h.b16 %v185
  %v1555 = vunpack.c.l.b16 %v186
  %v1556 = vunpack.c.l.b16 %v187
  %v1557 = vunpack.c.h.b16 %v187
  %v1558 = vunpack.c.l.b16 %v188
  %v1559 = vunpack.c.h.b16 %v188
  %v1560 = vunpack.c.l.b16 %v189
  %v1561 = vunpack.c.h.b16 %v189
  %v1562 = vunpack.c.l.b16 %v190
  %v1563 = vunpack.c.h.b16 %v190
  %v1564 = vunpack.c.l.b16 %v191
  %v1565 = vunpack.c.h.b16 %v191
  %v1566 = vunpack.c.l.b16 %v192
  %v1567 = vunpack.c.h.b16 %v192
  %v1568 = vunpack.c.l.b16 %v193
  %v1569 = vunpack.c.h.b16 %v193
  %v1570 = vunpack.c.l.b16 %v194
  %v1571 = vunpack.c.h.b16 %v194
  %v1572 = vunpack.c.l.b16 %v195
  %v1573 = vunpack.c.h.b16 %v195
  %v1574 = vunpack.c.l.b16 %v196
  %v1575 = vunpack.c.h.b16 %v196
  %v1576 = vunpack.c.l.b16 %v197
  %v1577 = vunpack.c.h.b16 %v197
  %v1578 = vunpack.c.l.b16 %v198
  %v1579 = vunpack.c.h.b16 %v198
  %v1580 = vunpack.c.l.b16 %v199
  %v1581 = vunpack.c.l.b16 %v200
  %v1582 = vunpack.c.h.b16 %v200
  %v1583 = vunpack.c.l.b16 %v201
  %v1584 = vunpack.c.h.b16 %v201
  %v1585 = vunpack.c.l.b16 %v202
  %v1586 = vunpack.c.h.b16 %v202
  %v1587 = vunpack.c.l.b16 %v203
  %v1588 = vunpack.c.h.b16 %v203
  %v1589 = vunpack.c.l.b16 %v204
  %v1590 = vunpack.c.h.b16 %v204
  %v1591 = vunpack.c.l.b16 %v205
  %v1592 = vunpack.c.h.b16 %v205
  %v1593 = vunpack.c.l.b16 %v206
  %v1594 = vunpack.c.h.b16 %v206
  %v1595 = vunpack.c.l.b16 %v207
  %v1596 = vunpack.c.h.b16 %v207
  %v1597 = vunpack.c.l.b16 %v208
  %v1598 = vunpack.c.h.b16 %v208
  %v1599 = vunpack.c.l.b16 %v209
  %v1600 = vunpack.c.h.b16 %v209
  %v1601 = vunpack.c.l.b16 %v210
  %v1602 = vunpack.c.h.b16 %v210
  %v1603 = vunpack.c.l.b16 %v211
  %v1604 = vunpack.c.h.b16 %v211
  %v1605 = vunpack.c.l.b16 %v212
  %v1606 = vunpack.c.l.b16 %v213
  %v1607 = vunpack.c.h.b16 %v213
  %v1608 = vunpack.c.l.b16 %v214
  %v1609 = vunpack.c.h.b16 %v214
  %v1610 = vunpack.c.l.b16 %v215
  %v1611 = vunpack.c.h.b16 %v215
  %v1612 = vunpack.c.l.b16 %v216
  %v1613 = vunpack.c.h.b16 %v216
  %v1614 = vunpack.c.l.b16 %v217
  %v1615 = vunpack.c.h.b16 %v217
  %v1616 = vunpack.c.l.b16 %v218
  %v1617 = vunpack.c.h.b16 %v218
  %v1618 = vunpack.c.l.b16 %v219
  %v1619 = vunpack.c.h.b16 %v219
  %v1620 = vunpack.c.l.b16 %v220
  %v1621 = vunpack.c.h.b16 %v220
  %v1622 = vunpack.c.l.b16 %v221
  %v1623 = vunpack.c.h.b16 %v221
  %v1624 = vunpack.c.l.b16 %v222
  %v1625 = vunpack.c.h.b16 %v222
  %v1626 = vunpack.c.l.b16 %v223
  %v1627 = vunpack.c.h.b16 %v223
  %v1628 = vunpack.c.l.b16 %v224
  %v1629 = vunpack.c.h.b16 %v224
  %v1630 = vunpack.c.l.b16 %v225
  %v1631 = vunpack.c.l.b16 %v226
  %v1632 = vunpack.c.h.b16 %v226
  %v1633 = vunpack.c.l.b16 %v227
  %v1634 = vunpack.c.h.b16 %v227
  %v1635 = vunpack.c.l.b16 %v228
  %v1636 = vunpack.c.h.b16 %v228
  %v1637 = vunpack.c.l.b16 %v229
  %v1638 = vunpack.c.h.b16 %v229
  %v1639 = vunpack.c.l.b16 %v230
  %v1640 = vunpack.c.h.b16 %v230
  %v1641 = vunpack.c.l.b16 %v231
  %v1642 = vunpack.c.h.b16 %v231
  %v1643 = vunpack.c.l.b16 %v232
  %v1644 = vunpack.c.h.b16 %v232
  %v1645 = vunpack.c.l.b16 %v233
  %v1646 = vunpack.c.h.b16 %v233
  %v1647 = vunpack.c.l.b16 %v234
  %v1648 = vunpack.c.h.b16 %v234
  %v1649 = vunpack.c.l.b16 %v235
  %v1650 = vunpack.c.h.b16 %v235
  %v1651 = vunpack.c.l.b16 %v236
  %v1652 = vunpack.c.h.b16 %v236
  %v1653 = vunpack.c.l.b16 %v237
  %v1654 = vunpack.c.h.b16 %v237
  %v1655 = vunpack.c.l.b16 %v238
  %v1656 = vunpack.c.l.b16 %v239
  %v1657 = vunpack.c.h.b16 %v239
  %v1658 = vunpack.c.l.b16 %v240
  %v1659 = vunpack.c.h.b16 %v240
  %v1660 = vunpack.c.l.b16 %v241
  %v1661 = vunpack.c.h.b16 %v241
  %v1662 = vunpack.c.l.b16 %v242
  %v1663 = vunpack.c.h.b16 %v242
  %v1664 = vunpack.c.l.b16 %v243
  %v1665 = vunpack.c.h.b16 %v243
  %v1666 = vunpack.c.l.b16 %v244
  %v1667 = vunpack.c.h.b16 %v244
  %v1668 = vunpack.c.l.b16 %v245
  %v1669 = vunpack.c.h.b16 %v245
  %v1670 = vunpack.c.l.b16 %v246
  %v1671 = vunpack.c.h.b16 %v246
  %v1672 = vunpack.c.l.b16 %v247
  %v1673 = vunpack.c.h.b16 %v247
  %v1674 = vunpack.c.l.b16 %v248
  %v1675 = vunpack.c.h.b16 %v248
  %v1676 = vunpack.c.l.b16 %v249
  %v1677 = vunpack.c.h.b16 %v249
  %v1678 = vunpack.c.l.b16 %v250
  %v1679 = vunpack.c.h.b16 %v250
  %v1680 = vunpack.c.l.b16 %v251
  %v1681 = vunpack.c.l.b16 %v252
  %v1682 = vunpack.c.h.b16 %v252
  %v1683 = vunpack.c.l.b16 %v253
  %v1684 = vunpack.c.h.b16 %v253
  %v1685 = vunpack.c.l.b16 %v254
  %v1686 = vunpack.c.h.b16 %v254
  %v1687 = vunpack.c.l.b16 %v255
  %v1688 = vunpack.c.h.b16 %v255
  %v1689 = vunpack.c.l.b16 %v256
  %v1690 = vunpack.c.h.b16 %v256
  %v1691 = vunpack.c.l.b16 %v257
  %v1692 = vunpack.c.h.b16 %v257
  %v1693 = vunpack.c.l.b16 %v258
  %v1694 = vunpack.c.h.b16 %v258
  %v1695 = vunpack.c.l.b16 %v259
  %v1696 = vunpack.c.h.b16 %v259
  %v1697 = vunpack.c.l.b16 %v260
  %v1698 = vunpack.c.h.b16 %v260
  %v1699 = vunpack.c.l.b16 %v261
  %v1700 = vunpack.c.h.b16 %v261
  %v1701 = vunpack.c.l.b16 %v262
  %v1702 = vunpack.c.h.b16 %v262
  %v1703 = vunpack.c.l.b16 %v263
  %v1704 = vunpack.c.h.b16 %v263
  %v1705 = vunpack.c.l.b16 %v264
  %v1706 = vunpack.c.l.b16 %v265
  %v1707 = vunpack.c.h.b16 %v265
  %v1708 = vunpack.c.l.b16 %v266
  %v1709 = vunpack.c.h.b16 %v266
  %v1710 = vunpack.c.l.b16 %v267
  %v1711 = vunpack.c.h.b16 %v267
  %v1712 = vunpack.c.l.b16 %v268
  %v1713 = vunpack.c.h.b16 %v268
  %v1714 = vunpack.c.l.b16 %v269
  %v1715 = vunpack.c.h.b16 %v269
  %v1716 = vunpack.c.l.b16 %v270
  %v1717 = vunpack.c.h.b16 %v270
  %v1718 = vunpack.c.l.b16 %v271
  %v1719 = vunpack.c.h.b16 %v271
  %v1720 = vunpack.c.l.b16 %v272
  %v1721 = vunpack.c.h.b16 %v272
  %v1722 = vunpack.c.l.b16 %v273
  %v1723 = vunpack.c.h.b16 %v273
  %v1724 = vunpack.c.l.b16 %v274
  %v1725 = vunpack.c.h.b16 %v274
  %v1726 = vunpack.c.l.b16 %v275
  %v1727 = vunpack.c.h.b16 %v275
  %v1728 = vunpack.c.l.b16 %v276
  %v1729 = vunpack.c.h.b16 %v276
  %v1730 = vunpack.c.l.b16 %v277
  %v1731 = vunpack.c.l.b16 %v278
  %v1732 = vunpack.c.h.b16 %v278
  %v1733 = vunpack.c.l.b16 %v279
  %v1734 = vunpack.c.h.b16 %v279
  %v1735 = vunpack.c.l.b16 %v280
  %v1736 = vunpack.c.h.b16 %v280
  %v1737 = vunpack.c.l.b16 %v281
  %v1738 = vunpack.c.h.b16 %v281
  %v1739 = vunpack.c.l.b16 %v282
  %v1740 = vunpack.c.h.b16 %v282
  %v1741 = vunpack.c.l.b16 %v283
  %v1742 = vunpack.c.h.b16 %v283
  %v1743 = vunpack.c.l.b16 %v284
  %v1744 = vunpack.c.h.b16 %v284
  %v1745 = vunpack.c.l.b16 %v285
  %v1746 = vunpack.c.h.b16 %v285
  %v1747 = vunpack.c.l.b16 %v286
  %v1748 = vunpack.c.h.b16 %v286
  %v1749 = vunpack.c.l.b16 %v287
  %v1750 = vunpack.c.h.b16 %v287
  %v1751 = vunpack.c.l.b16 %v288
  %v1752 = vunpack.c.h.b16 %v288
  %v1753 = vunpack.c.l.b16 %v289
  %v1754 = vunpack.c.h.b16 %v289
  %v1755 = vunpack.c.l.b16 %v290
  %v1756 = vunpack.c.l.b16 %v291
  %v1757 = vunpack.c.h.b16 %v291
  %v1758 = vunpack.c.l.b16 %v292
  %v1759 = vunpack.c.h.b16 %v292
  %v1760 = vunpack.c.l.b16 %v293
  %v1761 = vunpack.c.h.b16 %v293
  %v1762 = vunpack.c.l.b16 %v294
  %v1763 = vunpack.c.h.b16 %v294
  %v1764 = vunpack.c.l.b16 %v295
  %v1765 = vunpack.c.h.b16 %v295
  %v1766 = vunpack.c.l.b16 %v296
  %v1767 = vunpack.c.h.b16 %v296
  %v1768 = vunpack.c.l.b16 %v297
  %v1769 = vunpack.c.h.b16 %v297
  %v1770 = vunpack.c.l.b16 %v298
  %v1771 = vunpack.c.h.b16 %v298
  %v1772 = vunpack.c.l.b16 %v299
  %v1773 = vunpack.c.h.b16 %v299
  %v1774 = vunpack.c.l.b16 %v300
  %v1775 = vunpack.c.h.b16 %v300
  %v1776 = vunpack.c.l.b16 %v301
  %v1777 = vunpack.c.h.b16 %v301
  %v1778 = vunpack.c.l.b16 %v302
  %v1779 = vunpack.c.h.b16 %v302
  %v1780 = vunpack.c.l.b16 %v303
  %v1781 = vunpack.c.l.b16 %v304
  %v1782 = vunpack.c.h.b16 %v304
  %v1783 = vunpack.c.l.b16 %v305
  %v1784 = vunpack.c.h.b16 %v305
  %v1785 = vunpack.c.l.b16 %v306
  %v1786 = vunpack.c.h.b16 %v306
  %v1787 = vunpack.c.l.b16 %v307
  %v1788 = vunpack.c.h.b16 %v307
  %v1789 = vunpack.c.l.b16 %v308
  %v1790 = vunpack.c.h.b16 %v308
  %v1791 = vunpack.c.l.b16 %v309
  %v1792 = vunpack.c.h.b16 %v309
  %v1793 = vunpack.c.l.b16 %v310
  %v1794 = vunpack.c.h.b16 %v310
  %v1795 = vunpack.c.l.b16 %v311
  %v1796 = vunpack.c.h.b16 %v311
  %v1797 = vunpack.c.l.b16 %v312
  %v1798 = vunpack.c.h.b16 %v312
  %v1799 = vunpack.c.l.b16 %v313
  %v1800 = vunpack.c.h.b16 %v313
  %v1801 = vunpack.c.l.b16 %v314
  %v1802 = vunpack.c.h.b16 %v314
  %v1803 = vunpack.c.l.b16 %v315
  %v1804 = vunpack.c.h.b16 %v315
  %v1805 = vunpack.c.l.b16 %v316
  %v1806 = vunpack.c.l.b16 %v317
  %v1807 = vunpack.c.h.b16 %v317
  %v1808 = vunpack.c.l.b16 %v318
  %v1809 = vunpack.c.h.b16 %v318
  %v1810 = vunpack.c.l.b16 %v319
  %v1811 = vunpack.c.h.b16 %v319
  %v1812 = vunpack.c.l.b16 %v320
  %v1813 = vunpack.c.h.b16 %v320
  %v1814 = vunpack.c.l.b16 %v321
  %v1815 = vunpack.c.h.b16 %v321
  %v1816 = vunpack.c.l.b16 %v322
  %v1817 = vunpack.c.h.b16 %v322
  %v1818 = vunpack.c.l.b16 %v323
  %v1819 = vunpack.c.h.b16 %v323
  %v1820 = vunpack.c.l.b16 %v324
  %v1821 = vunpack.c.h.b16 %v324
  %v1822 = vunpack.c.l.b16 %v325
  %v1823 = vunpack.c.h.b16 %v325
  %v1824 = vunpack.c.l.b16 %v326
  %v1825 = vunpack.c.h.b16 %v326
  %v1826 = vunpack.c.l.b16 %v327
  %v1827 = vunpack.c.h.b16 %v327
  %v1828 = vunpack.c.l.b16 %v328
  %v1829 = vunpack.c.h.b16 %v328
  %v1830 = vunpack.c.l.b16 %v329
  %v1831 = vunpack.c.l.b16 %v330
  %v1832 = vunpack.c.h.b16 %v330
  %v1833 = vunpack.c.l.b16 %v331
  %v1834 = vunpack.c.h.b16 %v331
  %v1835 = vunpack.c.l.b16 %v332
  %v1836 = vunpack.c.h.b16 %v332
  %v1837 = vunpack.c.l.b16 %v333
  %v1838 = vunpack.c.h.b16 %v333
  %v1839 = vunpack.c.l.b16 %v334
  %v1840 = vunpack.c.h.b16 %v334
  %v1841 = vunpack.c.l.b16 %v335
  %v1842 = vunpack.c.h.b16 %v335
  %v1843 = vunpack.c.l.b16 %v336
  %v1844 = vunpack.c.h.b16 %v336
  %v1845 = vunpack.c.l.b16 %v337
  %v1846 = vunpack.c.h.b16 %v337
  %v1847 = vunpack.c.l.b16 %v338
  %v1848 = vunpack.c.h.b16 %v338
  %v1849 = vunpack.c.l.b16 %v339
  %v1850 = vunpack.c.h.b16 %v339
  %v1851 = vunpack.c.l.b16 %v340
  %v1852 = vunpack.c.h.b16 %v340
  %v1853 = vunpack.c.l.b16 %v341
  %v1854 = vunpack.c.h.b16 %v341
  %v1855 = vunpack.c.l.b16 %v342
  %v1856 = vunpack.c.l.b16 %v343
  %v1857 = vunpack.c.h.b16 %v343
  %v1858 = vunpack.c.l.b16 %v344
  %v1859 = vunpack.c.h.b16 %v344
  %v1860 = vunpack.c.l.b16 %v345
  %v1861 = vunpack.c.h.b16 %v345
  %v1862 = vunpack.c.l.b16 %v346
  %v1863 = vunpack.c.h.b16 %v346
  %v1864 = vunpack.c.l.b16 %v347
  %v1865 = vunpack.c.h.b16 %v347
  %v1866 = vunpack.c.l.b16 %v348
  %v1867 = vunpack.c.h.b16 %v348
  %v1868 = vunpack.c.l.b16 %v349
  %v1869 = vunpack.c.h.b16 %v349
  %v1870 = vunpack.c.l.b16 %v350
  %v1871 = vunpack.c.h.b16 %v350
  %v1872 = vunpack.c.l.b16 %v351
  %v1873 = vunpack.c.h.b16 %v351
  %v1874 = vunpack.c.l.b16 %v352
  %v1875 = vunpack.c.h.b16 %v352
  %v1876 = vunpack.c.l.b16 %v353
  %v1877 = vunpack.c.h.b16 %v353
  %v1878 = vunpack.c.l.b16 %v354
  %v1879 = vunpack.c.h.b16 %v354
  %v1880 = vunpack.c.l.b16 %v355
  %v1881 = vunpack.c.l.b16 %v356
  %v1882 = vunpack.c.h.b16 %v356
  %v1883 = vunpack.c.l.b16 %v357
  %v1884 = vunpack.c.h.b16 %v357
  %v1885 = vunpack.c.l.b16 %v358
  %v1886 = vunpack.c.h.b16 %v358
  %v1887 = vunpack.c.l.b16 %v359
  %v1888 = vunpack.c.h.b16 %v359
  %v1889 = vunpack.c.l.b16 %v360
  %v1890 = vunpack.c.h.b16 %v360
  %v1891 = vunpack.c.l.b16 %v361
  %v1892 = vunpack.c.h.b16 %v361
  %v1893 = vunpack.c.l.b16 %v362
  %v1894 = vunpack.c.h.b16 %v362
  %v1895 = vunpack.c.l.b16 %v363
  %v1896 = vunpack.c.h.b16 %v363
  %v1897 = vunpack.c.l.b16 %v364
  %v1898 = vunpack.c.h.b16 %v364
  %v1899 = vunpack.c.l.b16 %v365
  %v1900 = vunpack.c.h.b16 %v365
  %v1901 = vunpack.c.l.b16 %v366
  %v1902 = vunpack.c.h.b16 %v366
  %v1903 = vunpack.c.l.b16 %v367
  %v1904 = vunpack.c.h.b16 %v367
  %v1905 = vunpack.c.l.b16 %v368
  %v1906 = vunpack.c.l.b16 %v369
  %v1907 = vunpack.c.h.b16 %v369
  %v1908 = vunpack.c.l.b16 %v370
  %v1909 = vunpack.c.h.b16 %v370
  %v1910 = vunpack.c.l.b16 %v371
  %v1911 = vunpack.c.h.b16 %v371
  %v1912 = vunpack.c.l.b16 %v372
  %v1913 = vunpack.c.h.b16 %v372
  %v1914 = vunpack.c.l.b16 %v373
  %v1915 = vunpack.c.h.b16 %v373
  %v1916 = vunpack.c.l.b16 %v374
  %v1917 = vunpack.c.h.b16 %v374
  %v1918 = vunpack.c.l.b16 %v375
  %v1919 = vunpack.c.h.b16 %v375
  %v1920 = vunpack.c.l.b16 %v376
  %v1921 = vunpack.c.h.b16 %v376
  %v1922 = vunpack.c.l.b16 %v377
  %v1923 = vunpack.c.h.b16 %v377
  %v1924 = vunpack.c.l.b16 %v378
  %v1925 = vunpack.c.h.b16 %v378
  %v1926 = vunpack.c.l.b16 %v379
  %v1927 = vunpack.c.h.b16 %v379
  %v1928 = vunpack.c.l.b16 %v380
  %v1929 = vunpack.c.h.b16 %v380
  %v1930 = vunpack.c.l.b16 %v381
  %v1931 = vunpack.c.l.b16 %v382
  %v1932 = vunpack.c.h.b16 %v382
  %v1933 = vunpack.c.l.b16 %v383
  %v1934 = vunpack.c.h.b16 %v383
  %v1935 = vunpack.c.l.b16 %v384
  %v1936 = vunpack.c.h.b16 %v384
  %v1937 = vunpack.c.l.b16 %v385
  %v1938 = vunpack.c.h.b16 %v385
  %v1939 = vunpack.c.l.b16 %v386
  %v1940 = vunpack.c.h.b16 %v386
  %v1941 = vunpack.c.l.b16 %v387
  %v1942 = vunpack.c.h.b16 %v387
  %v1943 = vunpack.c.l.b16 %v388
  %v1944 = vunpack.c.h.b16 %v388
  %v1945 = vunpack.c.l.b16 %v389
  %v1946 = vunpack.c.h.b16 %v389
  %v1947 = vunpack.c.l.b16 %v390
  %v1948 = vunpack.c.h.b16 %v390
  %v1949 = vunpack.c.l.b16 %v391
  %v1950 = vunpack.c.h.b16 %v391
  %v1951 = vunpack.c.l.b16 %v392
  %v1952 = vunpack.c.h.b16 %v392
  %v1953 = vunpack.c.l.b16 %v393
  %v1954 = vunpack.c.h.b16 %v393
  %v1955 = vunpack.c.l.b16 %v394
  %v1956 = vunpack.c.l.b16 %v395
  %v1957 = vunpack.c.h.b16 %v395
  %v1958 = vunpack.c.l.b16 %v396
  %v1959 = vunpack.c.h.b16 %v396
  %v1960 = vunpack.c.l.b16 %v397
  %v1961 = vunpack.c.h.b16 %v397
  %v1962 = vunpack.c.l.b16 %v398
  %v1963 = vunpack.c.h.b16 %v398
  %v1964 = vunpack.c.l.b16 %v399
  %v1965 = vunpack.c.h.b16 %v399
  %v1966 = vunpack.c.l.b16 %v400
  %v1967 = vunpack.c.h.b16 %v400
  %v1968 = vunpack.c.l.b16 %v401
  %v1969 = vunpack.c.h.b16 %v401
  %v1970 = vunpack.c.l.b16 %v402
  %v1971 = vunpack.c.h.b16 %v402
  %v1972 = vunpack.c.l.b16 %v403
  %v1973 = vunpack.c.h.b16 %v403
  %v1974 = vunpack.c.l.b16 %v404
  %v1975 = vunpack.c.h.b16 %v404
  %v1976 = vunpack.c.l.b16 %v405
  %v1977 = vunpack.c.h.b16 %v405
  %v1978 = vunpack.c.l.b16 %v406
  %v1979 = vunpack.c.h.b16 %v406
  %v1980 = vunpack.c.l.b16 %v407
  %v1981 = vunpack.c.l.b16 %v408
  %v1982 = vunpack.c.h.b16 %v408
  %v1983 = vunpack.c.l.b16 %v409
  %v1984 = vunpack.c.h.b16 %v409
  %v1985 = vunpack.c.l.b16 %v410
  %v1986 = vunpack.c.h.b16 %v410
  %v1987 = vunpack.c.l.b16 %v411
  %v1988 = vunpack.c.h.b16 %v411
  %v1989 = vunpack.c.l.b16 %v412
  %v1990 = vunpack.c.h.b16 %v412
  %v1991 = vunpack.c.l.b16 %v413
  %v1992 = vunpack.c.h.b16 %v413
  %v1993 = vunpack.c.l.b16 %v414
  %v1994 = vunpack.c.h.b16 %v414
  %v1995 = vunpack.c.l.b16 %v415
  %v1996 = vunpack.c.h.b16 %v415
  %v1997 = vunpack.c.l.b16 %v416
  %v1998 = vunpack.c.h.b16 %v416
  %v1999 = vunpack.c.l.b16 %v417
  %v2000 = vunpack.c.h.b16 %v417
  %v2001 = vunpack.c.l.b16 %v418
  %v2002 = vunpack.c.h.b16 %v418
  %v2003 = vunpack.c.l.b16 %v419
  %v2004 = vunpack.c.h.b16 %v419
  %v2005 = vunpack.c.l.b16 %v420
  %v2006 = vpack.c.b16 %v1256, %v1231
  %v2007 = vpack.c.b16 %v1257, %v1232
  %v2008 = vpack.c.b16 %v1258, %v1233
  %v2009 = vpack.c.b16 %v1259, %v1234
  %v2010 = vpack.c.b16 %v1260, %v1235
  %v2011 = vpack.c.b16 %v1261, %v1236
  %v2012 = vpack.c.b16 %v1262, %v1237
  %v2013 = vpack.c.b16 %v1263, %v1238
  %v2014 = vpack.c.b16 %v1264, %v1239
  %v2015 = vpack.c.b16 %v1265, %v1240
  %v2016 = vpack.c.b16 %v1266, %v1241
  %v2017 = vpack.c.b16 %v1267, %v1242
  %v2018 = vpack.c.b16 %v1268, %v1243
  %v2019 = vpack.c.b16 %v1269, %v1244
  %v2020 = vpack.c.b16 %v1270, %v1245
  %v2021 = vpack.c.b16 %v1271, %v1246
  %v2022 = vpack.c.b16 %v1272, %v1247
  %v2023 = vpack.c.b16 %v1273, %v1248
  %v2024 = vpack.c.b16 %v1274, %v1249
  %v2025 = vpack.c.b16 %v1275, %v1250
  %v2026 = vpack.c.b16 %v1276, %v1251
  %v2027 = vpack.c.b16 %v1277, %v1252
  %v2028 = vpack.c.b16 %v1278, %v1253
  %v2029 = vpack.c.b16 %v1279, %v1254
  %v2030 = vpack.c.b16 %v1280, %v1255
  %v2031 = vpack.c.b16 %v1306, %v1281
  %v2032 = vpack.c.b16 %v1307, %v1282
  %v2033 = vpack.c.b16 %v1308, %v1283
  %v2034 = vpack.c.b16 %v1309, %v1284
  %v2035 = vpack.c.b16 %v1310, %v1285
  %v2036 = vpack.c.b16 %v1311, %v1286
  %v2037 = vpack.c.b16 %v1312, %v1287
  %v2038 = vpack.c.b16 %v1313, %v1288
  %v2039 = vpack.c.b16 %v1314, %v1289
  %v2040 = vpack.c.b16 %v1315, %v1290
  %v2041 = vpack.c.b16 %v1316, %v1291
  %v2042 = vpack.c.b16 %v1317, %v1292
  %v2043 = vpack.c.b16 %v1318, %v1293
  %v2044 = vpack.c.b16 %v1319, %v1294
  %v2045 = vpack.c.b16 %v1320, %v1295
  %v2046 = vpack.c.b16 %v1321, %v1296
  %v2047 = vpack.c.b16 %v1322, %v1297
  %v2048 = vpack.c.b16 %v1323, %v1298
  %v2049 = vpack.c.b16 %v1324, %v1299
  %v2050 = vpack.c.b16 %v1325, %v1300
  %v2051 = vpack.c.b16 %v1326, %v1301
  %v2052 = vpack.c.b16 %v1327, %v1302
  %v2053 = vpack.c.b16 %v1328, %v1303
  %v2054 = vpack.c.b16 %v1329, %v1304
  %v2055 = vpack.c.b16 %v1330, %v1305
  %v2056 = vpack.c.b16 %v1356, %v1331
  %v2057 = vpack.c.b16 %v1357, %v1332
  %v2058 = vpack.c.b16 %v1358, %v1333
  %v2059 = vpack.c.b16 %v1359, %v1334
  %v2060 = vpack.c.b16 %v1360, %v1335
  %v2061 = vpack.c.b16 %v1361, %v1336
  %v2062 = vpack.c.b16 %v1362, %v1337
  %v2063 = vpack.c.b16 %v1363, %v1338
  %v2064 = vpack.c.b16 %v1364, %v1339
  %v2065 = vpack.c.b16 %v1365, %v1340
  %v2066 = vpack.c.b16 %v1366, %v1341
  %v2067 = vpack.c.b16 %v1367, %v1342
  %v2068 = vpack.c.b16 %v1368, %v1343
  %v2069 = vpack.c.b16 %v1369, %v1344
  %v2070 = vpack.c.b16 %v1370, %v1345
  %v2071 = vpack.c.b16 %v1371, %v1346
  %v2072 = vpack.c.b16 %v1372, %v1347
  %v2073 = vpack.c.b16 %v1373, %v1348
  %v2074 = vpack.c.b16 %v1374, %v1349
  %v2075 = vpack.c.b16 %v1375, %v1350
  %v2076 = vpack.c.b16 %v1376, %v1351
  %v2077 = vpack.c.b16 %v1377, %v1352
  %v2078 = vpack.c.b16 %v1378, %v1353
  %v2079 = vpack.c.b16 %v1379, %v1354
  %v2080 = vpack.c.b16 %v1380, %v1355
  %v2081 = vpack.c.b16 %v1406, %v1381
  %v2082 = vpack.c.b16 %v1407, %v1382
  %v2083 = vpack.c.b16 %v1408, %v1383
  %v2084 = vpack.c.b16 %v1409, %v1384
  %v2085 = vpack.c.b16 %v1410, %v1385
  %v2086 = vpack.c.b16 %v1411, %v1386
  %v2087 = vpack.c.b16 %v1412, %v1387
  %v2088 = vpack.c.b16 %v1413, %v1388
  %v2089 = vpack.c.b16 %v1414, %v1389
  %v2090 = vpack.c.b16 %v1415, %v1390
  %v2091 = vpack.c.b16 %v1416, %v1391
  %v2092 = vpack.c.b16 %v1417, %v1392
  %v2093 = vpack.c.b16 %v1418, %v1393
  %v2094 = vpack.c.b16 %v1419, %v1394
  %v2095 = vpack.c.b16 %v1420, %v1395
  %v2096 = vpack.c.b16 %v1421, %v1396
  %v2097 = vpack.c.b16 %v1422, %v1397
  %v2098 = vpack.c.b16 %v1423, %v1398
  %v2099 = vpack.c.b16 %v1424, %v1399
  %v2100 = vpack.c.b16 %v1425, %v1400
  %v2101 = vpack.c.b16 %v1426, %v1401
  %v2102 = vpack.c.b16 %v1427, %v1402
  %v2103 = vpack.c.b16 %v1428, %v1403
  %v2104 = vpack.c.b16 %v1429, %v1404
  %v2105 = vpack.c.b16 %v1430, %v1405
  %v2106 = vpack.c.b16 %v1456, %v1431
  %v2107 = vpack.c.b16 %v1457, %v1432
  %v2108 = vpack.c.b16 %v1458, %v1433
  %v2109 = vpack.c.b16 %v1459, %v1434
  %v2110 = vpack.c.b16 %v1460, %v1435
  %v2111 = vpack.c.b16 %v1461, %v1436
  %v2112 = vpack.c.b16 %v1462, %v1437
  %v2113 = vpack.c.b16 %v1463, %v1438
  %v2114 = vpack.c.b16 %v1464, %v1439
  %v2115 = vpack.c.b16 %v1465, %v1440
  %v2116 = vpack.c.b16 %v1466, %v1441
  %v2117 = vpack.c.b16 %v1467, %v1442
  %v2118 = vpack.c.b16 %v1468, %v1443
  %v2119 = vpack.c.b16 %v1469, %v1444
  %v2120 = vpack.c.b16 %v1470, %v1445
  %v2121 = vpack.c.b16 %v1471, %v1446
  %v2122 = vpack.c.b16 %v1472, %v1447
  %v2123 = vpack.c.b16 %v1473, %v1448
  %v2124 = vpack.c.b16 %v1474, %v1449
  %v2125 = vpack.c.b16 %v1475, %v1450
  %v2126 = vpack.c.b16 %v1476, %v1451
  %v2127 = vpack.c.b16 %v1477, %v1452
  %v2128 = vpack.c.b16 %v1478, %v1453
  %v2129 = vpack.c.b16 %v1479, %v1454
  %v2130 = vpack.c.b16 %v1480, %v1455
  %v2131 = vpack.c.b16 %v1506, %v1481
  %v2132 = vpack.c.b16 %v1507, %v1482
  %v2133 = vpack.c.b16 %v1508, %v1483
  %v2134 = vpack.c.b16 %v1509, %v1484
  %v2135 = vpack.c.b16 %v1510, %v1485
  %v2136 = vpack.c.b16 %v1511, %v1486
  %v2137 = vpack.c.b16 %v1512, %v1487
  %v2138 = vpack.c.b16 %v1513, %v1488
  %v2139 = vpack.c.b16 %v1514, %v1489
  %v2140 = vpack.c.b16 %v1515, %v1490
  %v2141 = vpack.c.b16 %v1516, %v1491
  %v2142 = vpack.c.b16 %v1517, %v1492
  %v2143 = vpack.c.b16 %v1518, %v1493
  %v2144 = vpack.c.b16 %v1519, %v1494
  %v2145 = vpack.c.b16 %v1520, %v1495
  %v2146 = vpack.c.b16 %v1521, %v1496
  %v2147 = vpack.c.b16 %v1522, %v1497
  %v2148 = vpack.c.b16 %v1523, %v1498
  %v2149 = vpack.c.b16 %v1524, %v1499
  %v2150 = vpack.c.b16 %v1525, %v1500
  %v2151 = vpack.c.b16 %v1526, %v1501
  %v2152 = vpack.c.b16 %v1527, %v1502
  %v2153 = vpack.c.b16 %v1528, %v1503
  %v2154 = vpack.c.b16 %v1529, %v1504
  %v2155 = vpack.c.b16 %v1530, %v1505
  %v2156 = vpack.c.b16 %v1556, %v1531
  %v2157 = vpack.c.b16 %v1557, %v1532
  %v2158 = vpack.c.b16 %v1558, %v1533
  %v2159 = vpack.c.b16 %v1559, %v1534
  %v2160 = vpack.c.b16 %v1560, %v1535
  %v2161 = vpack.c.b16 %v1561, %v1536
  %v2162 = vpack.c.b16 %v1562, %v1537
  %v2163 = vpack.c.b16 %v1563, %v1538
  %v2164 = vpack.c.b16 %v1564, %v1539
  %v2165 = vpack.c.b16 %v1565, %v1540
  %v2166 = vpack.c.b16 %v1566, %v1541
  %v2167 = vpack.c.b16 %v1567, %v1542
  %v2168 = vpack.c.b16 %v1568, %v1543
  %v2169 = vpack.c.b16 %v1569, %v1544
  %v2170 = vpack.c.b16 %v1570, %v1545
  %v2171 = vpack.c.b16 %v1571, %v1546
  %v2172 = vpack.c.b16 %v1572, %v1547
  %v2173 = vpack.c.b16 %v1573, %v1548
  %v2174 = vpack.c.b16 %v1574, %v1549
  %v2175 = vpack.c.b16 %v1575, %v1550
  %v2176 = vpack.c.b16 %v1576, %v1551
  %v2177 = vpack.c.b16 %v1577, %v1552
  %v2178 = vpack.c.b16 %v1578, %v1553
  %v2179 = vpack.c.b16 %v1579, %v1554
  %v2180 = vpack.c.b16 %v1580, %v1555
  %v2181 = vpack.c.b16 %v1606, %v1581
  %v2182 = vpack.c.b16 %v1607, %v1582
  %v2183 = vpack.c.b16 %v1608, %v1583
  %v2184 = vpack.c.b16 %v1609, %v1584
  %v2185 = vpack.c.b16 %v1610, %v1585
  %v2186 = vpack.c.b16 %v1611, %v1586
  %v2187 = vpack.c.b16 %v1612, %v1587
  %v2188 = vpack.c.b16 %v1613, %v1588
  %v2189 = vpack.c.b16 %v1614, %v1589
  %v2190 = vpack.c.b16 %v1615, %v1590
  %v2191 = vpack.c.b16 %v1616, %v1591
  %v2192 = vpack.c.b16 %v1617, %v1592
  %v2193 = vpack.c.b16 %v1618, %v1593
  %v2194 = vpack.c.b16 %v1619, %v1594
  %v2195 = vpack.c.b16 %v1620, %v1595
  %v2196 = vpack.c.b16 %v1621, %v1596
  %v2197 = vpack.c.b16 %v1622, %v1597
  %v2198 = vpack.c.b16 %v1623, %v1598
  %v2199 = vpack.c.b16 %v1624, %v1599
  %v2200 = vpack.c.b16 %v1625, %v1600
  %v2201 = vpack.c.b16 %v1626, %v1601
  %v2202 = vpack.c.b16 %v1627, %v1602
  %v2203 = vpack.c.b16 %v1628, %v1603
  %v2204 = vpack.c.b16 %v1629, %v1604
  %v2205 = vpack.c.b16 %v1630, %v1605
  %v2206 = vpack.c.b16 %v1656, %v1631
  %v2207 = vpack.c.b16 %v1657, %v1632
  %v2208 = vpack.c.b16 %v1658, %v1633
  %v2209 = vpack.c.b16 %v1659, %v1634
  %v2210 = vpack.c.b16 %v1660, %v1635
  %v2211 = vpack.c.b16 %v1661, %v1636
  %v2212 = vpack.c.b16 %v1662, %v1637
  %v2213 = vpack.c.b16 %v1663, %v1638
  %v2214 = vpack.c.b16 %v1664, %v1639
  %v2215 = vpack.c.b16 %v1665, %v1640
  %v2216 = vpack.c.b16 %v1666, %v1641
  %v2217 = vpack.c.b16 %v1667, %v1642
  %v2218 = vpack.c.b16 %v1668, %v1643
  %v2219 = vpack.c.b16 %v1669, %v1644
  %v2220 = vpack.c.b16 %v1670, %v1645
  %v2221 = vpack.c.b16 %v1671, %v1646
  %v2222 = vpack.c.b16 %v1672, %v1647
  %v2223 = vpack.c.b16 %v1673, %v1648
  %v2224 = vpack.c.b16 %v1674, %v1649
  %v2225 = vpack.c.b16 %v1675, %v1650
  %v2226 = vpack.c.b16 %v1676, %v1651
  %v2227 = vpack.c.b16 %v1677, %v1652
  %v2228 = vpack.c.b16 %v1678, %v1653
  %v2229 = vpack.c.b16 %v1679, %v1654
  %v2230 = vpack.c.b16 %v1680, %v1655
  %v2231 = vpack.c.b16 %v1706, %v1681
  %v2232 = vpack.c.b16 %v1707, %v1682
  %v2233 = vpack.c.b16 %v1708, %v1683
  %v2234 = vpack.c.b16 %v1709, %v1684
  %v2235 = vpack.c.b16 %v1710, %v1685
  %v2236 = vpack.c.b16 %v1711, %v1686
  %v2237 = vpack.c.b16 %v1712, %v1687
  %v2238 = vpack.c.b16 %v1713, %v1688
  %v2239 = vpack.c.b16 %v1714, %v1689
  %v2240 = vpack.c.b16 %v1715, %v1690
  %v2241 = vpack.c.b16 %v1716, %v1691
  %v2242 = vpack.c.b16 %v1717, %v1692
  %v2243 = vpack.c.b16 %v1718, %v1693
  %v2244 = vpack.c.b16 %v1719, %v1694
  %v2245 = vpack.c.b16 %v1720, %v1695
  %v2246 = vpack.c.b16 %v1721, %v1696
  %v2247 = vpack.c.b16 %v1722, %v1697
  %v2248 = vpack.c.b16 %v1723, %v1698
  %v2249 = vpack.c.b16 %v1724, %v1699
  %v2250 = vpack.c.b16 %v1725, %v1700
  %v2251 = vpack.c.b16 %v1726, %v1701
  %v2252 = vpack.c.b16 %v1727, %v1702
  %v2253 = vpack.c.b16 %v1728, %v1703
  %v2254 = vpack.c.b16 %v1729, %v1704
  %v2255 = vpack.c.b16 %v1730, %v1705
  %v2256 = vpack.c.b16 %v1756, %v1731
  %v2257 = vpack.c.b16 %v1757, %v1732
  %v2258 = vpack.c.b16 %v1758, %v1733
  %v2259 = vpack.c.b16 %v1759, %v1734
  %v2260 = vpack.c.b16 %v1760, %v1735
  %v2261 = vpack.c.b16 %v1761, %v1736
  %v2262 = vpack.c.b16 %v1762, %v1737
  %v2263 = vpack.c.b16 %v1763, %v1738
  %v2264 = vpack.c.b16 %v1764, %v1739
  %v2265 = vpack.c.b16 %v1765, %v1740
  %v2266 = vpack.c.b16 %v1766, %v1741
  %v2267 = vpack.c.b16 %v1767, %v1742
  %v2268 = vpack.c.b16 %v1768, %v1743
  %v2269 = vpack.c.b16 %v1769, %v1744
  %v2270 = vpack.c.b16 %v1770, %v1745
  %v2271 = vpack.c.b16 %v1771, %v1746
  %v2272 = vpack.c.b16 %v1772, %v1747
  %v2273 = vpack.c.b16 %v1773, %v1748
  %v2274 = vpack.c.b16 %v1774, %v1749
  %v2275 = vpack.c.b16 %v1775, %v1750
  %v2276 = vpack.c.b16 %v1776, %v1751
  %v2277 = vpack.c.b16 %v1777, %v1752
  %v2278 = vpack.c.b16 %v1778, %v1753
  %v2279 = vpack.c.b16 %v1779, %v1754
  %v2280 = vpack.c.b16 %v1780, %v1755
  %v2281 = vpack.c.b16 %v1806, %v1781
  %v2282 = vpack.c.b16 %v1807, %v1782
  %v2283 = vpack.c.b16 %v1808, %v1783
  %v2284 = vpack.c.b16 %v1809, %v1784
  %v2285 = vpack.c.b16 %v1810, %v1785
  %v2286 = vpack.c.b16 %v1811, %v1786
  %v2287 = vpack.c.b16 %v1812, %v1787
  %v2288 = vpack.c.b16 %v1813, %v1788
  %v2289 = vpack.c.b16 %v1814, %v1789
  %v2290 = vpack.c.b16 %v1815, %v1790
  %v2291 = vpack.c.b16 %v1816, %v1791
  %v2292 = vpack.c.b16 %v1817, %v1792
  %v2293 = vpack.c.b16 %v1818, %v1793
  %v2294 = vpack.c.b16 %v1819, %v1794
  %v2295 = vpack.c.b16 %v1820, %v1795
  %v2296 = vpack.c.b16 %v1821, %v1796
  %v2297 = vpack.c.b16 %v1822, %v1797
  %v2298 = vpack.c.b16 %v1823, %v1798
  %v2299 = vpack.c.b16 %v1824, %v1799
  %v2300 = vpack.c.b16 %v1825, %v1800
  %v2301 = vpack.c.b16 %v1826, %v1801
  %v2302 = vpack.c.b16 %v1827, %v1802
  %v2303 = vpack.c.b16 %v1828, %v1803
  %v2304 = vpack.c.b16 %v1829, %v1804
  %v2305 = vpack.c.b16 %v1830, %v1805
  %v2306 = vpack.c.b16 %v1856, %v1831
  %v2307 = vpack.c.b16 %v1857, %v1832
  %v2308 = vpack.c.b16 %v1858, %v1833
  %v2309 = vpack.c.b16 %v1859, %v1834
  %v2310 = vpack.c.b16 %v1860, %v1835
  %v2311 = vpack.c.b16 %v1861, %v1836
  %v2312 = vpack.c.b16 %v1862, %v1837
  %v2313 = vpack.c.b16 %v1863, %v1838
  %v2314 = vpack.c.b16 %v1864, %v1839
  %v2315 = vpack.c.b16 %v1865, %v1840
  %v2316 = vpack.c.b16 %v1866, %v1841
  %v2317 = vpack.c.b16 %v1867, %v1842
  %v2318 = vpack.c.b16 %v1868, %v1843
  %v2319 = vpack.c.b16 %v1869, %v1844
  %v2320 = vpack.c.b16 %v1870, %v1845
  %v2321 = vpack.c.b16 %v1871, %v1846
  %v2322 = vpack.c.b16 %v1872, %v1847
  %v2323 = vpack.c.b16 %v1873, %v1848
  %v2324 = vpack.c.b16 %v1874, %v1849
  %v2325 = vpack.c.b16 %v1875, %v1850
  %v2326 = vpack.c.b16 %v1876, %v1851
  %v2327 = vpack.c.b16 %v1877, %v1852
  %v2328 = vpack.c.b16 %v1878, %v1853
  %v2329 = vpack.c.b16 %v1879, %v1854
  %v2330 = vpack.c.b16 %v1880, %v1855
  %v2331 = vpack.c.b16 %v1906, %v1881
  %v2332 = vpack.c.b16 %v1907, %v1882
  %v2333 = vpack.c.b16 %v1908, %v1883
  %v2334 = vpack.c.b16 %v1909, %v1884
  %v2335 = vpack.c.b16 %v1910, %v1885
  %v2336 = vpack.c.b16 %v1911, %v1886
  %v2337 = vpack.c.b16 %v1912, %v1887
  %v2338 = vpack.c.b16 %v1913, %v1888
  %v2339 = vpack.c.b16 %v1914, %v1889
  %v2340 = vpack.c.b16 %v1915, %v1890
  %v2341 = vpack.c.b16 %v1916, %v1891
  %v2342 = vpack.c.b16 %v1917, %v1892
  %v2343 = vpack.c.b16 %v1918, %v1893
  %v2344 = vpack.c.b16 %v1919, %v1894
  %v2345 = vpack.c.b16 %v1920, %v1895
  %v2346 = vpack.c.b16 %v1921, %v1896
  %v2347 = vpack.c.b16 %v1922, %v1897
  %v2348 = vpack.c.b16 %v1923, %v1898
  %v2349 = vpack.c.b16 %v1924, %v1899
  %v2350 = vpack.c.b16 %v1925, %v1900
  %v2351 = vpack.c.b16 %v1926, %v1901
  %v2352 = vpack.c.b16 %v1927, %v1902
  %v2353 = vpack.c.b16 %v1928, %v1903
  %v2354 = vpack.c.b16 %v1929, %v1904
  %v2355 = vpack.c.b16 %v1930, %v1905
  %v2356 = vpack.c.b16 %v1956, %v1931
  %v2357 = vpack.c.b16 %v1957, %v1932
  %v2358 = vpack.c.b16 %v1958, %v1933
  %v2359 = vpack.c.b16 %v1959, %v1934
  %v2360 = vpack.c.b16 %v1960, %v1935
  %v2361 = vpack.c.b16 %v1961, %v1936
  %v2362 = vpack.c.b16 %v1962, %v1937
  %v2363 = vpack.c.b16 %v1963, %v1938
  %v2364 = vpack.c.b16 %v1964, %v1939
  %v2365 = vpack.c.b16 %v1965, %v1940
  %v2366 = vpack.c.b16 %v1966, %v1941
  %v2367 = vpack.c.b16 %v1967, %v1942
  %v2368 = vpack.c.b16 %v1968, %v1943
  %v2369 = vpack.c.b16 %v1969, %v1944
  %v2370 = vpack.c.b16 %v1970, %v1945
  %v2371 = vpack.c.b16 %v1971, %v1946
  %v2372 = vpack.c.b16 %v1972, %v1947
  %v2373 = vpack.c.b16 %v1973, %v1948
  %v2374 = vpack.c.b16 %v1974, %v1949
  %v2375 = vpack.c.b16 %v1975, %v1950
  %v2376 = vpack.c.b16 %v1976, %v1951
  %v2377 = vpack.c.b16 %v1977, %v1952
  %v2378 = vpack.c.b16 %v1978, %v1953
  %v2379 = vpack.c.b16 %v1979, %v1954
  %v2380 = vpack.c.b16 %v1980, %v1955
  %v2381 = vpack.c.b16 %v1981, %v1981
  %v2382 = vpack.c.b16 %v1982, %v1982
  %v2383 = vpack.c.b16 %v1983, %v1983
  %v2384 = vpack.c.b16 %v1984, %v1984
  %v2385 = vpack.c.b16 %v1985, %v1985
  %v2386 = vpack.c.b16 %v1986, %v1986
  %v2387 = vpack.c.b16 %v1987, %v1987
  %v2388 = vpack.c.b16 %v1988, %v1988
  %v2389 = vpack.c.b16 %v1989, %v1989
  %v2390 = vpack.c.b16 %v1990, %v1990
  %v2391 = vpack.c.b16 %v1991, %v1991
  %v2392 = vpack.c.b16 %v1992, %v1992
  %v2393 = vpack.c.b16 %v1993, %v1993
  %v2394 = vpack.c.b16 %v1994, %v1994
  %v2395 = vpack.c.b16 %v1995, %v1995
  %v2396 = vpack.c.b16 %v1996, %v1996
  %v2397 = vpack.c.b16 %v1997, %v1997
  %v2398 = vpack.c.b16 %v1998, %v1998
  %v2399 = vpack.c.b16 %v1999, %v1999
  %v2400 = vpack.c.b16 %v2000, %v2000
  %v2401 = vpack.c.b16 %v2001, %v2001
  %v2402 = vpack.c.b16 %v2002, %v2002
  %v2403 = vpack.c.b16 %v2003, %v2003
  %v2404 = vpack.c.b16 %v2004, %v2004
  %v2405 = vpack.c.b16 %v2005, %v2005
  %v3206 = vunpack.c.l.b16 %v421
  %v3207 = vunpack.c.l.b16 %v422
  %v3208 = vunpack.c.l.b16 %v423
  %v3209 = vunpack.c.l.b16 %v424
  %v3210 = vunpack.c.l.b16 %v425
  %v3211 = vunpack.c.l.b16 %v426
  %v3212 = vunpack.c.l.b16 %v427
  %v3213 = vunpack.c.l.b16 %v428
  %v3214 = vunpack.c.l.b16 %v429
  %v3215 = vunpack.c.l.b16 %v430
  %v3216 = vunpack.c.l.b16 %v431
  %v3217 = vunpack.c.l.b16 %v432
  %v3218 = vunpack.c.l.b16 %v433
  %v3219 = vunpack.c.l.b16 %v434
  %v3220 = vunpack.c.l.b16 %v435
  %v3221 = vunpack.c.l.b16 %v436
  %v3222 = vunpack.c.l.b16 %v437
  %v3223 = vunpack.c.l.b16 %v438
  %v3224 = vunpack.c.l.b16 %v439
  %v3225 = vunpack.c.l.b16 %v440
  %v3226 = vunpack.c.l.b16 %v441
  %v3227 = vunpack.c.l.b16 %v442
  %v3228 = vunpack.c.l.b16 %v443
  %v3229 = vunpack.c.l.b16 %v444
  %v3230 = vunpack.c.l.b16 %v445
  %v3231 = vunpack.c.l.b16 %v446
  %v3232 = vunpack.c.l.b16 %v447
  %v3233 = vunpack.c.l.b16 %v448
  %v3234 = vunpack.c.l.b16 %v449
  %v3235 = vunpack.c.l.b16 %v450
  %v3236 = vunpack.c.l.b16 %v451
  %v3237 = vunpack.c.l.b16 %v452
  %v3238 = vunpack.c.l.b16 %v453
  %v3239 = vunpack.c.l.b16 %v454
  %v3240 = vunpack.c.l.b16 %v455
  %v3241 = vunpack.c.l.b16 %v456
  %v3242 = vunpack.c.l.b16 %v457
  %v3243 = vunpack.c.l.b16 %v458
  %v3244 = vunpack.c.l.b16 %v459
  %v3245 = vunpack.c.l.b16 %v460
  %v3246 = vunpack.c.l.b16 %v461
  %v3247 = vunpack.c.l.b16 %v462
  %v3248 = vunpack.c.l.b16 %v463
  %v3249 = vunpack.c.l.b16 %v464
  %v3250 = vunpack.c.l.b16 %v465
  %v3251 = vunpack.c.l.b16 %v466
  %v3252 = vunpack.c.l.b16 %v467
  %v3253 = vunpack.c.l.b16 %v468
  %v3254 = vunpack.c.l.b16 %v469
  %v3255 = vunpack.c.l.b16 %v470
  %v3256 = vunpack.c.l.b16 %v471
  %v3257 = vunpack.c.l.b16 %v472
  %v3258 = vunpack.c.l.b16 %v473
  %v3259 = vunpack.c.l.b16 %v474
  %v3260 = vunpack.c.l.b16 %v475
  %v3261 = vunpack.c.l.b16 %v476
  %v3262 = vunpack.c.l.b16 %v477
  %v3263 = vunpack.c.l.b16 %v478
  %v3264 = vunpack.c.l.b16 %v479
  %v3265 = vunpack.c.l.b16 %v480
  %v3266 = vunpack.c.l.b16 %v481
  %v3267 = vunpack.c.l.b16 %v482
  %v3268 = vunpack.c.l.b16 %v483
  %v3269 = vunpack.c.l.b16 %v484
  %v3270 = vunpack.c.l.b16 %v485
  %v3271 = vunpack.c.l.b16 %v486
  %v3272 = vunpack.c.l.b16 %v487
  %v3273 = vunpack.c.l.b16 %v488
  %v3274 = vunpack.c.l.b16 %v489
  %v3275 = vunpack.c.l.b16 %v490
  %v3276 = vunpack.c.l.b16 %v491
  %v3277 = vunpack.c.l.b16 %v492
  %v3278 = vunpack.c.l.b16 %v493
  %v3279 = vunpack.c.l.b16 %v494
  %v3280 = vunpack.c.l.b16 %v495
  %v3281 = vunpack.c.l.b16 %v496
  %v3282 = vunpack.c.l.b16 %v497
  %v3283 = vunpack.c.l.b16 %v498
  %v3284 = vunpack.c.l.b16 %v499
  %v3285 = vunpack.c.l.b16 %v500
  %v3286 = vunpack.c.l.b16 %v501
  %v3287 = vunpack.c.l.b16 %v502
  %v3288 = vunpack.c.l.b16 %v503
  %v3289 = vunpack.c.l.b16 %v504
  %v3290 = vunpack.c.l.b16 %v505
  %v3291 = vunpack.c.l.b16 %v506
  %v3292 = vunpack.c.l.b16 %v507
  %v3293 = vunpack.c.l.b16 %v508
  %v3294 = vunpack.c.l.b16 %v509
  %v3295 = vunpack.c.l.b16 %v510
  %v3296 = vunpack.c.l.b16 %v511
  %v3297 = vunpack.c.l.b16 %v512
  %v3298 = vunpack.c.l.b16 %v513
  %v3299 = vunpack.c.l.b16 %v514
  %v3300 = vunpack.c.l.b16 %v515
  %v3301 = vunpack.c.l.b16 %v516
  %v3302 = vunpack.c.l.b16 %v517
  %v3303 = vunpack.c.l.b16 %v518
  %v3304 = vunpack.c.l.b16 %v519
  %v3305 = vunpack.c.l.b16 %v520
  %v3306 = vunpack.c.l.b16 %v521
  %v3307 = vunpack.c.l.b16 %v522
  %v3308 = vunpack.c.l.b16 %v523
  %v3309 = vunpack.c.l.b16 %v524
  %v3310 = vunpack.c.l.b16 %v525
  %v3311 = vunpack.c.l.b16 %v526
  %v3312 = vunpack.c.l.b16 %v527
  %v3313 = vunpack.c.l.b16 %v528
  %v3314 = vunpack.c.l.b16 %v529
  %v3315 = vunpack.c.l.b16 %v530
  %v3316 = vunpack.c.l.b16 %v531
  %v3317 = vunpack.c.l.b16 %v532
  %v3318 = vunpack.c.l.b16 %v533
  %v3319 = vunpack.c.l.b16 %v534
  %v3320 = vunpack.c.l.b16 %v535
  %v3321 = vunpack.c.l.b16 %v536
  %v3322 = vunpack.c.l.b16 %v537
  %v3323 = vunpack.c.l.b16 %v538
  %v3324 = vunpack.c.l.b16 %v539
  %v3325 = vunpack.c.l.b16 %v540
  %v3326 = vunpack.c.l.b16 %v541
  %v3327 = vunpack.c.l.b16 %v542
  %v3328 = vunpack.c.l.b16 %v543
  %v3329 = vunpack.c.l.b16 %v544
  %v3330 = vunpack.c.l.b16 %v545
  %v3331 = vunpack.c.l.b16 %v546
  %v3332 = vunpack.c.l.b16 %v547
  %v3333 = vunpack.c.l.b16 %v548
  %v3334 = vunpack.c.l.b16 %v549
  %v3335 = vunpack.c.l.b16 %v550
  %v3336 = vunpack.c.l.b16 %v551
  %v3337 = vunpack.c.l.b16 %v552
  %v3338 = vunpack.c.l.b16 %v553
  %v3339 = vunpack.c.l.b16 %v554
  %v3340 = vunpack.c.l.b16 %v555
  %v3341 = vunpack.c.l.b16 %v556
  %v3342 = vunpack.c.l.b16 %v557
  %v3343 = vunpack.c.l.b16 %v558
  %v3344 = vunpack.c.l.b16 %v559
  %v3345 = vunpack.c.l.b16 %v560
  %v3346 = vunpack.c.l.b16 %v561
  %v3347 = vunpack.c.l.b16 %v562
  %v3348 = vunpack.c.l.b16 %v563
  %v3349 = vunpack.c.l.b16 %v564
  %v3350 = vunpack.c.l.b16 %v565
  %v3351 = vunpack.c.l.b16 %v566
  %v3352 = vunpack.c.l.b16 %v567
  %v3353 = vunpack.c.l.b16 %v568
  %v3354 = vunpack.c.l.b16 %v569
  %v3355 = vunpack.c.l.b16 %v570
  %v3356 = vunpack.c.l.b16 %v571
  %v3357 = vunpack.c.l.b16 %v572
  %v3358 = vunpack.c.l.b16 %v573
  %v3359 = vunpack.c.l.b16 %v574
  %v3360 = vunpack.c.l.b16 %v575
  %v3361 = vunpack.c.l.b16 %v576
  %v3362 = vunpack.c.l.b16 %v577
  %v3363 = vunpack.c.l.b16 %v578
  %v3364 = vunpack.c.l.b16 %v579
  %v3365 = vunpack.c.l.b16 %v580
  %v3366 = vunpack.c.l.b16 %v581
  %v3367 = vunpack.c.l.b16 %v582
  %v3368 = vunpack.c.l.b16 %v583
  %v3369 = vunpack.c.l.b16 %v584
  %v3370 = vunpack.c.l.b16 %v585
  %v3371 = vunpack.c.l.b16 %v586
  %v3372 = vunpack.c.l.b16 %v587
  %v3373 = vunpack.c.l.b16 %v588
  %v3374 = vunpack.c.l.b16 %v589
  %v3375 = vunpack.c.l.b16 %v590
  %v3376 = vunpack.c.l.b16 %v591
  %v3377 = vunpack.c.l.b16 %v592
  %v3378 = vunpack.c.l.b16 %v593
  %v3379 = vunpack.c.l.b16 %v594
  %v3380 = vunpack.c.l.b16 %v595
  %v3381 = vunpack.c.l.b16 %v596
  %v3382 = vunpack.c.l.b16 %v597
  %v3383 = vunpack.c.l.b16 %v598
  %v3384 = vunpack.c.l.b16 %v599
  %v3385 = vunpack.c.l.b16 %v600
  %v3386 = vunpack.c.l.b16 %v601
  %v3387 = vunpack.c.l.b16 %v602
  %v3388 = vunpack.c.l.b16 %v603
  %v3389 = vunpack.c.l.b16 %v604
  %v3390 = vunpack.c.l.b16 %v605
  %v3391 = vunpack.c.l.b16 %v606
  %v3392 = vunpack.c.l.b16 %v607
  %v3393 = vunpack.c.l.b16 %v608
  %v3394 = vunpack.c.l.b16 %v609
  %v3395 = vunpack.c.l.b16 %v610
  %v3396 = vunpack.c.l.b16 %v611
  %v3397 = vunpack.c.l.b16 %v612
  %v3398 = vunpack.c.l.b16 %v613
  %v3399 = vunpack.c.l.b16 %v614
  %v3400 = vunpack.c.l.b16 %v615
  %v3401 = vunpack.c.l.b16 %v616
  %v3402 = vunpack.c.l.b16 %v617
  %v3403 = vunpack.c.l.b16 %v618
  %v3404 = vunpack.c.l.b16 %v619
  %v3405 = vunpack.c.l.b16 %v620
  %v3406 = vunpack.c.l.b16 %v621
  %v3407 = vunpack.c.l.b16 %v622
  %v3408 = vunpack.c.l.b16 %v623
  %v3409 = vunpack.c.l.b16 %v624
  %v3410 = vunpack.c.l.b16 %v625
  %v3411 = vunpack.c.l.b16 %v626
  %v3412 = vunpack.c.l.b16 %v627
  %v3413 = vunpack.c.l.b16 %v628
  %v3414 = vunpack.c.l.b16 %v629
  %v3415 = vunpack.c.l.b16 %v630
  %v3416 = vunpack.c.l.b16 %v631
  %v3417 = vunpack.c.l.b16 %v632
  %v3418 = vunpack.c.l.b16 %v633
  %v3419 = vunpack.c.l.b16 %v634
  %v3420 = vunpack.c.l.b16 %v635
  %v3421 = vunpack.c.l.b16 %v636
  %v3422 = vunpack.c.l.b16 %v637
  %v3423 = vunpack.c.l.b16 %v638
  %v3424 = vunpack.c.l.b16 %v639
  %v3425 = vunpack.c.l.b16 %v640
  %v3426 = vunpack.c.l.b16 %v641
  %v3427 = vunpack.c.l.b16 %v642
  %v3428 = vunpack.c.l.b16 %v643
  %v3429 = vunpack.c.l.b16 %v644
  %v3430 = vunpack.c.l.b16 %v645
  %v3431 = vunpack.c.l.b16 %v646
  %v3432 = vunpack.c.l.b16 %v647
  %v3433 = vunpack.c.l.b16 %v648
  %v3434 = vunpack.c.l.b16 %v649
  %v3435 = vunpack.c.l.b16 %v650
  %v3436 = vunpack.c.l.b16 %v651
  %v3437 = vunpack.c.l.b16 %v652
  %v3438 = vunpack.c.l.b16 %v653
  %v3439 = vunpack.c.l.b16 %v654
  %v3440 = vunpack.c.l.b16 %v655
  %v3441 = vunpack.c.l.b16 %v656
  %v3442 = vunpack.c.l.b16 %v657
  %v3443 = vunpack.c.l.b16 %v658
  %v3444 = vunpack.c.l.b16 %v659
  %v3445 = vunpack.c.l.b16 %v660
  %v3446 = vunpack.c.l.b16 %v661
  %v3447 = vunpack.c.l.b16 %v662
  %v3448 = vunpack.c.l.b16 %v663
  %v3449 = vunpack.c.l.b16 %v664
  %v3450 = vunpack.c.l.b16 %v665
  %v3451 = vunpack.c.l.b16 %v666
  %v3452 = vunpack.c.l.b16 %v667
  %v3453 = vunpack.c.l.b16 %v668
  %v3454 = vunpack.c.l.b16 %v669
  %v3455 = vunpack.c.l.b16 %v670
  %v3456 = vunpack.c.l.b16 %v671
  %v3457 = vunpack.c.l.b16 %v672
  %v3458 = vunpack.c.l.b16 %v673
  %v3459 = vunpack.c.l.b16 %v674
  %v3460 = vunpack.c.l.b16 %v675
  %v3461 = vunpack.c.l.b16 %v676
  %v3462 = vunpack.c.l.b16 %v677
  %v3463 = vunpack.c.l.b16 %v678
  %v3464 = vunpack.c.l.b16 %v679
  %v3465 = vunpack.c.l.b16 %v680
  %v3466 = vunpack.c.l.b16 %v681
  %v3467 = vunpack.c.l.b16 %v682
  %v3468 = vunpack.c.l.b16 %v683
  %v3469 = vunpack.c.l.b16 %v684
  %v3470 = vunpack.c.l.b16 %v685
  %v3471 = vunpack.c.l.b16 %v686
  %v3472 = vunpack.c.l.b16 %v687
  %v3473 = vunpack.c.l.b16 %v688
  %v3474 = vunpack.c.l.b16 %v689
  %v3475 = vunpack.c.l.b16 %v690
  %v3476 = vunpack.c.l.b16 %v691
  %v3477 = vunpack.c.l.b16 %v692
  %v3478 = vunpack.c.l.b16 %v693
  %v3479 = vunpack.c.l.b16 %v694
  %v3480 = vunpack.c.l.b16 %v695
  %v3481 = vunpack.c.l.b16 %v696
  %v3482 = vunpack.c.l.b16 %v697
  %v3483 = vunpack.c.l.b16 %v698
  %v3484 = vunpack.c.l.b16 %v699
  %v3485 = vunpack.c.l.b16 %v700
  %v3486 = vunpack.c.l.b16 %v701
  %v3487 = vunpack.c.l.b16 %v702
  %v3488 = vunpack.c.l.b16 %v703
  %v3489 = vunpack.c.l.b16 %v704
  %v3490 = vunpack.c.l.b16 %v705
  %v3491 = vunpack.c.l.b16 %v706
  %v3492 = vunpack.c.l.b16 %v707
  %v3493 = vunpack.c.l.b16 %v708
  %v3494 = vunpack.c.l.b16 %v709
  %v3495 = vunpack.c.l.b16 %v710
  %v3496 = vunpack.c.l.b16 %v711
  %v3497 = vunpack.c.l.b16 %v712
  %v3498 = vunpack.c.l.b16 %v713
  %v3499 = vunpack.c.l.b16 %v714
  %v3500 = vunpack.c.l.b16 %v715
  %v3501 = vunpack.c.l.b16 %v716
  %v3502 = vunpack.c.l.b16 %v717
  %v3503 = vunpack.c.l.b16 %v718
  %v3504 = vunpack.c.l.b16 %v719
  %v3505 = vunpack.c.l.b16 %v720
  %v3506 = vunpack.c.l.b16 %v721
  %v3507 = vunpack.c.l.b16 %v722
  %v3508 = vunpack.c.l.b16 %v723
  %v3509 = vunpack.c.l.b16 %v724
  %v3510 = vunpack.c.l.b16 %v725
  %v3511 = vunpack.c.l.b16 %v726
  %v3512 = vunpack.c.l.b16 %v727
  %v3513 = vunpack.c.l.b16 %v728
  %v3514 = vunpack.c.l.b16 %v729
  %v3515 = vunpack.c.l.b16 %v730
  %v3516 = vunpack.c.l.b16 %v731
  %v3517 = vunpack.c.l.b16 %v732
  %v3518 = vunpack.c.l.b16 %v733
  %v3519 = vunpack.c.l.b16 %v734
  %v3520 = vunpack.c.l.b16 %v735
  %v3521 = vunpack.c.l.b16 %v736
  %v3522 = vunpack.c.l.b16 %v737
  %v3523 = vunpack.c.l.b16 %v738
  %v3524 = vunpack.c.l.b16 %v739
  %v3525 = vunpack.c.l.b16 %v740
  %v3526 = vunpack.c.l.b16 %v741
  %v3527 = vunpack.c.l.b16 %v742
  %v3528 = vunpack.c.l.b16 %v743
  %v3529 = vunpack.c.l.b16 %v744
  %v3530 = vunpack.c.l.b16 %v745
  %v3531 = vunpack.c.l.b16 %v746
  %v3532 = vunpack.c.l.b16 %v747
  %v3533 = vunpack.c.l.b16 %v748
  %v3534 = vunpack.c.l.b16 %v749
  %v3535 = vunpack.c.l.b16 %v750
  %v3536 = vunpack.c.l.b16 %v751
  %v3537 = vunpack.c.l.b16 %v752
  %v3538 = vunpack.c.l.b16 %v753
  %v3539 = vunpack.c.l.b16 %v754
  %v3540 = vunpack.c.l.b16 %v755
  %v3541 = vunpack.c.l.b16 %v756
  %v3542 = vunpack.c.l.b16 %v757
  %v3543 = vunpack.c.l.b16 %v758
  %v3544 = vunpack.c.l.b16 %v759
  %v3545 = vunpack.c.l.b16 %v760
  %v3546 = vunpack.c.l.b16 %v761
  %v3547 = vunpack.c.l.b16 %v762
  %v3548 = vunpack.c.l.b16 %v763
  %v3549 = vunpack.c.l.b16 %v764
  %v3550 = vunpack.c.l.b16 %v765
  %v3551 = vunpack.c.l.b16 %v766
  %v3552 = vunpack.c.l.b16 %v767
  %v3553 = vunpack.c.l.b16 %v768
  %v3554 = vunpack.c.l.b16 %v769
  %v3555 = vunpack.c.l.b16 %v770
  %v3556 = vunpack.c.l.b16 %v771
  %v3557 = vunpack.c.l.b16 %v772
  %v3558 = vunpack.c.l.b16 %v773
  %v3559 = vunpack.c.l.b16 %v774
  %v3560 = vunpack.c.l.b16 %v775
  %v3561 = vunpack.c.l.b16 %v776
  %v3562 = vunpack.c.l.b16 %v777
  %v3563 = vunpack.c.l.b16 %v778
  %v3564 = vunpack.c.l.b16 %v779
  %v3565 = vunpack.c.l.b16 %v780
  %v3566 = vunpack.c.l.b16 %v781
  %v3567 = vunpack.c.l.b16 %v782
  %v3568 = vunpack.c.l.b16 %v783
  %v3569 = vunpack.c.l.b16 %v784
  %v3570 = vunpack.c.l.b16 %v785
  %v3571 = vunpack.c.l.b16 %v786
  %v3572 = vunpack.c.l.b16 %v787
  %v3573 = vunpack.c.l.b16 %v788
  %v3574 = vunpack.c.l.b16 %v789
  %v3575 = vunpack.c.l.b16 %v790
  %v3576 = vunpack.c.l.b16 %v791
  %v3577 = vunpack.c.l.b16 %v792
  %v3578 = vunpack.c.l.b16 %v793
  %v3579 = vunpack.c.l.b16 %v794
  %v3580 = vunpack.c.l.b16 %v795
  %v3581 = vunpack.c.l.b16 %v796
  %v3582 = vunpack.c.l.b16 %v797
  %v3583 = vunpack.c.l.b16 %v798
  %v3584 = vunpack.c.l.b16 %v799
  %v3585 = vunpack.c.l.b16 %v800
  %v3586 = vunpack.c.l.b16 %v801
  %v3587 = vunpack.c.l.b16 %v802
  %v3588 = vunpack.c.l.b16 %v803
  %v3589 = vunpack.c.l.b16 %v804
  %v3590 = vunpack.c.l.b16 %v805
  %v3591 = vunpack.c.l.b16 %v806
  %v3592 = vunpack.c.l.b16 %v807
  %v3593 = vunpack.c.l.b16 %v808
  %v3594 = vunpack.c.l.b16 %v809
  %v3595 = vunpack.c.l.b16 %v810
  %v3596 = vunpack.c.l.b16 %v811
  %v3597 = vunpack.c.l.b16 %v812
  %v3598 = vunpack.c.l.b16 %v813
  %v3599 = vunpack.c.l.b16 %v814
  %v3600 = vunpack.c.l.b16 %v815
  %v3601 = vunpack.c.l.b16 %v816
  %v3602 = vunpack.c.l.b16 %v817
  %v3603 = vunpack.c.l.b16 %v818
  %v3604 = vunpack.c.l.b16 %v819
  %v3605 = vunpack.c.l.b16 %v820
  %v3606 = vpack.c.b16 %v3207, %v3206
  %v3607 = vpack.c.b16 %v3209, %v3208
  %v3608 = vpack.c.b16 %v3211, %v3210
  %v3609 = vpack.c.b16 %v3213, %v3212
  %v3610 = vpack.c.b16 %v3215, %v3214
  %v3611 = vpack.c.b16 %v3217, %v3216
  %v3612 = vpack.c.b16 %v3219, %v3218
  %v3613 = vpack.c.b16 %v3221, %v3220
  %v3614 = vpack.c.b16 %v3223, %v3222
  %v3615 = vpack.c.b16 %v3225, %v3224
  %v3616 = vpack.c.b16 %v3227, %v3226
  %v3617 = vpack.c.b16 %v3229, %v3228
  %v3618 = vpack.c.b16 %v3231, %v3230
  %v3619 = vpack.c.b16 %v3233, %v3232
  %v3620 = vpack.c.b16 %v3235, %v3234
  %v3621 = vpack.c.b16 %v3237, %v3236
  %v3622 = vpack.c.b16 %v3239, %v3238
  %v3623 = vpack.c.b16 %v3241, %v3240
  %v3624 = vpack.c.b16 %v3243, %v3242
  %v3625 = vpack.c.b16 %v3245, %v3244
  %v3626 = vpack.c.b16 %v3247, %v3246
  %v3627 = vpack.c.b16 %v3249, %v3248
  %v3628 = vpack.c.b16 %v3251, %v3250
  %v3629 = vpack.c.b16 %v3253, %v3252
  %v3630 = vpack.c.b16 %v3255, %v3254
  %v3631 = vpack.c.b16 %v3257, %v3256
  %v3632 = vpack.c.b16 %v3259, %v3258
  %v3633 = vpack.c.b16 %v3261, %v3260
  %v3634 = vpack.c.b16 %v3263, %v3262
  %v3635 = vpack.c.b16 %v3265, %v3264
  %v3636 = vpack.c.b16 %v3267, %v3266
  %v3637 = vpack.c.b16 %v3269, %v3268
  %v3638 = vpack.c.b16 %v3271, %v3270
  %v3639 = vpack.c.b16 %v3273, %v3272
  %v3640 = vpack.c.b16 %v3275, %v3274
  %v3641 = vpack.c.b16 %v3277, %v3276
  %v3642 = vpack.c.b16 %v3279, %v3278
  %v3643 = vpack.c.b16 %v3281, %v3280
  %v3644 = vpack.c.b16 %v3283, %v3282
  %v3645 = vpack.c.b16 %v3285, %v3284
  %v3646 = vpack.c.b16 %v3287, %v3286
  %v3647 = vpack.c.b16 %v3289, %v3288
  %v3648 = vpack.c.b16 %v3291, %v3290
  %v3649 = vpack.c.b16 %v3293, %v3292
  %v3650 = vpack.c.b16 %v3295, %v3294
  %v3651 = vpack.c.b16 %v3297, %v3296
  %v3652 = vpack.c.b16 %v3299, %v3298
  %v3653 = vpack.c.b16 %v3301, %v3300
  %v3654 = vpack.c.b16 %v3303, %v3302
  %v3655 = vpack.c.b16 %v3305, %v3304
  %v3656 = vpack.c.b16 %v3307, %v3306
  %v3657 = vpack.c.b16 %v3309, %v3308
  %v3658 = vpack.c.b16 %v3311, %v3310
  %v3659 = vpack.c.b16 %v3313, %v3312
  %v3660 = vpack.c.b16 %v3315, %v3314
  %v3661 = vpack.c.b16 %v3317, %v3316
  %v3662 = vpack.c.b16 %v3319, %v3318
  %v3663 = vpack.c.b16 %v3321, %v3320
  %v3664 = vpack.c.b16 %v3323, %v3322
  %v3665 = vpack.c.b16 %v3325, %v3324
  %v3666 = vpack.c.b16 %v3327, %v3326
  %v3667 = vpack.c.b16 %v3329, %v3328
  %v3668 = vpack.c.b16 %v3331, %v3330
  %v3669 = vpack.c.b16 %v3333, %v3332
  %v3670 = vpack.c.b16 %v3335, %v3334
  %v3671 = vpack.c.b16 %v3337, %v3336
  %v3672 = vpack.c.b16 %v3339, %v3338
  %v3673 = vpack.c.b16 %v3341, %v3340
  %v3674 = vpack.c.b16 %v3343, %v3342
  %v3675 = vpack.c.b16 %v3345, %v3344
  %v3676 = vpack.c.b16 %v3347, %v3346
  %v3677 = vpack.c.b16 %v3349, %v3348
  %v3678 = vpack.c.b16 %v3351, %v3350
  %v3679 = vpack.c.b16 %v3353, %v3352
  %v3680 = vpack.c.b16 %v3355, %v3354
  %v3681 = vpack.c.b16 %v3357, %v3356
  %v3682 = vpack.c.b16 %v3359, %v3358
  %v3683 = vpack.c.b16 %v3361, %v3360
  %v3684 = vpack.c.b16 %v3363, %v3362
  %v3685 = vpack.c.b16 %v3365, %v3364
  %v3686 = vpack.c.b16 %v3367, %v3366
  %v3687 = vpack.c.b16 %v3369, %v3368
  %v3688 = vpack.c.b16 %v3371, %v3370
  %v3689 = vpack.c.b16 %v3373, %v3372
  %v3690 = vpack.c.b16 %v3375, %v3374
  %v3691 = vpack.c.b16 %v3377, %v3376
  %v3692 = vpack.c.b16 %v3379, %v3378
  %v3693 = vpack.c.b16 %v3381, %v3380
  %v3694 = vpack.c.b16 %v3383, %v3382
  %v3695 = vpack.c.b16 %v3385, %v3384
  %v3696 = vpack.c.b16 %v3387, %v3386
  %v3697 = vpack.c.b16 %v3389, %v3388
  %v3698 = vpack.c.b16 %v3391, %v3390
  %v3699 = vpack.c.b16 %v3393, %v3392
  %v3700 = vpack.c.b16 %v3395, %v3394
  %v3701 = vpack.c.b16 %v3397, %v3396
  %v3702 = vpack.c.b16 %v3399, %v3398
  %v3703 = vpack.c.b16 %v3401, %v3400
  %v3704 = vpack.c.b16 %v3403, %v3402
  %v3705 = vpack.c.b16 %v3405, %v3404
  %v3706 = vpack.c.b16 %v3407, %v3406
  %v3707 = vpack.c.b16 %v3409, %v3408
  %v3708 = vpack.c.b16 %v3411, %v3410
  %v3709 = vpack.c.b16 %v3413, %v3412
  %v3710 = vpack.c.b16 %v3415, %v3414
  %v3711 = vpack.c.b16 %v3417, %v3416
  %v3712 = vpack.c.b16 %v3419, %v3418
  %v3713 = vpack.c.b16 %v3421, %v3420
  %v3714 = vpack.c.b16 %v3423, %v3422
  %v3715 = vpack.c.b16 %v3425, %v3424
  %v3716 = vpack.c.b16 %v3427, %v3426
  %v3717 = vpack.c.b16 %v3429, %v3428
  %v3718 = vpack.c.b16 %v3431, %v3430
  %v3719 = vpack.c.b16 %v3433, %v3432
  %v3720 = vpack.c.b16 %v3435, %v3434
  %v3721 = vpack.c.b16 %v3437, %v3436
  %v3722 = vpack.c.b16 %v3439, %v3438
  %v3723 = vpack.c.b16 %v3441, %v3440
  %v3724 = vpack.c.b16 %v3443, %v3442
  %v3725 = vpack.c.b16 %v3445, %v3444
  %v3726 = vpack.c.b16 %v3447, %v3446
  %v3727 = vpack.c.b16 %v3449, %v3448
  %v3728 = vpack.c.b16 %v3451, %v3450
  %v3729 = vpack.c.b16 %v3453, %v3452
  %v3730 = vpack.c.b16 %v3455, %v3454
  %v3731 = vpack.c.b16 %v3457, %v3456
  %v3732 = vpack.c.b16 %v3459, %v3458
  %v3733 = vpack.c.b16 %v3461, %v3460
  %v3734 = vpack.c.b16 %v3463, %v3462
  %v3735 = vpack.c.b16 %v3465, %v3464
  %v3736 = vpack.c.b16 %v3467, %v3466
  %v3737 = vpack.c.b16 %v3469, %v3468
  %v3738 = vpack.c.b16 %v3471, %v3470
  %v3739 = vpack.c.b16 %v3473, %v3472
  %v3740 = vpack.c.b16 %v3475, %v3474
  %v3741 = vpack.c.b16 %v3477, %v3476
  %v3742 = vpack.c.b16 %v3479, %v3478
  %v3743 = vpack.c.b16 %v3481, %v3480
  %v3744 = vpack.c.b16 %v3483, %v3482
  %v3745 = vpack.c.b16 %v3485, %v3484
  %v3746 = vpack.c.b16 %v3487, %v3486
  %v3747 = vpack.c.b16 %v3489, %v3488
  %v3748 = vpack.c.b16 %v3491, %v3490
  %v3749 = vpack.c.b16 %v3493, %v3492
  %v3750 = vpack.c.b16 %v3495, %v3494
  %v3751 = vpack.c.b16 %v3497, %v3496
  %v3752 = vpack.c.b16 %v3499, %v3498
  %v3753 = vpack.c.b16 %v3501, %v3500
  %v3754 = vpack.c.b16 %v3503, %v3502
  %v3755 = vpack.c.b16 %v3505, %v3504
  %v3756 = vpack.c.b16 %v3507, %v3506
  %v3757 = vpack.c.b16 %v3509, %v3508
  %v3758 = vpack.c.b16 %v3511, %v3510
  %v3759 = vpack.c.b16 %v3513, %v3512
  %v3760 = vpack.c.b16 %v3515, %v3514
  %v3761 = vpack.c.b16 %v3517, %v3516
  %v3762 = vpack.c.b16 %v3519, %v3518
  %v3763 = vpack.c.b16 %v3521, %v3520
  %v3764 = vpack.c.b16 %v3523, %v3522
  %v3765 = vpack.c.b16 %v3525, %v3524
  %v3766 = vpack.c.b16 %v3527, %v3526
  %v3767 = vpack.c.b16 %v3529, %v3528
  %v3768 = vpack.c.b16 %v3531, %v3530
  %v3769 = vpack.c.b16 %v3533, %v3532
  %v3770 = vpack.c.b16 %v3535, %v3534
  %v3771 = vpack.c.b16 %v3537, %v3536
  %v3772 = vpack.c.b16 %v3539, %v3538
  %v3773 = vpack.c.b16 %v3541, %v3540
  %v3774 = vpack.c.b16 %v3543, %v3542
  %v3775 = vpack.c.b16 %v3545, %v3544
  %v3776 = vpack.c.b16 %v3547, %v3546
  %v3777 = vpack.c.b16 %v3549, %v3548
  %v3778 = vpack.c.b16 %v3551, %v3550
  %v3779 = vpack.c.b16 %v3553, %v3552
  %v3780 = vpack.c.b16 %v3555, %v3554
  %v3781 = vpack.c.b16 %v3557, %v3556
  %v3782 = vpack.c.b16 %v3559, %v3558
  %v3783 = vpack.c.b16 %v3561, %v3560
  %v3784 = vpack.c.b16 %v3563, %v3562
  %v3785 = vpack.c.b16 %v3565, %v3564
  %v3786 = vpack.c.b16 %v3567, %v3566
  %v3787 = vpack.c.b16 %v3569, %v3568
  %v3788 = vpack.c.b16 %v3571, %v3570
  %v3789 = vpack.c.b16 %v3573, %v3572
  %v3790 = vpack.c.b16 %v3575, %v3574
  %v3791 = vpack.c.b16 %v3577, %v3576
  %v3792 = vpack.c.b16 %v3579, %v3578
  %v3793 = vpack.c.b16 %v3581, %v3580
  %v3794 = vpack.c.b16 %v3583, %v3582
  %v3795 = vpack.c.b16 %v3585, %v3584
  %v3796 = vpack.c.b16 %v3587, %v3586
  %v3797 = vpack.c.b16 %v3589, %v3588
  %v3798 = vpack.c.b16 %v3591, %v3590
  %v3799 = vpack.c.b16 %v3593, %v3592
  %v3800 = vpack.c.b16 %v3595, %v3594
  %v3801 = vpack.c.b16 %v3597, %v3596
  %v3802 = vpack.c.b16 %v3599, %v3598
  %v3803 = vpack.c.b16 %v3601, %v3600
  %v3804 = vpack.c.b16 %v3603, %v3602
  %v3805 = vpack.c.b16 %v3605, %v3604
  %4006 = vmatprep.subr.bf16.mxu0 0
  %4007 = vmatpush1.bf16.msra.mxu0 %v3606
  %4008 = vmatprep.subr.bf16.mxu0 0
  %4009 = vmatpush1.bf16.msra.mxu0 %v3607
  %4010 = vmatprep.subr.bf16.mxu0 0
  %4011 = vmatpush1.bf16.msra.mxu0 %v3608
  %4012 = vmatprep.subr.bf16.mxu0 0
  %4013 = vmatpush1.bf16.msra.mxu0 %v3609
  %4014 = vmatprep.subr.bf16.mxu0 0
  %4015 = vmatpush1.bf16.msra.mxu0 %v3610
  %4016 = vmatprep.subr.bf16.mxu0 0
  %4017 = vmatpush1.bf16.msra.mxu0 %v3611
  %4018 = vmatprep.subr.bf16.mxu0 0
  %4019 = vmatpush1.bf16.msra.mxu0 %v3612
  %4020 = vmatprep.subr.bf16.mxu0 0
  %4021 = vmatpush1.bf16.msra.mxu0 %v3613
  %4022 = vmatprep.subr.bf16.mxu0 0
  %4023 = vmatpush1.bf16.msra.mxu0 %v3614
  %4024 = vmatprep.subr.bf16.mxu0 0
  %4025 = vmatpush1.bf16.msra.mxu0 %v3615
  %4026 = vmatprep.subr.bf16.mxu0 0
  %4027 = vmatpush1.bf16.msra.mxu0 %v3616
  %4028 = vmatprep.subr.bf16.mxu0 0
  %4029 = vmatpush1.bf16.msra.mxu0 %v3617
  %4030 = vmatprep.subr.bf16.mxu0 0
  %4031 = vmatpush1.bf16.msra.mxu0 %v3618
  %4032 = vmatprep.subr.bf16.mxu0 0
  %4033 = vmatpush1.bf16.msra.mxu0 %v3619
  %4034 = vmatprep.subr.bf16.mxu0 0
  %4035 = vmatpush1.bf16.msra.mxu0 %v3620
  %4036 = vmatprep.subr.bf16.mxu0 0
  %4037 = vmatpush1.bf16.msra.mxu0 %v3621
  %4038 = vmatprep.mubr.bf16.mxu0 %v2007
  %4039 = vmatmul.mubr.bf16.gmra.mrb[0].mxu0 %v2006
  %v4040 = vpop.f32.mrb[0].mxu0
  %v4041 = vadd.f32 %v826, %v4040
  %v4042 = vpop.f32.mrb[0].mxu0
  %v4043 = vpop.f32.mrb[0].mxu0
  %v4044 = vadd.f32 %v826, %v4043
  %v4045 = vpop.f32.mrb[0].mxu0
  %4046 = vmatprep.mubr.bf16.mxu0 %v2032
  %4047 = vmatmul.mubr.bf16.gmra.mrb[0].mxu0 %v2031
  %v4048 = vpop.f32.mrb[0].mxu0
  %v4049 = vadd.f32 %v826, %v4048
  %v4050 = vpop.f32.mrb[0].mxu0
  %v4051 = vpop.f32.mrb[0].mxu0
  %v4052 = vadd.f32 %v826, %v4051
  %v4053 = vpop.f32.mrb[0].mxu0
  %4054 = vmatprep.mubr.bf16.mxu0 %v2057
  %4055 = vmatmul.mubr.bf16.gmra.mrb[0].mxu0 %v2056
  %v4056 = vpop.f32.mrb[0].mxu0
  %v4057 = vadd.f32 %v826, %v4056
  %v4058 = vpop.f32.mrb[0].mxu0
  %v4059 = vpop.f32.mrb[0].mxu0
  %v4060 = vadd.f32 %v826, %v4059
  %v4061 = vpop.f32.mrb[0].mxu0
  %4062 = vmatprep.mubr.bf16.mxu0 %v2082
  %4063 = vmatmul.mubr.bf16.gmra.mrb[0].mxu0 %v2081
  %v4064 = vpop.f32.mrb[0].mxu0
  %v4065 = vadd.f32 %v826, %v4064
  %v4066 = vpop.f32.mrb[0].mxu0
  %v4067 = vpop.f32.mrb[0].mxu0
  %v4068 = vadd.f32 %v826, %v4067
  %v4069 = vpop.f32.mrb[0].mxu0
  %4070 = vmatprep.mubr.bf16.mxu0 %v2107
  %4071 = vmatmul.mubr.bf16.gmra.mrb[0].mxu0 %v2106
  %v4072 = vpop.f32.mrb[0].mxu0
  %v4073 = vadd.f32 %v826, %v4072
  %v4074 = vpop.f32.mrb[0].mxu0
  %v4075 = vpop.f32.mrb[0].mxu0
  %v4076 = vadd.f32 %v826, %v4075
  %v4077 = vpop.f32.mrb[0].mxu0
  %4078 = vmatprep.mubr.bf16.mxu0 %v2132
  %4079 = vmatmul.mubr.bf16.gmra.mrb[0].mxu0 %v2131
  %v4080 = vpop.f32.mrb[0].mxu0
  %v4081 = vadd.f32 %v826, %v4080
  %v4082 = vpop.f32.mrb[0].mxu0
  %v4083 = vpop.f32.mrb[0].mxu0
  %v4084 = vadd.f32 %v826, %v4083
  %v4085 = vpop.f32.mrb[0].mxu0
  %4086 = vmatprep.mubr.bf16.mxu0 %v2157
  %4087 = vmatmul.mubr.bf16.gmra.mrb[0].mxu0 %v2156
  %v4088 = vpop.f32.mrb[0].mxu0
  %v4089 = vadd.f32 %v826, %v4088
  %v4090 = vpop.f32.mrb[0].mxu0
  %v4091 = vpop.f32.mrb[0].mxu0
  %v4092 = vadd.f32 %v826, %v4091
  %v4093 = vpop.f32.mrb[0].mxu0
  %4094 = vmatprep.mubr.bf16.mxu0 %v2182
  %4095 = vmatmul.mubr.bf16.gmra.mrb[0].mxu0 %v2181
  %v4096 = vpop.f32.mrb[0].mxu0
  %v4097 = vadd.f32 %v826, %v4096
  %v4098 = vpop.f32.mrb[0].mxu0
  %v4099 = vpop.f32.mrb[0].mxu0
  %v4100 = vadd.f32 %v826, %v4099
  %v4101 = vpop.f32.mrb[0].mxu0
  %4102 = vmatprep.mubr.bf16.mxu0 %v2207
  %4103 = vmatmul.mubr.bf16.gmra.mrb[0].mxu0 %v2206
  %v4104 = vpop.f32.mrb[0].mxu0
  %v4105 = vadd.f32 %v826, %v4104
  %v4106 = vpop.f32.mrb[0].mxu0
  %v4107 = vpop.f32.mrb[0].mxu0
  %v4108 = vadd.f32 %v826, %v4107
  %v4109 = vpop.f32.mrb[0].mxu0
  %4110 = vmatprep.mubr.bf16.mxu0 %v2232
  %4111 = vmatmul.mubr.bf16.gmra.mrb[0].mxu0 %v2231
  %v4112 = vpop.f32.mrb[0].mxu0
  %v4113 = vadd.f32 %v826, %v4112
  %v4114 = vpop.f32.mrb[0].mxu0
  %v4115 = vpop.f32.mrb[0].mxu0
  %v4116 = vadd.f32 %v826, %v4115
  %v4117 = vpop.f32.mrb[0].mxu0
  %4118 = vmatprep.mubr.bf16.mxu0 %v2257
  %4119 = vmatmul.mubr.bf16.gmra.mrb[0].mxu0 %v2256
  %v4120 = vpop.f32.mrb[0].mxu0
  %v4121 = vadd.f32 %v826, %v4120
  %v4122 = vpop.f32.mrb[0].mxu0
  %v4123 = vpop.f32.mrb[0].mxu0
  %v4124 = vadd.f32 %v826, %v4123
  %v4125 = vpop.f32.mrb[0].mxu0
  %4126 = vmatprep.mubr.bf16.mxu0 %v2282
  %4127 = vmatmul.mubr.bf16.gmra.mrb[0].mxu0 %v2281
  %v4128 = vpop.f32.mrb[0].mxu0
  %v4129 = vadd.f32 %v826, %v4128
  %v4130 = vpop.f32.mrb[0].mxu0
  %v4131 = vpop.f32.mrb[0].mxu0
  %v4132 = vadd.f32 %v826, %v4131
  %v4133 = vpop.f32.mrb[0].mxu0
  %4134 = vmatprep.mubr.bf16.mxu0 %v2307
  %4135 = vmatmul.mubr.bf16.gmra.mrb[0].mxu0 %v2306
  %v4136 = vpop.f32.mrb[0].mxu0
  %v4137 = vadd.f32 %v826, %v4136
  %v4138 = vpop.f32.mrb[0].mxu0
  %v4139 = vpop.f32.mrb[0].mxu0
  %v4140 = vadd.f32 %v826, %v4139
  %v4141 = vpop.f32.mrb[0].mxu0
  %4142 = vmatprep.mubr.bf16.mxu0 %v2332
  %4143 = vmatmul.mubr.bf16.gmra.mrb[0].mxu0 %v2331
  %v4144 = vpop.f32.mrb[0].mxu0
  %v4145 = vadd.f32 %v826, %v4144
  %v4146 = vpop.f32.mrb[0].mxu0
  %v4147 = vpop.f32.mrb[0].mxu0
  %v4148 = vadd.f32 %v826, %v4147
  %v4149 = vpop.f32.mrb[0].mxu0
  %4150 = vmatprep.mubr.bf16.mxu0 %v2357
  %4151 = vmatmul.mubr.bf16.gmra.mrb[0].mxu0 %v2356
  %v4152 = vpop.f32.mrb[0].mxu0
  %v4153 = vadd.f32 %v826, %v4152
  %v4154 = vpop.f32.mrb[0].mxu0
  %v4155 = vpop.f32.mrb[0].mxu0
  %v4156 = vadd.f32 %v826, %v4155
  %v4157 = vpop.f32.mrb[0].mxu0
  %4158 = vmatprep.mubr.bf16.mxu0 %v2382
  %4159 = vmatmul.mubr.bf16.gmra.mrb[0].mxu0 %v2381
  %v4160 = vpop.f32.mrb[0].mxu0
  %v4161 = vadd.f32 %v826, %v4160
  %v4162 = vpop.f32.mrb[0].mxu0
  %v4163 = vpop.f32.mrb[0].mxu0
  %v4164 = vpop.f32.mrb[0].mxu0
  %4165 = vdwg.mxu0
  %4166 = vmatprep.subr.bf16.mxu0 0
  %4167 = vmatpush1.bf16.msra.mxu0 %v3622
  %4168 = vmatprep.subr.bf16.mxu0 0
  %4169 = vmatpush1.bf16.msra.mxu0 %v3623
  %4170 = vmatprep.subr.bf16.mxu0 0
  %4171 = vmatpush1.bf16.msra.mxu0 %v3624
  %4172 = vmatprep.subr.bf16.mxu0 0
  %4173 = vmatpush1.bf16.msra.mxu0 %v3625
  %4174 = vmatprep.subr.bf16.mxu0 0
  %4175 = vmatpush1.bf16.msra.mxu0 %v3626
  %4176 = vmatprep.subr.bf16.mxu0 0
  %4177 = vmatpush1.bf16.msra.mxu0 %v3627
  %4178 = vmatprep.subr.bf16.mxu0 0
  %4179 = vmatpush1.bf16.msra.mxu0 %v3628
  %4180 = vmatprep.subr.bf16.mxu0 0
  %4181 = vmatpush1.bf16.msra.mxu0 %v3629
  %4182 = vmatprep.subr.bf16.mxu0 0
  %4183 = vmatpush1.bf16.msra.mxu0 %v3630
  %4184 = vmatprep.subr.bf16.mxu0 0
  %4185 = vmatpush1.bf16.msra.mxu0 %v3631
  %4186 = vmatprep.subr.bf16.mxu0 0
  %4187 = vmatpush1.bf16.msra.mxu0 %v3632
  %4188 = vmatprep.subr.bf16.mxu0 0
  %4189 = vmatpush1.bf16.msra.mxu0 %v3633
  %4190 = vmatprep.subr.bf16.mxu0 0
  %4191 = vmatpush1.bf16.msra.mxu0 %v3634
  %4192 = vmatprep.subr.bf16.mxu0 0
  %4193 = vmatpush1.bf16.msra.mxu0 %v3635
  %4194 = vmatprep.subr.bf16.mxu0 0
  %4195 = vmatpush1.bf16.msra.mxu0 %v3636
  %4196 = vmatprep.subr.bf16.mxu0 0
  %4197 = vmatpush1.bf16.msra.mxu0 %v3637
  %4198 = vmatprep.mubr.bf16.mxu0 %v2009
  %4199 = vmatmul.mubr.bf16.gmra.mrb[0].mxu0 %v2008
  %v4200 = vpop.f32.mrb[0].mxu0
  %v4201 = vadd.f32 %v4041, %v4200
  %v4202 = vpop.f32.mrb[0].mxu0
  %v4203 = vpop.f32.mrb[0].mxu0
  %v4204 = vadd.f32 %v4044, %v4203
  %v4205 = vpop.f32.mrb[0].mxu0
  %4206 = vmatprep.mubr.bf16.mxu0 %v2034
  %4207 = vmatmul.mubr.bf16.gmra.mrb[0].mxu0 %v2033
  %v4208 = vpop.f32.mrb[0].mxu0
  %v4209 = vadd.f32 %v4049, %v4208
  %v4210 = vpop.f32.mrb[0].mxu0
  %v4211 = vpop.f32.mrb[0].mxu0
  %v4212 = vadd.f32 %v4052, %v4211
  %v4213 = vpop.f32.mrb[0].mxu0
  %4214 = vmatprep.mubr.bf16.mxu0 %v2059
  %4215 = vmatmul.mubr.bf16.gmra.mrb[0].mxu0 %v2058
  %v4216 = vpop.f32.mrb[0].mxu0
  %v4217 = vadd.f32 %v4057, %v4216
  %v4218 = vpop.f32.mrb[0].mxu0
  %v4219 = vpop.f32.mrb[0].mxu0
  %v4220 = vadd.f32 %v4060, %v4219
  %v4221 = vpop.f32.mrb[0].mxu0
  %4222 = vmatprep.mubr.bf16.mxu0 %v2084
  %4223 = vmatmul.mubr.bf16.gmra.mrb[0].mxu0 %v2083
  %v4224 = vpop.f32.mrb[0].mxu0
  %v4225 = vadd.f32 %v4065, %v4224
  %v4226 = vpop.f32.mrb[0].mxu0
  %v4227 = vpop.f32.mrb[0].mxu0
  %v4228 = vadd.f32 %v4068, %v4227
  %v4229 = vpop.f32.mrb[0].mxu0
  %4230 = vmatprep.mubr.bf16.mxu0 %v2109
  %4231 = vmatmul.mubr.bf16.gmra.mrb[0].mxu0 %v2108
  %v4232 = vpop.f32.mrb[0].mxu0
  %v4233 = vadd.f32 %v4073, %v4232
  %v4234 = vpop.f32.mrb[0].mxu0
  %v4235 = vpop.f32.mrb[0].mxu0
  %v4236 = vadd.f32 %v4076, %v4235
  %v4237 = vpop.f32.mrb[0].mxu0
  %4238 = vmatprep.mubr.bf16.mxu0 %v2134
  %4239 = vmatmul.mubr.bf16.gmra.mrb[0].mxu0 %v2133
  %v4240 = vpop.f32.mrb[0].mxu0
  %v4241 = vadd.f32 %v4081, %v4240
  %v4242 = vpop.f32.mrb[0].mxu0
  %v4243 = vpop.f32.mrb[0].mxu0
  %v4244 = vadd.f32 %v4084, %v4243
  %v4245 = vpop.f32.mrb[0].mxu0
  %4246 = vmatprep.mubr.bf16.mxu0 %v2159
  %4247 = vmatmul.mubr.bf16.gmra.mrb[0].mxu0 %v2158
  %v4248 = vpop.f32.mrb[0].mxu0
  %v4249 = vadd.f32 %v4089, %v4248
  %v4250 = vpop.f32.mrb[0].mxu0
  %v4251 = vpop.f32.mrb[0].mxu0
  %v4252 = vadd.f32 %v4092, %v4251
  %v4253 = vpop.f32.mrb[0].mxu0
  %4254 = vmatprep.mubr.bf16.mxu0 %v2184
  %4255 = vmatmul.mubr.bf16.gmra.mrb[0].mxu0 %v2183
  %v4256 = vpop.f32.mrb[0].mxu0
  %v4257 = vadd.f32 %v4097, %v4256
  %v4258 = vpop.f32.mrb[0].mxu0
  %v4259 = vpop.f32.mrb[0].mxu0
  %v4260 = vadd.f32 %v4100, %v4259
  %v4261 = vpop.f32.mrb[0].mxu0
  %4262 = vmatprep.mubr.bf16.mxu0 %v2209
  %4263 = vmatmul.mubr.bf16.gmra.mrb[0].mxu0 %v2208
  %v4264 = vpop.f32.mrb[0].mxu0
  %v4265 = vadd.f32 %v4105, %v4264
  %v4266 = vpop.f32.mrb[0].mxu0
  %v4267 = vpop.f32.mrb[0].mxu0
  %v4268 = vadd.f32 %v4108, %v4267
  %v4269 = vpop.f32.mrb[0].mxu0
  %4270 = vmatprep.mubr.bf16.mxu0 %v2234
  %4271 = vmatmul.mubr.bf16.gmra.mrb[0].mxu0 %v2233
  %v4272 = vpop.f32.mrb[0].mxu0
  %v4273 = vadd.f32 %v4113, %v4272
  %v4274 = vpop.f32.mrb[0].mxu0
  %v4275 = vpop.f32.mrb[0].mxu0
  %v4276 = vadd.f32 %v4116, %v4275
  %v4277 = vpop.f32.mrb[0].mxu0
  %4278 = vmatprep.mubr.bf16.mxu0 %v2259
  %4279 = vmatmul.mubr.bf16.gmra.mrb[0].mxu0 %v2258
  %v4280 = vpop.f32.mrb[0].mxu0
  %v4281 = vadd.f32 %v4121, %v4280
  %v4282 = vpop.f32.mrb[0].mxu0
  %v4283 = vpop.f32.mrb[0].mxu0
  %v4284 = vadd.f32 %v4124, %v4283
  %v4285 = vpop.f32.mrb[0].mxu0
  %4286 = vmatprep.mubr.bf16.mxu0 %v2284
  %4287 = vmatmul.mubr.bf16.gmra.mrb[0].mxu0 %v2283
  %v4288 = vpop.f32.mrb[0].mxu0
  %v4289 = vadd.f32 %v4129, %v4288
  %v4290 = vpop.f32.mrb[0].mxu0
  %v4291 = vpop.f32.mrb[0].mxu0
  %v4292 = vadd.f32 %v4132, %v4291
  %v4293 = vpop.f32.mrb[0].mxu0
  %4294 = vmatprep.mubr.bf16.mxu0 %v2309
  %4295 = vmatmul.mubr.bf16.gmra.mrb[0].mxu0 %v2308
  %v4296 = vpop.f32.mrb[0].mxu0
  %v4297 = vadd.f32 %v4137, %v4296
  %v4298 = vpop.f32.mrb[0].mxu0
  %v4299 = vpop.f32.mrb[0].mxu0
  %v4300 = vadd.f32 %v4140, %v4299
  %v4301 = vpop.f32.mrb[0].mxu0
  %4302 = vmatprep.mubr.bf16.mxu0 %v2334
  %4303 = vmatmul.mubr.bf16.gmra.mrb[0].mxu0 %v2333
  %v4304 = vpop.f32.mrb[0].mxu0
  %v4305 = vadd.f32 %v4145, %v4304
  %v4306 = vpop.f32.mrb[0].mxu0
  %v4307 = vpop.f32.mrb[0].mxu0
  %v4308 = vadd.f32 %v4148, %v4307
  %v4309 = vpop.f32.mrb[0].mxu0
  %4310 = vmatprep.mubr.bf16.mxu0 %v2359
  %4311 = vmatmul.mubr.bf16.gmra.mrb[0].mxu0 %v2358
  %v4312 = vpop.f32.mrb[0].mxu0
  %v4313 = vadd.f32 %v4153, %v4312
  %v4314 = vpop.f32.mrb[0].mxu0
  %v4315 = vpop.f32.mrb[0].mxu0
  %v4316 = vadd.f32 %v4156, %v4315
  %v4317 = vpop.f32.mrb[0].mxu0
  %4318 = vmatprep.mubr.bf16.mxu0 %v2384
  %4319 = vmatmul.mubr.bf16.gmra.mrb[0].mxu0 %v2383
  %v4320 = vpop.f32.mrb[0].mxu0
  %v4321 = vadd.f32 %v4161, %v4320
  %v4322 = vpop.f32.mrb[0].mxu0
  %v4323 = vpop.f32.mrb[0].mxu0
  %v4324 = vpop.f32.mrb[0].mxu0
  %4325 = vdwg.mxu0
  %4326 = vmatprep.subr.bf16.mxu0 0
  %4327 = vmatpush1.bf16.msra.mxu0 %v3638
  %4328 = vmatprep.subr.bf16.mxu0 0
  %4329 = vmatpush1.bf16.msra.mxu0 %v3639
  %4330 = vmatprep.subr.bf16.mxu0 0
  %4331 = vmatpush1.bf16.msra.mxu0 %v3640
  %4332 = vmatprep.subr.bf16.mxu0 0
  %4333 = vmatpush1.bf16.msra.mxu0 %v3641
  %4334 = vmatprep.subr.bf16.mxu0 0
  %4335 = vmatpush1.bf16.msra.mxu0 %v3642
  %4336 = vmatprep.subr.bf16.mxu0 0
  %4337 = vmatpush1.bf16.msra.mxu0 %v3643
  %4338 = vmatprep.subr.bf16.mxu0 0
  %4339 = vmatpush1.bf16.msra.mxu0 %v3644
  %4340 = vmatprep.subr.bf16.mxu0 0
  %4341 = vmatpush1.bf16.msra.mxu0 %v3645
  %4342 = vmatprep.subr.bf16.mxu0 0
  %4343 = vmatpush1.bf16.msra.mxu0 %v3646
  %4344 = vmatprep.subr.bf16.mxu0 0
  %4345 = vmatpush1.bf16.msra.mxu0 %v3647
  %4346 = vmatprep.subr.bf16.mxu0 0
  %4347 = vmatpush1.bf16.msra.mxu0 %v3648
  %4348 = vmatprep.subr.bf16.mxu0 0
  %4349 = vmatpush1.bf16.msra.mxu0 %v3649
  %4350 = vmatprep.subr.bf16.mxu0 0
  %4351 = vmatpush1.bf16.msra.mxu0 %v3650
  %4352 = vmatprep.subr.bf16.mxu0 0
  %4353 = vmatpush1.bf16.msra.mxu0 %v3651
  %4354 = vmatprep.subr.bf16.mxu0 0
  %4355 = vmatpush1.bf16.msra.mxu0 %v3652
  %4356 = vmatprep.subr.bf16.mxu0 0
  %4357 = vmatpush1.bf16.msra.mxu0 %v3653
  %4358 = vmatprep.mubr.bf16.mxu0 %v2011
  %4359 = vmatmul.mubr.bf16.gmra.mrb[0].mxu0 %v2010
  %v4360 = vpop.f32.mrb[0].mxu0
  %v4361 = vadd.f32 %v4201, %v4360
  %v4362 = vpop.f32.mrb[0].mxu0
  %v4363 = vpop.f32.mrb[0].mxu0
  %v4364 = vadd.f32 %v4204, %v4363
  %v4365 = vpop.f32.mrb[0].mxu0
  %4366 = vmatprep.mubr.bf16.mxu0 %v2036
  %4367 = vmatmul.mubr.bf16.gmra.mrb[0].mxu0 %v2035
  %v4368 = vpop.f32.mrb[0].mxu0
  %v4369 = vadd.f32 %v4209, %v4368
  %v4370 = vpop.f32.mrb[0].mxu0
  %v4371 = vpop.f32.mrb[0].mxu0
  %v4372 = vadd.f32 %v4212, %v4371
  %v4373 = vpop.f32.mrb[0].mxu0
  %4374 = vmatprep.mubr.bf16.mxu0 %v2061
  %4375 = vmatmul.mubr.bf16.gmra.mrb[0].mxu0 %v2060
  %v4376 = vpop.f32.mrb[0].mxu0
  %v4377 = vadd.f32 %v4217, %v4376
  %v4378 = vpop.f32.mrb[0].mxu0
  %v4379 = vpop.f32.mrb[0].mxu0
  %v4380 = vadd.f32 %v4220, %v4379
  %v4381 = vpop.f32.mrb[0].mxu0
  %4382 = vmatprep.mubr.bf16.mxu0 %v2086
  %4383 = vmatmul.mubr.bf16.gmra.mrb[0].mxu0 %v2085
  %v4384 = vpop.f32.mrb[0].mxu0
  %v4385 = vadd.f32 %v4225, %v4384
  %v4386 = vpop.f32.mrb[0].mxu0
  %v4387 = vpop.f32.mrb[0].mxu0
  %v4388 = vadd.f32 %v4228, %v4387
  %v4389 = vpop.f32.mrb[0].mxu0
  %4390 = vmatprep.mubr.bf16.mxu0 %v2111
  %4391 = vmatmul.mubr.bf16.gmra.mrb[0].mxu0 %v2110
  %v4392 = vpop.f32.mrb[0].mxu0
  %v4393 = vadd.f32 %v4233, %v4392
  %v4394 = vpop.f32.mrb[0].mxu0
  %v4395 = vpop.f32.mrb[0].mxu0
  %v4396 = vadd.f32 %v4236, %v4395
  %v4397 = vpop.f32.mrb[0].mxu0
  %4398 = vmatprep.mubr.bf16.mxu0 %v2136
  %4399 = vmatmul.mubr.bf16.gmra.mrb[0].mxu0 %v2135
  %v4400 = vpop.f32.mrb[0].mxu0
  %v4401 = vadd.f32 %v4241, %v4400
  %v4402 = vpop.f32.mrb[0].mxu0
  %v4403 = vpop.f32.mrb[0].mxu0
  %v4404 = vadd.f32 %v4244, %v4403
  %v4405 = vpop.f32.mrb[0].mxu0
  %4406 = vmatprep.mubr.bf16.mxu0 %v2161
  %4407 = vmatmul.mubr.bf16.gmra.mrb[0].mxu0 %v2160
  %v4408 = vpop.f32.mrb[0].mxu0
  %v4409 = vadd.f32 %v4249, %v4408
  %v4410 = vpop.f32.mrb[0].mxu0
  %v4411 = vpop.f32.mrb[0].mxu0
  %v4412 = vadd.f32 %v4252, %v4411
  %v4413 = vpop.f32.mrb[0].mxu0
  %4414 = vmatprep.mubr.bf16.mxu0 %v2186
  %4415 = vmatmul.mubr.bf16.gmra.mrb[0].mxu0 %v2185
  %v4416 = vpop.f32.mrb[0].mxu0
  %v4417 = vadd.f32 %v4257, %v4416
  %v4418 = vpop.f32.mrb[0].mxu0
  %v4419 = vpop.f32.mrb[0].mxu0
  %v4420 = vadd.f32 %v4260, %v4419
  %v4421 = vpop.f32.mrb[0].mxu0
  %4422 = vmatprep.mubr.bf16.mxu0 %v2211
  %4423 = vmatmul.mubr.bf16.gmra.mrb[0].mxu0 %v2210
  %v4424 = vpop.f32.mrb[0].mxu0
  %v4425 = vadd.f32 %v4265, %v4424
  %v4426 = vpop.f32.mrb[0].mxu0
  %v4427 = vpop.f32.mrb[0].mxu0
  %v4428 = vadd.f32 %v4268, %v4427
  %v4429 = vpop.f32.mrb[0].mxu0
  %4430 = vmatprep.mubr.bf16.mxu0 %v2236
  %4431 = vmatmul.mubr.bf16.gmra.mrb[0].mxu0 %v2235
  %v4432 = vpop.f32.mrb[0].mxu0
  %v4433 = vadd.f32 %v4273, %v4432
  %v4434 = vpop.f32.mrb[0].mxu0
  %v4435 = vpop.f32.mrb[0].mxu0
  %v4436 = vadd.f32 %v4276, %v4435
  %v4437 = vpop.f32.mrb[0].mxu0
  %4438 = vmatprep.mubr.bf16.mxu0 %v2261
  %4439 = vmatmul.mubr.bf16.gmra.mrb[0].mxu0 %v2260
  %v4440 = vpop.f32.mrb[0].mxu0
  %v4441 = vadd.f32 %v4281, %v4440
  %v4442 = vpop.f32.mrb[0].mxu0
  %v4443 = vpop.f32.mrb[0].mxu0
  %v4444 = vadd.f32 %v4284, %v4443
  %v4445 = vpop.f32.mrb[0].mxu0
  %4446 = vmatprep.mubr.bf16.mxu0 %v2286
  %4447 = vmatmul.mubr.bf16.gmra.mrb[0].mxu0 %v2285
  %v4448 = vpop.f32.mrb[0].mxu0
  %v4449 = vadd.f32 %v4289, %v4448
  %v4450 = vpop.f32.mrb[0].mxu0
  %v4451 = vpop.f32.mrb[0].mxu0
  %v4452 = vadd.f32 %v4292, %v4451
  %v4453 = vpop.f32.mrb[0].mxu0
  %4454 = vmatprep.mubr.bf16.mxu0 %v2311
  %4455 = vmatmul.mubr.bf16.gmra.mrb[0].mxu0 %v2310
  %v4456 = vpop.f32.mrb[0].mxu0
  %v4457 = vadd.f32 %v4297, %v4456
  %v4458 = vpop.f32.mrb[0].mxu0
  %v4459 = vpop.f32.mrb[0].mxu0
  %v4460 = vadd.f32 %v4300, %v4459
  %v4461 = vpop.f32.mrb[0].mxu0
  %4462 = vmatprep.mubr.bf16.mxu0 %v2336
  %4463 = vmatmul.mubr.bf16.gmra.mrb[0].mxu0 %v2335
  %v4464 = vpop.f32.mrb[0].mxu0
  %v4465 = vadd.f32 %v4305, %v4464
  %v4466 = vpop.f32.mrb[0].mxu0
  %v4467 = vpop.f32.mrb[0].mxu0
  %v4468 = vadd.f32 %v4308, %v4467
  %v4469 = vpop.f32.mrb[0].mxu0
  %4470 = vmatprep.mubr.bf16.mxu0 %v2361
  %4471 = vmatmul.mubr.bf16.gmra.mrb[0].mxu0 %v2360
  %v4472 = vpop.f32.mrb[0].mxu0
  %v4473 = vadd.f32 %v4313, %v4472
  %v4474 = vpop.f32.mrb[0].mxu0
  %v4475 = vpop.f32.mrb[0].mxu0
  %v4476 = vadd.f32 %v4316, %v4475
  %v4477 = vpop.f32.mrb[0].mxu0
  %4478 = vmatprep.mubr.bf16.mxu0 %v2386
  %4479 = vmatmul.mubr.bf16.gmra.mrb[0].mxu0 %v2385
  %v4480 = vpop.f32.mrb[0].mxu0
  %v4481 = vadd.f32 %v4321, %v4480
  %v4482 = vpop.f32.mrb[0].mxu0
  %v4483 = vpop.f32.mrb[0].mxu0
  %v4484 = vpop.f32.mrb[0].mxu0
  %4485 = vdwg.mxu0
  %4486 = vmatprep.subr.bf16.mxu0 0
  %4487 = vmatpush1.bf16.msra.mxu0 %v3654
  %4488 = vmatprep.subr.bf16.mxu0 0
  %4489 = vmatpush1.bf16.msra.mxu0 %v3655
  %4490 = vmatprep.subr.bf16.mxu0 0
  %4491 = vmatpush1.bf16.msra.mxu0 %v3656
  %4492 = vmatprep.subr.bf16.mxu0 0
  %4493 = vmatpush1.bf16.msra.mxu0 %v3657
  %4494 = vmatprep.subr.bf16.mxu0 0
  %4495 = vmatpush1.bf16.msra.mxu0 %v3658
  %4496 = vmatprep.subr.bf16.mxu0 0
  %4497 = vmatpush1.bf16.msra.mxu0 %v3659
  %4498 = vmatprep.subr.bf16.mxu0 0
  %4499 = vmatpush1.bf16.msra.mxu0 %v3660
  %4500 = vmatprep.subr.bf16.mxu0 0
  %4501 = vmatpush1.bf16.msra.mxu0 %v3661
  %4502 = vmatprep.subr.bf16.mxu0 0
  %4503 = vmatpush1.bf16.msra.mxu0 %v3662
  %4504 = vmatprep.subr.bf16.mxu0 0
  %4505 = vmatpush1.bf16.msra.mxu0 %v3663
  %4506 = vmatprep.subr.bf16.mxu0 0
  %4507 = vmatpush1.bf16.msra.mxu0 %v3664
  %4508 = vmatprep.subr.bf16.mxu0 0
  %4509 = vmatpush1.bf16.msra.mxu0 %v3665
  %4510 = vmatprep.subr.bf16.mxu0 0
  %4511 = vmatpush1.bf16.msra.mxu0 %v3666
  %4512 = vmatprep.subr.bf16.mxu0 0
  %4513 = vmatpush1.bf16.msra.mxu0 %v3667
  %4514 = vmatprep.subr.bf16.mxu0 0
  %4515 = vmatpush1.bf16.msra.mxu0 %v3668
  %4516 = vmatprep.subr.bf16.mxu0 0
  %4517 = vmatpush1.bf16.msra.mxu0 %v3669
  %4518 = vmatprep.mubr.bf16.mxu0 %v2013
  %4519 = vmatmul.mubr.bf16.gmra.mrb[0].mxu0 %v2012
  %v4520 = vpop.f32.mrb[0].mxu0
  %v4521 = vadd.f32 %v4361, %v4520
  %v4522 = vpop.f32.mrb[0].mxu0
  %v4523 = vpop.f32.mrb[0].mxu0
  %v4524 = vadd.f32 %v4364, %v4523
  %v4525 = vpop.f32.mrb[0].mxu0
  %4526 = vmatprep.mubr.bf16.mxu0 %v2038
  %4527 = vmatmul.mubr.bf16.gmra.mrb[0].mxu0 %v2037
  %v4528 = vpop.f32.mrb[0].mxu0
  %v4529 = vadd.f32 %v4369, %v4528
  %v4530 = vpop.f32.mrb[0].mxu0
  %v4531 = vpop.f32.mrb[0].mxu0
  %v4532 = vadd.f32 %v4372, %v4531
  %v4533 = vpop.f32.mrb[0].mxu0
  %4534 = vmatprep.mubr.bf16.mxu0 %v2063
  %4535 = vmatmul.mubr.bf16.gmra.mrb[0].mxu0 %v2062
  %v4536 = vpop.f32.mrb[0].mxu0
  %v4537 = vadd.f32 %v4377, %v4536
  %v4538 = vpop.f32.mrb[0].mxu0
  %v4539 = vpop.f32.mrb[0].mxu0
  %v4540 = vadd.f32 %v4380, %v4539
  %v4541 = vpop.f32.mrb[0].mxu0
  %4542 = vmatprep.mubr.bf16.mxu0 %v2088
  %4543 = vmatmul.mubr.bf16.gmra.mrb[0].mxu0 %v2087
  %v4544 = vpop.f32.mrb[0].mxu0
  %v4545 = vadd.f32 %v4385, %v4544
  %v4546 = vpop.f32.mrb[0].mxu0
  %v4547 = vpop.f32.mrb[0].mxu0
  %v4548 = vadd.f32 %v4388, %v4547
  %v4549 = vpop.f32.mrb[0].mxu0
  %4550 = vmatprep.mubr.bf16.mxu0 %v2113
  %4551 = vmatmul.mubr.bf16.gmra.mrb[0].mxu0 %v2112
  %v4552 = vpop.f32.mrb[0].mxu0
  %v4553 = vadd.f32 %v4393, %v4552
  %v4554 = vpop.f32.mrb[0].mxu0
  %v4555 = vpop.f32.mrb[0].mxu0
  %v4556 = vadd.f32 %v4396, %v4555
  %v4557 = vpop.f32.mrb[0].mxu0
  %4558 = vmatprep.mubr.bf16.mxu0 %v2138
  %4559 = vmatmul.mubr.bf16.gmra.mrb[0].mxu0 %v2137
  %v4560 = vpop.f32.mrb[0].mxu0
  %v4561 = vadd.f32 %v4401, %v4560
  %v4562 = vpop.f32.mrb[0].mxu0
  %v4563 = vpop.f32.mrb[0].mxu0
  %v4564 = vadd.f32 %v4404, %v4563
  %v4565 = vpop.f32.mrb[0].mxu0
  %4566 = vmatprep.mubr.bf16.mxu0 %v2163
  %4567 = vmatmul.mubr.bf16.gmra.mrb[0].mxu0 %v2162
  %v4568 = vpop.f32.mrb[0].mxu0
  %v4569 = vadd.f32 %v4409, %v4568
  %v4570 = vpop.f32.mrb[0].mxu0
  %v4571 = vpop.f32.mrb[0].mxu0
  %v4572 = vadd.f32 %v4412, %v4571
  %v4573 = vpop.f32.mrb[0].mxu0
  %4574 = vmatprep.mubr.bf16.mxu0 %v2188
  %4575 = vmatmul.mubr.bf16.gmra.mrb[0].mxu0 %v2187
  %v4576 = vpop.f32.mrb[0].mxu0
  %v4577 = vadd.f32 %v4417, %v4576
  %v4578 = vpop.f32.mrb[0].mxu0
  %v4579 = vpop.f32.mrb[0].mxu0
  %v4580 = vadd.f32 %v4420, %v4579
  %v4581 = vpop.f32.mrb[0].mxu0
  %4582 = vmatprep.mubr.bf16.mxu0 %v2213
  %4583 = vmatmul.mubr.bf16.gmra.mrb[0].mxu0 %v2212
  %v4584 = vpop.f32.mrb[0].mxu0
  %v4585 = vadd.f32 %v4425, %v4584
  %v4586 = vpop.f32.mrb[0].mxu0
  %v4587 = vpop.f32.mrb[0].mxu0
  %v4588 = vadd.f32 %v4428, %v4587
  %v4589 = vpop.f32.mrb[0].mxu0
  %4590 = vmatprep.mubr.bf16.mxu0 %v2238
  %4591 = vmatmul.mubr.bf16.gmra.mrb[0].mxu0 %v2237
  %v4592 = vpop.f32.mrb[0].mxu0
  %v4593 = vadd.f32 %v4433, %v4592
  %v4594 = vpop.f32.mrb[0].mxu0
  %v4595 = vpop.f32.mrb[0].mxu0
  %v4596 = vadd.f32 %v4436, %v4595
  %v4597 = vpop.f32.mrb[0].mxu0
  %4598 = vmatprep.mubr.bf16.mxu0 %v2263
  %4599 = vmatmul.mubr.bf16.gmra.mrb[0].mxu0 %v2262
  %v4600 = vpop.f32.mrb[0].mxu0
  %v4601 = vadd.f32 %v4441, %v4600
  %v4602 = vpop.f32.mrb[0].mxu0
  %v4603 = vpop.f32.mrb[0].mxu0
  %v4604 = vadd.f32 %v4444, %v4603
  %v4605 = vpop.f32.mrb[0].mxu0
  %4606 = vmatprep.mubr.bf16.mxu0 %v2288
  %4607 = vmatmul.mubr.bf16.gmra.mrb[0].mxu0 %v2287
  %v4608 = vpop.f32.mrb[0].mxu0
  %v4609 = vadd.f32 %v4449, %v4608
  %v4610 = vpop.f32.mrb[0].mxu0
  %v4611 = vpop.f32.mrb[0].mxu0
  %v4612 = vadd.f32 %v4452, %v4611
  %v4613 = vpop.f32.mrb[0].mxu0
  %4614 = vmatprep.mubr.bf16.mxu0 %v2313
  %4615 = vmatmul.mubr.bf16.gmra.mrb[0].mxu0 %v2312
  %v4616 = vpop.f32.mrb[0].mxu0
  %v4617 = vadd.f32 %v4457, %v4616
  %v4618 = vpop.f32.mrb[0].mxu0
  %v4619 = vpop.f32.mrb[0].mxu0
  %v4620 = vadd.f32 %v4460, %v4619
  %v4621 = vpop.f32.mrb[0].mxu0
  %4622 = vmatprep.mubr.bf16.mxu0 %v2338
  %4623 = vmatmul.mubr.bf16.gmra.mrb[0].mxu0 %v2337
  %v4624 = vpop.f32.mrb[0].mxu0
  %v4625 = vadd.f32 %v4465, %v4624
  %v4626 = vpop.f32.mrb[0].mxu0
  %v4627 = vpop.f32.mrb[0].mxu0
  %v4628 = vadd.f32 %v4468, %v4627
  %v4629 = vpop.f32.mrb[0].mxu0
  %4630 = vmatprep.mubr.bf16.mxu0 %v2363
  %4631 = vmatmul.mubr.bf16.gmra.mrb[0].mxu0 %v2362
  %v4632 = vpop.f32.mrb[0].mxu0
  %v4633 = vadd.f32 %v4473, %v4632
  %v4634 = vpop.f32.mrb[0].mxu0
  %v4635 = vpop.f32.mrb[0].mxu0
  %v4636 = vadd.f32 %v4476, %v4635
  %v4637 = vpop.f32.mrb[0].mxu0
  %4638 = vmatprep.mubr.bf16.mxu0 %v2388
  %4639 = vmatmul.mubr.bf16.gmra.mrb[0].mxu0 %v2387
  %v4640 = vpop.f32.mrb[0].mxu0
  %v4641 = vadd.f32 %v4481, %v4640
  %v4642 = vpop.f32.mrb[0].mxu0
  %v4643 = vpop.f32.mrb[0].mxu0
  %v4644 = vpop.f32.mrb[0].mxu0
  %4645 = vdwg.mxu0
  %4646 = vmatprep.subr.bf16.mxu0 0
  %4647 = vmatpush1.bf16.msra.mxu0 %v3670
  %4648 = vmatprep.subr.bf16.mxu0 0
  %4649 = vmatpush1.bf16.msra.mxu0 %v3671
  %4650 = vmatprep.subr.bf16.mxu0 0
  %4651 = vmatpush1.bf16.msra.mxu0 %v3672
  %4652 = vmatprep.subr.bf16.mxu0 0
  %4653 = vmatpush1.bf16.msra.mxu0 %v3673
  %4654 = vmatprep.subr.bf16.mxu0 0
  %4655 = vmatpush1.bf16.msra.mxu0 %v3674
  %4656 = vmatprep.subr.bf16.mxu0 0
  %4657 = vmatpush1.bf16.msra.mxu0 %v3675
  %4658 = vmatprep.subr.bf16.mxu0 0
  %4659 = vmatpush1.bf16.msra.mxu0 %v3676
  %4660 = vmatprep.subr.bf16.mxu0 0
  %4661 = vmatpush1.bf16.msra.mxu0 %v3677
  %4662 = vmatprep.subr.bf16.mxu0 0
  %4663 = vmatpush1.bf16.msra.mxu0 %v3678
  %4664 = vmatprep.subr.bf16.mxu0 0
  %4665 = vmatpush1.bf16.msra.mxu0 %v3679
  %4666 = vmatprep.subr.bf16.mxu0 0
  %4667 = vmatpush1.bf16.msra.mxu0 %v3680
  %4668 = vmatprep.subr.bf16.mxu0 0
  %4669 = vmatpush1.bf16.msra.mxu0 %v3681
  %4670 = vmatprep.subr.bf16.mxu0 0
  %4671 = vmatpush1.bf16.msra.mxu0 %v3682
  %4672 = vmatprep.subr.bf16.mxu0 0
  %4673 = vmatpush1.bf16.msra.mxu0 %v3683
  %4674 = vmatprep.subr.bf16.mxu0 0
  %4675 = vmatpush1.bf16.msra.mxu0 %v3684
  %4676 = vmatprep.subr.bf16.mxu0 0
  %4677 = vmatpush1.bf16.msra.mxu0 %v3685
  %4678 = vmatprep.mubr.bf16.mxu0 %v2015
  %4679 = vmatmul.mubr.bf16.gmra.mrb[0].mxu0 %v2014
  %v4680 = vpop.f32.mrb[0].mxu0
  %v4681 = vadd.f32 %v4521, %v4680
  %v4682 = vpop.f32.mrb[0].mxu0
  %v4683 = vpop.f32.mrb[0].mxu0
  %v4684 = vadd.f32 %v4524, %v4683
  %v4685 = vpop.f32.mrb[0].mxu0
  %4686 = vmatprep.mubr.bf16.mxu0 %v2040
  %4687 = vmatmul.mubr.bf16.gmra.mrb[0].mxu0 %v2039
  %v4688 = vpop.f32.mrb[0].mxu0
  %v4689 = vadd.f32 %v4529, %v4688
  %v4690 = vpop.f32.mrb[0].mxu0
  %v4691 = vpop.f32.mrb[0].mxu0
  %v4692 = vadd.f32 %v4532, %v4691
  %v4693 = vpop.f32.mrb[0].mxu0
  %4694 = vmatprep.mubr.bf16.mxu0 %v2065
  %4695 = vmatmul.mubr.bf16.gmra.mrb[0].mxu0 %v2064
  %v4696 = vpop.f32.mrb[0].mxu0
  %v4697 = vadd.f32 %v4537, %v4696
  %v4698 = vpop.f32.mrb[0].mxu0
  %v4699 = vpop.f32.mrb[0].mxu0
  %v4700 = vadd.f32 %v4540, %v4699
  %v4701 = vpop.f32.mrb[0].mxu0
  %4702 = vmatprep.mubr.bf16.mxu0 %v2090
  %4703 = vmatmul.mubr.bf16.gmra.mrb[0].mxu0 %v2089
  %v4704 = vpop.f32.mrb[0].mxu0
  %v4705 = vadd.f32 %v4545, %v4704
  %v4706 = vpop.f32.mrb[0].mxu0
  %v4707 = vpop.f32.mrb[0].mxu0
  %v4708 = vadd.f32 %v4548, %v4707
  %v4709 = vpop.f32.mrb[0].mxu0
  %4710 = vmatprep.mubr.bf16.mxu0 %v2115
  %4711 = vmatmul.mubr.bf16.gmra.mrb[0].mxu0 %v2114
  %v4712 = vpop.f32.mrb[0].mxu0
  %v4713 = vadd.f32 %v4553, %v4712
  %v4714 = vpop.f32.mrb[0].mxu0
  %v4715 = vpop.f32.mrb[0].mxu0
  %v4716 = vadd.f32 %v4556, %v4715
  %v4717 = vpop.f32.mrb[0].mxu0
  %4718 = vmatprep.mubr.bf16.mxu0 %v2140
  %4719 = vmatmul.mubr.bf16.gmra.mrb[0].mxu0 %v2139
  %v4720 = vpop.f32.mrb[0].mxu0
  %v4721 = vadd.f32 %v4561, %v4720
  %v4722 = vpop.f32.mrb[0].mxu0
  %v4723 = vpop.f32.mrb[0].mxu0
  %v4724 = vadd.f32 %v4564, %v4723
  %v4725 = vpop.f32.mrb[0].mxu0
  %4726 = vmatprep.mubr.bf16.mxu0 %v2165
  %4727 = vmatmul.mubr.bf16.gmra.mrb[0].mxu0 %v2164
  %v4728 = vpop.f32.mrb[0].mxu0
  %v4729 = vadd.f32 %v4569, %v4728
  %v4730 = vpop.f32.mrb[0].mxu0
  %v4731 = vpop.f32.mrb[0].mxu0
  %v4732 = vadd.f32 %v4572, %v4731
  %v4733 = vpop.f32.mrb[0].mxu0
  %4734 = vmatprep.mubr.bf16.mxu0 %v2190
  %4735 = vmatmul.mubr.bf16.gmra.mrb[0].mxu0 %v2189
  %v4736 = vpop.f32.mrb[0].mxu0
  %v4737 = vadd.f32 %v4577, %v4736
  %v4738 = vpop.f32.mrb[0].mxu0
  %v4739 = vpop.f32.mrb[0].mxu0
  %v4740 = vadd.f32 %v4580, %v4739
  %v4741 = vpop.f32.mrb[0].mxu0
  %4742 = vmatprep.mubr.bf16.mxu0 %v2215
  %4743 = vmatmul.mubr.bf16.gmra.mrb[0].mxu0 %v2214
  %v4744 = vpop.f32.mrb[0].mxu0
  %v4745 = vadd.f32 %v4585, %v4744
  %v4746 = vpop.f32.mrb[0].mxu0
  %v4747 = vpop.f32.mrb[0].mxu0
  %v4748 = vadd.f32 %v4588, %v4747
  %v4749 = vpop.f32.mrb[0].mxu0
  %4750 = vmatprep.mubr.bf16.mxu0 %v2240
  %4751 = vmatmul.mubr.bf16.gmra.mrb[0].mxu0 %v2239
  %v4752 = vpop.f32.mrb[0].mxu0
  %v4753 = vadd.f32 %v4593, %v4752
  %v4754 = vpop.f32.mrb[0].mxu0
  %v4755 = vpop.f32.mrb[0].mxu0
  %v4756 = vadd.f32 %v4596, %v4755
  %v4757 = vpop.f32.mrb[0].mxu0
  %4758 = vmatprep.mubr.bf16.mxu0 %v2265
  %4759 = vmatmul.mubr.bf16.gmra.mrb[0].mxu0 %v2264
  %v4760 = vpop.f32.mrb[0].mxu0
  %v4761 = vadd.f32 %v4601, %v4760
  %v4762 = vpop.f32.mrb[0].mxu0
  %v4763 = vpop.f32.mrb[0].mxu0
  %v4764 = vadd.f32 %v4604, %v4763
  %v4765 = vpop.f32.mrb[0].mxu0
  %4766 = vmatprep.mubr.bf16.mxu0 %v2290
  %4767 = vmatmul.mubr.bf16.gmra.mrb[0].mxu0 %v2289
  %v4768 = vpop.f32.mrb[0].mxu0
  %v4769 = vadd.f32 %v4609, %v4768
  %v4770 = vpop.f32.mrb[0].mxu0
  %v4771 = vpop.f32.mrb[0].mxu0
  %v4772 = vadd.f32 %v4612, %v4771
  %v4773 = vpop.f32.mrb[0].mxu0
  %4774 = vmatprep.mubr.bf16.mxu0 %v2315
  %4775 = vmatmul.mubr.bf16.gmra.mrb[0].mxu0 %v2314
  %v4776 = vpop.f32.mrb[0].mxu0
  %v4777 = vadd.f32 %v4617, %v4776
  %v4778 = vpop.f32.mrb[0].mxu0
  %v4779 = vpop.f32.mrb[0].mxu0
  %v4780 = vadd.f32 %v4620, %v4779
  %v4781 = vpop.f32.mrb[0].mxu0
  %4782 = vmatprep.mubr.bf16.mxu0 %v2340
  %4783 = vmatmul.mubr.bf16.gmra.mrb[0].mxu0 %v2339
  %v4784 = vpop.f32.mrb[0].mxu0
  %v4785 = vadd.f32 %v4625, %v4784
  %v4786 = vpop.f32.mrb[0].mxu0
  %v4787 = vpop.f32.mrb[0].mxu0
  %v4788 = vadd.f32 %v4628, %v4787
  %v4789 = vpop.f32.mrb[0].mxu0
  %4790 = vmatprep.mubr.bf16.mxu0 %v2365
  %4791 = vmatmul.mubr.bf16.gmra.mrb[0].mxu0 %v2364
  %v4792 = vpop.f32.mrb[0].mxu0
  %v4793 = vadd.f32 %v4633, %v4792
  %v4794 = vpop.f32.mrb[0].mxu0
  %v4795 = vpop.f32.mrb[0].mxu0
  %v4796 = vadd.f32 %v4636, %v4795
  %v4797 = vpop.f32.mrb[0].mxu0
  %4798 = vmatprep.mubr.bf16.mxu0 %v2390
  %4799 = vmatmul.mubr.bf16.gmra.mrb[0].mxu0 %v2389
  %v4800 = vpop.f32.mrb[0].mxu0
  %v4801 = vadd.f32 %v4641, %v4800
  %v4802 = vpop.f32.mrb[0].mxu0
  %v4803 = vpop.f32.mrb[0].mxu0
  %v4804 = vpop.f32.mrb[0].mxu0
  %4805 = vdwg.mxu0
  %4806 = vmatprep.subr.bf16.mxu0 0
  %4807 = vmatpush1.bf16.msra.mxu0 %v3686
  %4808 = vmatprep.subr.bf16.mxu0 0
  %4809 = vmatpush1.bf16.msra.mxu0 %v3687
  %4810 = vmatprep.subr.bf16.mxu0 0
  %4811 = vmatpush1.bf16.msra.mxu0 %v3688
  %4812 = vmatprep.subr.bf16.mxu0 0
  %4813 = vmatpush1.bf16.msra.mxu0 %v3689
  %4814 = vmatprep.subr.bf16.mxu0 0
  %4815 = vmatpush1.bf16.msra.mxu0 %v3690
  %4816 = vmatprep.subr.bf16.mxu0 0
  %4817 = vmatpush1.bf16.msra.mxu0 %v3691
  %4818 = vmatprep.subr.bf16.mxu0 0
  %4819 = vmatpush1.bf16.msra.mxu0 %v3692
  %4820 = vmatprep.subr.bf16.mxu0 0
  %4821 = vmatpush1.bf16.msra.mxu0 %v3693
  %4822 = vmatprep.subr.bf16.mxu0 0
  %4823 = vmatpush1.bf16.msra.mxu0 %v3694
  %4824 = vmatprep.subr.bf16.mxu0 0
  %4825 = vmatpush1.bf16.msra.mxu0 %v3695
  %4826 = vmatprep.subr.bf16.mxu0 0
  %4827 = vmatpush1.bf16.msra.mxu0 %v3696
  %4828 = vmatprep.subr.bf16.mxu0 0
  %4829 = vmatpush1.bf16.msra.mxu0 %v3697
  %4830 = vmatprep.subr.bf16.mxu0 0
  %4831 = vmatpush1.bf16.msra.mxu0 %v3698
  %4832 = vmatprep.subr.bf16.mxu0 0
  %4833 = vmatpush1.bf16.msra.mxu0 %v3699
  %4834 = vmatprep.subr.bf16.mxu0 0
  %4835 = vmatpush1.bf16.msra.mxu0 %v3700
  %4836 = vmatprep.subr.bf16.mxu0 0
  %4837 = vmatpush1.bf16.msra.mxu0 %v3701
  %4838 = vmatprep.mubr.bf16.mxu0 %v2017
  %4839 = vmatmul.mubr.bf16.gmra.mrb[0].mxu0 %v2016
  %v4840 = vpop.f32.mrb[0].mxu0
  %v4841 = vadd.f32 %v4681, %v4840
  %v4842 = vpop.f32.mrb[0].mxu0
  %v4843 = vpop.f32.mrb[0].mxu0
  %v4844 = vadd.f32 %v4684, %v4843
  %v4845 = vpop.f32.mrb[0].mxu0
  %4846 = vmatprep.mubr.bf16.mxu0 %v2042
  %4847 = vmatmul.mubr.bf16.gmra.mrb[0].mxu0 %v2041
  %v4848 = vpop.f32.mrb[0].mxu0
  %v4849 = vadd.f32 %v4689, %v4848
  %v4850 = vpop.f32.mrb[0].mxu0
  %v4851 = vpop.f32.mrb[0].mxu0
  %v4852 = vadd.f32 %v4692, %v4851
  %v4853 = vpop.f32.mrb[0].mxu0
  %4854 = vmatprep.mubr.bf16.mxu0 %v2067
  %4855 = vmatmul.mubr.bf16.gmra.mrb[0].mxu0 %v2066
  %v4856 = vpop.f32.mrb[0].mxu0
  %v4857 = vadd.f32 %v4697, %v4856
  %v4858 = vpop.f32.mrb[0].mxu0
  %v4859 = vpop.f32.mrb[0].mxu0
  %v4860 = vadd.f32 %v4700, %v4859
  %v4861 = vpop.f32.mrb[0].mxu0
  %4862 = vmatprep.mubr.bf16.mxu0 %v2092
  %4863 = vmatmul.mubr.bf16.gmra.mrb[0].mxu0 %v2091
  %v4864 = vpop.f32.mrb[0].mxu0
  %v4865 = vadd.f32 %v4705, %v4864
  %v4866 = vpop.f32.mrb[0].mxu0
  %v4867 = vpop.f32.mrb[0].mxu0
  %v4868 = vadd.f32 %v4708, %v4867
  %v4869 = vpop.f32.mrb[0].mxu0
  %4870 = vmatprep.mubr.bf16.mxu0 %v2117
  %4871 = vmatmul.mubr.bf16.gmra.mrb[0].mxu0 %v2116
  %v4872 = vpop.f32.mrb[0].mxu0
  %v4873 = vadd.f32 %v4713, %v4872
  %v4874 = vpop.f32.mrb[0].mxu0
  %v4875 = vpop.f32.mrb[0].mxu0
  %v4876 = vadd.f32 %v4716, %v4875
  %v4877 = vpop.f32.mrb[0].mxu0
  %4878 = vmatprep.mubr.bf16.mxu0 %v2142
  %4879 = vmatmul.mubr.bf16.gmra.mrb[0].mxu0 %v2141
  %v4880 = vpop.f32.mrb[0].mxu0
  %v4881 = vadd.f32 %v4721, %v4880
  %v4882 = vpop.f32.mrb[0].mxu0
  %v4883 = vpop.f32.mrb[0].mxu0
  %v4884 = vadd.f32 %v4724, %v4883
  %v4885 = vpop.f32.mrb[0].mxu0
  %4886 = vmatprep.mubr.bf16.mxu0 %v2167
  %4887 = vmatmul.mubr.bf16.gmra.mrb[0].mxu0 %v2166
  %v4888 = vpop.f32.mrb[0].mxu0
  %v4889 = vadd.f32 %v4729, %v4888
  %v4890 = vpop.f32.mrb[0].mxu0
  %v4891 = vpop.f32.mrb[0].mxu0
  %v4892 = vadd.f32 %v4732, %v4891
  %v4893 = vpop.f32.mrb[0].mxu0
  %4894 = vmatprep.mubr.bf16.mxu0 %v2192
  %4895 = vmatmul.mubr.bf16.gmra.mrb[0].mxu0 %v2191
  %v4896 = vpop.f32.mrb[0].mxu0
  %v4897 = vadd.f32 %v4737, %v4896
  %v4898 = vpop.f32.mrb[0].mxu0
  %v4899 = vpop.f32.mrb[0].mxu0
  %v4900 = vadd.f32 %v4740, %v4899
  %v4901 = vpop.f32.mrb[0].mxu0
  %4902 = vmatprep.mubr.bf16.mxu0 %v2217
  %4903 = vmatmul.mubr.bf16.gmra.mrb[0].mxu0 %v2216
  %v4904 = vpop.f32.mrb[0].mxu0
  %v4905 = vadd.f32 %v4745, %v4904
  %v4906 = vpop.f32.mrb[0].mxu0
  %v4907 = vpop.f32.mrb[0].mxu0
  %v4908 = vadd.f32 %v4748, %v4907
  %v4909 = vpop.f32.mrb[0].mxu0
  %4910 = vmatprep.mubr.bf16.mxu0 %v2242
  %4911 = vmatmul.mubr.bf16.gmra.mrb[0].mxu0 %v2241
  %v4912 = vpop.f32.mrb[0].mxu0
  %v4913 = vadd.f32 %v4753, %v4912
  %v4914 = vpop.f32.mrb[0].mxu0
  %v4915 = vpop.f32.mrb[0].mxu0
  %v4916 = vadd.f32 %v4756, %v4915
  %v4917 = vpop.f32.mrb[0].mxu0
  %4918 = vmatprep.mubr.bf16.mxu0 %v2267
  %4919 = vmatmul.mubr.bf16.gmra.mrb[0].mxu0 %v2266
  %v4920 = vpop.f32.mrb[0].mxu0
  %v4921 = vadd.f32 %v4761, %v4920
  %v4922 = vpop.f32.mrb[0].mxu0
  %v4923 = vpop.f32.mrb[0].mxu0
  %v4924 = vadd.f32 %v4764, %v4923
  %v4925 = vpop.f32.mrb[0].mxu0
  %4926 = vmatprep.mubr.bf16.mxu0 %v2292
  %4927 = vmatmul.mubr.bf16.gmra.mrb[0].mxu0 %v2291
  %v4928 = vpop.f32.mrb[0].mxu0
  %v4929 = vadd.f32 %v4769, %v4928
  %v4930 = vpop.f32.mrb[0].mxu0
  %v4931 = vpop.f32.mrb[0].mxu0
  %v4932 = vadd.f32 %v4772, %v4931
  %v4933 = vpop.f32.mrb[0].mxu0
  %4934 = vmatprep.mubr.bf16.mxu0 %v2317
  %4935 = vmatmul.mubr.bf16.gmra.mrb[0].mxu0 %v2316
  %v4936 = vpop.f32.mrb[0].mxu0
  %v4937 = vadd.f32 %v4777, %v4936
  %v4938 = vpop.f32.mrb[0].mxu0
  %v4939 = vpop.f32.mrb[0].mxu0
  %v4940 = vadd.f32 %v4780, %v4939
  %v4941 = vpop.f32.mrb[0].mxu0
  %4942 = vmatprep.mubr.bf16.mxu0 %v2342
  %4943 = vmatmul.mubr.bf16.gmra.mrb[0].mxu0 %v2341
  %v4944 = vpop.f32.mrb[0].mxu0
  %v4945 = vadd.f32 %v4785, %v4944
  %v4946 = vpop.f32.mrb[0].mxu0
  %v4947 = vpop.f32.mrb[0].mxu0
  %v4948 = vadd.f32 %v4788, %v4947
  %v4949 = vpop.f32.mrb[0].mxu0
  %4950 = vmatprep.mubr.bf16.mxu0 %v2367
  %4951 = vmatmul.mubr.bf16.gmra.mrb[0].mxu0 %v2366
  %v4952 = vpop.f32.mrb[0].mxu0
  %v4953 = vadd.f32 %v4793, %v4952
  %v4954 = vpop.f32.mrb[0].mxu0
  %v4955 = vpop.f32.mrb[0].mxu0
  %v4956 = vadd.f32 %v4796, %v4955
  %v4957 = vpop.f32.mrb[0].mxu0
  %4958 = vmatprep.mubr.bf16.mxu0 %v2392
  %4959 = vmatmul.mubr.bf16.gmra.mrb[0].mxu0 %v2391
  %v4960 = vpop.f32.mrb[0].mxu0
  %v4961 = vadd.f32 %v4801, %v4960
  %v4962 = vpop.f32.mrb[0].mxu0
  %v4963 = vpop.f32.mrb[0].mxu0
  %v4964 = vpop.f32.mrb[0].mxu0
  %4965 = vdwg.mxu0
  %4966 = vmatprep.subr.bf16.mxu0 0
  %4967 = vmatpush1.bf16.msra.mxu0 %v3702
  %4968 = vmatprep.subr.bf16.mxu0 0
  %4969 = vmatpush1.bf16.msra.mxu0 %v3703
  %4970 = vmatprep.subr.bf16.mxu0 0
  %4971 = vmatpush1.bf16.msra.mxu0 %v3704
  %4972 = vmatprep.subr.bf16.mxu0 0
  %4973 = vmatpush1.bf16.msra.mxu0 %v3705
  %4974 = vmatprep.subr.bf16.mxu0 0
  %4975 = vmatpush1.bf16.msra.mxu0 %v3706
  %4976 = vmatprep.subr.bf16.mxu0 0
  %4977 = vmatpush1.bf16.msra.mxu0 %v3707
  %4978 = vmatprep.subr.bf16.mxu0 0
  %4979 = vmatpush1.bf16.msra.mxu0 %v3708
  %4980 = vmatprep.subr.bf16.mxu0 0
  %4981 = vmatpush1.bf16.msra.mxu0 %v3709
  %4982 = vmatprep.subr.bf16.mxu0 0
  %4983 = vmatpush1.bf16.msra.mxu0 %v3710
  %4984 = vmatprep.subr.bf16.mxu0 0
  %4985 = vmatpush1.bf16.msra.mxu0 %v3711
  %4986 = vmatprep.subr.bf16.mxu0 0
  %4987 = vmatpush1.bf16.msra.mxu0 %v3712
  %4988 = vmatprep.subr.bf16.mxu0 0
  %4989 = vmatpush1.bf16.msra.mxu0 %v3713
  %4990 = vmatprep.subr.bf16.mxu0 0
  %4991 = vmatpush1.bf16.msra.mxu0 %v3714
  %4992 = vmatprep.subr.bf16.mxu0 0
  %4993 = vmatpush1.bf16.msra.mxu0 %v3715
  %4994 = vmatprep.subr.bf16.mxu0 0
  %4995 = vmatpush1.bf16.msra.mxu0 %v3716
  %4996 = vmatprep.subr.bf16.mxu0 0
  %4997 = vmatpush1.bf16.msra.mxu0 %v3717
  %4998 = vmatprep.mubr.bf16.mxu0 %v2019
  %4999 = vmatmul.mubr.bf16.gmra.mrb[0].mxu0 %v2018
  %v5000 = vpop.f32.mrb[0].mxu0
  %v5001 = vadd.f32 %v4841, %v5000
  %v5002 = vpop.f32.mrb[0].mxu0
  %v5003 = vpop.f32.mrb[0].mxu0
  %v5004 = vadd.f32 %v4844, %v5003
  %v5005 = vpop.f32.mrb[0].mxu0
  %5006 = vmatprep.mubr.bf16.mxu0 %v2044
  %5007 = vmatmul.mubr.bf16.gmra.mrb[0].mxu0 %v2043
  %v5008 = vpop.f32.mrb[0].mxu0
  %v5009 = vadd.f32 %v4849, %v5008
  %v5010 = vpop.f32.mrb[0].mxu0
  %v5011 = vpop.f32.mrb[0].mxu0
  %v5012 = vadd.f32 %v4852, %v5011
  %v5013 = vpop.f32.mrb[0].mxu0
  %5014 = vmatprep.mubr.bf16.mxu0 %v2069
  %5015 = vmatmul.mubr.bf16.gmra.mrb[0].mxu0 %v2068
  %v5016 = vpop.f32.mrb[0].mxu0
  %v5017 = vadd.f32 %v4857, %v5016
  %v5018 = vpop.f32.mrb[0].mxu0
  %v5019 = vpop.f32.mrb[0].mxu0
  %v5020 = vadd.f32 %v4860, %v5019
  %v5021 = vpop.f32.mrb[0].mxu0
  %5022 = vmatprep.mubr.bf16.mxu0 %v2094
  %5023 = vmatmul.mubr.bf16.gmra.mrb[0].mxu0 %v2093
  %v5024 = vpop.f32.mrb[0].mxu0
  %v5025 = vadd.f32 %v4865, %v5024
  %v5026 = vpop.f32.mrb[0].mxu0
  %v5027 = vpop.f32.mrb[0].mxu0
  %v5028 = vadd.f32 %v4868, %v5027
  %v5029 = vpop.f32.mrb[0].mxu0
  %5030 = vmatprep.mubr.bf16.mxu0 %v2119
  %5031 = vmatmul.mubr.bf16.gmra.mrb[0].mxu0 %v2118
  %v5032 = vpop.f32.mrb[0].mxu0
  %v5033 = vadd.f32 %v4873, %v5032
  %v5034 = vpop.f32.mrb[0].mxu0
  %v5035 = vpop.f32.mrb[0].mxu0
  %v5036 = vadd.f32 %v4876, %v5035
  %v5037 = vpop.f32.mrb[0].mxu0
  %5038 = vmatprep.mubr.bf16.mxu0 %v2144
  %5039 = vmatmul.mubr.bf16.gmra.mrb[0].mxu0 %v2143
  %v5040 = vpop.f32.mrb[0].mxu0
  %v5041 = vadd.f32 %v4881, %v5040
  %v5042 = vpop.f32.mrb[0].mxu0
  %v5043 = vpop.f32.mrb[0].mxu0
  %v5044 = vadd.f32 %v4884, %v5043
  %v5045 = vpop.f32.mrb[0].mxu0
  %5046 = vmatprep.mubr.bf16.mxu0 %v2169
  %5047 = vmatmul.mubr.bf16.gmra.mrb[0].mxu0 %v2168
  %v5048 = vpop.f32.mrb[0].mxu0
  %v5049 = vadd.f32 %v4889, %v5048
  %v5050 = vpop.f32.mrb[0].mxu0
  %v5051 = vpop.f32.mrb[0].mxu0
  %v5052 = vadd.f32 %v4892, %v5051
  %v5053 = vpop.f32.mrb[0].mxu0
  %5054 = vmatprep.mubr.bf16.mxu0 %v2194
  %5055 = vmatmul.mubr.bf16.gmra.mrb[0].mxu0 %v2193
  %v5056 = vpop.f32.mrb[0].mxu0
  %v5057 = vadd.f32 %v4897, %v5056
  %v5058 = vpop.f32.mrb[0].mxu0
  %v5059 = vpop.f32.mrb[0].mxu0
  %v5060 = vadd.f32 %v4900, %v5059
  %v5061 = vpop.f32.mrb[0].mxu0
  %5062 = vmatprep.mubr.bf16.mxu0 %v2219
  %5063 = vmatmul.mubr.bf16.gmra.mrb[0].mxu0 %v2218
  %v5064 = vpop.f32.mrb[0].mxu0
  %v5065 = vadd.f32 %v4905, %v5064
  %v5066 = vpop.f32.mrb[0].mxu0
  %v5067 = vpop.f32.mrb[0].mxu0
  %v5068 = vadd.f32 %v4908, %v5067
  %v5069 = vpop.f32.mrb[0].mxu0
  %5070 = vmatprep.mubr.bf16.mxu0 %v2244
  %5071 = vmatmul.mubr.bf16.gmra.mrb[0].mxu0 %v2243
  %v5072 = vpop.f32.mrb[0].mxu0
  %v5073 = vadd.f32 %v4913, %v5072
  %v5074 = vpop.f32.mrb[0].mxu0
  %v5075 = vpop.f32.mrb[0].mxu0
  %v5076 = vadd.f32 %v4916, %v5075
  %v5077 = vpop.f32.mrb[0].mxu0
  %5078 = vmatprep.mubr.bf16.mxu0 %v2269
  %5079 = vmatmul.mubr.bf16.gmra.mrb[0].mxu0 %v2268
  %v5080 = vpop.f32.mrb[0].mxu0
  %v5081 = vadd.f32 %v4921, %v5080
  %v5082 = vpop.f32.mrb[0].mxu0
  %v5083 = vpop.f32.mrb[0].mxu0
  %v5084 = vadd.f32 %v4924, %v5083
  %v5085 = vpop.f32.mrb[0].mxu0
  %5086 = vmatprep.mubr.bf16.mxu0 %v2294
  %5087 = vmatmul.mubr.bf16.gmra.mrb[0].mxu0 %v2293
  %v5088 = vpop.f32.mrb[0].mxu0
  %v5089 = vadd.f32 %v4929, %v5088
  %v5090 = vpop.f32.mrb[0].mxu0
  %v5091 = vpop.f32.mrb[0].mxu0
  %v5092 = vadd.f32 %v4932, %v5091
  %v5093 = vpop.f32.mrb[0].mxu0
  %5094 = vmatprep.mubr.bf16.mxu0 %v2319
  %5095 = vmatmul.mubr.bf16.gmra.mrb[0].mxu0 %v2318
  %v5096 = vpop.f32.mrb[0].mxu0
  %v5097 = vadd.f32 %v4937, %v5096
  %v5098 = vpop.f32.mrb[0].mxu0
  %v5099 = vpop.f32.mrb[0].mxu0
  %v5100 = vadd.f32 %v4940, %v5099
  %v5101 = vpop.f32.mrb[0].mxu0
  %5102 = vmatprep.mubr.bf16.mxu0 %v2344
  %5103 = vmatmul.mubr.bf16.gmra.mrb[0].mxu0 %v2343
  %v5104 = vpop.f32.mrb[0].mxu0
  %v5105 = vadd.f32 %v4945, %v5104
  %v5106 = vpop.f32.mrb[0].mxu0
  %v5107 = vpop.f32.mrb[0].mxu0
  %v5108 = vadd.f32 %v4948, %v5107
  %v5109 = vpop.f32.mrb[0].mxu0
  %5110 = vmatprep.mubr.bf16.mxu0 %v2369
  %5111 = vmatmul.mubr.bf16.gmra.mrb[0].mxu0 %v2368
  %v5112 = vpop.f32.mrb[0].mxu0
  %v5113 = vadd.f32 %v4953, %v5112
  %v5114 = vpop.f32.mrb[0].mxu0
  %v5115 = vpop.f32.mrb[0].mxu0
  %v5116 = vadd.f32 %v4956, %v5115
  %v5117 = vpop.f32.mrb[0].mxu0
  %5118 = vmatprep.mubr.bf16.mxu0 %v2394
  %5119 = vmatmul.mubr.bf16.gmra.mrb[0].mxu0 %v2393
  %v5120 = vpop.f32.mrb[0].mxu0
  %v5121 = vadd.f32 %v4961, %v5120
  %v5122 = vpop.f32.mrb[0].mxu0
  %v5123 = vpop.f32.mrb[0].mxu0
  %v5124 = vpop.f32.mrb[0].mxu0
  %5125 = vdwg.mxu0
  %5126 = vmatprep.subr.bf16.mxu0 0
  %5127 = vmatpush1.bf16.msra.mxu0 %v3718
  %5128 = vmatprep.subr.bf16.mxu0 0
  %5129 = vmatpush1.bf16.msra.mxu0 %v3719
  %5130 = vmatprep.subr.bf16.mxu0 0
  %5131 = vmatpush1.bf16.msra.mxu0 %v3720
  %5132 = vmatprep.subr.bf16.mxu0 0
  %5133 = vmatpush1.bf16.msra.mxu0 %v3721
  %5134 = vmatprep.subr.bf16.mxu0 0
  %5135 = vmatpush1.bf16.msra.mxu0 %v3722
  %5136 = vmatprep.subr.bf16.mxu0 0
  %5137 = vmatpush1.bf16.msra.mxu0 %v3723
  %5138 = vmatprep.subr.bf16.mxu0 0
  %5139 = vmatpush1.bf16.msra.mxu0 %v3724
  %5140 = vmatprep.subr.bf16.mxu0 0
  %5141 = vmatpush1.bf16.msra.mxu0 %v3725
  %5142 = vmatprep.subr.bf16.mxu0 0
  %5143 = vmatpush1.bf16.msra.mxu0 %v3726
  %5144 = vmatprep.subr.bf16.mxu0 0
  %5145 = vmatpush1.bf16.msra.mxu0 %v3727
  %5146 = vmatprep.subr.bf16.mxu0 0
  %5147 = vmatpush1.bf16.msra.mxu0 %v3728
  %5148 = vmatprep.subr.bf16.mxu0 0
  %5149 = vmatpush1.bf16.msra.mxu0 %v3729
  %5150 = vmatprep.subr.bf16.mxu0 0
  %5151 = vmatpush1.bf16.msra.mxu0 %v3730
  %5152 = vmatprep.subr.bf16.mxu0 0
  %5153 = vmatpush1.bf16.msra.mxu0 %v3731
  %5154 = vmatprep.subr.bf16.mxu0 0
  %5155 = vmatpush1.bf16.msra.mxu0 %v3732
  %5156 = vmatprep.subr.bf16.mxu0 0
  %5157 = vmatpush1.bf16.msra.mxu0 %v3733
  %5158 = vmatprep.mubr.bf16.mxu0 %v2021
  %5159 = vmatmul.mubr.bf16.gmra.mrb[0].mxu0 %v2020
  %v5160 = vpop.f32.mrb[0].mxu0
  %v5161 = vadd.f32 %v5001, %v5160
  %v5162 = vpop.f32.mrb[0].mxu0
  %v5163 = vpop.f32.mrb[0].mxu0
  %v5164 = vadd.f32 %v5004, %v5163
  %v5165 = vpop.f32.mrb[0].mxu0
  %5166 = vmatprep.mubr.bf16.mxu0 %v2046
  %5167 = vmatmul.mubr.bf16.gmra.mrb[0].mxu0 %v2045
  %v5168 = vpop.f32.mrb[0].mxu0
  %v5169 = vadd.f32 %v5009, %v5168
  %v5170 = vpop.f32.mrb[0].mxu0
  %v5171 = vpop.f32.mrb[0].mxu0
  %v5172 = vadd.f32 %v5012, %v5171
  %v5173 = vpop.f32.mrb[0].mxu0
  %5174 = vmatprep.mubr.bf16.mxu0 %v2071
  %5175 = vmatmul.mubr.bf16.gmra.mrb[0].mxu0 %v2070
  %v5176 = vpop.f32.mrb[0].mxu0
  %v5177 = vadd.f32 %v5017, %v5176
  %v5178 = vpop.f32.mrb[0].mxu0
  %v5179 = vpop.f32.mrb[0].mxu0
  %v5180 = vadd.f32 %v5020, %v5179
  %v5181 = vpop.f32.mrb[0].mxu0
  %5182 = vmatprep.mubr.bf16.mxu0 %v2096
  %5183 = vmatmul.mubr.bf16.gmra.mrb[0].mxu0 %v2095
  %v5184 = vpop.f32.mrb[0].mxu0
  %v5185 = vadd.f32 %v5025, %v5184
  %v5186 = vpop.f32.mrb[0].mxu0
  %v5187 = vpop.f32.mrb[0].mxu0
  %v5188 = vadd.f32 %v5028, %v5187
  %v5189 = vpop.f32.mrb[0].mxu0
  %5190 = vmatprep.mubr.bf16.mxu0 %v2121
  %5191 = vmatmul.mubr.bf16.gmra.mrb[0].mxu0 %v2120
  %v5192 = vpop.f32.mrb[0].mxu0
  %v5193 = vadd.f32 %v5033, %v5192
  %v5194 = vpop.f32.mrb[0].mxu0
  %v5195 = vpop.f32.mrb[0].mxu0
  %v5196 = vadd.f32 %v5036, %v5195
  %v5197 = vpop.f32.mrb[0].mxu0
  %5198 = vmatprep.mubr.bf16.mxu0 %v2146
  %5199 = vmatmul.mubr.bf16.gmra.mrb[0].mxu0 %v2145
  %v5200 = vpop.f32.mrb[0].mxu0
  %v5201 = vadd.f32 %v5041, %v5200
  %v5202 = vpop.f32.mrb[0].mxu0
  %v5203 = vpop.f32.mrb[0].mxu0
  %v5204 = vadd.f32 %v5044, %v5203
  %v5205 = vpop.f32.mrb[0].mxu0
  %5206 = vmatprep.mubr.bf16.mxu0 %v2171
  %5207 = vmatmul.mubr.bf16.gmra.mrb[0].mxu0 %v2170
  %v5208 = vpop.f32.mrb[0].mxu0
  %v5209 = vadd.f32 %v5049, %v5208
  %v5210 = vpop.f32.mrb[0].mxu0
  %v5211 = vpop.f32.mrb[0].mxu0
  %v5212 = vadd.f32 %v5052, %v5211
  %v5213 = vpop.f32.mrb[0].mxu0
  %5214 = vmatprep.mubr.bf16.mxu0 %v2196
  %5215 = vmatmul.mubr.bf16.gmra.mrb[0].mxu0 %v2195
  %v5216 = vpop.f32.mrb[0].mxu0
  %v5217 = vadd.f32 %v5057, %v5216
  %v5218 = vpop.f32.mrb[0].mxu0
  %v5219 = vpop.f32.mrb[0].mxu0
  %v5220 = vadd.f32 %v5060, %v5219
  %v5221 = vpop.f32.mrb[0].mxu0
  %5222 = vmatprep.mubr.bf16.mxu0 %v2221
  %5223 = vmatmul.mubr.bf16.gmra.mrb[0].mxu0 %v2220
  %v5224 = vpop.f32.mrb[0].mxu0
  %v5225 = vadd.f32 %v5065, %v5224
  %v5226 = vpop.f32.mrb[0].mxu0
  %v5227 = vpop.f32.mrb[0].mxu0
  %v5228 = vadd.f32 %v5068, %v5227
  %v5229 = vpop.f32.mrb[0].mxu0
  %5230 = vmatprep.mubr.bf16.mxu0 %v2246
  %5231 = vmatmul.mubr.bf16.gmra.mrb[0].mxu0 %v2245
  %v5232 = vpop.f32.mrb[0].mxu0
  %v5233 = vadd.f32 %v5073, %v5232
  %v5234 = vpop.f32.mrb[0].mxu0
  %v5235 = vpop.f32.mrb[0].mxu0
  %v5236 = vadd.f32 %v5076, %v5235
  %v5237 = vpop.f32.mrb[0].mxu0
  %5238 = vmatprep.mubr.bf16.mxu0 %v2271
  %5239 = vmatmul.mubr.bf16.gmra.mrb[0].mxu0 %v2270
  %v5240 = vpop.f32.mrb[0].mxu0
  %v5241 = vadd.f32 %v5081, %v5240
  %v5242 = vpop.f32.mrb[0].mxu0
  %v5243 = vpop.f32.mrb[0].mxu0
  %v5244 = vadd.f32 %v5084, %v5243
  %v5245 = vpop.f32.mrb[0].mxu0
  %5246 = vmatprep.mubr.bf16.mxu0 %v2296
  %5247 = vmatmul.mubr.bf16.gmra.mrb[0].mxu0 %v2295
  %v5248 = vpop.f32.mrb[0].mxu0
  %v5249 = vadd.f32 %v5089, %v5248
  %v5250 = vpop.f32.mrb[0].mxu0
  %v5251 = vpop.f32.mrb[0].mxu0
  %v5252 = vadd.f32 %v5092, %v5251
  %v5253 = vpop.f32.mrb[0].mxu0
  %5254 = vmatprep.mubr.bf16.mxu0 %v2321
  %5255 = vmatmul.mubr.bf16.gmra.mrb[0].mxu0 %v2320
  %v5256 = vpop.f32.mrb[0].mxu0
  %v5257 = vadd.f32 %v5097, %v5256
  %v5258 = vpop.f32.mrb[0].mxu0
  %v5259 = vpop.f32.mrb[0].mxu0
  %v5260 = vadd.f32 %v5100, %v5259
  %v5261 = vpop.f32.mrb[0].mxu0
  %5262 = vmatprep.mubr.bf16.mxu0 %v2346
  %5263 = vmatmul.mubr.bf16.gmra.mrb[0].mxu0 %v2345
  %v5264 = vpop.f32.mrb[0].mxu0
  %v5265 = vadd.f32 %v5105, %v5264
  %v5266 = vpop.f32.mrb[0].mxu0
  %v5267 = vpop.f32.mrb[0].mxu0
  %v5268 = vadd.f32 %v5108, %v5267
  %v5269 = vpop.f32.mrb[0].mxu0
  %5270 = vmatprep.mubr.bf16.mxu0 %v2371
  %5271 = vmatmul.mubr.bf16.gmra.mrb[0].mxu0 %v2370
  %v5272 = vpop.f32.mrb[0].mxu0
  %v5273 = vadd.f32 %v5113, %v5272
  %v5274 = vpop.f32.mrb[0].mxu0
  %v5275 = vpop.f32.mrb[0].mxu0
  %v5276 = vadd.f32 %v5116, %v5275
  %v5277 = vpop.f32.mrb[0].mxu0
  %5278 = vmatprep.mubr.bf16.mxu0 %v2396
  %5279 = vmatmul.mubr.bf16.gmra.mrb[0].mxu0 %v2395
  %v5280 = vpop.f32.mrb[0].mxu0
  %v5281 = vadd.f32 %v5121, %v5280
  %v5282 = vpop.f32.mrb[0].mxu0
  %v5283 = vpop.f32.mrb[0].mxu0
  %v5284 = vpop.f32.mrb[0].mxu0
  %5285 = vdwg.mxu0
  %5286 = vmatprep.subr.bf16.mxu0 0
  %5287 = vmatpush1.bf16.msra.mxu0 %v3734
  %5288 = vmatprep.subr.bf16.mxu0 0
  %5289 = vmatpush1.bf16.msra.mxu0 %v3735
  %5290 = vmatprep.subr.bf16.mxu0 0
  %5291 = vmatpush1.bf16.msra.mxu0 %v3736
  %5292 = vmatprep.subr.bf16.mxu0 0
  %5293 = vmatpush1.bf16.msra.mxu0 %v3737
  %5294 = vmatprep.subr.bf16.mxu0 0
  %5295 = vmatpush1.bf16.msra.mxu0 %v3738
  %5296 = vmatprep.subr.bf16.mxu0 0
  %5297 = vmatpush1.bf16.msra.mxu0 %v3739
  %5298 = vmatprep.subr.bf16.mxu0 0
  %5299 = vmatpush1.bf16.msra.mxu0 %v3740
  %5300 = vmatprep.subr.bf16.mxu0 0
  %5301 = vmatpush1.bf16.msra.mxu0 %v3741
  %5302 = vmatprep.subr.bf16.mxu0 0
  %5303 = vmatpush1.bf16.msra.mxu0 %v3742
  %5304 = vmatprep.subr.bf16.mxu0 0
  %5305 = vmatpush1.bf16.msra.mxu0 %v3743
  %5306 = vmatprep.subr.bf16.mxu0 0
  %5307 = vmatpush1.bf16.msra.mxu0 %v3744
  %5308 = vmatprep.subr.bf16.mxu0 0
  %5309 = vmatpush1.bf16.msra.mxu0 %v3745
  %5310 = vmatprep.subr.bf16.mxu0 0
  %5311 = vmatpush1.bf16.msra.mxu0 %v3746
  %5312 = vmatprep.subr.bf16.mxu0 0
  %5313 = vmatpush1.bf16.msra.mxu0 %v3747
  %5314 = vmatprep.subr.bf16.mxu0 0
  %5315 = vmatpush1.bf16.msra.mxu0 %v3748
  %5316 = vmatprep.subr.bf16.mxu0 0
  %5317 = vmatpush1.bf16.msra.mxu0 %v3749
  %5318 = vmatprep.mubr.bf16.mxu0 %v2023
  %5319 = vmatmul.mubr.bf16.gmra.mrb[0].mxu0 %v2022
  %v5320 = vpop.f32.mrb[0].mxu0
  %v5321 = vadd.f32 %v5161, %v5320
  %v5322 = vpop.f32.mrb[0].mxu0
  %v5323 = vpop.f32.mrb[0].mxu0
  %v5324 = vadd.f32 %v5164, %v5323
  %v5325 = vpop.f32.mrb[0].mxu0
  %5326 = vmatprep.mubr.bf16.mxu0 %v2048
  %5327 = vmatmul.mubr.bf16.gmra.mrb[0].mxu0 %v2047
  %v5328 = vpop.f32.mrb[0].mxu0
  %v5329 = vadd.f32 %v5169, %v5328
  %v5330 = vpop.f32.mrb[0].mxu0
  %v5331 = vpop.f32.mrb[0].mxu0
  %v5332 = vadd.f32 %v5172, %v5331
  %v5333 = vpop.f32.mrb[0].mxu0
  %5334 = vmatprep.mubr.bf16.mxu0 %v2073
  %5335 = vmatmul.mubr.bf16.gmra.mrb[0].mxu0 %v2072
  %v5336 = vpop.f32.mrb[0].mxu0
  %v5337 = vadd.f32 %v5177, %v5336
  %v5338 = vpop.f32.mrb[0].mxu0
  %v5339 = vpop.f32.mrb[0].mxu0
  %v5340 = vadd.f32 %v5180, %v5339
  %v5341 = vpop.f32.mrb[0].mxu0
  %5342 = vmatprep.mubr.bf16.mxu0 %v2098
  %5343 = vmatmul.mubr.bf16.gmra.mrb[0].mxu0 %v2097
  %v5344 = vpop.f32.mrb[0].mxu0
  %v5345 = vadd.f32 %v5185, %v5344
  %v5346 = vpop.f32.mrb[0].mxu0
  %v5347 = vpop.f32.mrb[0].mxu0
  %v5348 = vadd.f32 %v5188, %v5347
  %v5349 = vpop.f32.mrb[0].mxu0
  %5350 = vmatprep.mubr.bf16.mxu0 %v2123
  %5351 = vmatmul.mubr.bf16.gmra.mrb[0].mxu0 %v2122
  %v5352 = vpop.f32.mrb[0].mxu0
  %v5353 = vadd.f32 %v5193, %v5352
  %v5354 = vpop.f32.mrb[0].mxu0
  %v5355 = vpop.f32.mrb[0].mxu0
  %v5356 = vadd.f32 %v5196, %v5355
  %v5357 = vpop.f32.mrb[0].mxu0
  %5358 = vmatprep.mubr.bf16.mxu0 %v2148
  %5359 = vmatmul.mubr.bf16.gmra.mrb[0].mxu0 %v2147
  %v5360 = vpop.f32.mrb[0].mxu0
  %v5361 = vadd.f32 %v5201, %v5360
  %v5362 = vpop.f32.mrb[0].mxu0
  %v5363 = vpop.f32.mrb[0].mxu0
  %v5364 = vadd.f32 %v5204, %v5363
  %v5365 = vpop.f32.mrb[0].mxu0
  %5366 = vmatprep.mubr.bf16.mxu0 %v2173
  %5367 = vmatmul.mubr.bf16.gmra.mrb[0].mxu0 %v2172
  %v5368 = vpop.f32.mrb[0].mxu0
  %v5369 = vadd.f32 %v5209, %v5368
  %v5370 = vpop.f32.mrb[0].mxu0
  %v5371 = vpop.f32.mrb[0].mxu0
  %v5372 = vadd.f32 %v5212, %v5371
  %v5373 = vpop.f32.mrb[0].mxu0
  %5374 = vmatprep.mubr.bf16.mxu0 %v2198
  %5375 = vmatmul.mubr.bf16.gmra.mrb[0].mxu0 %v2197
  %v5376 = vpop.f32.mrb[0].mxu0
  %v5377 = vadd.f32 %v5217, %v5376
  %v5378 = vpop.f32.mrb[0].mxu0
  %v5379 = vpop.f32.mrb[0].mxu0
  %v5380 = vadd.f32 %v5220, %v5379
  %v5381 = vpop.f32.mrb[0].mxu0
  %5382 = vmatprep.mubr.bf16.mxu0 %v2223
  %5383 = vmatmul.mubr.bf16.gmra.mrb[0].mxu0 %v2222
  %v5384 = vpop.f32.mrb[0].mxu0
  %v5385 = vadd.f32 %v5225, %v5384
  %v5386 = vpop.f32.mrb[0].mxu0
  %v5387 = vpop.f32.mrb[0].mxu0
  %v5388 = vadd.f32 %v5228, %v5387
  %v5389 = vpop.f32.mrb[0].mxu0
  %5390 = vmatprep.mubr.bf16.mxu0 %v2248
  %5391 = vmatmul.mubr.bf16.gmra.mrb[0].mxu0 %v2247
  %v5392 = vpop.f32.mrb[0].mxu0
  %v5393 = vadd.f32 %v5233, %v5392
  %v5394 = vpop.f32.mrb[0].mxu0
  %v5395 = vpop.f32.mrb[0].mxu0
  %v5396 = vadd.f32 %v5236, %v5395
  %v5397 = vpop.f32.mrb[0].mxu0
  %5398 = vmatprep.mubr.bf16.mxu0 %v2273
  %5399 = vmatmul.mubr.bf16.gmra.mrb[0].mxu0 %v2272
  %v5400 = vpop.f32.mrb[0].mxu0
  %v5401 = vadd.f32 %v5241, %v5400
  %v5402 = vpop.f32.mrb[0].mxu0
  %v5403 = vpop.f32.mrb[0].mxu0
  %v5404 = vadd.f32 %v5244, %v5403
  %v5405 = vpop.f32.mrb[0].mxu0
  %5406 = vmatprep.mubr.bf16.mxu0 %v2298
  %5407 = vmatmul.mubr.bf16.gmra.mrb[0].mxu0 %v2297
  %v5408 = vpop.f32.mrb[0].mxu0
  %v5409 = vadd.f32 %v5249, %v5408
  %v5410 = vpop.f32.mrb[0].mxu0
  %v5411 = vpop.f32.mrb[0].mxu0
  %v5412 = vadd.f32 %v5252, %v5411
  %v5413 = vpop.f32.mrb[0].mxu0
  %5414 = vmatprep.mubr.bf16.mxu0 %v2323
  %5415 = vmatmul.mubr.bf16.gmra.mrb[0].mxu0 %v2322
  %v5416 = vpop.f32.mrb[0].mxu0
  %v5417 = vadd.f32 %v5257, %v5416
  %v5418 = vpop.f32.mrb[0].mxu0
  %v5419 = vpop.f32.mrb[0].mxu0
  %v5420 = vadd.f32 %v5260, %v5419
  %v5421 = vpop.f32.mrb[0].mxu0
  %5422 = vmatprep.mubr.bf16.mxu0 %v2348
  %5423 = vmatmul.mubr.bf16.gmra.mrb[0].mxu0 %v2347
  %v5424 = vpop.f32.mrb[0].mxu0
  %v5425 = vadd.f32 %v5265, %v5424
  %v5426 = vpop.f32.mrb[0].mxu0
  %v5427 = vpop.f32.mrb[0].mxu0
  %v5428 = vadd.f32 %v5268, %v5427
  %v5429 = vpop.f32.mrb[0].mxu0
  %5430 = vmatprep.mubr.bf16.mxu0 %v2373
  %5431 = vmatmul.mubr.bf16.gmra.mrb[0].mxu0 %v2372
  %v5432 = vpop.f32.mrb[0].mxu0
  %v5433 = vadd.f32 %v5273, %v5432
  %v5434 = vpop.f32.mrb[0].mxu0
  %v5435 = vpop.f32.mrb[0].mxu0
  %v5436 = vadd.f32 %v5276, %v5435
  %v5437 = vpop.f32.mrb[0].mxu0
  %5438 = vmatprep.mubr.bf16.mxu0 %v2398
  %5439 = vmatmul.mubr.bf16.gmra.mrb[0].mxu0 %v2397
  %v5440 = vpop.f32.mrb[0].mxu0
  %v5441 = vadd.f32 %v5281, %v5440
  %v5442 = vpop.f32.mrb[0].mxu0
  %v5443 = vpop.f32.mrb[0].mxu0
  %v5444 = vpop.f32.mrb[0].mxu0
  %5445 = vdwg.mxu0
  %5446 = vmatprep.subr.bf16.mxu0 0
  %5447 = vmatpush1.bf16.msra.mxu0 %v3750
  %5448 = vmatprep.subr.bf16.mxu0 0
  %5449 = vmatpush1.bf16.msra.mxu0 %v3751
  %5450 = vmatprep.subr.bf16.mxu0 0
  %5451 = vmatpush1.bf16.msra.mxu0 %v3752
  %5452 = vmatprep.subr.bf16.mxu0 0
  %5453 = vmatpush1.bf16.msra.mxu0 %v3753
  %5454 = vmatprep.subr.bf16.mxu0 0
  %5455 = vmatpush1.bf16.msra.mxu0 %v3754
  %5456 = vmatprep.subr.bf16.mxu0 0
  %5457 = vmatpush1.bf16.msra.mxu0 %v3755
  %5458 = vmatprep.subr.bf16.mxu0 0
  %5459 = vmatpush1.bf16.msra.mxu0 %v3756
  %5460 = vmatprep.subr.bf16.mxu0 0
  %5461 = vmatpush1.bf16.msra.mxu0 %v3757
  %5462 = vmatprep.subr.bf16.mxu0 0
  %5463 = vmatpush1.bf16.msra.mxu0 %v3758
  %5464 = vmatprep.subr.bf16.mxu0 0
  %5465 = vmatpush1.bf16.msra.mxu0 %v3759
  %5466 = vmatprep.subr.bf16.mxu0 0
  %5467 = vmatpush1.bf16.msra.mxu0 %v3760
  %5468 = vmatprep.subr.bf16.mxu0 0
  %5469 = vmatpush1.bf16.msra.mxu0 %v3761
  %5470 = vmatprep.subr.bf16.mxu0 0
  %5471 = vmatpush1.bf16.msra.mxu0 %v3762
  %5472 = vmatprep.subr.bf16.mxu0 0
  %5473 = vmatpush1.bf16.msra.mxu0 %v3763
  %5474 = vmatprep.subr.bf16.mxu0 0
  %5475 = vmatpush1.bf16.msra.mxu0 %v3764
  %5476 = vmatprep.subr.bf16.mxu0 0
  %5477 = vmatpush1.bf16.msra.mxu0 %v3765
  %5478 = vmatprep.mubr.bf16.mxu0 %v2025
  %5479 = vmatmul.mubr.bf16.gmra.mrb[0].mxu0 %v2024
  %v5480 = vpop.f32.mrb[0].mxu0
  %v5481 = vadd.f32 %v5321, %v5480
  %v5482 = vpop.f32.mrb[0].mxu0
  %v5483 = vpop.f32.mrb[0].mxu0
  %v5484 = vadd.f32 %v5324, %v5483
  %v5485 = vpop.f32.mrb[0].mxu0
  %5486 = vmatprep.mubr.bf16.mxu0 %v2050
  %5487 = vmatmul.mubr.bf16.gmra.mrb[0].mxu0 %v2049
  %v5488 = vpop.f32.mrb[0].mxu0
  %v5489 = vadd.f32 %v5329, %v5488
  %v5490 = vpop.f32.mrb[0].mxu0
  %v5491 = vpop.f32.mrb[0].mxu0
  %v5492 = vadd.f32 %v5332, %v5491
  %v5493 = vpop.f32.mrb[0].mxu0
  %5494 = vmatprep.mubr.bf16.mxu0 %v2075
  %5495 = vmatmul.mubr.bf16.gmra.mrb[0].mxu0 %v2074
  %v5496 = vpop.f32.mrb[0].mxu0
  %v5497 = vadd.f32 %v5337, %v5496
  %v5498 = vpop.f32.mrb[0].mxu0
  %v5499 = vpop.f32.mrb[0].mxu0
  %v5500 = vadd.f32 %v5340, %v5499
  %v5501 = vpop.f32.mrb[0].mxu0
  %5502 = vmatprep.mubr.bf16.mxu0 %v2100
  %5503 = vmatmul.mubr.bf16.gmra.mrb[0].mxu0 %v2099
  %v5504 = vpop.f32.mrb[0].mxu0
  %v5505 = vadd.f32 %v5345, %v5504
  %v5506 = vpop.f32.mrb[0].mxu0
  %v5507 = vpop.f32.mrb[0].mxu0
  %v5508 = vadd.f32 %v5348, %v5507
  %v5509 = vpop.f32.mrb[0].mxu0
  %5510 = vmatprep.mubr.bf16.mxu0 %v2125
  %5511 = vmatmul.mubr.bf16.gmra.mrb[0].mxu0 %v2124
  %v5512 = vpop.f32.mrb[0].mxu0
  %v5513 = vadd.f32 %v5353, %v5512
  %v5514 = vpop.f32.mrb[0].mxu0
  %v5515 = vpop.f32.mrb[0].mxu0
  %v5516 = vadd.f32 %v5356, %v5515
  %v5517 = vpop.f32.mrb[0].mxu0
  %5518 = vmatprep.mubr.bf16.mxu0 %v2150
  %5519 = vmatmul.mubr.bf16.gmra.mrb[0].mxu0 %v2149
  %v5520 = vpop.f32.mrb[0].mxu0
  %v5521 = vadd.f32 %v5361, %v5520
  %v5522 = vpop.f32.mrb[0].mxu0
  %v5523 = vpop.f32.mrb[0].mxu0
  %v5524 = vadd.f32 %v5364, %v5523
  %v5525 = vpop.f32.mrb[0].mxu0
  %5526 = vmatprep.mubr.bf16.mxu0 %v2175
  %5527 = vmatmul.mubr.bf16.gmra.mrb[0].mxu0 %v2174
  %v5528 = vpop.f32.mrb[0].mxu0
  %v5529 = vadd.f32 %v5369, %v5528
  %v5530 = vpop.f32.mrb[0].mxu0
  %v5531 = vpop.f32.mrb[0].mxu0
  %v5532 = vadd.f32 %v5372, %v5531
  %v5533 = vpop.f32.mrb[0].mxu0
  %5534 = vmatprep.mubr.bf16.mxu0 %v2200
  %5535 = vmatmul.mubr.bf16.gmra.mrb[0].mxu0 %v2199
  %v5536 = vpop.f32.mrb[0].mxu0
  %v5537 = vadd.f32 %v5377, %v5536
  %v5538 = vpop.f32.mrb[0].mxu0
  %v5539 = vpop.f32.mrb[0].mxu0
  %v5540 = vadd.f32 %v5380, %v5539
  %v5541 = vpop.f32.mrb[0].mxu0
  %5542 = vmatprep.mubr.bf16.mxu0 %v2225
  %5543 = vmatmul.mubr.bf16.gmra.mrb[0].mxu0 %v2224
  %v5544 = vpop.f32.mrb[0].mxu0
  %v5545 = vadd.f32 %v5385, %v5544
  %v5546 = vpop.f32.mrb[0].mxu0
  %v5547 = vpop.f32.mrb[0].mxu0
  %v5548 = vadd.f32 %v5388, %v5547
  %v5549 = vpop.f32.mrb[0].mxu0
  %5550 = vmatprep.mubr.bf16.mxu0 %v2250
  %5551 = vmatmul.mubr.bf16.gmra.mrb[0].mxu0 %v2249
  %v5552 = vpop.f32.mrb[0].mxu0
  %v5553 = vadd.f32 %v5393, %v5552
  %v5554 = vpop.f32.mrb[0].mxu0
  %v5555 = vpop.f32.mrb[0].mxu0
  %v5556 = vadd.f32 %v5396, %v5555
  %v5557 = vpop.f32.mrb[0].mxu0
  %5558 = vmatprep.mubr.bf16.mxu0 %v2275
  %5559 = vmatmul.mubr.bf16.gmra.mrb[0].mxu0 %v2274
  %v5560 = vpop.f32.mrb[0].mxu0
  %v5561 = vadd.f32 %v5401, %v5560
  %v5562 = vpop.f32.mrb[0].mxu0
  %v5563 = vpop.f32.mrb[0].mxu0
  %v5564 = vadd.f32 %v5404, %v5563
  %v5565 = vpop.f32.mrb[0].mxu0
  %5566 = vmatprep.mubr.bf16.mxu0 %v2300
  %5567 = vmatmul.mubr.bf16.gmra.mrb[0].mxu0 %v2299
  %v5568 = vpop.f32.mrb[0].mxu0
  %v5569 = vadd.f32 %v5409, %v5568
  %v5570 = vpop.f32.mrb[0].mxu0
  %v5571 = vpop.f32.mrb[0].mxu0
  %v5572 = vadd.f32 %v5412, %v5571
  %v5573 = vpop.f32.mrb[0].mxu0
  %5574 = vmatprep.mubr.bf16.mxu0 %v2325
  %5575 = vmatmul.mubr.bf16.gmra.mrb[0].mxu0 %v2324
  %v5576 = vpop.f32.mrb[0].mxu0
  %v5577 = vadd.f32 %v5417, %v5576
  %v5578 = vpop.f32.mrb[0].mxu0
  %v5579 = vpop.f32.mrb[0].mxu0
  %v5580 = vadd.f32 %v5420, %v5579
  %v5581 = vpop.f32.mrb[0].mxu0
  %5582 = vmatprep.mubr.bf16.mxu0 %v2350
  %5583 = vmatmul.mubr.bf16.gmra.mrb[0].mxu0 %v2349
  %v5584 = vpop.f32.mrb[0].mxu0
  %v5585 = vadd.f32 %v5425, %v5584
  %v5586 = vpop.f32.mrb[0].mxu0
  %v5587 = vpop.f32.mrb[0].mxu0
  %v5588 = vadd.f32 %v5428, %v5587
  %v5589 = vpop.f32.mrb[0].mxu0
  %5590 = vmatprep.mubr.bf16.mxu0 %v2375
  %5591 = vmatmul.mubr.bf16.gmra.mrb[0].mxu0 %v2374
  %v5592 = vpop.f32.mrb[0].mxu0
  %v5593 = vadd.f32 %v5433, %v5592
  %v5594 = vpop.f32.mrb[0].mxu0
  %v5595 = vpop.f32.mrb[0].mxu0
  %v5596 = vadd.f32 %v5436, %v5595
  %v5597 = vpop.f32.mrb[0].mxu0
  %5598 = vmatprep.mubr.bf16.mxu0 %v2400
  %5599 = vmatmul.mubr.bf16.gmra.mrb[0].mxu0 %v2399
  %v5600 = vpop.f32.mrb[0].mxu0
  %v5601 = vadd.f32 %v5441, %v5600
  %v5602 = vpop.f32.mrb[0].mxu0
  %v5603 = vpop.f32.mrb[0].mxu0
  %v5604 = vpop.f32.mrb[0].mxu0
  %5605 = vdwg.mxu0
  %5606 = vmatprep.subr.bf16.mxu0 0
  %5607 = vmatpush1.bf16.msra.mxu0 %v3766
  %5608 = vmatprep.subr.bf16.mxu0 0
  %5609 = vmatpush1.bf16.msra.mxu0 %v3767
  %5610 = vmatprep.subr.bf16.mxu0 0
  %5611 = vmatpush1.bf16.msra.mxu0 %v3768
  %5612 = vmatprep.subr.bf16.mxu0 0
  %5613 = vmatpush1.bf16.msra.mxu0 %v3769
  %5614 = vmatprep.subr.bf16.mxu0 0
  %5615 = vmatpush1.bf16.msra.mxu0 %v3770
  %5616 = vmatprep.subr.bf16.mxu0 0
  %5617 = vmatpush1.bf16.msra.mxu0 %v3771
  %5618 = vmatprep.subr.bf16.mxu0 0
  %5619 = vmatpush1.bf16.msra.mxu0 %v3772
  %5620 = vmatprep.subr.bf16.mxu0 0
  %5621 = vmatpush1.bf16.msra.mxu0 %v3773
  %5622 = vmatprep.subr.bf16.mxu0 0
  %5623 = vmatpush1.bf16.msra.mxu0 %v3774
  %5624 = vmatprep.subr.bf16.mxu0 0
  %5625 = vmatpush1.bf16.msra.mxu0 %v3775
  %5626 = vmatprep.subr.bf16.mxu0 0
  %5627 = vmatpush1.bf16.msra.mxu0 %v3776
  %5628 = vmatprep.subr.bf16.mxu0 0
  %5629 = vmatpush1.bf16.msra.mxu0 %v3777
  %5630 = vmatprep.subr.bf16.mxu0 0
  %5631 = vmatpush1.bf16.msra.mxu0 %v3778
  %5632 = vmatprep.subr.bf16.mxu0 0
  %5633 = vmatpush1.bf16.msra.mxu0 %v3779
  %5634 = vmatprep.subr.bf16.mxu0 0
  %5635 = vmatpush1.bf16.msra.mxu0 %v3780
  %5636 = vmatprep.subr.bf16.mxu0 0
  %5637 = vmatpush1.bf16.msra.mxu0 %v3781
  %5638 = vmatprep.mubr.bf16.mxu0 %v2027
  %5639 = vmatmul.mubr.bf16.gmra.mrb[0].mxu0 %v2026
  %v5640 = vpop.f32.mrb[0].mxu0
  %v5641 = vadd.f32 %v5481, %v5640
  %v5642 = vpop.f32.mrb[0].mxu0
  %v5643 = vpop.f32.mrb[0].mxu0
  %v5644 = vadd.f32 %v5484, %v5643
  %v5645 = vpop.f32.mrb[0].mxu0
  %5646 = vmatprep.mubr.bf16.mxu0 %v2052
  %5647 = vmatmul.mubr.bf16.gmra.mrb[0].mxu0 %v2051
  %v5648 = vpop.f32.mrb[0].mxu0
  %v5649 = vadd.f32 %v5489, %v5648
  %v5650 = vpop.f32.mrb[0].mxu0
  %v5651 = vpop.f32.mrb[0].mxu0
  %v5652 = vadd.f32 %v5492, %v5651
  %v5653 = vpop.f32.mrb[0].mxu0
  %5654 = vmatprep.mubr.bf16.mxu0 %v2077
  %5655 = vmatmul.mubr.bf16.gmra.mrb[0].mxu0 %v2076
  %v5656 = vpop.f32.mrb[0].mxu0
  %v5657 = vadd.f32 %v5497, %v5656
  %v5658 = vpop.f32.mrb[0].mxu0
  %v5659 = vpop.f32.mrb[0].mxu0
  %v5660 = vadd.f32 %v5500, %v5659
  %v5661 = vpop.f32.mrb[0].mxu0
  %5662 = vmatprep.mubr.bf16.mxu0 %v2102
  %5663 = vmatmul.mubr.bf16.gmra.mrb[0].mxu0 %v2101
  %v5664 = vpop.f32.mrb[0].mxu0
  %v5665 = vadd.f32 %v5505, %v5664
  %v5666 = vpop.f32.mrb[0].mxu0
  %v5667 = vpop.f32.mrb[0].mxu0
  %v5668 = vadd.f32 %v5508, %v5667
  %v5669 = vpop.f32.mrb[0].mxu0
  %5670 = vmatprep.mubr.bf16.mxu0 %v2127
  %5671 = vmatmul.mubr.bf16.gmra.mrb[0].mxu0 %v2126
  %v5672 = vpop.f32.mrb[0].mxu0
  %v5673 = vadd.f32 %v5513, %v5672
  %v5674 = vpop.f32.mrb[0].mxu0
  %v5675 = vpop.f32.mrb[0].mxu0
  %v5676 = vadd.f32 %v5516, %v5675
  %v5677 = vpop.f32.mrb[0].mxu0
  %5678 = vmatprep.mubr.bf16.mxu0 %v2152
  %5679 = vmatmul.mubr.bf16.gmra.mrb[0].mxu0 %v2151
  %v5680 = vpop.f32.mrb[0].mxu0
  %v5681 = vadd.f32 %v5521, %v5680
  %v5682 = vpop.f32.mrb[0].mxu0
  %v5683 = vpop.f32.mrb[0].mxu0
  %v5684 = vadd.f32 %v5524, %v5683
  %v5685 = vpop.f32.mrb[0].mxu0
  %5686 = vmatprep.mubr.bf16.mxu0 %v2177
  %5687 = vmatmul.mubr.bf16.gmra.mrb[0].mxu0 %v2176
  %v5688 = vpop.f32.mrb[0].mxu0
  %v5689 = vadd.f32 %v5529, %v5688
  %v5690 = vpop.f32.mrb[0].mxu0
  %v5691 = vpop.f32.mrb[0].mxu0
  %v5692 = vadd.f32 %v5532, %v5691
  %v5693 = vpop.f32.mrb[0].mxu0
  %5694 = vmatprep.mubr.bf16.mxu0 %v2202
  %5695 = vmatmul.mubr.bf16.gmra.mrb[0].mxu0 %v2201
  %v5696 = vpop.f32.mrb[0].mxu0
  %v5697 = vadd.f32 %v5537, %v5696
  %v5698 = vpop.f32.mrb[0].mxu0
  %v5699 = vpop.f32.mrb[0].mxu0
  %v5700 = vadd.f32 %v5540, %v5699
  %v5701 = vpop.f32.mrb[0].mxu0
  %5702 = vmatprep.mubr.bf16.mxu0 %v2227
  %5703 = vmatmul.mubr.bf16.gmra.mrb[0].mxu0 %v2226
  %v5704 = vpop.f32.mrb[0].mxu0
  %v5705 = vadd.f32 %v5545, %v5704
  %v5706 = vpop.f32.mrb[0].mxu0
  %v5707 = vpop.f32.mrb[0].mxu0
  %v5708 = vadd.f32 %v5548, %v5707
  %v5709 = vpop.f32.mrb[0].mxu0
  %5710 = vmatprep.mubr.bf16.mxu0 %v2252
  %5711 = vmatmul.mubr.bf16.gmra.mrb[0].mxu0 %v2251
  %v5712 = vpop.f32.mrb[0].mxu0
  %v5713 = vadd.f32 %v5553, %v5712
  %v5714 = vpop.f32.mrb[0].mxu0
  %v5715 = vpop.f32.mrb[0].mxu0
  %v5716 = vadd.f32 %v5556, %v5715
  %v5717 = vpop.f32.mrb[0].mxu0
  %5718 = vmatprep.mubr.bf16.mxu0 %v2277
  %5719 = vmatmul.mubr.bf16.gmra.mrb[0].mxu0 %v2276
  %v5720 = vpop.f32.mrb[0].mxu0
  %v5721 = vadd.f32 %v5561, %v5720
  %v5722 = vpop.f32.mrb[0].mxu0
  %v5723 = vpop.f32.mrb[0].mxu0
  %v5724 = vadd.f32 %v5564, %v5723
  %v5725 = vpop.f32.mrb[0].mxu0
  %5726 = vmatprep.mubr.bf16.mxu0 %v2302
  %5727 = vmatmul.mubr.bf16.gmra.mrb[0].mxu0 %v2301
  %v5728 = vpop.f32.mrb[0].mxu0
  %v5729 = vadd.f32 %v5569, %v5728
  %v5730 = vpop.f32.mrb[0].mxu0
  %v5731 = vpop.f32.mrb[0].mxu0
  %v5732 = vadd.f32 %v5572, %v5731
  %v5733 = vpop.f32.mrb[0].mxu0
  %5734 = vmatprep.mubr.bf16.mxu0 %v2327
  %5735 = vmatmul.mubr.bf16.gmra.mrb[0].mxu0 %v2326
  %v5736 = vpop.f32.mrb[0].mxu0
  %v5737 = vadd.f32 %v5577, %v5736
  %v5738 = vpop.f32.mrb[0].mxu0
  %v5739 = vpop.f32.mrb[0].mxu0
  %v5740 = vadd.f32 %v5580, %v5739
  %v5741 = vpop.f32.mrb[0].mxu0
  %5742 = vmatprep.mubr.bf16.mxu0 %v2352
  %5743 = vmatmul.mubr.bf16.gmra.mrb[0].mxu0 %v2351
  %v5744 = vpop.f32.mrb[0].mxu0
  %v5745 = vadd.f32 %v5585, %v5744
  %v5746 = vpop.f32.mrb[0].mxu0
  %v5747 = vpop.f32.mrb[0].mxu0
  %v5748 = vadd.f32 %v5588, %v5747
  %v5749 = vpop.f32.mrb[0].mxu0
  %5750 = vmatprep.mubr.bf16.mxu0 %v2377
  %5751 = vmatmul.mubr.bf16.gmra.mrb[0].mxu0 %v2376
  %v5752 = vpop.f32.mrb[0].mxu0
  %v5753 = vadd.f32 %v5593, %v5752
  %v5754 = vpop.f32.mrb[0].mxu0
  %v5755 = vpop.f32.mrb[0].mxu0
  %v5756 = vadd.f32 %v5596, %v5755
  %v5757 = vpop.f32.mrb[0].mxu0
  %5758 = vmatprep.mubr.bf16.mxu0 %v2402
  %5759 = vmatmul.mubr.bf16.gmra.mrb[0].mxu0 %v2401
  %v5760 = vpop.f32.mrb[0].mxu0
  %v5761 = vadd.f32 %v5601, %v5760
  %v5762 = vpop.f32.mrb[0].mxu0
  %v5763 = vpop.f32.mrb[0].mxu0
  %v5764 = vpop.f32.mrb[0].mxu0
  %5765 = vdwg.mxu0
  %5766 = vmatprep.subr.bf16.mxu0 0
  %5767 = vmatpush1.bf16.msra.mxu0 %v3782
  %5768 = vmatprep.subr.bf16.mxu0 0
  %5769 = vmatpush1.bf16.msra.mxu0 %v3783
  %5770 = vmatprep.subr.bf16.mxu0 0
  %5771 = vmatpush1.bf16.msra.mxu0 %v3784
  %5772 = vmatprep.subr.bf16.mxu0 0
  %5773 = vmatpush1.bf16.msra.mxu0 %v3785
  %5774 = vmatprep.subr.bf16.mxu0 0
  %5775 = vmatpush1.bf16.msra.mxu0 %v3786
  %5776 = vmatprep.subr.bf16.mxu0 0
  %5777 = vmatpush1.bf16.msra.mxu0 %v3787
  %5778 = vmatprep.subr.bf16.mxu0 0
  %5779 = vmatpush1.bf16.msra.mxu0 %v3788
  %5780 = vmatprep.subr.bf16.mxu0 0
  %5781 = vmatpush1.bf16.msra.mxu0 %v3789
  %5782 = vmatprep.subr.bf16.mxu0 0
  %5783 = vmatpush1.bf16.msra.mxu0 %v3790
  %5784 = vmatprep.subr.bf16.mxu0 0
  %5785 = vmatpush1.bf16.msra.mxu0 %v3791
  %5786 = vmatprep.subr.bf16.mxu0 0
  %5787 = vmatpush1.bf16.msra.mxu0 %v3792
  %5788 = vmatprep.subr.bf16.mxu0 0
  %5789 = vmatpush1.bf16.msra.mxu0 %v3793
  %5790 = vmatprep.subr.bf16.mxu0 0
  %5791 = vmatpush1.bf16.msra.mxu0 %v3794
  %5792 = vmatprep.subr.bf16.mxu0 0
  %5793 = vmatpush1.bf16.msra.mxu0 %v3795
  %5794 = vmatprep.subr.bf16.mxu0 0
  %5795 = vmatpush1.bf16.msra.mxu0 %v3796
  %5796 = vmatprep.subr.bf16.mxu0 0
  %5797 = vmatpush1.bf16.msra.mxu0 %v3797
  %5798 = vmatprep.mubr.bf16.mxu0 %v2029
  %5799 = vmatmul.mubr.bf16.gmra.mrb[0].mxu0 %v2028
  %v5800 = vpop.f32.mrb[0].mxu0
  %v5801 = vadd.f32 %v5641, %v5800
  %v5802 = vpop.f32.mrb[0].mxu0
  %v5803 = vpop.f32.mrb[0].mxu0
  %v5804 = vadd.f32 %v5644, %v5803
  %v5805 = vpop.f32.mrb[0].mxu0
  %5806 = vmatprep.mubr.bf16.mxu0 %v2054
  %5807 = vmatmul.mubr.bf16.gmra.mrb[0].mxu0 %v2053
  %v5808 = vpop.f32.mrb[0].mxu0
  %v5809 = vadd.f32 %v5649, %v5808
  %v5810 = vpop.f32.mrb[0].mxu0
  %v5811 = vpop.f32.mrb[0].mxu0
  %v5812 = vadd.f32 %v5652, %v5811
  %v5813 = vpop.f32.mrb[0].mxu0
  %5814 = vmatprep.mubr.bf16.mxu0 %v2079
  %5815 = vmatmul.mubr.bf16.gmra.mrb[0].mxu0 %v2078
  %v5816 = vpop.f32.mrb[0].mxu0
  %v5817 = vadd.f32 %v5657, %v5816
  %v5818 = vpop.f32.mrb[0].mxu0
  %v5819 = vpop.f32.mrb[0].mxu0
  %v5820 = vadd.f32 %v5660, %v5819
  %v5821 = vpop.f32.mrb[0].mxu0
  %5822 = vmatprep.mubr.bf16.mxu0 %v2104
  %5823 = vmatmul.mubr.bf16.gmra.mrb[0].mxu0 %v2103
  %v5824 = vpop.f32.mrb[0].mxu0
  %v5825 = vadd.f32 %v5665, %v5824
  %v5826 = vpop.f32.mrb[0].mxu0
  %v5827 = vpop.f32.mrb[0].mxu0
  %v5828 = vadd.f32 %v5668, %v5827
  %v5829 = vpop.f32.mrb[0].mxu0
  %5830 = vmatprep.mubr.bf16.mxu0 %v2129
  %5831 = vmatmul.mubr.bf16.gmra.mrb[0].mxu0 %v2128
  %v5832 = vpop.f32.mrb[0].mxu0
  %v5833 = vadd.f32 %v5673, %v5832
  %v5834 = vpop.f32.mrb[0].mxu0
  %v5835 = vpop.f32.mrb[0].mxu0
  %v5836 = vadd.f32 %v5676, %v5835
  %v5837 = vpop.f32.mrb[0].mxu0
  %5838 = vmatprep.mubr.bf16.mxu0 %v2154
  %5839 = vmatmul.mubr.bf16.gmra.mrb[0].mxu0 %v2153
  %v5840 = vpop.f32.mrb[0].mxu0
  %v5841 = vadd.f32 %v5681, %v5840
  %v5842 = vpop.f32.mrb[0].mxu0
  %v5843 = vpop.f32.mrb[0].mxu0
  %v5844 = vadd.f32 %v5684, %v5843
  %v5845 = vpop.f32.mrb[0].mxu0
  %5846 = vmatprep.mubr.bf16.mxu0 %v2179
  %5847 = vmatmul.mubr.bf16.gmra.mrb[0].mxu0 %v2178
  %v5848 = vpop.f32.mrb[0].mxu0
  %v5849 = vadd.f32 %v5689, %v5848
  %v5850 = vpop.f32.mrb[0].mxu0
  %v5851 = vpop.f32.mrb[0].mxu0
  %v5852 = vadd.f32 %v5692, %v5851
  %v5853 = vpop.f32.mrb[0].mxu0
  %5854 = vmatprep.mubr.bf16.mxu0 %v2204
  %5855 = vmatmul.mubr.bf16.gmra.mrb[0].mxu0 %v2203
  %v5856 = vpop.f32.mrb[0].mxu0
  %v5857 = vadd.f32 %v5697, %v5856
  %v5858 = vpop.f32.mrb[0].mxu0
  %v5859 = vpop.f32.mrb[0].mxu0
  %v5860 = vadd.f32 %v5700, %v5859
  %v5861 = vpop.f32.mrb[0].mxu0
  %5862 = vmatprep.mubr.bf16.mxu0 %v2229
  %5863 = vmatmul.mubr.bf16.gmra.mrb[0].mxu0 %v2228
  %v5864 = vpop.f32.mrb[0].mxu0
  %v5865 = vadd.f32 %v5705, %v5864
  %v5866 = vpop.f32.mrb[0].mxu0
  %v5867 = vpop.f32.mrb[0].mxu0
  %v5868 = vadd.f32 %v5708, %v5867
  %v5869 = vpop.f32.mrb[0].mxu0
  %5870 = vmatprep.mubr.bf16.mxu0 %v2254
  %5871 = vmatmul.mubr.bf16.gmra.mrb[0].mxu0 %v2253
  %v5872 = vpop.f32.mrb[0].mxu0
  %v5873 = vadd.f32 %v5713, %v5872
  %v5874 = vpop.f32.mrb[0].mxu0
  %v5875 = vpop.f32.mrb[0].mxu0
  %v5876 = vadd.f32 %v5716, %v5875
  %v5877 = vpop.f32.mrb[0].mxu0
  %5878 = vmatprep.mubr.bf16.mxu0 %v2279
  %5879 = vmatmul.mubr.bf16.gmra.mrb[0].mxu0 %v2278
  %v5880 = vpop.f32.mrb[0].mxu0
  %v5881 = vadd.f32 %v5721, %v5880
  %v5882 = vpop.f32.mrb[0].mxu0
  %v5883 = vpop.f32.mrb[0].mxu0
  %v5884 = vadd.f32 %v5724, %v5883
  %v5885 = vpop.f32.mrb[0].mxu0
  %5886 = vmatprep.mubr.bf16.mxu0 %v2304
  %5887 = vmatmul.mubr.bf16.gmra.mrb[0].mxu0 %v2303
  %v5888 = vpop.f32.mrb[0].mxu0
  %v5889 = vadd.f32 %v5729, %v5888
  %v5890 = vpop.f32.mrb[0].mxu0
  %v5891 = vpop.f32.mrb[0].mxu0
  %v5892 = vadd.f32 %v5732, %v5891
  %v5893 = vpop.f32.mrb[0].mxu0
  %5894 = vmatprep.mubr.bf16.mxu0 %v2329
  %5895 = vmatmul.mubr.bf16.gmra.mrb[0].mxu0 %v2328
  %v5896 = vpop.f32.mrb[0].mxu0
  %v5897 = vadd.f32 %v5737, %v5896
  %v5898 = vpop.f32.mrb[0].mxu0
  %v5899 = vpop.f32.mrb[0].mxu0
  %v5900 = vadd.f32 %v5740, %v5899
  %v5901 = vpop.f32.mrb[0].mxu0
  %5902 = vmatprep.mubr.bf16.mxu0 %v2354
  %5903 = vmatmul.mubr.bf16.gmra.mrb[0].mxu0 %v2353
  %v5904 = vpop.f32.mrb[0].mxu0
  %v5905 = vadd.f32 %v5745, %v5904
  %v5906 = vpop.f32.mrb[0].mxu0
  %v5907 = vpop.f32.mrb[0].mxu0
  %v5908 = vadd.f32 %v5748, %v5907
  %v5909 = vpop.f32.mrb[0].mxu0
  %5910 = vmatprep.mubr.bf16.mxu0 %v2379
  %5911 = vmatmul.mubr.bf16.gmra.mrb[0].mxu0 %v2378
  %v5912 = vpop.f32.mrb[0].mxu0
  %v5913 = vadd.f32 %v5753, %v5912
  %v5914 = vpop.f32.mrb[0].mxu0
  %v5915 = vpop.f32.mrb[0].mxu0
  %v5916 = vadd.f32 %v5756, %v5915
  %v5917 = vpop.f32.mrb[0].mxu0
  %5918 = vmatprep.mubr.bf16.mxu0 %v2404
  %5919 = vmatmul.mubr.bf16.gmra.mrb[0].mxu0 %v2403
  %v5920 = vpop.f32.mrb[0].mxu0
  %v5921 = vadd.f32 %v5761, %v5920
  %v5922 = vpop.f32.mrb[0].mxu0
  %v5923 = vpop.f32.mrb[0].mxu0
  %v5924 = vpop.f32.mrb[0].mxu0
  %5925 = vdwg.mxu0
  %5926 = vmatprep.subr.bf16.mxu0 0
  %5927 = vmatpush1.bf16.msra.mxu0 %v3798
  %5928 = vmatprep.subr.bf16.mxu0 0
  %5929 = vmatpush1.bf16.msra.mxu0 %v3799
  %5930 = vmatprep.subr.bf16.mxu0 0
  %5931 = vmatpush1.bf16.msra.mxu0 %v3800
  %5932 = vmatprep.subr.bf16.mxu0 0
  %5933 = vmatpush1.bf16.msra.mxu0 %v3801
  %5934 = vmatprep.subr.bf16.mxu0 0
  %5935 = vmatpush1.bf16.msra.mxu0 %v3802
  %5936 = vmatprep.subr.bf16.mxu0 0
  %5937 = vmatpush1.bf16.msra.mxu0 %v3803
  %5938 = vmatprep.subr.bf16.mxu0 0
  %5939 = vmatpush1.bf16.msra.mxu0 %v3804
  %5940 = vmatprep.subr.bf16.mxu0 0
  %5941 = vmatpush1.bf16.msra.mxu0 %v3805
  %5942 = vmatprep.subr.bf16.mxu0 0
  %5943 = vmatpush1.bf16.msra.mxu0 0
  %5944 = vmatprep.subr.bf16.mxu0 0
  %5945 = vmatpush1.bf16.msra.mxu0 0
  %5946 = vmatprep.subr.bf16.mxu0 0
  %5947 = vmatpush1.bf16.msra.mxu0 0
  %5948 = vmatprep.subr.bf16.mxu0 0
  %5949 = vmatpush1.bf16.msra.mxu0 0
  %5950 = vmatprep.subr.bf16.mxu0 0
  %5951 = vmatpush1.bf16.msra.mxu0 0
  %5952 = vmatprep.subr.bf16.mxu0 0
  %5953 = vmatpush1.bf16.msra.mxu0 0
  %5954 = vmatprep.subr.bf16.mxu0 0
  %5955 = vmatpush1.bf16.msra.mxu0 0
  %5956 = vmatprep.subr.bf16.mxu0 0
  %5957 = vmatpush1.bf16.msra.mxu0 0
  %5958 = vmatprep.mubr.bf16.mxu0 0
  %5959 = vmatmul.mubr.bf16.gmra.mrb[0].mxu0 %v2030
  %v5960 = vpop.f32.mrb[0].mxu0
  %v5961 = vadd.f32 %v5801, %v5960
  %v5962 = vpop.f32.mrb[0].mxu0
  %v5963 = vpop.f32.mrb[0].mxu0
  %v5964 = vadd.f32 %v5804, %v5963
  %v5965 = vpop.f32.mrb[0].mxu0
  %5966 = vmatprep.mubr.bf16.mxu0 0
  %5967 = vmatmul.mubr.bf16.gmra.mrb[0].mxu0 %v2055
  %v5968 = vpop.f32.mrb[0].mxu0
  %v5969 = vadd.f32 %v5809, %v5968
  %v5970 = vpop.f32.mrb[0].mxu0
  %v5971 = vpop.f32.mrb[0].mxu0
  %v5972 = vadd.f32 %v5812, %v5971
  %v5973 = vpop.f32.mrb[0].mxu0
  %5974 = vmatprep.mubr.bf16.mxu0 0
  %5975 = vmatmul.mubr.bf16.gmra.mrb[0].mxu0 %v2080
  %v5976 = vpop.f32.mrb[0].mxu0
  %v5977 = vadd.f32 %v5817, %v5976
  %v5978 = vpop.f32.mrb[0].mxu0
  %v5979 = vpop.f32.mrb[0].mxu0
  %v5980 = vadd.f32 %v5820, %v5979
  %v5981 = vpop.f32.mrb[0].mxu0
  %5982 = vmatprep.mubr.bf16.mxu0 0
  %5983 = vmatmul.mubr.bf16.gmra.mrb[0].mxu0 %v2105
  %v5984 = vpop.f32.mrb[0].mxu0
  %v5985 = vadd.f32 %v5825, %v5984
  %v5986 = vpop.f32.mrb[0].mxu0
  %v5987 = vpop.f32.mrb[0].mxu0
  %v5988 = vadd.f32 %v5828, %v5987
  %v5989 = vpop.f32.mrb[0].mxu0
  %5990 = vmatprep.mubr.bf16.mxu0 0
  %5991 = vmatmul.mubr.bf16.gmra.mrb[0].mxu0 %v2130
  %v5992 = vpop.f32.mrb[0].mxu0
  %v5993 = vadd.f32 %v5833, %v5992
  %v5994 = vpop.f32.mrb[0].mxu0
  %v5995 = vpop.f32.mrb[0].mxu0
  %v5996 = vadd.f32 %v5836, %v5995
  %v5997 = vpop.f32.mrb[0].mxu0
  %5998 = vmatprep.mubr.bf16.mxu0 0
  %5999 = vmatmul.mubr.bf16.gmra.mrb[0].mxu0 %v2155
  %v6000 = vpop.f32.mrb[0].mxu0
  %v6001 = vadd.f32 %v5841, %v6000
  %v6002 = vpop.f32.mrb[0].mxu0
  %v6003 = vpop.f32.mrb[0].mxu0
  %v6004 = vadd.f32 %v5844, %v6003
  %v6005 = vpop.f32.mrb[0].mxu0
  %6006 = vmatprep.mubr.bf16.mxu0 0
  %6007 = vmatmul.mubr.bf16.gmra.mrb[0].mxu0 %v2180
  %v6008 = vpop.f32.mrb[0].mxu0
  %v6009 = vadd.f32 %v5849, %v6008
  %v6010 = vpop.f32.mrb[0].mxu0
  %v6011 = vpop.f32.mrb[0].mxu0
  %v6012 = vadd.f32 %v5852, %v6011
  %v6013 = vpop.f32.mrb[0].mxu0
  %6014 = vmatprep.mubr.bf16.mxu0 0
  %6015 = vmatmul.mubr.bf16.gmra.mrb[0].mxu0 %v2205
  %v6016 = vpop.f32.mrb[0].mxu0
  %v6017 = vadd.f32 %v5857, %v6016
  %v6018 = vpop.f32.mrb[0].mxu0
  %v6019 = vpop.f32.mrb[0].mxu0
  %v6020 = vadd.f32 %v5860, %v6019
  %v6021 = vpop.f32.mrb[0].mxu0
  %6022 = vmatprep.mubr.bf16.mxu0 0
  %6023 = vmatmul.mubr.bf16.gmra.mrb[0].mxu0 %v2230
  %v6024 = vpop.f32.mrb[0].mxu0
  %v6025 = vadd.f32 %v5865, %v6024
  %v6026 = vpop.f32.mrb[0].mxu0
  %v6027 = vpop.f32.mrb[0].mxu0
  %v6028 = vadd.f32 %v5868, %v6027
  %v6029 = vpop.f32.mrb[0].mxu0
  %6030 = vmatprep.mubr.bf16.mxu0 0
  %6031 = vmatmul.mubr.bf16.gmra.mrb[0].mxu0 %v2255
  %v6032 = vpop.f32.mrb[0].mxu0
  %v6033 = vadd.f32 %v5873, %v6032
  %v6034 = vpop.f32.mrb[0].mxu0
  %v6035 = vpop.f32.mrb[0].mxu0
  %v6036 = vadd.f32 %v5876, %v6035
  %v6037 = vpop.f32.mrb[0].mxu0
  %6038 = vmatprep.mubr.bf16.mxu0 0
  %6039 = vmatmul.mubr.bf16.gmra.mrb[0].mxu0 %v2280
  %v6040 = vpop.f32.mrb[0].mxu0
  %v6041 = vadd.f32 %v5881, %v6040
  %v6042 = vpop.f32.mrb[0].mxu0
  %v6043 = vpop.f32.mrb[0].mxu0
  %v6044 = vadd.f32 %v5884, %v6043
  %v6045 = vpop.f32.mrb[0].mxu0
  %6046 = vmatprep.mubr.bf16.mxu0 0
  %6047 = vmatmul.mubr.bf16.gmra.mrb[0].mxu0 %v2305
  %v6048 = vpop.f32.mrb[0].mxu0
  %v6049 = vadd.f32 %v5889, %v6048
  %v6050 = vpop.f32.mrb[0].mxu0
  %v6051 = vpop.f32.mrb[0].mxu0
  %v6052 = vadd.f32 %v5892, %v6051
  %v6053 = vpop.f32.mrb[0].mxu0
  %6054 = vmatprep.mubr.bf16.mxu0 0
  %6055 = vmatmul.mubr.bf16.gmra.mrb[0].mxu0 %v2330
  %v6056 = vpop.f32.mrb[0].mxu0
  %v6057 = vadd.f32 %v5897, %v6056
  %v6058 = vpop.f32.mrb[0].mxu0
  %v6059 = vpop.f32.mrb[0].mxu0
  %v6060 = vadd.f32 %v5900, %v6059
  %v6061 = vpop.f32.mrb[0].mxu0
  %6062 = vmatprep.mubr.bf16.mxu0 0
  %6063 = vmatmul.mubr.bf16.gmra.mrb[0].mxu0 %v2355
  %v6064 = vpop.f32.mrb[0].mxu0
  %v6065 = vadd.f32 %v5905, %v6064
  %v6066 = vpop.f32.mrb[0].mxu0
  %v6067 = vpop.f32.mrb[0].mxu0
  %v6068 = vadd.f32 %v5908, %v6067
  %v6069 = vpop.f32.mrb[0].mxu0
  %6070 = vmatprep.mubr.bf16.mxu0 0
  %6071 = vmatmul.mubr.bf16.gmra.mrb[0].mxu0 %v2380
  %v6072 = vpop.f32.mrb[0].mxu0
  %v6073 = vadd.f32 %v5913, %v6072
  %v6074 = vpop.f32.mrb[0].mxu0
  %v6075 = vpop.f32.mrb[0].mxu0
  %v6076 = vadd.f32 %v5916, %v6075
  %v6077 = vpop.f32.mrb[0].mxu0
  %6078 = vmatprep.mubr.bf16.mxu0 0
  %6079 = vmatmul.mubr.bf16.gmra.mrb[0].mxu0 %v2405
  %v6080 = vpop.f32.mrb[0].mxu0
  %v6081 = vadd.f32 %v5921, %v6080
  %v6082 = vpop.f32.mrb[0].mxu0
  %v6083 = vpop.f32.mrb[0].mxu0
  %v6084 = vpop.f32.mrb[0].mxu0
  %6085 = vdwg.mxu0
  %v6086 = vmax.f32 %v5961, 0.0
  %v6087 = vmax.f32 %v5964, 0.0
  %v6088 = vmax.f32 %v5969, 0.0
  %v6089 = vmax.f32 %v5972, 0.0
  %v6090 = vmax.f32 %v5977, 0.0
  %v6091 = vmax.f32 %v5980, 0.0
  %v6092 = vmax.f32 %v5985, 0.0
  %v6093 = vmax.f32 %v5988, 0.0
  %v6094 = vmax.f32 %v5993, 0.0
  %v6095 = vmax.f32 %v5996, 0.0
  %v6096 = vmax.f32 %v6001, 0.0
  %v6097 = vmax.f32 %v6004, 0.0
  %v6098 = vmax.f32 %v6009, 0.0
  %v6099 = vmax.f32 %v6012, 0.0
  %v6100 = vmax.f32 %v6017, 0.0
  %v6101 = vmax.f32 %v6020, 0.0
  %v6102 = vmax.f32 %v6025, 0.0
  %v6103 = vmax.f32 %v6028, 0.0
  %v6104 = vmax.f32 %v6033, 0.0
  %v6105 = vmax.f32 %v6036, 0.0
  %v6106 = vmax.f32 %v6041, 0.0
  %v6107 = vmax.f32 %v6044, 0.0
  %v6108 = vmax.f32 %v6049, 0.0
  %v6109 = vmax.f32 %v6052, 0.0
  %v6110 = vmax.f32 %v6057, 0.0
  %v6111 = vmax.f32 %v6060, 0.0
  %v6112 = vmax.f32 %v6065, 0.0
  %v6113 = vmax.f32 %v6068, 0.0
  %v6114 = vmax.f32 %v6073, 0.0
  %v6115 = vmax.f32 %v6076, 0.0
  %v6116 = vmax.f32 %v6081, 0.0
  %v6117 = vpack.c.bf16 %v6087, %v6086
  %v6118 = vpack.c.bf16 %v6089, %v6088
  %v6119 = vpack.c.bf16 %v6091, %v6090
  %v6120 = vpack.c.bf16 %v6093, %v6092
  %v6121 = vpack.c.bf16 %v6095, %v6094
  %v6122 = vpack.c.bf16 %v6097, %v6096
  %v6123 = vpack.c.bf16 %v6099, %v6098
  %v6124 = vpack.c.bf16 %v6101, %v6100
  %v6125 = vpack.c.bf16 %v6103, %v6102
  %v6126 = vpack.c.bf16 %v6105, %v6104
  %v6127 = vpack.c.bf16 %v6107, %v6106
  %v6128 = vpack.c.bf16 %v6109, %v6108
  %v6129 = vpack.c.bf16 %v6111, %v6110
  %v6130 = vpack.c.bf16 %v6113, %v6112
  %v6131 = vpack.c.bf16 %v6115, %v6114
  %v6132 = vpack.c.bf16 %v6116, %v6116
  %v6133 = vld [vmem:[%s3] sm:$0xf]
  %v6134 = vld [vmem:[%s3 + $0x4] sm:$0xf]
  %v6135 = vld [vmem:[%s3 + $0x8] sm:$0xf]
  %v6136 = vld [vmem:[%s3 + $0xc] sm:$0xf]
  %v6137 = vld [vmem:[%s3 + $0x10] sm:$0xf]
  %v6138 = vld [vmem:[%s3 + $0x14] sm:$0xf]
  %v6139 = vld [vmem:[%s3 + $0x18] sm:$0xf]
  %v6140 = vld [vmem:[%s3 + $0x1c] sm:$0xf]
  %v6149 = vunpack.c.l.b16 %v6133
  %v6150 = vunpack.c.l.b16 %v6134
  %v6151 = vunpack.c.l.b16 %v6135
  %v6152 = vunpack.c.l.b16 %v6136
  %v6153 = vunpack.c.l.b16 %v6137
  %v6154 = vunpack.c.l.b16 %v6138
  %v6155 = vunpack.c.l.b16 %v6139
  %v6156 = vunpack.c.l.b16 %v6140
  %v6157 = vpack.c.b16 %v6150, %v6149
  %v6158 = vpack.c.b16 %v6152, %v6151
  %v6159 = vpack.c.b16 %v6154, %v6153
  %v6160 = vpack.c.b16 %v6156, %v6155
  %vm6165 = vcmask 523264
  %v6167 = vsel %vm6165, %v6117, 0
  %v6170 = vsel %vm6165, %v6118, 0
  %v6173 = vsel %vm6165, %v6119, 0
  %v6176 = vsel %vm6165, %v6120, 0
  %v6179 = vsel %vm6165, %v6121, 0
  %v6182 = vsel %vm6165, %v6122, 0
  %v6185 = vsel %vm6165, %v6123, 0
  %v6188 = vsel %vm6165, %v6124, 0
  %v6191 = vsel %vm6165, %v6125, 0
  %v6194 = vsel %vm6165, %v6126, 0
  %v6197 = vsel %vm6165, %v6127, 0
  %v6200 = vsel %vm6165, %v6128, 0
  %v6203 = vsel %vm6165, %v6129, 0
  %v6206 = vsel %vm6165, %v6130, 0
  %v6209 = vsel %vm6165, %v6131, 0
  %v6212 = vsel %vm6165, %v6132, 0
  %6214 = vmatprep.subr.bf16.mxu0 0
  %6215 = vmatpush1.bf16.msra.mxu0 %v6157
  %6216 = vmatprep.subr.bf16.mxu0 0
  %6217 = vmatpush1.bf16.msra.mxu0 %v6158
  %6218 = vmatprep.subr.bf16.mxu0 0
  %6219 = vmatpush1.bf16.msra.mxu0 %v6159
  %6220 = vmatprep.subr.bf16.mxu0 0
  %6221 = vmatpush1.bf16.msra.mxu0 %v6160
  %6222 = vmatprep.subr.bf16.mxu0 0
  %6223 = vmatpush1.bf16.msra.mxu0 0
  %6224 = vmatprep.subr.bf16.mxu0 0
  %6225 = vmatpush1.bf16.msra.mxu0 0
  %6226 = vmatprep.subr.bf16.mxu0 0
  %6227 = vmatpush1.bf16.msra.mxu0 0
  %6228 = vmatprep.subr.bf16.mxu0 0
  %6229 = vmatpush1.bf16.msra.mxu0 0
  %6230 = vmatprep.subr.bf16.mxu0 0
  %6231 = vmatpush1.bf16.msra.mxu0 0
  %6232 = vmatprep.subr.bf16.mxu0 0
  %6233 = vmatpush1.bf16.msra.mxu0 0
  %6234 = vmatprep.subr.bf16.mxu0 0
  %6235 = vmatpush1.bf16.msra.mxu0 0
  %6236 = vmatprep.subr.bf16.mxu0 0
  %6237 = vmatpush1.bf16.msra.mxu0 0
  %6238 = vmatprep.subr.bf16.mxu0 0
  %6239 = vmatpush1.bf16.msra.mxu0 0
  %6240 = vmatprep.subr.bf16.mxu0 0
  %6241 = vmatpush1.bf16.msra.mxu0 0
  %6242 = vmatprep.subr.bf16.mxu0 0
  %6243 = vmatpush1.bf16.msra.mxu0 0
  %6244 = vmatprep.subr.bf16.mxu0 0
  %6245 = vmatpush1.bf16.msra.mxu0 0
  %6246 = vmatprep.mubr.bf16.mxu0 0
  %6247 = vmatmul.mubr.bf16.gmra.mrb[0].mxu0 %v6167
  %v6248 = vpop.f32.mrb[0].mxu0
  %v6249 = vadd.f32 0.0, %v6248
  %v6250 = vpop.f32.mrb[0].mxu0
  %v6251 = vpop.f32.mrb[0].mxu0
  %v6252 = vadd.f32 0.0, %v6251
  %v6253 = vpop.f32.mrb[0].mxu0
  %6254 = vmatprep.mubr.bf16.mxu0 0
  %6255 = vmatmul.mubr.bf16.gmra.mrb[0].mxu0 %v6170
  %v6256 = vpop.f32.mrb[0].mxu0
  %v6257 = vadd.f32 0.0, %v6256
  %v6258 = vpop.f32.mrb[0].mxu0
  %v6259 = vpop.f32.mrb[0].mxu0
  %v6260 = vadd.f32 0.0, %v6259
  %v6261 = vpop.f32.mrb[0].mxu0
  %6262 = vmatprep.mubr.bf16.mxu0 0
  %6263 = vmatmul.mubr.bf16.gmra.mrb[0].mxu0 %v6173
  %v6264 = vpop.f32.mrb[0].mxu0
  %v6265 = vadd.f32 0.0, %v6264
  %v6266 = vpop.f32.mrb[0].mxu0
  %v6267 = vpop.f32.mrb[0].mxu0
  %v6268 = vadd.f32 0.0, %v6267
  %v6269 = vpop.f32.mrb[0].mxu0
  %6270 = vmatprep.mubr.bf16.mxu0 0
  %6271 = vmatmul.mubr.bf16.gmra.mrb[0].mxu0 %v6176
  %v6272 = vpop.f32.mrb[0].mxu0
  %v6273 = vadd.f32 0.0, %v6272
  %v6274 = vpop.f32.mrb[0].mxu0
  %v6275 = vpop.f32.mrb[0].mxu0
  %v6276 = vadd.f32 0.0, %v6275
  %v6277 = vpop.f32.mrb[0].mxu0
  %6278 = vmatprep.mubr.bf16.mxu0 0
  %6279 = vmatmul.mubr.bf16.gmra.mrb[0].mxu0 %v6179
  %v6280 = vpop.f32.mrb[0].mxu0
  %v6281 = vadd.f32 0.0, %v6280
  %v6282 = vpop.f32.mrb[0].mxu0
  %v6283 = vpop.f32.mrb[0].mxu0
  %v6284 = vadd.f32 0.0, %v6283
  %v6285 = vpop.f32.mrb[0].mxu0
  %6286 = vmatprep.mubr.bf16.mxu0 0
  %6287 = vmatmul.mubr.bf16.gmra.mrb[0].mxu0 %v6182
  %v6288 = vpop.f32.mrb[0].mxu0
  %v6289 = vadd.f32 0.0, %v6288
  %v6290 = vpop.f32.mrb[0].mxu0
  %v6291 = vpop.f32.mrb[0].mxu0
  %v6292 = vadd.f32 0.0, %v6291
  %v6293 = vpop.f32.mrb[0].mxu0
  %6294 = vmatprep.mubr.bf16.mxu0 0
  %6295 = vmatmul.mubr.bf16.gmra.mrb[0].mxu0 %v6185
  %v6296 = vpop.f32.mrb[0].mxu0
  %v6297 = vadd.f32 0.0, %v6296
  %v6298 = vpop.f32.mrb[0].mxu0
  %v6299 = vpop.f32.mrb[0].mxu0
  %v6300 = vadd.f32 0.0, %v6299
  %v6301 = vpop.f32.mrb[0].mxu0
  %6302 = vmatprep.mubr.bf16.mxu0 0
  %6303 = vmatmul.mubr.bf16.gmra.mrb[0].mxu0 %v6188
  %v6304 = vpop.f32.mrb[0].mxu0
  %v6305 = vadd.f32 0.0, %v6304
  %v6306 = vpop.f32.mrb[0].mxu0
  %v6307 = vpop.f32.mrb[0].mxu0
  %v6308 = vadd.f32 0.0, %v6307
  %v6309 = vpop.f32.mrb[0].mxu0
  %6310 = vmatprep.mubr.bf16.mxu0 0
  %6311 = vmatmul.mubr.bf16.gmra.mrb[0].mxu0 %v6191
  %v6312 = vpop.f32.mrb[0].mxu0
  %v6313 = vadd.f32 0.0, %v6312
  %v6314 = vpop.f32.mrb[0].mxu0
  %v6315 = vpop.f32.mrb[0].mxu0
  %v6316 = vadd.f32 0.0, %v6315
  %v6317 = vpop.f32.mrb[0].mxu0
  %6318 = vmatprep.mubr.bf16.mxu0 0
  %6319 = vmatmul.mubr.bf16.gmra.mrb[0].mxu0 %v6194
  %v6320 = vpop.f32.mrb[0].mxu0
  %v6321 = vadd.f32 0.0, %v6320
  %v6322 = vpop.f32.mrb[0].mxu0
  %v6323 = vpop.f32.mrb[0].mxu0
  %v6324 = vadd.f32 0.0, %v6323
  %v6325 = vpop.f32.mrb[0].mxu0
  %6326 = vmatprep.mubr.bf16.mxu0 0
  %6327 = vmatmul.mubr.bf16.gmra.mrb[0].mxu0 %v6197
  %v6328 = vpop.f32.mrb[0].mxu0
  %v6329 = vadd.f32 0.0, %v6328
  %v6330 = vpop.f32.mrb[0].mxu0
  %v6331 = vpop.f32.mrb[0].mxu0
  %v6332 = vadd.f32 0.0, %v6331
  %v6333 = vpop.f32.mrb[0].mxu0
  %6334 = vmatprep.mubr.bf16.mxu0 0
  %6335 = vmatmul.mubr.bf16.gmra.mrb[0].mxu0 %v6200
  %v6336 = vpop.f32.mrb[0].mxu0
  %v6337 = vadd.f32 0.0, %v6336
  %v6338 = vpop.f32.mrb[0].mxu0
  %v6339 = vpop.f32.mrb[0].mxu0
  %v6340 = vadd.f32 0.0, %v6339
  %v6341 = vpop.f32.mrb[0].mxu0
  %6342 = vmatprep.mubr.bf16.mxu0 0
  %6343 = vmatmul.mubr.bf16.gmra.mrb[0].mxu0 %v6203
  %v6344 = vpop.f32.mrb[0].mxu0
  %v6345 = vadd.f32 0.0, %v6344
  %v6346 = vpop.f32.mrb[0].mxu0
  %v6347 = vpop.f32.mrb[0].mxu0
  %v6348 = vadd.f32 0.0, %v6347
  %v6349 = vpop.f32.mrb[0].mxu0
  %6350 = vmatprep.mubr.bf16.mxu0 0
  %6351 = vmatmul.mubr.bf16.gmra.mrb[0].mxu0 %v6206
  %v6352 = vpop.f32.mrb[0].mxu0
  %v6353 = vadd.f32 0.0, %v6352
  %v6354 = vpop.f32.mrb[0].mxu0
  %v6355 = vpop.f32.mrb[0].mxu0
  %v6356 = vadd.f32 0.0, %v6355
  %v6357 = vpop.f32.mrb[0].mxu0
  %6358 = vmatprep.mubr.bf16.mxu0 0
  %6359 = vmatmul.mubr.bf16.gmra.mrb[0].mxu0 %v6209
  %v6360 = vpop.f32.mrb[0].mxu0
  %v6361 = vadd.f32 0.0, %v6360
  %v6362 = vpop.f32.mrb[0].mxu0
  %v6363 = vpop.f32.mrb[0].mxu0
  %v6364 = vadd.f32 0.0, %v6363
  %v6365 = vpop.f32.mrb[0].mxu0
  %6366 = vmatprep.mubr.bf16.mxu0 0
  %6367 = vmatmul.mubr.bf16.gmra.mrb[0].mxu0 %v6212
  %v6368 = vpop.f32.mrb[0].mxu0
  %v6369 = vadd.f32 0.0, %v6368
  %v6370 = vpop.f32.mrb[0].mxu0
  %v6371 = vpop.f32.mrb[0].mxu0
  %v6372 = vpop.f32.mrb[0].mxu0
  %6373 = vdwg.mxu0
  %6374 = vst.msk [vmem:[%s4] sm:$0xff] %vm6165, %v6249
  %6375 = vst.msk [vmem:[%s4 + $0x8] sm:$0xff] %vm6165, %v6252
  %6376 = vst.msk [vmem:[%s4 + $0x10] sm:$0xff] %vm6165, %v6257
  %6377 = vst.msk [vmem:[%s4 + $0x18] sm:$0xff] %vm6165, %v6260
  %6378 = vst.msk [vmem:[%s4 + $0x20] sm:$0xff] %vm6165, %v6265
  %6379 = vst.msk [vmem:[%s4 + $0x28] sm:$0xff] %vm6165, %v6268
  %6380 = vst.msk [vmem:[%s4 + $0x30] sm:$0xff] %vm6165, %v6273
  %6381 = vst.msk [vmem:[%s4 + $0x38] sm:$0xff] %vm6165, %v6276
  %6382 = vst.msk [vmem:[%s4 + $0x40] sm:$0xff] %vm6165, %v6281
  %6383 = vst.msk [vmem:[%s4 + $0x48] sm:$0xff] %vm6165, %v6284
  %6384 = vst.msk [vmem:[%s4 + $0x50] sm:$0xff] %vm6165, %v6289
  %6385 = vst.msk [vmem:[%s4 + $0x58] sm:$0xff] %vm6165, %v6292
  %6386 = vst.msk [vmem:[%s4 + $0x60] sm:$0xff] %vm6165, %v6297
  %6387 = vst.msk [vmem:[%s4 + $0x68] sm:$0xff] %vm6165, %v6300
  %6388 = vst.msk [vmem:[%s4 + $0x70] sm:$0xff] %vm6165, %v6305
  %6389 = vst.msk [vmem:[%s4 + $0x78] sm:$0xff] %vm6165, %v6308
  %6390 = vst.msk [vmem:[%s4 + $0x80] sm:$0xff] %vm6165, %v6313
  %6391 = vst.msk [vmem:[%s4 + $0x88] sm:$0xff] %vm6165, %v6316
  %6392 = vst.msk [vmem:[%s4 + $0x90] sm:$0xff] %vm6165, %v6321
  %6393 = vst.msk [vmem:[%s4 + $0x98] sm:$0xff] %vm6165, %v6324
  %6394 = vst.msk [vmem:[%s4 + $0xa0] sm:$0xff] %vm6165, %v6329
  %6395 = vst.msk [vmem:[%s4 + $0xa8] sm:$0xff] %vm6165, %v6332
  %6396 = vst.msk [vmem:[%s4 + $0xb0] sm:$0xff] %vm6165, %v6337
  %6397 = vst.msk [vmem:[%s4 + $0xb8] sm:$0xff] %vm6165, %v6340
  %6398 = vst.msk [vmem:[%s4 + $0xc0] sm:$0xff] %vm6165, %v6345
  %6399 = vst.msk [vmem:[%s4 + $0xc8] sm:$0xff] %vm6165, %v6348
  %6400 = vst.msk [vmem:[%s4 + $0xd0] sm:$0xff] %vm6165, %v6353
  %6401 = vst.msk [vmem:[%s4 + $0xd8] sm:$0xff] %vm6165, %v6356
  %6402 = vst.msk [vmem:[%s4 + $0xe0] sm:$0xff] %vm6165, %v6361
  %6403 = vst.msk [vmem:[%s4 + $0xe8] sm:$0xff] %vm6165, %v6364
  %6404 = vst.msk [vmem:[%s4 + $0xf0] sm:$0xff] %vm6165, %v6369
  // Predicated region
  $region18: #{generator_forward.3} parent=0 // pred_check
    _
  $region19: #{generator_forward.3} parent=0 // pred_check_branch
    %6406 = sbr.rel (0) target = $region21
  $region20: #{generator_forward.3} parent=0 // pred_region
    _
  $region21: #{generator_forward.3} parent=0 // pred_fallthru
    _
  // Predicated region
  $region22: #{generator_forward.3} parent=0 // pred_check
    _
  $region23: #{generator_forward.3} parent=0 // pred_check_branch
    %6408 = sbr.rel (0) target = $region25
  $region24: #{generator_forward.3} parent=0 // pred_region
    _
  $region25: #{generator_forward.3} parent=0 // pred_fallthru
    _

</llo_original>
